<compile_context>
chip_gen: v5e
topology: v5e:2x2
jax: 0.10.0
libtpu: 0.0.40
codegen_flags: <defaults>
</compile_context>

<pallas_src>
import functools
import numpy as np
import jax
import jax.numpy as jnp
from jax.experimental import pallas as pl
from jax.experimental.pallas import tpu as pltpu

# ---------------- model hyper-parameters (small synthetic config) -----------
C, HH, W = 32, 4, 4          # channel, height, width  (size=[C, HH, W])
SPLIT = 4
PRED_STEP = 4
B = 2                        # batch
WS = W // SPLIT              # width of each split (== 1, as in the module)
H_LSTM = C * HH * WS         # 32*4*1 = 128  (lane aligned)
N_ROLL = PRED_STEP + SPLIT - 1   # autoregressive rollout steps (7)
T_OUT = 1 + N_ROLL               # output blocks per direction (8)

_VMEM = pl.BlockSpec(memory_space=pltpu.MemorySpace.VMEM)


# ---------------- LSTM cell pieces (gate layout: i, f, o, g) ------------------
def _gate_math(gates, c, Hn):
    # one contiguous sigmoid over 3H lanes, one tanh over the last H lanes
    sg = jax.nn.sigmoid(gates[:, :3 * Hn])
    g = jnp.tanh(gates[:, 3 * Hn:])
    i = sg[:, :Hn]
    f = sg[:, Hn:2 * Hn]
    o = sg[:, 2 * Hn:3 * Hn]
    c_new = f * c + i * g
    h_new = o * jnp.tanh(c_new)
    return h_new, c_new


def _cell_hproj(xproj, h, c, w_hh_ref, layer, b, Hn):
    # layer-0 cell whose input projection was precomputed (teacher-forced)
    gates = xproj + jnp.dot(h.astype(jnp.bfloat16), w_hh_ref[layer],
                            preferred_element_type=jnp.float32) + b
    return _gate_math(gates, c, Hn)


def _cell_full(x, h, c, w_ih_ref, w_hh_ref, layer, b, Hn):
    gates = (jnp.dot(x.astype(jnp.bfloat16), w_ih_ref[layer],
                     preferred_element_type=jnp.float32)
             + jnp.dot(h.astype(jnp.bfloat16), w_hh_ref[layer],
                       preferred_element_type=jnp.float32)
             + b)
    return _gate_math(gates, c, Hn)


# ---------------- the single fused Pallas kernel -----------------------------
def _fused_lstm_conv_kernel(enc_flat_ref, dec_flat_ref,
                            w_e_ih_ref, w_e_hh_ref, w_d_ih_ref, w_d_hh_ref,
                            b_enc_ref, b_dec_ref,
                            a1_ref, a2_ref, cb_ref,
                            ys_ref, conv_ref,
                            *, n_enc, n_dec, n_roll, n_mid, batch):
    Hn = enc_flat_ref.shape[1]
    B2 = enc_flat_ref.shape[0] // n_enc      # 2*B : both chains batched
    G = 4 * Hn

    # small hoisted bias broadcasts (f32, 4 x (B2, 4H) = 32 KiB)
    b_e0 = jnp.broadcast_to(b_enc_ref[0], (B2, G))
    b_e1 = jnp.broadcast_to(b_enc_ref[1], (B2, G))
    b_d0 = jnp.broadcast_to(b_dec_ref[0], (B2, G))
    b_d1 = jnp.broadcast_to(b_dec_ref[1], (B2, G))

    zero = jnp.zeros((B2, Hn), jnp.float32)
    h0, c0, h1, c1 = zero, zero, zero, zero

    # ---- encoder phase ------------------------------------------------------
    # batched layer-0 input projection for all encoder steps (M = n_enc*B2)
    xproj_e = jnp.dot(enc_flat_ref[...], w_e_ih_ref[0],
                      preferred_element_type=jnp.float32)
    for t in range(n_enc):                     # static -> fully unrolled
        h0, c0 = _cell_hproj(xproj_e[t * B2:(t + 1) * B2], h0, c0,
                             w_e_hh_ref, 0, b_e0, Hn)
        h1, c1 = _cell_full(h0, h1, c1, w_e_ih_ref, w_e_hh_ref, 1, b_e1, Hn)

    # ---- decoder (teacher forced) + autoregressive rollout ------------------
    xproj_d = jnp.dot(dec_flat_ref[...], w_d_ih_ref[0],
                      preferred_element_type=jnp.float32)
    outs = []
    prev = zero
    for t in range(n_dec + n_roll):
        if t < n_dec:
            h0, c0 = _cell_hproj(xproj_d[t * B2:(t + 1) * B2], h0, c0,
                                 w_d_hh_ref, 0, b_d0, Hn)
        else:
            h0, c0 = _cell_full(prev, h0, c0, w_d_ih_ref, w_d_hh_ref, 0,
                                b_d0, Hn)
        h1, c1 = _cell_full(h0, h1, c1, w_d_ih_ref, w_d_hh_ref, 1, b_d1, Hn)
        prev = h1
        if t >= n_dec - 1:
            outs.append(h1)

    # ---- sublane-dense slab writeback: (T_OUT*2B, H) = full (8,128) tiles ---
    ys_ref[...] = jnp.concatenate(outs, axis=0)

    # ---- batched 1x1 conv + LeakyReLU(0.2) over the middle window -----------
    # middle column w: first C channels <- x1-chain block w,
    #                  second C channels <- x2-chain block (n_mid-1-w)
    lhs1 = jnp.concatenate([outs[w][0:batch] for w in range(n_mid)],
                           axis=0).astype(jnp.bfloat16)        # (n_mid*B, H)
    lhs2 = jnp.concatenate([outs[n_mid - 1 - w][batch:2 * batch]
                            for w in range(n_mid)],
                           axis=0).astype(jnp.bfloat16)        # (n_mid*B, H)
    cb = jnp.broadcast_to(cb_ref[...], (n_mid * batch, Hn))
    yb = (jnp.dot(lhs1, a1_ref[...], preferred_element_type=jnp.float32)
          + jnp.dot(lhs2, a2_ref[...], preferred_element_type=jnp.float32)
          + cb)
    conv_ref[...] = jnp.where(yb > 0, yb, 0.2 * yb)


# ---------------- helpers -----------------------------------------------------
def _split_flatten(x, split):
    # x: (B, C, H, W) -> (split, B, C*H*ws) and its within-split width-flipped
    Bn, Cc, Hh, Wd = x.shape
    ws = Wd // split
    xs = jnp.stack(jnp.split(x, split, axis=3))          # (split, B, C, H, ws)
    flat = xs.reshape(split, Bn, Cc * Hh * ws)
    flat_rev = jnp.flip(xs, axis=4).reshape(split, Bn, Cc * Hh * ws)
    return flat, flat_rev


# ---------------- Pallas forward pass (mirrors the PyTorch module) -----------
def pallas_forward(x1, x2, params):
    Bn, Cc, Hh, Wd = x1.shape
    ws = Wd // SPLIT
    # TODO(synk): the fused conv/rollout path assumes width/split == 1 (true
    # for the module's default size=[*,4,4], split=4); other sizes need the
    # within-block width flip and a different Kronecker expansion.
    assert ws == 1
    Hn = Cc * Hh * ws

    w_e_ih, w_e_hh, b_enc = params["enc"]
    w_d_ih, w_d_hh, b_dec = params["dec"]
    conv_w, conv_b = params["conv_w"], params["conv_b"]

    x1_split, x1_split_rev = _split_flatten(x1, SPLIT)
    x2_split, x2_split_rev = _split_flatten(x2, SPLIT)

    # batch the two independent directional chains along rows:
    #   rows [0:B]  : encoder over x2 (fwd)    -> decoder over x1 (fwd)
    #   rows [B:2B] : encoder over x1 reversed -> decoder over x2 reversed
    enc_seq = jnp.concatenate([x2_split, x1_split_rev[::-1]], axis=1)
    dec_seq = jnp.concatenate([x1_split, x2_split_rev[::-1]], axis=1)
    B2 = 2 * Bn
    enc_flat = enc_seq.reshape(SPLIT * B2, Hn).astype(jnp.bfloat16)
    dec_flat = dec_seq.reshape(SPLIT * B2, Hn).astype(jnp.bfloat16)

    # Kronecker-expanded 1x1-conv weights: the conv becomes a lane-dense bf16
    # matmul directly on the flattened (C*HH*ws) LSTM outputs.
    eye = jnp.eye(Hh * ws, dtype=jnp.float32)
    a1 = jnp.kron(conv_w[:, :Cc].T, eye).astype(jnp.bfloat16)    # (H, H)
    a2 = jnp.kron(conv_w[:, Cc:].T, eye).astype(jnp.bfloat16)    # (H, H)
    cb = jnp.repeat(conv_b, Hh * ws)[None, :]                    # (1, H)

    n_mid = PRED_STEP                        # middle columns fed to the conv

    # advisory cost estimate for XLA scheduling of the surrounding glue
    cells = 2 * (SPLIT + SPLIT + N_ROLL)
    serial_matmuls = 2 * cells - 2 * SPLIT                # xproj hoisted for 8
    flops = (2 * 2 * (SPLIT * B2) * Hn * (4 * Hn)          # batched x-projs
             + serial_matmuls * 2 * B2 * Hn * (4 * Hn)
             + 2 * 2 * (n_mid * Bn) * Hn * Hn)             # conv tail
    transc = cells * 5 * B2 * Hn
    bytes_acc = ((enc_flat.size + dec_flat.size) * 2
                 + (w_e_ih.size + w_e_hh.size + w_d_ih.size + w_d_hh.size) * 2
                 + (b_enc.size + b_dec.size) * 4
                 + (a1.size + a2.size) * 2 + cb.size * 4
                 + (T_OUT * B2 * Hn + n_mid * Bn * Hn) * 4)

    ys2d, conv2d = pl.pallas_call(
        functools.partial(_fused_lstm_conv_kernel, n_enc=SPLIT, n_dec=SPLIT,
                          n_roll=N_ROLL, n_mid=n_mid, batch=Bn),
        out_shape=(jax.ShapeDtypeStruct((T_OUT * B2, Hn), jnp.float32),
                   jax.ShapeDtypeStruct((n_mid * Bn, Hn), jnp.float32)),
        in_specs=[_VMEM] * 11,
        out_specs=(_VMEM, _VMEM),
        cost_estimate=pl.CostEstimate(flops=flops, transcendentals=transc,
                                      bytes_accessed=bytes_acc),
    )(enc_flat, dec_flat, w_e_ih, w_e_hh, w_d_ih, w_d_hh,
      b_enc, b_dec, a1, a2, cb)

    ys = ys2d.reshape(T_OUT, B2, Hn)
    outs1 = ys[:, :Bn, :]                     # (T_OUT, B, H) x1-direction
    outs2 = ys[:, Bn:, :]                     # (T_OUT, B, H) x2-direction

    blocks1 = outs1.reshape(T_OUT, Bn, Cc, Hh, ws)
    x1_out = jnp.concatenate([x1] + [blocks1[t] for t in range(T_OUT)], axis=3)
    blocks2 = jnp.flip(outs2.reshape(T_OUT, Bn, Cc, Hh, ws), axis=4)
    x2_out = jnp.concatenate(
        [blocks2[t] for t in reversed(range(T_OUT))] + [x2], axis=3)

    x1_t = (x1_out[:, :, :, :Wd], x1_out[:, :, :, Wd:-Wd], x1_out[:, :, :, -Wd:])
    x2_t = (x2_out[:, :, :, :Wd], x2_out[:, :, :, Wd:-Wd], x2_out[:, :, :, -Wd:])

    # conv2d: (n_mid*B, H) with lane index = co*HH + h  ->  NCHW (B, C, HH, Wm)
    conv_y = conv2d.reshape(n_mid, Bn, Hn)
    out = jnp.transpose(conv_y.reshape(n_mid, Bn, Cc, Hh), (1, 2, 3, 0))
    return out, x1_t, x2_t


# ---------------- pure-JAX reference (same cell math, PyTorch control flow) --
# NOTE: the reference uses the same bf16 LSTM/conv weights as the kernel so
# the check validates the fused control flow, not bf16-vs-f32 drift.
def _ref_cell(x, h, c, w_ih, w_hh, b):
    gates = (jnp.dot(x.astype(jnp.bfloat16), w_ih,
                     preferred_element_type=jnp.float32)
             + jnp.dot(h.astype(jnp.bfloat16), w_hh,
                       preferred_element_type=jnp.float32)
             + b)
    Hn = h.shape[-1]
    i = jax.nn.sigmoid(gates[:, 0:Hn])
    f = jax.nn.sigmoid(gates[:, Hn:2 * Hn])
    o = jax.nn.sigmoid(gates[:, 2 * Hn:3 * Hn])
    g = jnp.tanh(gates[:, 3 * Hn:4 * Hn])
    c_new = f * c + i * g
    h_new = o * jnp.tanh(c_new)
    return h_new, c_new


def _ref_stack_step(x, state, w_ih, w_hh, b):
    h0, c0, h1, c1 = state
    h0, c0 = _ref_cell(x, h0, c0, w_ih[0], w_hh[0], b[0])
    h1, c1 = _ref_cell(h0, h1, c1, w_ih[1], w_hh[1], b[1])
    return h1, (h0, c0, h1, c1)


def reference_forward(x1, x2, params):
    Bn, Cc, Hh, Wd = x1.shape
    ws = Wd // SPLIT
    Hn = Cc * Hh * ws
    w_e_ih, w_e_hh, b_enc = params["enc"]
    w_d_ih, w_d_hh, b_dec = params["dec"]
    conv_w, conv_b = params["conv_w"], params["conv_b"]

    x1_split, x1_split_rev = _split_flatten(x1, SPLIT)
    x2_split, x2_split_rev = _split_flatten(x2, SPLIT)

    zero = jnp.zeros((Bn, Hn), jnp.float32)
    init = (zero, zero, zero, zero)

    st = init
    for i in range(SPLIT):
        y, st = _ref_stack_step(x2_split[i], st, w_e_ih, w_e_hh, b_enc)
    hidden_x2 = st
    st = init
    for i in reversed(range(SPLIT)):
        y, st = _ref_stack_step(x1_split_rev[i], st, w_e_ih, w_e_hh, b_enc)
    hidden_x1_rev = st

    st = hidden_x2
    for i in range(SPLIT):
        y, st = _ref_stack_step(x1_split[i], st, w_d_ih, w_d_hh, b_dec)
    x1_out = jnp.concatenate([x1, y.reshape(Bn, Cc, Hh, ws)], axis=3)
    for _ in range(N_ROLL):
        y, st = _ref_stack_step(y, st, w_d_ih, w_d_hh, b_dec)
        x1_out = jnp.concatenate([x1_out, y.reshape(Bn, Cc, Hh, ws)], axis=3)

    st = hidden_x1_rev
    for i in reversed(range(SPLIT)):
        y, st = _ref_stack_step(x2_split_rev[i], st, w_d_ih, w_d_hh, b_dec)
    x2_out = jnp.concatenate(
        [jnp.flip(y.reshape(Bn, Cc, Hh, ws), axis=3), x2], axis=3)
    for _ in range(N_ROLL):
        y, st = _ref_stack_step(y, st, w_d_ih, w_d_hh, b_dec)
        x2_out = jnp.concatenate(
            [jnp.flip(y.reshape(Bn, Cc, Hh, ws), axis=3), x2_out], axis=3)

    x1_t = (x1_out[..., :Wd], x1_out[..., Wd:-Wd], x1_out[..., -Wd:])
    x2_t = (x2_out[..., :Wd], x2_out[..., Wd:-Wd], x2_out[..., -Wd:])

    conv_in = jnp.concatenate([x1_t[1], x2_t[1]], axis=1)   # (B, 2C, HH, Wm)
    Wm = conv_in.shape[3]
    xm = jnp.transpose(conv_in, (0, 2, 3, 1)).reshape(-1, 2 * Cc)
    ym = xm @ conv_w.T + conv_b[None, :]
    ym = jnp.where(ym > 0, ym, 0.2 * ym)
    out = jnp.transpose(ym.reshape(Bn, Hh, Wm, Cc), (0, 3, 1, 2))
    return out, x1_t, x2_t


# ---------------- deterministic parameter init --------------------------------
def make_params(key):
    def uniform(k, shape, scale):
        return jax.random.uniform(k, shape, jnp.float32, -scale, scale)

    ks = jax.random.split(key, 10)
    kscale = 1.0 / np.sqrt(H_LSTM)
    # PyTorch gate order (i, f, g, o) -> kernel order (i, f, o, g)
    perm = np.array([0, 1, 3, 2])

    def lstm_params(k4):
        wih = uniform(k4[0], (2, 4 * H_LSTM, H_LSTM), kscale)
        whh = uniform(k4[1], (2, 4 * H_LSTM, H_LSTM), kscale)
        bih = uniform(k4[2], (2, 4 * H_LSTM), kscale)
        bhh = uniform(k4[3], (2, 4 * H_LSTM), kscale)

        def reorder_w(w):   # (2, 4H, H) -> (2, H, 4H), gate cols (i,f,o,g)
            w4 = w.reshape(2, 4, H_LSTM, H_LSTM)[:, perm]
            return jnp.transpose(w4.reshape(2, 4 * H_LSTM, H_LSTM), (0, 2, 1))

        w_ih = reorder_w(wih).astype(jnp.bfloat16)      # bf16 MXU operands
        w_hh = reorder_w(whh).astype(jnp.bfloat16)
        b = (bih + bhh).reshape(2, 4, H_LSTM)[:, perm].reshape(
            2, 1, 4 * H_LSTM)                           # fused f32 bias
        return w_ih, w_hh, b

    cscale = 1.0 / np.sqrt(2 * C)
    # conv weights rounded through bf16 so the kernel's bf16 Kronecker
    # expansion is exact w.r.t. the reference's f32 conv
    conv_w = uniform(ks[8], (C, 2 * C), cscale).astype(jnp.bfloat16).astype(
        jnp.float32)
    return {
        "enc": lstm_params(ks[0:4]),
        "dec": lstm_params(ks[4:8]),
        "conv_w": conv_w,                              # 1x1 conv weight
        "conv_b": uniform(ks[9], (C,), cscale),
    }


# ---------------- main --------------------------------------------------------
if __name__ == "__main__":
    key = jax.random.PRNGKey(0)
    kp, k1, k2 = jax.random.split(key, 3)
    params = make_params(kp)
    x1 = jax.random.normal(k1, (B, C, HH, W), jnp.float32)
    x2 = jax.random.normal(k2, (B, C, HH, W), jnp.float32)

    fwd_pallas = jax.jit(pallas_forward)
    fwd_ref = jax.jit(reference_forward)

    out_p, x1t_p, x2t_p = fwd_pallas(x1, x2, params)
    jax.block_until_ready(out_p)

    out_r, x1t_r, x2t_r = fwd_ref(x1, x2, params)
    jax.block_until_ready(out_r)

    np.testing.assert_allclose(np.asarray(out_p), np.asarray(out_r),
                               rtol=5e-3, atol=5e-3)
    for a, b_ in zip(x1t_p + x2t_p, x1t_r + x2t_r):
        np.testing.assert_allclose(np.asarray(a), np.asarray(b_),
                                   rtol=5e-3, atol=5e-3)

    assert out_p.shape == (B, C, HH, PRED_STEP * WS)
    print("KERNEL_OK")
</pallas_src>

<mosaic_0001>
module attributes {stable_mosaic.version = 11 : i64} {
  func.func @_fused_lstm_conv_kernel(%arg0: memref<16x128xbf16, #tpu.memory_space<vmem>>, %arg1: memref<16x128xbf16, #tpu.memory_space<vmem>>, %arg2: memref<2x128x512xbf16, #tpu.memory_space<vmem>>, %arg3: memref<2x128x512xbf16, #tpu.memory_space<vmem>>, %arg4: memref<2x128x512xbf16, #tpu.memory_space<vmem>>, %arg5: memref<2x128x512xbf16, #tpu.memory_space<vmem>>, %arg6: memref<2x1x512xf32, #tpu.memory_space<vmem>>, %arg7: memref<2x1x512xf32, #tpu.memory_space<vmem>>, %arg8: memref<128x128xbf16, #tpu.memory_space<vmem>>, %arg9: memref<128x128xbf16, #tpu.memory_space<vmem>>, %arg10: memref<1x128xf32, #tpu.memory_space<vmem>>, %arg11: memref<32x128xf32, #tpu.memory_space<vmem>>, %arg12: memref<8x128xf32, #tpu.memory_space<vmem>>) attributes {dimension_semantics = [], scalar_prefetch = 0 : i64, scratch_operands = 0 : i64, tpu.core_type = #tpu.core_type<tc>} {
    %c0 = arith.constant 0 : index
    %c0_0 = arith.constant 0 : index
    %c0_1 = arith.constant 0 : index
    %0 = vector.load %arg6[%c0, %c0_0, %c0_1] : memref<2x1x512xf32, #tpu.memory_space<vmem>>, vector<1x1x512xf32>
    %1 = vector.shape_cast %0 : vector<1x1x512xf32> to vector<1x512xf32>
    %2 = vector.shape_cast %1 : vector<1x512xf32> to vector<1x512xf32>
    %3 = vector.broadcast %2 : vector<1x512xf32> to vector<4x512xf32>
    %c1 = arith.constant 1 : index
    %c0_2 = arith.constant 0 : index
    %c0_3 = arith.constant 0 : index
    %4 = vector.load %arg6[%c1, %c0_2, %c0_3] : memref<2x1x512xf32, #tpu.memory_space<vmem>>, vector<1x1x512xf32>
    %5 = vector.shape_cast %4 : vector<1x1x512xf32> to vector<1x512xf32>
    %6 = vector.shape_cast %5 : vector<1x512xf32> to vector<1x512xf32>
    %7 = vector.broadcast %6 : vector<1x512xf32> to vector<4x512xf32>
    %c0_4 = arith.constant 0 : index
    %c0_5 = arith.constant 0 : index
    %c0_6 = arith.constant 0 : index
    %8 = vector.load %arg7[%c0_4, %c0_5, %c0_6] : memref<2x1x512xf32, #tpu.memory_space<vmem>>, vector<1x1x512xf32>
    %9 = vector.shape_cast %8 : vector<1x1x512xf32> to vector<1x512xf32>
    %10 = vector.shape_cast %9 : vector<1x512xf32> to vector<1x512xf32>
    %11 = vector.broadcast %10 : vector<1x512xf32> to vector<4x512xf32>
    %c1_7 = arith.constant 1 : index
    %c0_8 = arith.constant 0 : index
    %c0_9 = arith.constant 0 : index
    %12 = vector.load %arg7[%c1_7, %c0_8, %c0_9] : memref<2x1x512xf32, #tpu.memory_space<vmem>>, vector<1x1x512xf32>
    %13 = vector.shape_cast %12 : vector<1x1x512xf32> to vector<1x512xf32>
    %14 = vector.shape_cast %13 : vector<1x512xf32> to vector<1x512xf32>
    %15 = vector.broadcast %14 : vector<1x512xf32> to vector<4x512xf32>
    %cst = arith.constant 0.000000e+00 : f32
    %16 = vector.broadcast %cst : f32 to vector<4x128xf32>
    %c0_10 = arith.constant 0 : index
    %c0_11 = arith.constant 0 : index
    %17 = vector.load %arg0[%c0_10, %c0_11] : memref<16x128xbf16, #tpu.memory_space<vmem>>, vector<16x128xbf16>
    %c0_12 = arith.constant 0 : index
    %c0_13 = arith.constant 0 : index
    %c0_14 = arith.constant 0 : index
    %18 = vector.load %arg2[%c0_12, %c0_13, %c0_14] : memref<2x128x512xbf16, #tpu.memory_space<vmem>>, vector<1x128x512xbf16>
    %19 = vector.shape_cast %18 : vector<1x128x512xbf16> to vector<128x512xbf16>
    %cst_15 = arith.constant dense<0.000000e+00> : vector<16x512xf32>
    %20 = tpu.matmul %17, %19, %cst_15 {dimension_numbers = #tpu.dot_dimension_numbers<[1], [0], [0], [1], [0, 0, 1, 1], [], []>} : vector<16x128xbf16>, vector<128x512xbf16>, vector<16x512xf32> -> vector<16x512xf32>
    %21 = vector.extract_strided_slice %20 {offsets = [0, 0], sizes = [4, 512], strides = [1, 1]} : vector<16x512xf32> to vector<4x512xf32>
    %22 = arith.truncf %16 : vector<4x128xf32> to vector<4x128xbf16>
    %c0_16 = arith.constant 0 : index
    %c0_17 = arith.constant 0 : index
    %c0_18 = arith.constant 0 : index
    %23 = vector.load %arg3[%c0_16, %c0_17, %c0_18] : memref<2x128x512xbf16, #tpu.memory_space<vmem>>, vector<1x128x512xbf16>
    %24 = vector.shape_cast %23 : vector<1x128x512xbf16> to vector<128x512xbf16>
    %cst_19 = arith.constant dense<0.000000e+00> : vector<4x512xf32>
    %25 = tpu.matmul %22, %24, %cst_19 {dimension_numbers = #tpu.dot_dimension_numbers<[1], [0], [0], [1], [0, 0, 1, 1], [], []>} : vector<4x128xbf16>, vector<128x512xbf16>, vector<4x512xf32> -> vector<4x512xf32>
    %26 = arith.addf %21, %25 : vector<4x512xf32>
    %27 = arith.addf %26, %3 : vector<4x512xf32>
    %28 = vector.extract_strided_slice %27 {offsets = [0, 0], sizes = [4, 384], strides = [1, 1]} : vector<4x512xf32> to vector<4x384xf32>
    %29 = arith.negf %28 : vector<4x384xf32>
    %30 = math.exp %29 : vector<4x384xf32>
    %cst_20 = arith.constant 1.000000e+00 : f32
    %31 = vector.broadcast %cst_20 : f32 to vector<4x384xf32>
    %32 = arith.addf %31, %30 : vector<4x384xf32>
    %33 = arith.divf %31, %32 : vector<4x384xf32>
    %34 = vector.extract_strided_slice %27 {offsets = [0, 384], sizes = [4, 128], strides = [1, 1]} : vector<4x512xf32> to vector<4x128xf32>
    %35 = math.tanh %34 : vector<4x128xf32>
    %36 = vector.extract_strided_slice %33 {offsets = [0, 0], sizes = [4, 128], strides = [1, 1]} : vector<4x384xf32> to vector<4x128xf32>
    %37 = vector.extract_strided_slice %33 {offsets = [0, 128], sizes = [4, 128], strides = [1, 1]} : vector<4x384xf32> to vector<4x128xf32>
    %38 = vector.extract_strided_slice %33 {offsets = [0, 256], sizes = [4, 128], strides = [1, 1]} : vector<4x384xf32> to vector<4x128xf32>
    %39 = arith.mulf %37, %16 : vector<4x128xf32>
    %40 = arith.mulf %36, %35 : vector<4x128xf32>
    %41 = arith.addf %39, %40 : vector<4x128xf32>
    %42 = math.tanh %41 : vector<4x128xf32>
    %43 = arith.mulf %38, %42 : vector<4x128xf32>
    %44 = arith.truncf %43 : vector<4x128xf32> to vector<4x128xbf16>
    %c1_21 = arith.constant 1 : index
    %c0_22 = arith.constant 0 : index
    %c0_23 = arith.constant 0 : index
    %45 = vector.load %arg2[%c1_21, %c0_22, %c0_23] : memref<2x128x512xbf16, #tpu.memory_space<vmem>>, vector<1x128x512xbf16>
    %46 = vector.shape_cast %45 : vector<1x128x512xbf16> to vector<128x512xbf16>
    %cst_24 = arith.constant dense<0.000000e+00> : vector<4x512xf32>
    %47 = tpu.matmul %44, %46, %cst_24 {dimension_numbers = #tpu.dot_dimension_numbers<[1], [0], [0], [1], [0, 0, 1, 1], [], []>} : vector<4x128xbf16>, vector<128x512xbf16>, vector<4x512xf32> -> vector<4x512xf32>
    %48 = arith.truncf %16 : vector<4x128xf32> to vector<4x128xbf16>
    %c1_25 = arith.constant 1 : index
    %c0_26 = arith.constant 0 : index
    %c0_27 = arith.constant 0 : index
    %49 = vector.load %arg3[%c1_25, %c0_26, %c0_27] : memref<2x128x512xbf16, #tpu.memory_space<vmem>>, vector<1x128x512xbf16>
    %50 = vector.shape_cast %49 : vector<1x128x512xbf16> to vector<128x512xbf16>
    %cst_28 = arith.constant dense<0.000000e+00> : vector<4x512xf32>
    %51 = tpu.matmul %48, %50, %cst_28 {dimension_numbers = #tpu.dot_dimension_numbers<[1], [0], [0], [1], [0, 0, 1, 1], [], []>} : vector<4x128xbf16>, vector<128x512xbf16>, vector<4x512xf32> -> vector<4x512xf32>
    %52 = arith.addf %47, %51 : vector<4x512xf32>
    %53 = arith.addf %52, %7 : vector<4x512xf32>
    %54 = vector.extract_strided_slice %53 {offsets = [0, 0], sizes = [4, 384], strides = [1, 1]} : vector<4x512xf32> to vector<4x384xf32>
    %55 = arith.negf %54 : vector<4x384xf32>
    %56 = math.exp %55 : vector<4x384xf32>
    %cst_29 = arith.constant 1.000000e+00 : f32
    %57 = vector.broadcast %cst_29 : f32 to vector<4x384xf32>
    %58 = arith.addf %57, %56 : vector<4x384xf32>
    %59 = arith.divf %57, %58 : vector<4x384xf32>
    %60 = vector.extract_strided_slice %53 {offsets = [0, 384], sizes = [4, 128], strides = [1, 1]} : vector<4x512xf32> to vector<4x128xf32>
    %61 = math.tanh %60 : vector<4x128xf32>
    %62 = vector.extract_strided_slice %59 {offsets = [0, 0], sizes = [4, 128], strides = [1, 1]} : vector<4x384xf32> to vector<4x128xf32>
    %63 = vector.extract_strided_slice %59 {offsets = [0, 128], sizes = [4, 128], strides = [1, 1]} : vector<4x384xf32> to vector<4x128xf32>
    %64 = vector.extract_strided_slice %59 {offsets = [0, 256], sizes = [4, 128], strides = [1, 1]} : vector<4x384xf32> to vector<4x128xf32>
    %65 = arith.mulf %63, %16 : vector<4x128xf32>
    %66 = arith.mulf %62, %61 : vector<4x128xf32>
    %67 = arith.addf %65, %66 : vector<4x128xf32>
    %68 = math.tanh %67 : vector<4x128xf32>
    %69 = arith.mulf %64, %68 : vector<4x128xf32>
    %70 = vector.extract_strided_slice %20 {offsets = [4, 0], sizes = [4, 512], strides = [1, 1]} : vector<16x512xf32> to vector<4x512xf32>
    %71 = arith.truncf %43 : vector<4x128xf32> to vector<4x128xbf16>
    %c0_30 = arith.constant 0 : index
    %c0_31 = arith.constant 0 : index
    %c0_32 = arith.constant 0 : index
    %72 = vector.load %arg3[%c0_30, %c0_31, %c0_32] : memref<2x128x512xbf16, #tpu.memory_space<vmem>>, vector<1x128x512xbf16>
    %73 = vector.shape_cast %72 : vector<1x128x512xbf16> to vector<128x512xbf16>
    %cst_33 = arith.constant dense<0.000000e+00> : vector<4x512xf32>
    %74 = tpu.matmul %71, %73, %cst_33 {dimension_numbers = #tpu.dot_dimension_numbers<[1], [0], [0], [1], [0, 0, 1, 1], [], []>} : vector<4x128xbf16>, vector<128x512xbf16>, vector<4x512xf32> -> vector<4x512xf32>
    %75 = arith.addf %70, %74 : vector<4x512xf32>
    %76 = arith.addf %75, %3 : vector<4x512xf32>
    %77 = vector.extract_strided_slice %76 {offsets = [0, 0], sizes = [4, 384], strides = [1, 1]} : vector<4x512xf32> to vector<4x384xf32>
    %78 = arith.negf %77 : vector<4x384xf32>
    %79 = math.exp %78 : vector<4x384xf32>
    %cst_34 = arith.constant 1.000000e+00 : f32
    %80 = vector.broadcast %cst_34 : f32 to vector<4x384xf32>
    %81 = arith.addf %80, %79 : vector<4x384xf32>
    %82 = arith.divf %80, %81 : vector<4x384xf32>
    %83 = vector.extract_strided_slice %76 {offsets = [0, 384], sizes = [4, 128], strides = [1, 1]} : vector<4x512xf32> to vector<4x128xf32>
    %84 = math.tanh %83 : vector<4x128xf32>
    %85 = vector.extract_strided_slice %82 {offsets = [0, 0], sizes = [4, 128], strides = [1, 1]} : vector<4x384xf32> to vector<4x128xf32>
    %86 = vector.extract_strided_slice %82 {offsets = [0, 128], sizes = [4, 128], strides = [1, 1]} : vector<4x384xf32> to vector<4x128xf32>
    %87 = vector.extract_strided_slice %82 {offsets = [0, 256], sizes = [4, 128], strides = [1, 1]} : vector<4x384xf32> to vector<4x128xf32>
    %88 = arith.mulf %86, %41 : vector<4x128xf32>
    %89 = arith.mulf %85, %84 : vector<4x128xf32>
    %90 = arith.addf %88, %89 : vector<4x128xf32>
    %91 = math.tanh %90 : vector<4x128xf32>
    %92 = arith.mulf %87, %91 : vector<4x128xf32>
    %93 = arith.truncf %92 : vector<4x128xf32> to vector<4x128xbf16>
    %c1_35 = arith.constant 1 : index
    %c0_36 = arith.constant 0 : index
    %c0_37 = arith.constant 0 : index
    %94 = vector.load %arg2[%c1_35, %c0_36, %c0_37] : memref<2x128x512xbf16, #tpu.memory_space<vmem>>, vector<1x128x512xbf16>
    %95 = vector.shape_cast %94 : vector<1x128x512xbf16> to vector<128x512xbf16>
    %cst_38 = arith.constant dense<0.000000e+00> : vector<4x512xf32>
    %96 = tpu.matmul %93, %95, %cst_38 {dimension_numbers = #tpu.dot_dimension_numbers<[1], [0], [0], [1], [0, 0, 1, 1], [], []>} : vector<4x128xbf16>, vector<128x512xbf16>, vector<4x512xf32> -> vector<4x512xf32>
    %97 = arith.truncf %69 : vector<4x128xf32> to vector<4x128xbf16>
    %c1_39 = arith.constant 1 : index
    %c0_40 = arith.constant 0 : index
    %c0_41 = arith.constant 0 : index
    %98 = vector.load %arg3[%c1_39, %c0_40, %c0_41] : memref<2x128x512xbf16, #tpu.memory_space<vmem>>, vector<1x128x512xbf16>
    %99 = vector.shape_cast %98 : vector<1x128x512xbf16> to vector<128x512xbf16>
    %cst_42 = arith.constant dense<0.000000e+00> : vector<4x512xf32>
    %100 = tpu.matmul %97, %99, %cst_42 {dimension_numbers = #tpu.dot_dimension_numbers<[1], [0], [0], [1], [0, 0, 1, 1], [], []>} : vector<4x128xbf16>, vector<128x512xbf16>, vector<4x512xf32> -> vector<4x512xf32>
    %101 = arith.addf %96, %100 : vector<4x512xf32>
    %102 = arith.addf %101, %7 : vector<4x512xf32>
    %103 = vector.extract_strided_slice %102 {offsets = [0, 0], sizes = [4, 384], strides = [1, 1]} : vector<4x512xf32> to vector<4x384xf32>
    %104 = arith.negf %103 : vector<4x384xf32>
    %105 = math.exp %104 : vector<4x384xf32>
    %cst_43 = arith.constant 1.000000e+00 : f32
    %106 = vector.broadcast %cst_43 : f32 to vector<4x384xf32>
    %107 = arith.addf %106, %105 : vector<4x384xf32>
    %108 = arith.divf %106, %107 : vector<4x384xf32>
    %109 = vector.extract_strided_slice %102 {offsets = [0, 384], sizes = [4, 128], strides = [1, 1]} : vector<4x512xf32> to vector<4x128xf32>
    %110 = math.tanh %109 : vector<4x128xf32>
    %111 = vector.extract_strided_slice %108 {offsets = [0, 0], sizes = [4, 128], strides = [1, 1]} : vector<4x384xf32> to vector<4x128xf32>
    %112 = vector.extract_strided_slice %108 {offsets = [0, 128], sizes = [4, 128], strides = [1, 1]} : vector<4x384xf32> to vector<4x128xf32>
    %113 = vector.extract_strided_slice %108 {offsets = [0, 256], sizes = [4, 128], strides = [1, 1]} : vector<4x384xf32> to vector<4x128xf32>
    %114 = arith.mulf %112, %67 : vector<4x128xf32>
    %115 = arith.mulf %111, %110 : vector<4x128xf32>
    %116 = arith.addf %114, %115 : vector<4x128xf32>
    %117 = math.tanh %116 : vector<4x128xf32>
    %118 = arith.mulf %113, %117 : vector<4x128xf32>
    %119 = vector.extract_strided_slice %20 {offsets = [8, 0], sizes = [4, 512], strides = [1, 1]} : vector<16x512xf32> to vector<4x512xf32>
    %120 = arith.truncf %92 : vector<4x128xf32> to vector<4x128xbf16>
    %c0_44 = arith.constant 0 : index
    %c0_45 = arith.constant 0 : index
    %c0_46 = arith.constant 0 : index
    %121 = vector.load %arg3[%c0_44, %c0_45, %c0_46] : memref<2x128x512xbf16, #tpu.memory_space<vmem>>, vector<1x128x512xbf16>
    %122 = vector.shape_cast %121 : vector<1x128x512xbf16> to vector<128x512xbf16>
    %cst_47 = arith.constant dense<0.000000e+00> : vector<4x512xf32>
    %123 = tpu.matmul %120, %122, %cst_47 {dimension_numbers = #tpu.dot_dimension_numbers<[1], [0], [0], [1], [0, 0, 1, 1], [], []>} : vector<4x128xbf16>, vector<128x512xbf16>, vector<4x512xf32> -> vector<4x512xf32>
    %124 = arith.addf %119, %123 : vector<4x512xf32>
    %125 = arith.addf %124, %3 : vector<4x512xf32>
    %126 = vector.extract_strided_slice %125 {offsets = [0, 0], sizes = [4, 384], strides = [1, 1]} : vector<4x512xf32> to vector<4x384xf32>
    %127 = arith.negf %126 : vector<4x384xf32>
    %128 = math.exp %127 : vector<4x384xf32>
    %cst_48 = arith.constant 1.000000e+00 : f32
    %129 = vector.broadcast %cst_48 : f32 to vector<4x384xf32>
    %130 = arith.addf %129, %128 : vector<4x384xf32>
    %131 = arith.divf %129, %130 : vector<4x384xf32>
    %132 = vector.extract_strided_slice %125 {offsets = [0, 384], sizes = [4, 128], strides = [1, 1]} : vector<4x512xf32> to vector<4x128xf32>
    %133 = math.tanh %132 : vector<4x128xf32>
    %134 = vector.extract_strided_slice %131 {offsets = [0, 0], sizes = [4, 128], strides = [1, 1]} : vector<4x384xf32> to vector<4x128xf32>
    %135 = vector.extract_strided_slice %131 {offsets = [0, 128], sizes = [4, 128], strides = [1, 1]} : vector<4x384xf32> to vector<4x128xf32>
    %136 = vector.extract_strided_slice %131 {offsets = [0, 256], sizes = [4, 128], strides = [1, 1]} : vector<4x384xf32> to vector<4x128xf32>
    %137 = arith.mulf %135, %90 : vector<4x128xf32>
    %138 = arith.mulf %134, %133 : vector<4x128xf32>
    %139 = arith.addf %137, %138 : vector<4x128xf32>
    %140 = math.tanh %139 : vector<4x128xf32>
    %141 = arith.mulf %136, %140 : vector<4x128xf32>
    %142 = arith.truncf %141 : vector<4x128xf32> to vector<4x128xbf16>
    %c1_49 = arith.constant 1 : index
    %c0_50 = arith.constant 0 : index
    %c0_51 = arith.constant 0 : index
    %143 = vector.load %arg2[%c1_49, %c0_50, %c0_51] : memref<2x128x512xbf16, #tpu.memory_space<vmem>>, vector<1x128x512xbf16>
    %144 = vector.shape_cast %143 : vector<1x128x512xbf16> to vector<128x512xbf16>
    %cst_52 = arith.constant dense<0.000000e+00> : vector<4x512xf32>
    %145 = tpu.matmul %142, %144, %cst_52 {dimension_numbers = #tpu.dot_dimension_numbers<[1], [0], [0], [1], [0, 0, 1, 1], [], []>} : vector<4x128xbf16>, vector<128x512xbf16>, vector<4x512xf32> -> vector<4x512xf32>
    %146 = arith.truncf %118 : vector<4x128xf32> to vector<4x128xbf16>
    %c1_53 = arith.constant 1 : index
    %c0_54 = arith.constant 0 : index
    %c0_55 = arith.constant 0 : index
    %147 = vector.load %arg3[%c1_53, %c0_54, %c0_55] : memref<2x128x512xbf16, #tpu.memory_space<vmem>>, vector<1x128x512xbf16>
    %148 = vector.shape_cast %147 : vector<1x128x512xbf16> to vector<128x512xbf16>
    %cst_56 = arith.constant dense<0.000000e+00> : vector<4x512xf32>
    %149 = tpu.matmul %146, %148, %cst_56 {dimension_numbers = #tpu.dot_dimension_numbers<[1], [0], [0], [1], [0, 0, 1, 1], [], []>} : vector<4x128xbf16>, vector<128x512xbf16>, vector<4x512xf32> -> vector<4x512xf32>
    %150 = arith.addf %145, %149 : vector<4x512xf32>
    %151 = arith.addf %150, %7 : vector<4x512xf32>
    %152 = vector.extract_strided_slice %151 {offsets = [0, 0], sizes = [4, 384], strides = [1, 1]} : vector<4x512xf32> to vector<4x384xf32>
    %153 = arith.negf %152 : vector<4x384xf32>
    %154 = math.exp %153 : vector<4x384xf32>
    %cst_57 = arith.constant 1.000000e+00 : f32
    %155 = vector.broadcast %cst_57 : f32 to vector<4x384xf32>
    %156 = arith.addf %155, %154 : vector<4x384xf32>
    %157 = arith.divf %155, %156 : vector<4x384xf32>
    %158 = vector.extract_strided_slice %151 {offsets = [0, 384], sizes = [4, 128], strides = [1, 1]} : vector<4x512xf32> to vector<4x128xf32>
    %159 = math.tanh %158 : vector<4x128xf32>
    %160 = vector.extract_strided_slice %157 {offsets = [0, 0], sizes = [4, 128], strides = [1, 1]} : vector<4x384xf32> to vector<4x128xf32>
    %161 = vector.extract_strided_slice %157 {offsets = [0, 128], sizes = [4, 128], strides = [1, 1]} : vector<4x384xf32> to vector<4x128xf32>
    %162 = vector.extract_strided_slice %157 {offsets = [0, 256], sizes = [4, 128], strides = [1, 1]} : vector<4x384xf32> to vector<4x128xf32>
    %163 = arith.mulf %161, %116 : vector<4x128xf32>
    %164 = arith.mulf %160, %159 : vector<4x128xf32>
    %165 = arith.addf %163, %164 : vector<4x128xf32>
    %166 = math.tanh %165 : vector<4x128xf32>
    %167 = arith.mulf %162, %166 : vector<4x128xf32>
    %168 = vector.extract_strided_slice %20 {offsets = [12, 0], sizes = [4, 512], strides = [1, 1]} : vector<16x512xf32> to vector<4x512xf32>
    %169 = arith.truncf %141 : vector<4x128xf32> to vector<4x128xbf16>
    %c0_58 = arith.constant 0 : index
    %c0_59 = arith.constant 0 : index
    %c0_60 = arith.constant 0 : index
    %170 = vector.load %arg3[%c0_58, %c0_59, %c0_60] : memref<2x128x512xbf16, #tpu.memory_space<vmem>>, vector<1x128x512xbf16>
    %171 = vector.shape_cast %170 : vector<1x128x512xbf16> to vector<128x512xbf16>
    %cst_61 = arith.constant dense<0.000000e+00> : vector<4x512xf32>
    %172 = tpu.matmul %169, %171, %cst_61 {dimension_numbers = #tpu.dot_dimension_numbers<[1], [0], [0], [1], [0, 0, 1, 1], [], []>} : vector<4x128xbf16>, vector<128x512xbf16>, vector<4x512xf32> -> vector<4x512xf32>
    %173 = arith.addf %168, %172 : vector<4x512xf32>
    %174 = arith.addf %173, %3 : vector<4x512xf32>
    %175 = vector.extract_strided_slice %174 {offsets = [0, 0], sizes = [4, 384], strides = [1, 1]} : vector<4x512xf32> to vector<4x384xf32>
    %176 = arith.negf %175 : vector<4x384xf32>
    %177 = math.exp %176 : vector<4x384xf32>
    %cst_62 = arith.constant 1.000000e+00 : f32
    %178 = vector.broadcast %cst_62 : f32 to vector<4x384xf32>
    %179 = arith.addf %178, %177 : vector<4x384xf32>
    %180 = arith.divf %178, %179 : vector<4x384xf32>
    %181 = vector.extract_strided_slice %174 {offsets = [0, 384], sizes = [4, 128], strides = [1, 1]} : vector<4x512xf32> to vector<4x128xf32>
    %182 = math.tanh %181 : vector<4x128xf32>
    %183 = vector.extract_strided_slice %180 {offsets = [0, 0], sizes = [4, 128], strides = [1, 1]} : vector<4x384xf32> to vector<4x128xf32>
    %184 = vector.extract_strided_slice %180 {offsets = [0, 128], sizes = [4, 128], strides = [1, 1]} : vector<4x384xf32> to vector<4x128xf32>
    %185 = vector.extract_strided_slice %180 {offsets = [0, 256], sizes = [4, 128], strides = [1, 1]} : vector<4x384xf32> to vector<4x128xf32>
    %186 = arith.mulf %184, %139 : vector<4x128xf32>
    %187 = arith.mulf %183, %182 : vector<4x128xf32>
    %188 = arith.addf %186, %187 : vector<4x128xf32>
    %189 = math.tanh %188 : vector<4x128xf32>
    %190 = arith.mulf %185, %189 : vector<4x128xf32>
    %191 = arith.truncf %190 : vector<4x128xf32> to vector<4x128xbf16>
    %c1_63 = arith.constant 1 : index
    %c0_64 = arith.constant 0 : index
    %c0_65 = arith.constant 0 : index
    %192 = vector.load %arg2[%c1_63, %c0_64, %c0_65] : memref<2x128x512xbf16, #tpu.memory_space<vmem>>, vector<1x128x512xbf16>
    %193 = vector.shape_cast %192 : vector<1x128x512xbf16> to vector<128x512xbf16>
    %cst_66 = arith.constant dense<0.000000e+00> : vector<4x512xf32>
    %194 = tpu.matmul %191, %193, %cst_66 {dimension_numbers = #tpu.dot_dimension_numbers<[1], [0], [0], [1], [0, 0, 1, 1], [], []>} : vector<4x128xbf16>, vector<128x512xbf16>, vector<4x512xf32> -> vector<4x512xf32>
    %195 = arith.truncf %167 : vector<4x128xf32> to vector<4x128xbf16>
    %c1_67 = arith.constant 1 : index
    %c0_68 = arith.constant 0 : index
    %c0_69 = arith.constant 0 : index
    %196 = vector.load %arg3[%c1_67, %c0_68, %c0_69] : memref<2x128x512xbf16, #tpu.memory_space<vmem>>, vector<1x128x512xbf16>
    %197 = vector.shape_cast %196 : vector<1x128x512xbf16> to vector<128x512xbf16>
    %cst_70 = arith.constant dense<0.000000e+00> : vector<4x512xf32>
    %198 = tpu.matmul %195, %197, %cst_70 {dimension_numbers = #tpu.dot_dimension_numbers<[1], [0], [0], [1], [0, 0, 1, 1], [], []>} : vector<4x128xbf16>, vector<128x512xbf16>, vector<4x512xf32> -> vector<4x512xf32>
    %199 = arith.addf %194, %198 : vector<4x512xf32>
    %200 = arith.addf %199, %7 : vector<4x512xf32>
    %201 = vector.extract_strided_slice %200 {offsets = [0, 0], sizes = [4, 384], strides = [1, 1]} : vector<4x512xf32> to vector<4x384xf32>
    %202 = arith.negf %201 : vector<4x384xf32>
    %203 = math.exp %202 : vector<4x384xf32>
    %cst_71 = arith.constant 1.000000e+00 : f32
    %204 = vector.broadcast %cst_71 : f32 to vector<4x384xf32>
    %205 = arith.addf %204, %203 : vector<4x384xf32>
    %206 = arith.divf %204, %205 : vector<4x384xf32>
    %207 = vector.extract_strided_slice %200 {offsets = [0, 384], sizes = [4, 128], strides = [1, 1]} : vector<4x512xf32> to vector<4x128xf32>
    %208 = math.tanh %207 : vector<4x128xf32>
    %209 = vector.extract_strided_slice %206 {offsets = [0, 0], sizes = [4, 128], strides = [1, 1]} : vector<4x384xf32> to vector<4x128xf32>
    %210 = vector.extract_strided_slice %206 {offsets = [0, 128], sizes = [4, 128], strides = [1, 1]} : vector<4x384xf32> to vector<4x128xf32>
    %211 = vector.extract_strided_slice %206 {offsets = [0, 256], sizes = [4, 128], strides = [1, 1]} : vector<4x384xf32> to vector<4x128xf32>
    %212 = arith.mulf %210, %165 : vector<4x128xf32>
    %213 = arith.mulf %209, %208 : vector<4x128xf32>
    %214 = arith.addf %212, %213 : vector<4x128xf32>
    %215 = math.tanh %214 : vector<4x128xf32>
    %216 = arith.mulf %211, %215 : vector<4x128xf32>
    %c0_72 = arith.constant 0 : index
    %c0_73 = arith.constant 0 : index
    %217 = vector.load %arg1[%c0_72, %c0_73] : memref<16x128xbf16, #tpu.memory_space<vmem>>, vector<16x128xbf16>
    %c0_74 = arith.constant 0 : index
    %c0_75 = arith.constant 0 : index
    %c0_76 = arith.constant 0 : index
    %218 = vector.load %arg4[%c0_74, %c0_75, %c0_76] : memref<2x128x512xbf16, #tpu.memory_space<vmem>>, vector<1x128x512xbf16>
    %219 = vector.shape_cast %218 : vector<1x128x512xbf16> to vector<128x512xbf16>
    %cst_77 = arith.constant dense<0.000000e+00> : vector<16x512xf32>
    %220 = tpu.matmul %217, %219, %cst_77 {dimension_numbers = #tpu.dot_dimension_numbers<[1], [0], [0], [1], [0, 0, 1, 1], [], []>} : vector<16x128xbf16>, vector<128x512xbf16>, vector<16x512xf32> -> vector<16x512xf32>
    %221 = vector.extract_strided_slice %220 {offsets = [0, 0], sizes = [4, 512], strides = [1, 1]} : vector<16x512xf32> to vector<4x512xf32>
    %222 = arith.truncf %190 : vector<4x128xf32> to vector<4x128xbf16>
    %c0_78 = arith.constant 0 : index
    %c0_79 = arith.constant 0 : index
    %c0_80 = arith.constant 0 : index
    %223 = vector.load %arg5[%c0_78, %c0_79, %c0_80] : memref<2x128x512xbf16, #tpu.memory_space<vmem>>, vector<1x128x512xbf16>
    %224 = vector.shape_cast %223 : vector<1x128x512xbf16> to vector<128x512xbf16>
    %cst_81 = arith.constant dense<0.000000e+00> : vector<4x512xf32>
    %225 = tpu.matmul %222, %224, %cst_81 {dimension_numbers = #tpu.dot_dimension_numbers<[1], [0], [0], [1], [0, 0, 1, 1], [], []>} : vector<4x128xbf16>, vector<128x512xbf16>, vector<4x512xf32> -> vector<4x512xf32>
    %226 = arith.addf %221, %225 : vector<4x512xf32>
    %227 = arith.addf %226, %11 : vector<4x512xf32>
    %228 = vector.extract_strided_slice %227 {offsets = [0, 0], sizes = [4, 384], strides = [1, 1]} : vector<4x512xf32> to vector<4x384xf32>
    %229 = arith.negf %228 : vector<4x384xf32>
    %230 = math.exp %229 : vector<4x384xf32>
    %cst_82 = arith.constant 1.000000e+00 : f32
    %231 = vector.broadcast %cst_82 : f32 to vector<4x384xf32>
    %232 = arith.addf %231, %230 : vector<4x384xf32>
    %233 = arith.divf %231, %232 : vector<4x384xf32>
    %234 = vector.extract_strided_slice %227 {offsets = [0, 384], sizes = [4, 128], strides = [1, 1]} : vector<4x512xf32> to vector<4x128xf32>
    %235 = math.tanh %234 : vector<4x128xf32>
    %236 = vector.extract_strided_slice %233 {offsets = [0, 0], sizes = [4, 128], strides = [1, 1]} : vector<4x384xf32> to vector<4x128xf32>
    %237 = vector.extract_strided_slice %233 {offsets = [0, 128], sizes = [4, 128], strides = [1, 1]} : vector<4x384xf32> to vector<4x128xf32>
    %238 = vector.extract_strided_slice %233 {offsets = [0, 256], sizes = [4, 128], strides = [1, 1]} : vector<4x384xf32> to vector<4x128xf32>
    %239 = arith.mulf %237, %188 : vector<4x128xf32>
    %240 = arith.mulf %236, %235 : vector<4x128xf32>
    %241 = arith.addf %239, %240 : vector<4x128xf32>
    %242 = math.tanh %241 : vector<4x128xf32>
    %243 = arith.mulf %238, %242 : vector<4x128xf32>
    %244 = arith.truncf %243 : vector<4x128xf32> to vector<4x128xbf16>
    %c1_83 = arith.constant 1 : index
    %c0_84 = arith.constant 0 : index
    %c0_85 = arith.constant 0 : index
    %245 = vector.load %arg4[%c1_83, %c0_84, %c0_85] : memref<2x128x512xbf16, #tpu.memory_space<vmem>>, vector<1x128x512xbf16>
    %246 = vector.shape_cast %245 : vector<1x128x512xbf16> to vector<128x512xbf16>
    %cst_86 = arith.constant dense<0.000000e+00> : vector<4x512xf32>
    %247 = tpu.matmul %244, %246, %cst_86 {dimension_numbers = #tpu.dot_dimension_numbers<[1], [0], [0], [1], [0, 0, 1, 1], [], []>} : vector<4x128xbf16>, vector<128x512xbf16>, vector<4x512xf32> -> vector<4x512xf32>
    %248 = arith.truncf %216 : vector<4x128xf32> to vector<4x128xbf16>
    %c1_87 = arith.constant 1 : index
    %c0_88 = arith.constant 0 : index
    %c0_89 = arith.constant 0 : index
    %249 = vector.load %arg5[%c1_87, %c0_88, %c0_89] : memref<2x128x512xbf16, #tpu.memory_space<vmem>>, vector<1x128x512xbf16>
    %250 = vector.shape_cast %249 : vector<1x128x512xbf16> to vector<128x512xbf16>
    %cst_90 = arith.constant dense<0.000000e+00> : vector<4x512xf32>
    %251 = tpu.matmul %248, %250, %cst_90 {dimension_numbers = #tpu.dot_dimension_numbers<[1], [0], [0], [1], [0, 0, 1, 1], [], []>} : vector<4x128xbf16>, vector<128x512xbf16>, vector<4x512xf32> -> vector<4x512xf32>
    %252 = arith.addf %247, %251 : vector<4x512xf32>
    %253 = arith.addf %252, %15 : vector<4x512xf32>
    %254 = vector.extract_strided_slice %253 {offsets = [0, 0], sizes = [4, 384], strides = [1, 1]} : vector<4x512xf32> to vector<4x384xf32>
    %255 = arith.negf %254 : vector<4x384xf32>
    %256 = math.exp %255 : vector<4x384xf32>
    %cst_91 = arith.constant 1.000000e+00 : f32
    %257 = vector.broadcast %cst_91 : f32 to vector<4x384xf32>
    %258 = arith.addf %257, %256 : vector<4x384xf32>
    %259 = arith.divf %257, %258 : vector<4x384xf32>
    %260 = vector.extract_strided_slice %253 {offsets = [0, 384], sizes = [4, 128], strides = [1, 1]} : vector<4x512xf32> to vector<4x128xf32>
    %261 = math.tanh %260 : vector<4x128xf32>
    %262 = vector.extract_strided_slice %259 {offsets = [0, 0], sizes = [4, 128], strides = [1, 1]} : vector<4x384xf32> to vector<4x128xf32>
    %263 = vector.extract_strided_slice %259 {offsets = [0, 128], sizes = [4, 128], strides = [1, 1]} : vector<4x384xf32> to vector<4x128xf32>
    %264 = vector.extract_strided_slice %259 {offsets = [0, 256], sizes = [4, 128], strides = [1, 1]} : vector<4x384xf32> to vector<4x128xf32>
    %265 = arith.mulf %263, %214 : vector<4x128xf32>
    %266 = arith.mulf %262, %261 : vector<4x128xf32>
    %267 = arith.addf %265, %266 : vector<4x128xf32>
    %268 = math.tanh %267 : vector<4x128xf32>
    %269 = arith.mulf %264, %268 : vector<4x128xf32>
    %270 = vector.extract_strided_slice %220 {offsets = [4, 0], sizes = [4, 512], strides = [1, 1]} : vector<16x512xf32> to vector<4x512xf32>
    %271 = arith.truncf %243 : vector<4x128xf32> to vector<4x128xbf16>
    %c0_92 = arith.constant 0 : index
    %c0_93 = arith.constant 0 : index
    %c0_94 = arith.constant 0 : index
    %272 = vector.load %arg5[%c0_92, %c0_93, %c0_94] : memref<2x128x512xbf16, #tpu.memory_space<vmem>>, vector<1x128x512xbf16>
    %273 = vector.shape_cast %272 : vector<1x128x512xbf16> to vector<128x512xbf16>
    %cst_95 = arith.constant dense<0.000000e+00> : vector<4x512xf32>
    %274 = tpu.matmul %271, %273, %cst_95 {dimension_numbers = #tpu.dot_dimension_numbers<[1], [0], [0], [1], [0, 0, 1, 1], [], []>} : vector<4x128xbf16>, vector<128x512xbf16>, vector<4x512xf32> -> vector<4x512xf32>
    %275 = arith.addf %270, %274 : vector<4x512xf32>
    %276 = arith.addf %275, %11 : vector<4x512xf32>
    %277 = vector.extract_strided_slice %276 {offsets = [0, 0], sizes = [4, 384], strides = [1, 1]} : vector<4x512xf32> to vector<4x384xf32>
    %278 = arith.negf %277 : vector<4x384xf32>
    %279 = math.exp %278 : vector<4x384xf32>
    %cst_96 = arith.constant 1.000000e+00 : f32
    %280 = vector.broadcast %cst_96 : f32 to vector<4x384xf32>
    %281 = arith.addf %280, %279 : vector<4x384xf32>
    %282 = arith.divf %280, %281 : vector<4x384xf32>
    %283 = vector.extract_strided_slice %276 {offsets = [0, 384], sizes = [4, 128], strides = [1, 1]} : vector<4x512xf32> to vector<4x128xf32>
    %284 = math.tanh %283 : vector<4x128xf32>
    %285 = vector.extract_strided_slice %282 {offsets = [0, 0], sizes = [4, 128], strides = [1, 1]} : vector<4x384xf32> to vector<4x128xf32>
    %286 = vector.extract_strided_slice %282 {offsets = [0, 128], sizes = [4, 128], strides = [1, 1]} : vector<4x384xf32> to vector<4x128xf32>
    %287 = vector.extract_strided_slice %282 {offsets = [0, 256], sizes = [4, 128], strides = [1, 1]} : vector<4x384xf32> to vector<4x128xf32>
    %288 = arith.mulf %286, %241 : vector<4x128xf32>
    %289 = arith.mulf %285, %284 : vector<4x128xf32>
    %290 = arith.addf %288, %289 : vector<4x128xf32>
    %291 = math.tanh %290 : vector<4x128xf32>
    %292 = arith.mulf %287, %291 : vector<4x128xf32>
    %293 = arith.truncf %292 : vector<4x128xf32> to vector<4x128xbf16>
    %c1_97 = arith.constant 1 : index
    %c0_98 = arith.constant 0 : index
    %c0_99 = arith.constant 0 : index
    %294 = vector.load %arg4[%c1_97, %c0_98, %c0_99] : memref<2x128x512xbf16, #tpu.memory_space<vmem>>, vector<1x128x512xbf16>
    %295 = vector.shape_cast %294 : vector<1x128x512xbf16> to vector<128x512xbf16>
    %cst_100 = arith.constant dense<0.000000e+00> : vector<4x512xf32>
    %296 = tpu.matmul %293, %295, %cst_100 {dimension_numbers = #tpu.dot_dimension_numbers<[1], [0], [0], [1], [0, 0, 1, 1], [], []>} : vector<4x128xbf16>, vector<128x512xbf16>, vector<4x512xf32> -> vector<4x512xf32>
    %297 = arith.truncf %269 : vector<4x128xf32> to vector<4x128xbf16>
    %c1_101 = arith.constant 1 : index
    %c0_102 = arith.constant 0 : index
    %c0_103 = arith.constant 0 : index
    %298 = vector.load %arg5[%c1_101, %c0_102, %c0_103] : memref<2x128x512xbf16, #tpu.memory_space<vmem>>, vector<1x128x512xbf16>
    %299 = vector.shape_cast %298 : vector<1x128x512xbf16> to vector<128x512xbf16>
    %cst_104 = arith.constant dense<0.000000e+00> : vector<4x512xf32>
    %300 = tpu.matmul %297, %299, %cst_104 {dimension_numbers = #tpu.dot_dimension_numbers<[1], [0], [0], [1], [0, 0, 1, 1], [], []>} : vector<4x128xbf16>, vector<128x512xbf16>, vector<4x512xf32> -> vector<4x512xf32>
    %301 = arith.addf %296, %300 : vector<4x512xf32>
    %302 = arith.addf %301, %15 : vector<4x512xf32>
    %303 = vector.extract_strided_slice %302 {offsets = [0, 0], sizes = [4, 384], strides = [1, 1]} : vector<4x512xf32> to vector<4x384xf32>
    %304 = arith.negf %303 : vector<4x384xf32>
    %305 = math.exp %304 : vector<4x384xf32>
    %cst_105 = arith.constant 1.000000e+00 : f32
    %306 = vector.broadcast %cst_105 : f32 to vector<4x384xf32>
    %307 = arith.addf %306, %305 : vector<4x384xf32>
    %308 = arith.divf %306, %307 : vector<4x384xf32>
    %309 = vector.extract_strided_slice %302 {offsets = [0, 384], sizes = [4, 128], strides = [1, 1]} : vector<4x512xf32> to vector<4x128xf32>
    %310 = math.tanh %309 : vector<4x128xf32>
    %311 = vector.extract_strided_slice %308 {offsets = [0, 0], sizes = [4, 128], strides = [1, 1]} : vector<4x384xf32> to vector<4x128xf32>
    %312 = vector.extract_strided_slice %308 {offsets = [0, 128], sizes = [4, 128], strides = [1, 1]} : vector<4x384xf32> to vector<4x128xf32>
    %313 = vector.extract_strided_slice %308 {offsets = [0, 256], sizes = [4, 128], strides = [1, 1]} : vector<4x384xf32> to vector<4x128xf32>
    %314 = arith.mulf %312, %267 : vector<4x128xf32>
    %315 = arith.mulf %311, %310 : vector<4x128xf32>
    %316 = arith.addf %314, %315 : vector<4x128xf32>
    %317 = math.tanh %316 : vector<4x128xf32>
    %318 = arith.mulf %313, %317 : vector<4x128xf32>
    %319 = vector.extract_strided_slice %220 {offsets = [8, 0], sizes = [4, 512], strides = [1, 1]} : vector<16x512xf32> to vector<4x512xf32>
    %320 = arith.truncf %292 : vector<4x128xf32> to vector<4x128xbf16>
    %c0_106 = arith.constant 0 : index
    %c0_107 = arith.constant 0 : index
    %c0_108 = arith.constant 0 : index
    %321 = vector.load %arg5[%c0_106, %c0_107, %c0_108] : memref<2x128x512xbf16, #tpu.memory_space<vmem>>, vector<1x128x512xbf16>
    %322 = vector.shape_cast %321 : vector<1x128x512xbf16> to vector<128x512xbf16>
    %cst_109 = arith.constant dense<0.000000e+00> : vector<4x512xf32>
    %323 = tpu.matmul %320, %322, %cst_109 {dimension_numbers = #tpu.dot_dimension_numbers<[1], [0], [0], [1], [0, 0, 1, 1], [], []>} : vector<4x128xbf16>, vector<128x512xbf16>, vector<4x512xf32> -> vector<4x512xf32>
    %324 = arith.addf %319, %323 : vector<4x512xf32>
    %325 = arith.addf %324, %11 : vector<4x512xf32>
    %326 = vector.extract_strided_slice %325 {offsets = [0, 0], sizes = [4, 384], strides = [1, 1]} : vector<4x512xf32> to vector<4x384xf32>
    %327 = arith.negf %326 : vector<4x384xf32>
    %328 = math.exp %327 : vector<4x384xf32>
    %cst_110 = arith.constant 1.000000e+00 : f32
    %329 = vector.broadcast %cst_110 : f32 to vector<4x384xf32>
    %330 = arith.addf %329, %328 : vector<4x384xf32>
    %331 = arith.divf %329, %330 : vector<4x384xf32>
    %332 = vector.extract_strided_slice %325 {offsets = [0, 384], sizes = [4, 128], strides = [1, 1]} : vector<4x512xf32> to vector<4x128xf32>
    %333 = math.tanh %332 : vector<4x128xf32>
    %334 = vector.extract_strided_slice %331 {offsets = [0, 0], sizes = [4, 128], strides = [1, 1]} : vector<4x384xf32> to vector<4x128xf32>
    %335 = vector.extract_strided_slice %331 {offsets = [0, 128], sizes = [4, 128], strides = [1, 1]} : vector<4x384xf32> to vector<4x128xf32>
    %336 = vector.extract_strided_slice %331 {offsets = [0, 256], sizes = [4, 128], strides = [1, 1]} : vector<4x384xf32> to vector<4x128xf32>
    %337 = arith.mulf %335, %290 : vector<4x128xf32>
    %338 = arith.mulf %334, %333 : vector<4x128xf32>
    %339 = arith.addf %337, %338 : vector<4x128xf32>
    %340 = math.tanh %339 : vector<4x128xf32>
    %341 = arith.mulf %336, %340 : vector<4x128xf32>
    %342 = arith.truncf %341 : vector<4x128xf32> to vector<4x128xbf16>
    %c1_111 = arith.constant 1 : index
    %c0_112 = arith.constant 0 : index
    %c0_113 = arith.constant 0 : index
    %343 = vector.load %arg4[%c1_111, %c0_112, %c0_113] : memref<2x128x512xbf16, #tpu.memory_space<vmem>>, vector<1x128x512xbf16>
    %344 = vector.shape_cast %343 : vector<1x128x512xbf16> to vector<128x512xbf16>
    %cst_114 = arith.constant dense<0.000000e+00> : vector<4x512xf32>
    %345 = tpu.matmul %342, %344, %cst_114 {dimension_numbers = #tpu.dot_dimension_numbers<[1], [0], [0], [1], [0, 0, 1, 1], [], []>} : vector<4x128xbf16>, vector<128x512xbf16>, vector<4x512xf32> -> vector<4x512xf32>
    %346 = arith.truncf %318 : vector<4x128xf32> to vector<4x128xbf16>
    %c1_115 = arith.constant 1 : index
    %c0_116 = arith.constant 0 : index
    %c0_117 = arith.constant 0 : index
    %347 = vector.load %arg5[%c1_115, %c0_116, %c0_117] : memref<2x128x512xbf16, #tpu.memory_space<vmem>>, vector<1x128x512xbf16>
    %348 = vector.shape_cast %347 : vector<1x128x512xbf16> to vector<128x512xbf16>
    %cst_118 = arith.constant dense<0.000000e+00> : vector<4x512xf32>
    %349 = tpu.matmul %346, %348, %cst_118 {dimension_numbers = #tpu.dot_dimension_numbers<[1], [0], [0], [1], [0, 0, 1, 1], [], []>} : vector<4x128xbf16>, vector<128x512xbf16>, vector<4x512xf32> -> vector<4x512xf32>
    %350 = arith.addf %345, %349 : vector<4x512xf32>
    %351 = arith.addf %350, %15 : vector<4x512xf32>
    %352 = vector.extract_strided_slice %351 {offsets = [0, 0], sizes = [4, 384], strides = [1, 1]} : vector<4x512xf32> to vector<4x384xf32>
    %353 = arith.negf %352 : vector<4x384xf32>
    %354 = math.exp %353 : vector<4x384xf32>
    %cst_119 = arith.constant 1.000000e+00 : f32
    %355 = vector.broadcast %cst_119 : f32 to vector<4x384xf32>
    %356 = arith.addf %355, %354 : vector<4x384xf32>
    %357 = arith.divf %355, %356 : vector<4x384xf32>
    %358 = vector.extract_strided_slice %351 {offsets = [0, 384], sizes = [4, 128], strides = [1, 1]} : vector<4x512xf32> to vector<4x128xf32>
    %359 = math.tanh %358 : vector<4x128xf32>
    %360 = vector.extract_strided_slice %357 {offsets = [0, 0], sizes = [4, 128], strides = [1, 1]} : vector<4x384xf32> to vector<4x128xf32>
    %361 = vector.extract_strided_slice %357 {offsets = [0, 128], sizes = [4, 128], strides = [1, 1]} : vector<4x384xf32> to vector<4x128xf32>
    %362 = vector.extract_strided_slice %357 {offsets = [0, 256], sizes = [4, 128], strides = [1, 1]} : vector<4x384xf32> to vector<4x128xf32>
    %363 = arith.mulf %361, %316 : vector<4x128xf32>
    %364 = arith.mulf %360, %359 : vector<4x128xf32>
    %365 = arith.addf %363, %364 : vector<4x128xf32>
    %366 = math.tanh %365 : vector<4x128xf32>
    %367 = arith.mulf %362, %366 : vector<4x128xf32>
    %368 = vector.extract_strided_slice %220 {offsets = [12, 0], sizes = [4, 512], strides = [1, 1]} : vector<16x512xf32> to vector<4x512xf32>
    %369 = arith.truncf %341 : vector<4x128xf32> to vector<4x128xbf16>
    %c0_120 = arith.constant 0 : index
    %c0_121 = arith.constant 0 : index
    %c0_122 = arith.constant 0 : index
    %370 = vector.load %arg5[%c0_120, %c0_121, %c0_122] : memref<2x128x512xbf16, #tpu.memory_space<vmem>>, vector<1x128x512xbf16>
    %371 = vector.shape_cast %370 : vector<1x128x512xbf16> to vector<128x512xbf16>
    %cst_123 = arith.constant dense<0.000000e+00> : vector<4x512xf32>
    %372 = tpu.matmul %369, %371, %cst_123 {dimension_numbers = #tpu.dot_dimension_numbers<[1], [0], [0], [1], [0, 0, 1, 1], [], []>} : vector<4x128xbf16>, vector<128x512xbf16>, vector<4x512xf32> -> vector<4x512xf32>
    %373 = arith.addf %368, %372 : vector<4x512xf32>
    %374 = arith.addf %373, %11 : vector<4x512xf32>
    %375 = vector.extract_strided_slice %374 {offsets = [0, 0], sizes = [4, 384], strides = [1, 1]} : vector<4x512xf32> to vector<4x384xf32>
    %376 = arith.negf %375 : vector<4x384xf32>
    %377 = math.exp %376 : vector<4x384xf32>
    %cst_124 = arith.constant 1.000000e+00 : f32
    %378 = vector.broadcast %cst_124 : f32 to vector<4x384xf32>
    %379 = arith.addf %378, %377 : vector<4x384xf32>
    %380 = arith.divf %378, %379 : vector<4x384xf32>
    %381 = vector.extract_strided_slice %374 {offsets = [0, 384], sizes = [4, 128], strides = [1, 1]} : vector<4x512xf32> to vector<4x128xf32>
    %382 = math.tanh %381 : vector<4x128xf32>
    %383 = vector.extract_strided_slice %380 {offsets = [0, 0], sizes = [4, 128], strides = [1, 1]} : vector<4x384xf32> to vector<4x128xf32>
    %384 = vector.extract_strided_slice %380 {offsets = [0, 128], sizes = [4, 128], strides = [1, 1]} : vector<4x384xf32> to vector<4x128xf32>
    %385 = vector.extract_strided_slice %380 {offsets = [0, 256], sizes = [4, 128], strides = [1, 1]} : vector<4x384xf32> to vector<4x128xf32>
    %386 = arith.mulf %384, %339 : vector<4x128xf32>
    %387 = arith.mulf %383, %382 : vector<4x128xf32>
    %388 = arith.addf %386, %387 : vector<4x128xf32>
    %389 = math.tanh %388 : vector<4x128xf32>
    %390 = arith.mulf %385, %389 : vector<4x128xf32>
    %391 = arith.truncf %390 : vector<4x128xf32> to vector<4x128xbf16>
    %c1_125 = arith.constant 1 : index
    %c0_126 = arith.constant 0 : index
    %c0_127 = arith.constant 0 : index
    %392 = vector.load %arg4[%c1_125, %c0_126, %c0_127] : memref<2x128x512xbf16, #tpu.memory_space<vmem>>, vector<1x128x512xbf16>
    %393 = vector.shape_cast %392 : vector<1x128x512xbf16> to vector<128x512xbf16>
    %cst_128 = arith.constant dense<0.000000e+00> : vector<4x512xf32>
    %394 = tpu.matmul %391, %393, %cst_128 {dimension_numbers = #tpu.dot_dimension_numbers<[1], [0], [0], [1], [0, 0, 1, 1], [], []>} : vector<4x128xbf16>, vector<128x512xbf16>, vector<4x512xf32> -> vector<4x512xf32>
    %395 = arith.truncf %367 : vector<4x128xf32> to vector<4x128xbf16>
    %c1_129 = arith.constant 1 : index
    %c0_130 = arith.constant 0 : index
    %c0_131 = arith.constant 0 : index
    %396 = vector.load %arg5[%c1_129, %c0_130, %c0_131] : memref<2x128x512xbf16, #tpu.memory_space<vmem>>, vector<1x128x512xbf16>
    %397 = vector.shape_cast %396 : vector<1x128x512xbf16> to vector<128x512xbf16>
    %cst_132 = arith.constant dense<0.000000e+00> : vector<4x512xf32>
    %398 = tpu.matmul %395, %397, %cst_132 {dimension_numbers = #tpu.dot_dimension_numbers<[1], [0], [0], [1], [0, 0, 1, 1], [], []>} : vector<4x128xbf16>, vector<128x512xbf16>, vector<4x512xf32> -> vector<4x512xf32>
    %399 = arith.addf %394, %398 : vector<4x512xf32>
    %400 = arith.addf %399, %15 : vector<4x512xf32>
    %401 = vector.extract_strided_slice %400 {offsets = [0, 0], sizes = [4, 384], strides = [1, 1]} : vector<4x512xf32> to vector<4x384xf32>
    %402 = arith.negf %401 : vector<4x384xf32>
    %403 = math.exp %402 : vector<4x384xf32>
    %cst_133 = arith.constant 1.000000e+00 : f32
    %404 = vector.broadcast %cst_133 : f32 to vector<4x384xf32>
    %405 = arith.addf %404, %403 : vector<4x384xf32>
    %406 = arith.divf %404, %405 : vector<4x384xf32>
    %407 = vector.extract_strided_slice %400 {offsets = [0, 384], sizes = [4, 128], strides = [1, 1]} : vector<4x512xf32> to vector<4x128xf32>
    %408 = math.tanh %407 : vector<4x128xf32>
    %409 = vector.extract_strided_slice %406 {offsets = [0, 0], sizes = [4, 128], strides = [1, 1]} : vector<4x384xf32> to vector<4x128xf32>
    %410 = vector.extract_strided_slice %406 {offsets = [0, 128], sizes = [4, 128], strides = [1, 1]} : vector<4x384xf32> to vector<4x128xf32>
    %411 = vector.extract_strided_slice %406 {offsets = [0, 256], sizes = [4, 128], strides = [1, 1]} : vector<4x384xf32> to vector<4x128xf32>
    %412 = arith.mulf %410, %365 : vector<4x128xf32>
    %413 = arith.mulf %409, %408 : vector<4x128xf32>
    %414 = arith.addf %412, %413 : vector<4x128xf32>
    %415 = math.tanh %414 : vector<4x128xf32>
    %416 = arith.mulf %411, %415 : vector<4x128xf32>
    %417 = arith.truncf %416 : vector<4x128xf32> to vector<4x128xbf16>
    %c0_134 = arith.constant 0 : index
    %c0_135 = arith.constant 0 : index
    %c0_136 = arith.constant 0 : index
    %418 = vector.load %arg4[%c0_134, %c0_135, %c0_136] : memref<2x128x512xbf16, #tpu.memory_space<vmem>>, vector<1x128x512xbf16>
    %419 = vector.shape_cast %418 : vector<1x128x512xbf16> to vector<128x512xbf16>
    %cst_137 = arith.constant dense<0.000000e+00> : vector<4x512xf32>
    %420 = tpu.matmul %417, %419, %cst_137 {dimension_numbers = #tpu.dot_dimension_numbers<[1], [0], [0], [1], [0, 0, 1, 1], [], []>} : vector<4x128xbf16>, vector<128x512xbf16>, vector<4x512xf32> -> vector<4x512xf32>
    %421 = arith.truncf %390 : vector<4x128xf32> to vector<4x128xbf16>
    %c0_138 = arith.constant 0 : index
    %c0_139 = arith.constant 0 : index
    %c0_140 = arith.constant 0 : index
    %422 = vector.load %arg5[%c0_138, %c0_139, %c0_140] : memref<2x128x512xbf16, #tpu.memory_space<vmem>>, vector<1x128x512xbf16>
    %423 = vector.shape_cast %422 : vector<1x128x512xbf16> to vector<128x512xbf16>
    %cst_141 = arith.constant dense<0.000000e+00> : vector<4x512xf32>
    %424 = tpu.matmul %421, %423, %cst_141 {dimension_numbers = #tpu.dot_dimension_numbers<[1], [0], [0], [1], [0, 0, 1, 1], [], []>} : vector<4x128xbf16>, vector<128x512xbf16>, vector<4x512xf32> -> vector<4x512xf32>
    %425 = arith.addf %420, %424 : vector<4x512xf32>
    %426 = arith.addf %425, %11 : vector<4x512xf32>
    %427 = vector.extract_strided_slice %426 {offsets = [0, 0], sizes = [4, 384], strides = [1, 1]} : vector<4x512xf32> to vector<4x384xf32>
    %428 = arith.negf %427 : vector<4x384xf32>
    %429 = math.exp %428 : vector<4x384xf32>
    %cst_142 = arith.constant 1.000000e+00 : f32
    %430 = vector.broadcast %cst_142 : f32 to vector<4x384xf32>
    %431 = arith.addf %430, %429 : vector<4x384xf32>
    %432 = arith.divf %430, %431 : vector<4x384xf32>
    %433 = vector.extract_strided_slice %426 {offsets = [0, 384], sizes = [4, 128], strides = [1, 1]} : vector<4x512xf32> to vector<4x128xf32>
    %434 = math.tanh %433 : vector<4x128xf32>
    %435 = vector.extract_strided_slice %432 {offsets = [0, 0], sizes = [4, 128], strides = [1, 1]} : vector<4x384xf32> to vector<4x128xf32>
    %436 = vector.extract_strided_slice %432 {offsets = [0, 128], sizes = [4, 128], strides = [1, 1]} : vector<4x384xf32> to vector<4x128xf32>
    %437 = vector.extract_strided_slice %432 {offsets = [0, 256], sizes = [4, 128], strides = [1, 1]} : vector<4x384xf32> to vector<4x128xf32>
    %438 = arith.mulf %436, %388 : vector<4x128xf32>
    %439 = arith.mulf %435, %434 : vector<4x128xf32>
    %440 = arith.addf %438, %439 : vector<4x128xf32>
    %441 = math.tanh %440 : vector<4x128xf32>
    %442 = arith.mulf %437, %441 : vector<4x128xf32>
    %443 = arith.truncf %442 : vector<4x128xf32> to vector<4x128xbf16>
    %c1_143 = arith.constant 1 : index
    %c0_144 = arith.constant 0 : index
    %c0_145 = arith.constant 0 : index
    %444 = vector.load %arg4[%c1_143, %c0_144, %c0_145] : memref<2x128x512xbf16, #tpu.memory_space<vmem>>, vector<1x128x512xbf16>
    %445 = vector.shape_cast %444 : vector<1x128x512xbf16> to vector<128x512xbf16>
    %cst_146 = arith.constant dense<0.000000e+00> : vector<4x512xf32>
    %446 = tpu.matmul %443, %445, %cst_146 {dimension_numbers = #tpu.dot_dimension_numbers<[1], [0], [0], [1], [0, 0, 1, 1], [], []>} : vector<4x128xbf16>, vector<128x512xbf16>, vector<4x512xf32> -> vector<4x512xf32>
    %447 = arith.truncf %416 : vector<4x128xf32> to vector<4x128xbf16>
    %c1_147 = arith.constant 1 : index
    %c0_148 = arith.constant 0 : index
    %c0_149 = arith.constant 0 : index
    %448 = vector.load %arg5[%c1_147, %c0_148, %c0_149] : memref<2x128x512xbf16, #tpu.memory_space<vmem>>, vector<1x128x512xbf16>
    %449 = vector.shape_cast %448 : vector<1x128x512xbf16> to vector<128x512xbf16>
    %cst_150 = arith.constant dense<0.000000e+00> : vector<4x512xf32>
    %450 = tpu.matmul %447, %449, %cst_150 {dimension_numbers = #tpu.dot_dimension_numbers<[1], [0], [0], [1], [0, 0, 1, 1], [], []>} : vector<4x128xbf16>, vector<128x512xbf16>, vector<4x512xf32> -> vector<4x512xf32>
    %451 = arith.addf %446, %450 : vector<4x512xf32>
    %452 = arith.addf %451, %15 : vector<4x512xf32>
    %453 = vector.extract_strided_slice %452 {offsets = [0, 0], sizes = [4, 384], strides = [1, 1]} : vector<4x512xf32> to vector<4x384xf32>
    %454 = arith.negf %453 : vector<4x384xf32>
    %455 = math.exp %454 : vector<4x384xf32>
    %cst_151 = arith.constant 1.000000e+00 : f32
    %456 = vector.broadcast %cst_151 : f32 to vector<4x384xf32>
    %457 = arith.addf %456, %455 : vector<4x384xf32>
    %458 = arith.divf %456, %457 : vector<4x384xf32>
    %459 = vector.extract_strided_slice %452 {offsets = [0, 384], sizes = [4, 128], strides = [1, 1]} : vector<4x512xf32> to vector<4x128xf32>
    %460 = math.tanh %459 : vector<4x128xf32>
    %461 = vector.extract_strided_slice %458 {offsets = [0, 0], sizes = [4, 128], strides = [1, 1]} : vector<4x384xf32> to vector<4x128xf32>
    %462 = vector.extract_strided_slice %458 {offsets = [0, 128], sizes = [4, 128], strides = [1, 1]} : vector<4x384xf32> to vector<4x128xf32>
    %463 = vector.extract_strided_slice %458 {offsets = [0, 256], sizes = [4, 128], strides = [1, 1]} : vector<4x384xf32> to vector<4x128xf32>
    %464 = arith.mulf %462, %414 : vector<4x128xf32>
    %465 = arith.mulf %461, %460 : vector<4x128xf32>
    %466 = arith.addf %464, %465 : vector<4x128xf32>
    %467 = math.tanh %466 : vector<4x128xf32>
    %468 = arith.mulf %463, %467 : vector<4x128xf32>
    %469 = arith.truncf %468 : vector<4x128xf32> to vector<4x128xbf16>
    %c0_152 = arith.constant 0 : index
    %c0_153 = arith.constant 0 : index
    %c0_154 = arith.constant 0 : index
    %470 = vector.load %arg4[%c0_152, %c0_153, %c0_154] : memref<2x128x512xbf16, #tpu.memory_space<vmem>>, vector<1x128x512xbf16>
    %471 = vector.shape_cast %470 : vector<1x128x512xbf16> to vector<128x512xbf16>
    %cst_155 = arith.constant dense<0.000000e+00> : vector<4x512xf32>
    %472 = tpu.matmul %469, %471, %cst_155 {dimension_numbers = #tpu.dot_dimension_numbers<[1], [0], [0], [1], [0, 0, 1, 1], [], []>} : vector<4x128xbf16>, vector<128x512xbf16>, vector<4x512xf32> -> vector<4x512xf32>
    %473 = arith.truncf %442 : vector<4x128xf32> to vector<4x128xbf16>
    %c0_156 = arith.constant 0 : index
    %c0_157 = arith.constant 0 : index
    %c0_158 = arith.constant 0 : index
    %474 = vector.load %arg5[%c0_156, %c0_157, %c0_158] : memref<2x128x512xbf16, #tpu.memory_space<vmem>>, vector<1x128x512xbf16>
    %475 = vector.shape_cast %474 : vector<1x128x512xbf16> to vector<128x512xbf16>
    %cst_159 = arith.constant dense<0.000000e+00> : vector<4x512xf32>
    %476 = tpu.matmul %473, %475, %cst_159 {dimension_numbers = #tpu.dot_dimension_numbers<[1], [0], [0], [1], [0, 0, 1, 1], [], []>} : vector<4x128xbf16>, vector<128x512xbf16>, vector<4x512xf32> -> vector<4x512xf32>
    %477 = arith.addf %472, %476 : vector<4x512xf32>
    %478 = arith.addf %477, %11 : vector<4x512xf32>
    %479 = vector.extract_strided_slice %478 {offsets = [0, 0], sizes = [4, 384], strides = [1, 1]} : vector<4x512xf32> to vector<4x384xf32>
    %480 = arith.negf %479 : vector<4x384xf32>
    %481 = math.exp %480 : vector<4x384xf32>
    %cst_160 = arith.constant 1.000000e+00 : f32
    %482 = vector.broadcast %cst_160 : f32 to vector<4x384xf32>
    %483 = arith.addf %482, %481 : vector<4x384xf32>
    %484 = arith.divf %482, %483 : vector<4x384xf32>
    %485 = vector.extract_strided_slice %478 {offsets = [0, 384], sizes = [4, 128], strides = [1, 1]} : vector<4x512xf32> to vector<4x128xf32>
    %486 = math.tanh %485 : vector<4x128xf32>
    %487 = vector.extract_strided_slice %484 {offsets = [0, 0], sizes = [4, 128], strides = [1, 1]} : vector<4x384xf32> to vector<4x128xf32>
    %488 = vector.extract_strided_slice %484 {offsets = [0, 128], sizes = [4, 128], strides = [1, 1]} : vector<4x384xf32> to vector<4x128xf32>
    %489 = vector.extract_strided_slice %484 {offsets = [0, 256], sizes = [4, 128], strides = [1, 1]} : vector<4x384xf32> to vector<4x128xf32>
    %490 = arith.mulf %488, %440 : vector<4x128xf32>
    %491 = arith.mulf %487, %486 : vector<4x128xf32>
    %492 = arith.addf %490, %491 : vector<4x128xf32>
    %493 = math.tanh %492 : vector<4x128xf32>
    %494 = arith.mulf %489, %493 : vector<4x128xf32>
    %495 = arith.truncf %494 : vector<4x128xf32> to vector<4x128xbf16>
    %c1_161 = arith.constant 1 : index
    %c0_162 = arith.constant 0 : index
    %c0_163 = arith.constant 0 : index
    %496 = vector.load %arg4[%c1_161, %c0_162, %c0_163] : memref<2x128x512xbf16, #tpu.memory_space<vmem>>, vector<1x128x512xbf16>
    %497 = vector.shape_cast %496 : vector<1x128x512xbf16> to vector<128x512xbf16>
    %cst_164 = arith.constant dense<0.000000e+00> : vector<4x512xf32>
    %498 = tpu.matmul %495, %497, %cst_164 {dimension_numbers = #tpu.dot_dimension_numbers<[1], [0], [0], [1], [0, 0, 1, 1], [], []>} : vector<4x128xbf16>, vector<128x512xbf16>, vector<4x512xf32> -> vector<4x512xf32>
    %499 = arith.truncf %468 : vector<4x128xf32> to vector<4x128xbf16>
    %c1_165 = arith.constant 1 : index
    %c0_166 = arith.constant 0 : index
    %c0_167 = arith.constant 0 : index
    %500 = vector.load %arg5[%c1_165, %c0_166, %c0_167] : memref<2x128x512xbf16, #tpu.memory_space<vmem>>, vector<1x128x512xbf16>
    %501 = vector.shape_cast %500 : vector<1x128x512xbf16> to vector<128x512xbf16>
    %cst_168 = arith.constant dense<0.000000e+00> : vector<4x512xf32>
    %502 = tpu.matmul %499, %501, %cst_168 {dimension_numbers = #tpu.dot_dimension_numbers<[1], [0], [0], [1], [0, 0, 1, 1], [], []>} : vector<4x128xbf16>, vector<128x512xbf16>, vector<4x512xf32> -> vector<4x512xf32>
    %503 = arith.addf %498, %502 : vector<4x512xf32>
    %504 = arith.addf %503, %15 : vector<4x512xf32>
    %505 = vector.extract_strided_slice %504 {offsets = [0, 0], sizes = [4, 384], strides = [1, 1]} : vector<4x512xf32> to vector<4x384xf32>
    %506 = arith.negf %505 : vector<4x384xf32>
    %507 = math.exp %506 : vector<4x384xf32>
    %cst_169 = arith.constant 1.000000e+00 : f32
    %508 = vector.broadcast %cst_169 : f32 to vector<4x384xf32>
    %509 = arith.addf %508, %507 : vector<4x384xf32>
    %510 = arith.divf %508, %509 : vector<4x384xf32>
    %511 = vector.extract_strided_slice %504 {offsets = [0, 384], sizes = [4, 128], strides = [1, 1]} : vector<4x512xf32> to vector<4x128xf32>
    %512 = math.tanh %511 : vector<4x128xf32>
    %513 = vector.extract_strided_slice %510 {offsets = [0, 0], sizes = [4, 128], strides = [1, 1]} : vector<4x384xf32> to vector<4x128xf32>
    %514 = vector.extract_strided_slice %510 {offsets = [0, 128], sizes = [4, 128], strides = [1, 1]} : vector<4x384xf32> to vector<4x128xf32>
    %515 = vector.extract_strided_slice %510 {offsets = [0, 256], sizes = [4, 128], strides = [1, 1]} : vector<4x384xf32> to vector<4x128xf32>
    %516 = arith.mulf %514, %466 : vector<4x128xf32>
    %517 = arith.mulf %513, %512 : vector<4x128xf32>
    %518 = arith.addf %516, %517 : vector<4x128xf32>
    %519 = math.tanh %518 : vector<4x128xf32>
    %520 = arith.mulf %515, %519 : vector<4x128xf32>
    %521 = arith.truncf %520 : vector<4x128xf32> to vector<4x128xbf16>
    %c0_170 = arith.constant 0 : index
    %c0_171 = arith.constant 0 : index
    %c0_172 = arith.constant 0 : index
    %522 = vector.load %arg4[%c0_170, %c0_171, %c0_172] : memref<2x128x512xbf16, #tpu.memory_space<vmem>>, vector<1x128x512xbf16>
    %523 = vector.shape_cast %522 : vector<1x128x512xbf16> to vector<128x512xbf16>
    %cst_173 = arith.constant dense<0.000000e+00> : vector<4x512xf32>
    %524 = tpu.matmul %521, %523, %cst_173 {dimension_numbers = #tpu.dot_dimension_numbers<[1], [0], [0], [1], [0, 0, 1, 1], [], []>} : vector<4x128xbf16>, vector<128x512xbf16>, vector<4x512xf32> -> vector<4x512xf32>
    %525 = arith.truncf %494 : vector<4x128xf32> to vector<4x128xbf16>
    %c0_174 = arith.constant 0 : index
    %c0_175 = arith.constant 0 : index
    %c0_176 = arith.constant 0 : index
    %526 = vector.load %arg5[%c0_174, %c0_175, %c0_176] : memref<2x128x512xbf16, #tpu.memory_space<vmem>>, vector<1x128x512xbf16>
    %527 = vector.shape_cast %526 : vector<1x128x512xbf16> to vector<128x512xbf16>
    %cst_177 = arith.constant dense<0.000000e+00> : vector<4x512xf32>
    %528 = tpu.matmul %525, %527, %cst_177 {dimension_numbers = #tpu.dot_dimension_numbers<[1], [0], [0], [1], [0, 0, 1, 1], [], []>} : vector<4x128xbf16>, vector<128x512xbf16>, vector<4x512xf32> -> vector<4x512xf32>
    %529 = arith.addf %524, %528 : vector<4x512xf32>
    %530 = arith.addf %529, %11 : vector<4x512xf32>
    %531 = vector.extract_strided_slice %530 {offsets = [0, 0], sizes = [4, 384], strides = [1, 1]} : vector<4x512xf32> to vector<4x384xf32>
    %532 = arith.negf %531 : vector<4x384xf32>
    %533 = math.exp %532 : vector<4x384xf32>
    %cst_178 = arith.constant 1.000000e+00 : f32
    %534 = vector.broadcast %cst_178 : f32 to vector<4x384xf32>
    %535 = arith.addf %534, %533 : vector<4x384xf32>
    %536 = arith.divf %534, %535 : vector<4x384xf32>
    %537 = vector.extract_strided_slice %530 {offsets = [0, 384], sizes = [4, 128], strides = [1, 1]} : vector<4x512xf32> to vector<4x128xf32>
    %538 = math.tanh %537 : vector<4x128xf32>
    %539 = vector.extract_strided_slice %536 {offsets = [0, 0], sizes = [4, 128], strides = [1, 1]} : vector<4x384xf32> to vector<4x128xf32>
    %540 = vector.extract_strided_slice %536 {offsets = [0, 128], sizes = [4, 128], strides = [1, 1]} : vector<4x384xf32> to vector<4x128xf32>
    %541 = vector.extract_strided_slice %536 {offsets = [0, 256], sizes = [4, 128], strides = [1, 1]} : vector<4x384xf32> to vector<4x128xf32>
    %542 = arith.mulf %540, %492 : vector<4x128xf32>
    %543 = arith.mulf %539, %538 : vector<4x128xf32>
    %544 = arith.addf %542, %543 : vector<4x128xf32>
    %545 = math.tanh %544 : vector<4x128xf32>
    %546 = arith.mulf %541, %545 : vector<4x128xf32>
    %547 = arith.truncf %546 : vector<4x128xf32> to vector<4x128xbf16>
    %c1_179 = arith.constant 1 : index
    %c0_180 = arith.constant 0 : index
    %c0_181 = arith.constant 0 : index
    %548 = vector.load %arg4[%c1_179, %c0_180, %c0_181] : memref<2x128x512xbf16, #tpu.memory_space<vmem>>, vector<1x128x512xbf16>
    %549 = vector.shape_cast %548 : vector<1x128x512xbf16> to vector<128x512xbf16>
    %cst_182 = arith.constant dense<0.000000e+00> : vector<4x512xf32>
    %550 = tpu.matmul %547, %549, %cst_182 {dimension_numbers = #tpu.dot_dimension_numbers<[1], [0], [0], [1], [0, 0, 1, 1], [], []>} : vector<4x128xbf16>, vector<128x512xbf16>, vector<4x512xf32> -> vector<4x512xf32>
    %551 = arith.truncf %520 : vector<4x128xf32> to vector<4x128xbf16>
    %c1_183 = arith.constant 1 : index
    %c0_184 = arith.constant 0 : index
    %c0_185 = arith.constant 0 : index
    %552 = vector.load %arg5[%c1_183, %c0_184, %c0_185] : memref<2x128x512xbf16, #tpu.memory_space<vmem>>, vector<1x128x512xbf16>
    %553 = vector.shape_cast %552 : vector<1x128x512xbf16> to vector<128x512xbf16>
    %cst_186 = arith.constant dense<0.000000e+00> : vector<4x512xf32>
    %554 = tpu.matmul %551, %553, %cst_186 {dimension_numbers = #tpu.dot_dimension_numbers<[1], [0], [0], [1], [0, 0, 1, 1], [], []>} : vector<4x128xbf16>, vector<128x512xbf16>, vector<4x512xf32> -> vector<4x512xf32>
    %555 = arith.addf %550, %554 : vector<4x512xf32>
    %556 = arith.addf %555, %15 : vector<4x512xf32>
    %557 = vector.extract_strided_slice %556 {offsets = [0, 0], sizes = [4, 384], strides = [1, 1]} : vector<4x512xf32> to vector<4x384xf32>
    %558 = arith.negf %557 : vector<4x384xf32>
    %559 = math.exp %558 : vector<4x384xf32>
    %cst_187 = arith.constant 1.000000e+00 : f32
    %560 = vector.broadcast %cst_187 : f32 to vector<4x384xf32>
    %561 = arith.addf %560, %559 : vector<4x384xf32>
    %562 = arith.divf %560, %561 : vector<4x384xf32>
    %563 = vector.extract_strided_slice %556 {offsets = [0, 384], sizes = [4, 128], strides = [1, 1]} : vector<4x512xf32> to vector<4x128xf32>
    %564 = math.tanh %563 : vector<4x128xf32>
    %565 = vector.extract_strided_slice %562 {offsets = [0, 0], sizes = [4, 128], strides = [1, 1]} : vector<4x384xf32> to vector<4x128xf32>
    %566 = vector.extract_strided_slice %562 {offsets = [0, 128], sizes = [4, 128], strides = [1, 1]} : vector<4x384xf32> to vector<4x128xf32>
    %567 = vector.extract_strided_slice %562 {offsets = [0, 256], sizes = [4, 128], strides = [1, 1]} : vector<4x384xf32> to vector<4x128xf32>
    %568 = arith.mulf %566, %518 : vector<4x128xf32>
    %569 = arith.mulf %565, %564 : vector<4x128xf32>
    %570 = arith.addf %568, %569 : vector<4x128xf32>
    %571 = math.tanh %570 : vector<4x128xf32>
    %572 = arith.mulf %567, %571 : vector<4x128xf32>
    %573 = arith.truncf %572 : vector<4x128xf32> to vector<4x128xbf16>
    %c0_188 = arith.constant 0 : index
    %c0_189 = arith.constant 0 : index
    %c0_190 = arith.constant 0 : index
    %574 = vector.load %arg4[%c0_188, %c0_189, %c0_190] : memref<2x128x512xbf16, #tpu.memory_space<vmem>>, vector<1x128x512xbf16>
    %575 = vector.shape_cast %574 : vector<1x128x512xbf16> to vector<128x512xbf16>
    %cst_191 = arith.constant dense<0.000000e+00> : vector<4x512xf32>
    %576 = tpu.matmul %573, %575, %cst_191 {dimension_numbers = #tpu.dot_dimension_numbers<[1], [0], [0], [1], [0, 0, 1, 1], [], []>} : vector<4x128xbf16>, vector<128x512xbf16>, vector<4x512xf32> -> vector<4x512xf32>
    %577 = arith.truncf %546 : vector<4x128xf32> to vector<4x128xbf16>
    %c0_192 = arith.constant 0 : index
    %c0_193 = arith.constant 0 : index
    %c0_194 = arith.constant 0 : index
    %578 = vector.load %arg5[%c0_192, %c0_193, %c0_194] : memref<2x128x512xbf16, #tpu.memory_space<vmem>>, vector<1x128x512xbf16>
    %579 = vector.shape_cast %578 : vector<1x128x512xbf16> to vector<128x512xbf16>
    %cst_195 = arith.constant dense<0.000000e+00> : vector<4x512xf32>
    %580 = tpu.matmul %577, %579, %cst_195 {dimension_numbers = #tpu.dot_dimension_numbers<[1], [0], [0], [1], [0, 0, 1, 1], [], []>} : vector<4x128xbf16>, vector<128x512xbf16>, vector<4x512xf32> -> vector<4x512xf32>
    %581 = arith.addf %576, %580 : vector<4x512xf32>
    %582 = arith.addf %581, %11 : vector<4x512xf32>
    %583 = vector.extract_strided_slice %582 {offsets = [0, 0], sizes = [4, 384], strides = [1, 1]} : vector<4x512xf32> to vector<4x384xf32>
    %584 = arith.negf %583 : vector<4x384xf32>
    %585 = math.exp %584 : vector<4x384xf32>
    %cst_196 = arith.constant 1.000000e+00 : f32
    %586 = vector.broadcast %cst_196 : f32 to vector<4x384xf32>
    %587 = arith.addf %586, %585 : vector<4x384xf32>
    %588 = arith.divf %586, %587 : vector<4x384xf32>
    %589 = vector.extract_strided_slice %582 {offsets = [0, 384], sizes = [4, 128], strides = [1, 1]} : vector<4x512xf32> to vector<4x128xf32>
    %590 = math.tanh %589 : vector<4x128xf32>
    %591 = vector.extract_strided_slice %588 {offsets = [0, 0], sizes = [4, 128], strides = [1, 1]} : vector<4x384xf32> to vector<4x128xf32>
    %592 = vector.extract_strided_slice %588 {offsets = [0, 128], sizes = [4, 128], strides = [1, 1]} : vector<4x384xf32> to vector<4x128xf32>
    %593 = vector.extract_strided_slice %588 {offsets = [0, 256], sizes = [4, 128], strides = [1, 1]} : vector<4x384xf32> to vector<4x128xf32>
    %594 = arith.mulf %592, %544 : vector<4x128xf32>
    %595 = arith.mulf %591, %590 : vector<4x128xf32>
    %596 = arith.addf %594, %595 : vector<4x128xf32>
    %597 = math.tanh %596 : vector<4x128xf32>
    %598 = arith.mulf %593, %597 : vector<4x128xf32>
    %599 = arith.truncf %598 : vector<4x128xf32> to vector<4x128xbf16>
    %c1_197 = arith.constant 1 : index
    %c0_198 = arith.constant 0 : index
    %c0_199 = arith.constant 0 : index
    %600 = vector.load %arg4[%c1_197, %c0_198, %c0_199] : memref<2x128x512xbf16, #tpu.memory_space<vmem>>, vector<1x128x512xbf16>
    %601 = vector.shape_cast %600 : vector<1x128x512xbf16> to vector<128x512xbf16>
    %cst_200 = arith.constant dense<0.000000e+00> : vector<4x512xf32>
    %602 = tpu.matmul %599, %601, %cst_200 {dimension_numbers = #tpu.dot_dimension_numbers<[1], [0], [0], [1], [0, 0, 1, 1], [], []>} : vector<4x128xbf16>, vector<128x512xbf16>, vector<4x512xf32> -> vector<4x512xf32>
    %603 = arith.truncf %572 : vector<4x128xf32> to vector<4x128xbf16>
    %c1_201 = arith.constant 1 : index
    %c0_202 = arith.constant 0 : index
    %c0_203 = arith.constant 0 : index
    %604 = vector.load %arg5[%c1_201, %c0_202, %c0_203] : memref<2x128x512xbf16, #tpu.memory_space<vmem>>, vector<1x128x512xbf16>
    %605 = vector.shape_cast %604 : vector<1x128x512xbf16> to vector<128x512xbf16>
    %cst_204 = arith.constant dense<0.000000e+00> : vector<4x512xf32>
    %606 = tpu.matmul %603, %605, %cst_204 {dimension_numbers = #tpu.dot_dimension_numbers<[1], [0], [0], [1], [0, 0, 1, 1], [], []>} : vector<4x128xbf16>, vector<128x512xbf16>, vector<4x512xf32> -> vector<4x512xf32>
    %607 = arith.addf %602, %606 : vector<4x512xf32>
    %608 = arith.addf %607, %15 : vector<4x512xf32>
    %609 = vector.extract_strided_slice %608 {offsets = [0, 0], sizes = [4, 384], strides = [1, 1]} : vector<4x512xf32> to vector<4x384xf32>
    %610 = arith.negf %609 : vector<4x384xf32>
    %611 = math.exp %610 : vector<4x384xf32>
    %cst_205 = arith.constant 1.000000e+00 : f32
    %612 = vector.broadcast %cst_205 : f32 to vector<4x384xf32>
    %613 = arith.addf %612, %611 : vector<4x384xf32>
    %614 = arith.divf %612, %613 : vector<4x384xf32>
    %615 = vector.extract_strided_slice %608 {offsets = [0, 384], sizes = [4, 128], strides = [1, 1]} : vector<4x512xf32> to vector<4x128xf32>
    %616 = math.tanh %615 : vector<4x128xf32>
    %617 = vector.extract_strided_slice %614 {offsets = [0, 0], sizes = [4, 128], strides = [1, 1]} : vector<4x384xf32> to vector<4x128xf32>
    %618 = vector.extract_strided_slice %614 {offsets = [0, 128], sizes = [4, 128], strides = [1, 1]} : vector<4x384xf32> to vector<4x128xf32>
    %619 = vector.extract_strided_slice %614 {offsets = [0, 256], sizes = [4, 128], strides = [1, 1]} : vector<4x384xf32> to vector<4x128xf32>
    %620 = arith.mulf %618, %570 : vector<4x128xf32>
    %621 = arith.mulf %617, %616 : vector<4x128xf32>
    %622 = arith.addf %620, %621 : vector<4x128xf32>
    %623 = math.tanh %622 : vector<4x128xf32>
    %624 = arith.mulf %619, %623 : vector<4x128xf32>
    %625 = arith.truncf %624 : vector<4x128xf32> to vector<4x128xbf16>
    %c0_206 = arith.constant 0 : index
    %c0_207 = arith.constant 0 : index
    %c0_208 = arith.constant 0 : index
    %626 = vector.load %arg4[%c0_206, %c0_207, %c0_208] : memref<2x128x512xbf16, #tpu.memory_space<vmem>>, vector<1x128x512xbf16>
    %627 = vector.shape_cast %626 : vector<1x128x512xbf16> to vector<128x512xbf16>
    %cst_209 = arith.constant dense<0.000000e+00> : vector<4x512xf32>
    %628 = tpu.matmul %625, %627, %cst_209 {dimension_numbers = #tpu.dot_dimension_numbers<[1], [0], [0], [1], [0, 0, 1, 1], [], []>} : vector<4x128xbf16>, vector<128x512xbf16>, vector<4x512xf32> -> vector<4x512xf32>
    %629 = arith.truncf %598 : vector<4x128xf32> to vector<4x128xbf16>
    %c0_210 = arith.constant 0 : index
    %c0_211 = arith.constant 0 : index
    %c0_212 = arith.constant 0 : index
    %630 = vector.load %arg5[%c0_210, %c0_211, %c0_212] : memref<2x128x512xbf16, #tpu.memory_space<vmem>>, vector<1x128x512xbf16>
    %631 = vector.shape_cast %630 : vector<1x128x512xbf16> to vector<128x512xbf16>
    %cst_213 = arith.constant dense<0.000000e+00> : vector<4x512xf32>
    %632 = tpu.matmul %629, %631, %cst_213 {dimension_numbers = #tpu.dot_dimension_numbers<[1], [0], [0], [1], [0, 0, 1, 1], [], []>} : vector<4x128xbf16>, vector<128x512xbf16>, vector<4x512xf32> -> vector<4x512xf32>
    %633 = arith.addf %628, %632 : vector<4x512xf32>
    %634 = arith.addf %633, %11 : vector<4x512xf32>
    %635 = vector.extract_strided_slice %634 {offsets = [0, 0], sizes = [4, 384], strides = [1, 1]} : vector<4x512xf32> to vector<4x384xf32>
    %636 = arith.negf %635 : vector<4x384xf32>
    %637 = math.exp %636 : vector<4x384xf32>
    %cst_214 = arith.constant 1.000000e+00 : f32
    %638 = vector.broadcast %cst_214 : f32 to vector<4x384xf32>
    %639 = arith.addf %638, %637 : vector<4x384xf32>
    %640 = arith.divf %638, %639 : vector<4x384xf32>
    %641 = vector.extract_strided_slice %634 {offsets = [0, 384], sizes = [4, 128], strides = [1, 1]} : vector<4x512xf32> to vector<4x128xf32>
    %642 = math.tanh %641 : vector<4x128xf32>
    %643 = vector.extract_strided_slice %640 {offsets = [0, 0], sizes = [4, 128], strides = [1, 1]} : vector<4x384xf32> to vector<4x128xf32>
    %644 = vector.extract_strided_slice %640 {offsets = [0, 128], sizes = [4, 128], strides = [1, 1]} : vector<4x384xf32> to vector<4x128xf32>
    %645 = vector.extract_strided_slice %640 {offsets = [0, 256], sizes = [4, 128], strides = [1, 1]} : vector<4x384xf32> to vector<4x128xf32>
    %646 = arith.mulf %644, %596 : vector<4x128xf32>
    %647 = arith.mulf %643, %642 : vector<4x128xf32>
    %648 = arith.addf %646, %647 : vector<4x128xf32>
    %649 = math.tanh %648 : vector<4x128xf32>
    %650 = arith.mulf %645, %649 : vector<4x128xf32>
    %651 = arith.truncf %650 : vector<4x128xf32> to vector<4x128xbf16>
    %c1_215 = arith.constant 1 : index
    %c0_216 = arith.constant 0 : index
    %c0_217 = arith.constant 0 : index
    %652 = vector.load %arg4[%c1_215, %c0_216, %c0_217] : memref<2x128x512xbf16, #tpu.memory_space<vmem>>, vector<1x128x512xbf16>
    %653 = vector.shape_cast %652 : vector<1x128x512xbf16> to vector<128x512xbf16>
    %cst_218 = arith.constant dense<0.000000e+00> : vector<4x512xf32>
    %654 = tpu.matmul %651, %653, %cst_218 {dimension_numbers = #tpu.dot_dimension_numbers<[1], [0], [0], [1], [0, 0, 1, 1], [], []>} : vector<4x128xbf16>, vector<128x512xbf16>, vector<4x512xf32> -> vector<4x512xf32>
    %655 = arith.truncf %624 : vector<4x128xf32> to vector<4x128xbf16>
    %c1_219 = arith.constant 1 : index
    %c0_220 = arith.constant 0 : index
    %c0_221 = arith.constant 0 : index
    %656 = vector.load %arg5[%c1_219, %c0_220, %c0_221] : memref<2x128x512xbf16, #tpu.memory_space<vmem>>, vector<1x128x512xbf16>
    %657 = vector.shape_cast %656 : vector<1x128x512xbf16> to vector<128x512xbf16>
    %cst_222 = arith.constant dense<0.000000e+00> : vector<4x512xf32>
    %658 = tpu.matmul %655, %657, %cst_222 {dimension_numbers = #tpu.dot_dimension_numbers<[1], [0], [0], [1], [0, 0, 1, 1], [], []>} : vector<4x128xbf16>, vector<128x512xbf16>, vector<4x512xf32> -> vector<4x512xf32>
    %659 = arith.addf %654, %658 : vector<4x512xf32>
    %660 = arith.addf %659, %15 : vector<4x512xf32>
    %661 = vector.extract_strided_slice %660 {offsets = [0, 0], sizes = [4, 384], strides = [1, 1]} : vector<4x512xf32> to vector<4x384xf32>
    %662 = arith.negf %661 : vector<4x384xf32>
    %663 = math.exp %662 : vector<4x384xf32>
    %cst_223 = arith.constant 1.000000e+00 : f32
    %664 = vector.broadcast %cst_223 : f32 to vector<4x384xf32>
    %665 = arith.addf %664, %663 : vector<4x384xf32>
    %666 = arith.divf %664, %665 : vector<4x384xf32>
    %667 = vector.extract_strided_slice %660 {offsets = [0, 384], sizes = [4, 128], strides = [1, 1]} : vector<4x512xf32> to vector<4x128xf32>
    %668 = math.tanh %667 : vector<4x128xf32>
    %669 = vector.extract_strided_slice %666 {offsets = [0, 0], sizes = [4, 128], strides = [1, 1]} : vector<4x384xf32> to vector<4x128xf32>
    %670 = vector.extract_strided_slice %666 {offsets = [0, 128], sizes = [4, 128], strides = [1, 1]} : vector<4x384xf32> to vector<4x128xf32>
    %671 = vector.extract_strided_slice %666 {offsets = [0, 256], sizes = [4, 128], strides = [1, 1]} : vector<4x384xf32> to vector<4x128xf32>
    %672 = arith.mulf %670, %622 : vector<4x128xf32>
    %673 = arith.mulf %669, %668 : vector<4x128xf32>
    %674 = arith.addf %672, %673 : vector<4x128xf32>
    %675 = math.tanh %674 : vector<4x128xf32>
    %676 = arith.mulf %671, %675 : vector<4x128xf32>
    %677 = arith.truncf %676 : vector<4x128xf32> to vector<4x128xbf16>
    %c0_224 = arith.constant 0 : index
    %c0_225 = arith.constant 0 : index
    %c0_226 = arith.constant 0 : index
    %678 = vector.load %arg4[%c0_224, %c0_225, %c0_226] : memref<2x128x512xbf16, #tpu.memory_space<vmem>>, vector<1x128x512xbf16>
    %679 = vector.shape_cast %678 : vector<1x128x512xbf16> to vector<128x512xbf16>
    %cst_227 = arith.constant dense<0.000000e+00> : vector<4x512xf32>
    %680 = tpu.matmul %677, %679, %cst_227 {dimension_numbers = #tpu.dot_dimension_numbers<[1], [0], [0], [1], [0, 0, 1, 1], [], []>} : vector<4x128xbf16>, vector<128x512xbf16>, vector<4x512xf32> -> vector<4x512xf32>
    %681 = arith.truncf %650 : vector<4x128xf32> to vector<4x128xbf16>
    %c0_228 = arith.constant 0 : index
    %c0_229 = arith.constant 0 : index
    %c0_230 = arith.constant 0 : index
    %682 = vector.load %arg5[%c0_228, %c0_229, %c0_230] : memref<2x128x512xbf16, #tpu.memory_space<vmem>>, vector<1x128x512xbf16>
    %683 = vector.shape_cast %682 : vector<1x128x512xbf16> to vector<128x512xbf16>
    %cst_231 = arith.constant dense<0.000000e+00> : vector<4x512xf32>
    %684 = tpu.matmul %681, %683, %cst_231 {dimension_numbers = #tpu.dot_dimension_numbers<[1], [0], [0], [1], [0, 0, 1, 1], [], []>} : vector<4x128xbf16>, vector<128x512xbf16>, vector<4x512xf32> -> vector<4x512xf32>
    %685 = arith.addf %680, %684 : vector<4x512xf32>
    %686 = arith.addf %685, %11 : vector<4x512xf32>
    %687 = vector.extract_strided_slice %686 {offsets = [0, 0], sizes = [4, 384], strides = [1, 1]} : vector<4x512xf32> to vector<4x384xf32>
    %688 = arith.negf %687 : vector<4x384xf32>
    %689 = math.exp %688 : vector<4x384xf32>
    %cst_232 = arith.constant 1.000000e+00 : f32
    %690 = vector.broadcast %cst_232 : f32 to vector<4x384xf32>
    %691 = arith.addf %690, %689 : vector<4x384xf32>
    %692 = arith.divf %690, %691 : vector<4x384xf32>
    %693 = vector.extract_strided_slice %686 {offsets = [0, 384], sizes = [4, 128], strides = [1, 1]} : vector<4x512xf32> to vector<4x128xf32>
    %694 = math.tanh %693 : vector<4x128xf32>
    %695 = vector.extract_strided_slice %692 {offsets = [0, 0], sizes = [4, 128], strides = [1, 1]} : vector<4x384xf32> to vector<4x128xf32>
    %696 = vector.extract_strided_slice %692 {offsets = [0, 128], sizes = [4, 128], strides = [1, 1]} : vector<4x384xf32> to vector<4x128xf32>
    %697 = vector.extract_strided_slice %692 {offsets = [0, 256], sizes = [4, 128], strides = [1, 1]} : vector<4x384xf32> to vector<4x128xf32>
    %698 = arith.mulf %696, %648 : vector<4x128xf32>
    %699 = arith.mulf %695, %694 : vector<4x128xf32>
    %700 = arith.addf %698, %699 : vector<4x128xf32>
    %701 = math.tanh %700 : vector<4x128xf32>
    %702 = arith.mulf %697, %701 : vector<4x128xf32>
    %703 = arith.truncf %702 : vector<4x128xf32> to vector<4x128xbf16>
    %c1_233 = arith.constant 1 : index
    %c0_234 = arith.constant 0 : index
    %c0_235 = arith.constant 0 : index
    %704 = vector.load %arg4[%c1_233, %c0_234, %c0_235] : memref<2x128x512xbf16, #tpu.memory_space<vmem>>, vector<1x128x512xbf16>
    %705 = vector.shape_cast %704 : vector<1x128x512xbf16> to vector<128x512xbf16>
    %cst_236 = arith.constant dense<0.000000e+00> : vector<4x512xf32>
    %706 = tpu.matmul %703, %705, %cst_236 {dimension_numbers = #tpu.dot_dimension_numbers<[1], [0], [0], [1], [0, 0, 1, 1], [], []>} : vector<4x128xbf16>, vector<128x512xbf16>, vector<4x512xf32> -> vector<4x512xf32>
    %707 = arith.truncf %676 : vector<4x128xf32> to vector<4x128xbf16>
    %c1_237 = arith.constant 1 : index
    %c0_238 = arith.constant 0 : index
    %c0_239 = arith.constant 0 : index
    %708 = vector.load %arg5[%c1_237, %c0_238, %c0_239] : memref<2x128x512xbf16, #tpu.memory_space<vmem>>, vector<1x128x512xbf16>
    %709 = vector.shape_cast %708 : vector<1x128x512xbf16> to vector<128x512xbf16>
    %cst_240 = arith.constant dense<0.000000e+00> : vector<4x512xf32>
    %710 = tpu.matmul %707, %709, %cst_240 {dimension_numbers = #tpu.dot_dimension_numbers<[1], [0], [0], [1], [0, 0, 1, 1], [], []>} : vector<4x128xbf16>, vector<128x512xbf16>, vector<4x512xf32> -> vector<4x512xf32>
    %711 = arith.addf %706, %710 : vector<4x512xf32>
    %712 = arith.addf %711, %15 : vector<4x512xf32>
    %713 = vector.extract_strided_slice %712 {offsets = [0, 0], sizes = [4, 384], strides = [1, 1]} : vector<4x512xf32> to vector<4x384xf32>
    %714 = arith.negf %713 : vector<4x384xf32>
    %715 = math.exp %714 : vector<4x384xf32>
    %cst_241 = arith.constant 1.000000e+00 : f32
    %716 = vector.broadcast %cst_241 : f32 to vector<4x384xf32>
    %717 = arith.addf %716, %715 : vector<4x384xf32>
    %718 = arith.divf %716, %717 : vector<4x384xf32>
    %719 = vector.extract_strided_slice %712 {offsets = [0, 384], sizes = [4, 128], strides = [1, 1]} : vector<4x512xf32> to vector<4x128xf32>
    %720 = math.tanh %719 : vector<4x128xf32>
    %721 = vector.extract_strided_slice %718 {offsets = [0, 0], sizes = [4, 128], strides = [1, 1]} : vector<4x384xf32> to vector<4x128xf32>
    %722 = vector.extract_strided_slice %718 {offsets = [0, 128], sizes = [4, 128], strides = [1, 1]} : vector<4x384xf32> to vector<4x128xf32>
    %723 = vector.extract_strided_slice %718 {offsets = [0, 256], sizes = [4, 128], strides = [1, 1]} : vector<4x384xf32> to vector<4x128xf32>
    %724 = arith.mulf %722, %674 : vector<4x128xf32>
    %725 = arith.mulf %721, %720 : vector<4x128xf32>
    %726 = arith.addf %724, %725 : vector<4x128xf32>
    %727 = math.tanh %726 : vector<4x128xf32>
    %728 = arith.mulf %723, %727 : vector<4x128xf32>
    %729 = arith.truncf %728 : vector<4x128xf32> to vector<4x128xbf16>
    %c0_242 = arith.constant 0 : index
    %c0_243 = arith.constant 0 : index
    %c0_244 = arith.constant 0 : index
    %730 = vector.load %arg4[%c0_242, %c0_243, %c0_244] : memref<2x128x512xbf16, #tpu.memory_space<vmem>>, vector<1x128x512xbf16>
    %731 = vector.shape_cast %730 : vector<1x128x512xbf16> to vector<128x512xbf16>
    %cst_245 = arith.constant dense<0.000000e+00> : vector<4x512xf32>
    %732 = tpu.matmul %729, %731, %cst_245 {dimension_numbers = #tpu.dot_dimension_numbers<[1], [0], [0], [1], [0, 0, 1, 1], [], []>} : vector<4x128xbf16>, vector<128x512xbf16>, vector<4x512xf32> -> vector<4x512xf32>
    %733 = arith.truncf %702 : vector<4x128xf32> to vector<4x128xbf16>
    %c0_246 = arith.constant 0 : index
    %c0_247 = arith.constant 0 : index
    %c0_248 = arith.constant 0 : index
    %734 = vector.load %arg5[%c0_246, %c0_247, %c0_248] : memref<2x128x512xbf16, #tpu.memory_space<vmem>>, vector<1x128x512xbf16>
    %735 = vector.shape_cast %734 : vector<1x128x512xbf16> to vector<128x512xbf16>
    %cst_249 = arith.constant dense<0.000000e+00> : vector<4x512xf32>
    %736 = tpu.matmul %733, %735, %cst_249 {dimension_numbers = #tpu.dot_dimension_numbers<[1], [0], [0], [1], [0, 0, 1, 1], [], []>} : vector<4x128xbf16>, vector<128x512xbf16>, vector<4x512xf32> -> vector<4x512xf32>
    %737 = arith.addf %732, %736 : vector<4x512xf32>
    %738 = arith.addf %737, %11 : vector<4x512xf32>
    %739 = vector.extract_strided_slice %738 {offsets = [0, 0], sizes = [4, 384], strides = [1, 1]} : vector<4x512xf32> to vector<4x384xf32>
    %740 = arith.negf %739 : vector<4x384xf32>
    %741 = math.exp %740 : vector<4x384xf32>
    %cst_250 = arith.constant 1.000000e+00 : f32
    %742 = vector.broadcast %cst_250 : f32 to vector<4x384xf32>
    %743 = arith.addf %742, %741 : vector<4x384xf32>
    %744 = arith.divf %742, %743 : vector<4x384xf32>
    %745 = vector.extract_strided_slice %738 {offsets = [0, 384], sizes = [4, 128], strides = [1, 1]} : vector<4x512xf32> to vector<4x128xf32>
    %746 = math.tanh %745 : vector<4x128xf32>
    %747 = vector.extract_strided_slice %744 {offsets = [0, 0], sizes = [4, 128], strides = [1, 1]} : vector<4x384xf32> to vector<4x128xf32>
    %748 = vector.extract_strided_slice %744 {offsets = [0, 128], sizes = [4, 128], strides = [1, 1]} : vector<4x384xf32> to vector<4x128xf32>
    %749 = vector.extract_strided_slice %744 {offsets = [0, 256], sizes = [4, 128], strides = [1, 1]} : vector<4x384xf32> to vector<4x128xf32>
    %750 = arith.mulf %748, %700 : vector<4x128xf32>
    %751 = arith.mulf %747, %746 : vector<4x128xf32>
    %752 = arith.addf %750, %751 : vector<4x128xf32>
    %753 = math.tanh %752 : vector<4x128xf32>
    %754 = arith.mulf %749, %753 : vector<4x128xf32>
    %755 = arith.truncf %754 : vector<4x128xf32> to vector<4x128xbf16>
    %c1_251 = arith.constant 1 : index
    %c0_252 = arith.constant 0 : index
    %c0_253 = arith.constant 0 : index
    %756 = vector.load %arg4[%c1_251, %c0_252, %c0_253] : memref<2x128x512xbf16, #tpu.memory_space<vmem>>, vector<1x128x512xbf16>
    %757 = vector.shape_cast %756 : vector<1x128x512xbf16> to vector<128x512xbf16>
    %cst_254 = arith.constant dense<0.000000e+00> : vector<4x512xf32>
    %758 = tpu.matmul %755, %757, %cst_254 {dimension_numbers = #tpu.dot_dimension_numbers<[1], [0], [0], [1], [0, 0, 1, 1], [], []>} : vector<4x128xbf16>, vector<128x512xbf16>, vector<4x512xf32> -> vector<4x512xf32>
    %759 = arith.truncf %728 : vector<4x128xf32> to vector<4x128xbf16>
    %c1_255 = arith.constant 1 : index
    %c0_256 = arith.constant 0 : index
    %c0_257 = arith.constant 0 : index
    %760 = vector.load %arg5[%c1_255, %c0_256, %c0_257] : memref<2x128x512xbf16, #tpu.memory_space<vmem>>, vector<1x128x512xbf16>
    %761 = vector.shape_cast %760 : vector<1x128x512xbf16> to vector<128x512xbf16>
    %cst_258 = arith.constant dense<0.000000e+00> : vector<4x512xf32>
    %762 = tpu.matmul %759, %761, %cst_258 {dimension_numbers = #tpu.dot_dimension_numbers<[1], [0], [0], [1], [0, 0, 1, 1], [], []>} : vector<4x128xbf16>, vector<128x512xbf16>, vector<4x512xf32> -> vector<4x512xf32>
    %763 = arith.addf %758, %762 : vector<4x512xf32>
    %764 = arith.addf %763, %15 : vector<4x512xf32>
    %765 = vector.extract_strided_slice %764 {offsets = [0, 0], sizes = [4, 384], strides = [1, 1]} : vector<4x512xf32> to vector<4x384xf32>
    %766 = arith.negf %765 : vector<4x384xf32>
    %767 = math.exp %766 : vector<4x384xf32>
    %cst_259 = arith.constant 1.000000e+00 : f32
    %768 = vector.broadcast %cst_259 : f32 to vector<4x384xf32>
    %769 = arith.addf %768, %767 : vector<4x384xf32>
    %770 = arith.divf %768, %769 : vector<4x384xf32>
    %771 = vector.extract_strided_slice %764 {offsets = [0, 384], sizes = [4, 128], strides = [1, 1]} : vector<4x512xf32> to vector<4x128xf32>
    %772 = math.tanh %771 : vector<4x128xf32>
    %773 = vector.extract_strided_slice %770 {offsets = [0, 0], sizes = [4, 128], strides = [1, 1]} : vector<4x384xf32> to vector<4x128xf32>
    %774 = vector.extract_strided_slice %770 {offsets = [0, 128], sizes = [4, 128], strides = [1, 1]} : vector<4x384xf32> to vector<4x128xf32>
    %775 = vector.extract_strided_slice %770 {offsets = [0, 256], sizes = [4, 128], strides = [1, 1]} : vector<4x384xf32> to vector<4x128xf32>
    %776 = arith.mulf %774, %726 : vector<4x128xf32>
    %777 = arith.mulf %773, %772 : vector<4x128xf32>
    %778 = arith.addf %776, %777 : vector<4x128xf32>
    %779 = math.tanh %778 : vector<4x128xf32>
    %780 = arith.mulf %775, %779 : vector<4x128xf32>
    %781 = tpu.concatenate %416, %468, %520, %572, %624, %676, %728, %780 in 0 : vector<4x128xf32>, vector<4x128xf32>, vector<4x128xf32>, vector<4x128xf32>, vector<4x128xf32>, vector<4x128xf32>, vector<4x128xf32>, vector<4x128xf32> -> vector<32x128xf32>
    %c0_260 = arith.constant 0 : index
    %c0_261 = arith.constant 0 : index
    %782 = vector.load %arg11[%c0_260, %c0_261] : memref<32x128xf32, #tpu.memory_space<vmem>>, vector<32x128xf32>
    tpu.vector_store %arg11[%c0_260, %c0_261], %781 {strides = array<i32>} : memref<32x128xf32, #tpu.memory_space<vmem>>, vector<32x128xf32>,
    %783 = vector.extract_strided_slice %416 {offsets = [0, 0], sizes = [2, 128], strides = [1, 1]} : vector<4x128xf32> to vector<2x128xf32>
    %784 = vector.extract_strided_slice %468 {offsets = [0, 0], sizes = [2, 128], strides = [1, 1]} : vector<4x128xf32> to vector<2x128xf32>
    %785 = vector.extract_strided_slice %520 {offsets = [0, 0], sizes = [2, 128], strides = [1, 1]} : vector<4x128xf32> to vector<2x128xf32>
    %786 = vector.extract_strided_slice %572 {offsets = [0, 0], sizes = [2, 128], strides = [1, 1]} : vector<4x128xf32> to vector<2x128xf32>
    %787 = tpu.concatenate %783, %784, %785, %786 in 0 : vector<2x128xf32>, vector<2x128xf32>, vector<2x128xf32>, vector<2x128xf32> -> vector<8x128xf32>
    %788 = arith.truncf %787 : vector<8x128xf32> to vector<8x128xbf16>
    %789 = vector.extract_strided_slice %572 {offsets = [2, 0], sizes = [2, 128], strides = [1, 1]} : vector<4x128xf32> to vector<2x128xf32>
    %790 = vector.extract_strided_slice %520 {offsets = [2, 0], sizes = [2, 128], strides = [1, 1]} : vector<4x128xf32> to vector<2x128xf32>
    %791 = vector.extract_strided_slice %468 {offsets = [2, 0], sizes = [2, 128], strides = [1, 1]} : vector<4x128xf32> to vector<2x128xf32>
    %792 = vector.extract_strided_slice %416 {offsets = [2, 0], sizes = [2, 128], strides = [1, 1]} : vector<4x128xf32> to vector<2x128xf32>
    %793 = tpu.concatenate %789, %790, %791, %792 in 0 : vector<2x128xf32>, vector<2x128xf32>, vector<2x128xf32>, vector<2x128xf32> -> vector<8x128xf32>
    %794 = arith.truncf %793 : vector<8x128xf32> to vector<8x128xbf16>
    %c0_262 = arith.constant 0 : index
    %c0_263 = arith.constant 0 : index
    %795 = vector.load %arg10[%c0_262, %c0_263] : memref<1x128xf32, #tpu.memory_space<vmem>>, vector<1x128xf32>
    %796 = vector.shape_cast %795 : vector<1x128xf32> to vector<1x128xf32>
    %797 = vector.broadcast %796 : vector<1x128xf32> to vector<8x128xf32>
    %c0_264 = arith.constant 0 : index
    %c0_265 = arith.constant 0 : index
    %798 = vector.load %arg8[%c0_264, %c0_265] : memref<128x128xbf16, #tpu.memory_space<vmem>>, vector<128x128xbf16>
    %cst_266 = arith.constant dense<0.000000e+00> : vector<8x128xf32>
    %799 = tpu.matmul %788, %798, %cst_266 {dimension_numbers = #tpu.dot_dimension_numbers<[1], [0], [0], [1], [0, 0, 1, 1], [], []>} : vector<8x128xbf16>, vector<128x128xbf16>, vector<8x128xf32> -> vector<8x128xf32>
    %c0_267 = arith.constant 0 : index
    %c0_268 = arith.constant 0 : index
    %800 = vector.load %arg9[%c0_267, %c0_268] : memref<128x128xbf16, #tpu.memory_space<vmem>>, vector<128x128xbf16>
    %cst_269 = arith.constant dense<0.000000e+00> : vector<8x128xf32>
    %801 = tpu.matmul %794, %800, %cst_269 {dimension_numbers = #tpu.dot_dimension_numbers<[1], [0], [0], [1], [0, 0, 1, 1], [], []>} : vector<8x128xbf16>, vector<128x128xbf16>, vector<8x128xf32> -> vector<8x128xf32>
    %802 = arith.addf %799, %801 : vector<8x128xf32>
    %803 = arith.addf %802, %797 : vector<8x128xf32>
    %cst_270 = arith.constant 0.000000e+00 : f32
    %804 = vector.broadcast %cst_270 : f32 to vector<8x128xf32>
    %805 = arith.cmpf ogt, %803, %804 : vector<8x128xf32>
    %cst_271 = arith.constant 2.000000e-01 : f32
    %806 = vector.broadcast %cst_271 : f32 to vector<8x128xf32>
    %807 = arith.mulf %806, %803 : vector<8x128xf32>
    %808 = arith.select %805, %803, %807 : vector<8x128xi1>, vector<8x128xf32>
    %c0_272 = arith.constant 0 : index
    %c0_273 = arith.constant 0 : index
    %809 = vector.load %arg12[%c0_272, %c0_273] : memref<8x128xf32, #tpu.memory_space<vmem>>, vector<8x128xf32>
    tpu.vector_store %arg12[%c0_272, %c0_273], %808 {strides = array<i32>} : memref<8x128xf32, #tpu.memory_space<vmem>>, vector<8x128xf32>,
    return
  }
}

</mosaic_0001>

<llo_original>
// kernel: squeeze.31
$region0: #{squeeze.31}
  %s0 = inlined_call_operand.vmem [shape: f32[1,2,128], index: 0, kind: input, shape index: {}]
  %s1 = inlined_call_operand.vmem [shape: f32[2,32,4,1], index: 1, kind: output, shape index: {}]
  $region1: #{squeeze.31} parent=0
    #allocation0 [shape = 'u8[4096]{0}', space=vmem, size = 0x1000, scoped, tag = 'scoped mem for input reshape']
    %s3 = ssub.s32 4, 1
    %v4 = vld [vmem:[%s0] sm:%s3]
    %5 = vst [vmem:[#allocation0] sm:%s3] %v4
    %v6 = vld [vmem:[#allocation0] sm:$0x3]
    %vm7 = vcmask 31744
    %8 = vst.msk [vmem:[%s1] sm:$0x1] %vm7, %v6
    %s9 = scalar_lea.vmem %s1, 31
    %10 = vst.msk [vmem:[%s9] sm:$0x2] %vm7, %v6
    %v11 = vld [vmem:[#allocation0] sm:$0x3]
    %12 = vrot.lane.b32.xlu0 %v11, 124
    %v13 = vpop.permute.xlu0 %12
    %vm14 = vcmask 31744
    %s15 = scalar_lea.vmem %s1, 1
    %16 = vst.msk [vmem:[%s15] sm:$0x1] %vm14, %v13
    %s17 = scalar_lea.vmem %s1, 32
    %18 = vst.msk [vmem:[%s17] sm:$0x2] %vm14, %v13
    %v19 = vld [vmem:[#allocation0] sm:$0x3]
    %20 = vrot.lane.b32.xlu0 %v19, 120
    %v21 = vpop.permute.xlu0 %20
    %vm22 = vcmask 31744
    %s23 = scalar_lea.vmem %s1, 2
    %24 = vst.msk [vmem:[%s23] sm:$0x1] %vm22, %v21
    %s25 = scalar_lea.vmem %s1, 33
    %26 = vst.msk [vmem:[%s25] sm:$0x2] %vm22, %v21
    %v27 = vld [vmem:[#allocation0] sm:$0x3]
    %28 = vrot.lane.b32.xlu0 %v27, 116
    %v29 = vpop.permute.xlu0 %28
    %vm30 = vcmask 31744
    %s31 = scalar_lea.vmem %s1, 3
    %32 = vst.msk [vmem:[%s31] sm:$0x1] %vm30, %v29
    %s33 = scalar_lea.vmem %s1, 34
    %34 = vst.msk [vmem:[%s33] sm:$0x2] %vm30, %v29
    %v35 = vld [vmem:[#allocation0] sm:$0x3]
    %36 = vrot.lane.b32.xlu0 %v35, 112
    %v37 = vpop.permute.xlu0 %36
    %vm38 = vcmask 31744
    %s39 = scalar_lea.vmem %s1, 4
    %40 = vst.msk [vmem:[%s39] sm:$0x1] %vm38, %v37
    %s41 = scalar_lea.vmem %s1, 35
    %42 = vst.msk [vmem:[%s41] sm:$0x2] %vm38, %v37
    %v43 = vld [vmem:[#allocation0] sm:$0x3]
    %44 = vrot.lane.b32.xlu0 %v43, 108
    %v45 = vpop.permute.xlu0 %44
    %vm46 = vcmask 31744
    %s47 = scalar_lea.vmem %s1, 5
    %48 = vst.msk [vmem:[%s47] sm:$0x1] %vm46, %v45
    %s49 = scalar_lea.vmem %s1, 36
    %50 = vst.msk [vmem:[%s49] sm:$0x2] %vm46, %v45
    %v51 = vld [vmem:[#allocation0] sm:$0x3]
    %52 = vrot.lane.b32.xlu0 %v51, 104
    %v53 = vpop.permute.xlu0 %52
    %vm54 = vcmask 31744
    %s55 = scalar_lea.vmem %s1, 6
    %56 = vst.msk [vmem:[%s55] sm:$0x1] %vm54, %v53
    %s57 = scalar_lea.vmem %s1, 37
    %58 = vst.msk [vmem:[%s57] sm:$0x2] %vm54, %v53
    %v59 = vld [vmem:[#allocation0] sm:$0x3]
    %60 = vrot.lane.b32.xlu0 %v59, 100
    %v61 = vpop.permute.xlu0 %60
    %vm62 = vcmask 31744
    %s63 = scalar_lea.vmem %s1, 7
    %64 = vst.msk [vmem:[%s63] sm:$0x1] %vm62, %v61
    %s65 = scalar_lea.vmem %s1, 38
    %66 = vst.msk [vmem:[%s65] sm:$0x2] %vm62, %v61
    %v67 = vld [vmem:[#allocation0] sm:$0x3]
    %68 = vrot.lane.b32.xlu0 %v67, 96
    %v69 = vpop.permute.xlu0 %68
    %vm70 = vcmask 31744
    %s71 = scalar_lea.vmem %s1, 8
    %72 = vst.msk [vmem:[%s71] sm:$0x1] %vm70, %v69
    %s73 = scalar_lea.vmem %s1, 39
    %74 = vst.msk [vmem:[%s73] sm:$0x2] %vm70, %v69
    %v75 = vld [vmem:[#allocation0] sm:$0x3]
    %76 = vrot.lane.b32.xlu0 %v75, 92
    %v77 = vpop.permute.xlu0 %76
    %vm78 = vcmask 31744
    %s79 = scalar_lea.vmem %s1, 9
    %80 = vst.msk [vmem:[%s79] sm:$0x1] %vm78, %v77
    %s81 = scalar_lea.vmem %s1, 40
    %82 = vst.msk [vmem:[%s81] sm:$0x2] %vm78, %v77
    %v83 = vld [vmem:[#allocation0] sm:$0x3]
    %84 = vrot.lane.b32.xlu0 %v83, 88
    %v85 = vpop.permute.xlu0 %84
    %vm86 = vcmask 31744
    %s87 = scalar_lea.vmem %s1, 10
    %88 = vst.msk [vmem:[%s87] sm:$0x1] %vm86, %v85
    %s89 = scalar_lea.vmem %s1, 41
    %90 = vst.msk [vmem:[%s89] sm:$0x2] %vm86, %v85
    %v91 = vld [vmem:[#allocation0] sm:$0x3]
    %92 = vrot.lane.b32.xlu0 %v91, 84
    %v93 = vpop.permute.xlu0 %92
    %vm94 = vcmask 31744
    %s95 = scalar_lea.vmem %s1, 11
    %96 = vst.msk [vmem:[%s95] sm:$0x1] %vm94, %v93
    %s97 = scalar_lea.vmem %s1, 42
    %98 = vst.msk [vmem:[%s97] sm:$0x2] %vm94, %v93
    %v99 = vld [vmem:[#allocation0] sm:$0x3]
    %100 = vrot.lane.b32.xlu0 %v99, 80
    %v101 = vpop.permute.xlu0 %100
    %vm102 = vcmask 31744
    %s103 = scalar_lea.vmem %s1, 12
    %104 = vst.msk [vmem:[%s103] sm:$0x1] %vm102, %v101
    %s105 = scalar_lea.vmem %s1, 43
    %106 = vst.msk [vmem:[%s105] sm:$0x2] %vm102, %v101
    %v107 = vld [vmem:[#allocation0] sm:$0x3]
    %108 = vrot.lane.b32.xlu0 %v107, 76
    %v109 = vpop.permute.xlu0 %108
    %vm110 = vcmask 31744
    %s111 = scalar_lea.vmem %s1, 13
    %112 = vst.msk [vmem:[%s111] sm:$0x1] %vm110, %v109
    %s113 = scalar_lea.vmem %s1, 44
    %114 = vst.msk [vmem:[%s113] sm:$0x2] %vm110, %v109
    %v115 = vld [vmem:[#allocation0] sm:$0x3]
    %116 = vrot.lane.b32.xlu0 %v115, 72
    %v117 = vpop.permute.xlu0 %116
    %vm118 = vcmask 31744
    %s119 = scalar_lea.vmem %s1, 14
    %120 = vst.msk [vmem:[%s119] sm:$0x1] %vm118, %v117
    %s121 = scalar_lea.vmem %s1, 45
    %122 = vst.msk [vmem:[%s121] sm:$0x2] %vm118, %v117
    %v123 = vld [vmem:[#allocation0] sm:$0x3]
    %124 = vrot.lane.b32.xlu0 %v123, 68
    %v125 = vpop.permute.xlu0 %124
    %vm126 = vcmask 31744
    %s127 = scalar_lea.vmem %s1, 15
    %128 = vst.msk [vmem:[%s127] sm:$0x1] %vm126, %v125
    %s129 = scalar_lea.vmem %s1, 46
    %130 = vst.msk [vmem:[%s129] sm:$0x2] %vm126, %v125
    %v131 = vld [vmem:[#allocation0] sm:$0x3]
    %132 = vrot.lane.b32.xlu0 %v131, 64
    %v133 = vpop.permute.xlu0 %132
    %vm134 = vcmask 31744
    %s135 = scalar_lea.vmem %s1, 16
    %136 = vst.msk [vmem:[%s135] sm:$0x1] %vm134, %v133
    %s137 = scalar_lea.vmem %s1, 47
    %138 = vst.msk [vmem:[%s137] sm:$0x2] %vm134, %v133
    %v139 = vld [vmem:[#allocation0] sm:$0x3]
    %140 = vrot.lane.b32.xlu0 %v139, 60
    %v141 = vpop.permute.xlu0 %140
    %vm142 = vcmask 31744
    %s143 = scalar_lea.vmem %s1, 17
    %144 = vst.msk [vmem:[%s143] sm:$0x1] %vm142, %v141
    %s145 = scalar_lea.vmem %s1, 48
    %146 = vst.msk [vmem:[%s145] sm:$0x2] %vm142, %v141
    %v147 = vld [vmem:[#allocation0] sm:$0x3]
    %148 = vrot.lane.b32.xlu0 %v147, 56
    %v149 = vpop.permute.xlu0 %148
    %vm150 = vcmask 31744
    %s151 = scalar_lea.vmem %s1, 18
    %152 = vst.msk [vmem:[%s151] sm:$0x1] %vm150, %v149
    %s153 = scalar_lea.vmem %s1, 49
    %154 = vst.msk [vmem:[%s153] sm:$0x2] %vm150, %v149
    %v155 = vld [vmem:[#allocation0] sm:$0x3]
    %156 = vrot.lane.b32.xlu0 %v155, 52
    %v157 = vpop.permute.xlu0 %156
    %vm158 = vcmask 31744
    %s159 = scalar_lea.vmem %s1, 19
    %160 = vst.msk [vmem:[%s159] sm:$0x1] %vm158, %v157
    %s161 = scalar_lea.vmem %s1, 50
    %162 = vst.msk [vmem:[%s161] sm:$0x2] %vm158, %v157
    %v163 = vld [vmem:[#allocation0] sm:$0x3]
    %164 = vrot.lane.b32.xlu0 %v163, 48
    %v165 = vpop.permute.xlu0 %164
    %vm166 = vcmask 31744
    %s167 = scalar_lea.vmem %s1, 20
    %168 = vst.msk [vmem:[%s167] sm:$0x1] %vm166, %v165
    %s169 = scalar_lea.vmem %s1, 51
    %170 = vst.msk [vmem:[%s169] sm:$0x2] %vm166, %v165
    %v171 = vld [vmem:[#allocation0] sm:$0x3]
    %172 = vrot.lane.b32.xlu0 %v171, 44
    %v173 = vpop.permute.xlu0 %172
    %vm174 = vcmask 31744
    %s175 = scalar_lea.vmem %s1, 21
    %176 = vst.msk [vmem:[%s175] sm:$0x1] %vm174, %v173
    %s177 = scalar_lea.vmem %s1, 52
    %178 = vst.msk [vmem:[%s177] sm:$0x2] %vm174, %v173
    %v179 = vld [vmem:[#allocation0] sm:$0x3]
    %180 = vrot.lane.b32.xlu0 %v179, 40
    %v181 = vpop.permute.xlu0 %180
    %vm182 = vcmask 31744
    %s183 = scalar_lea.vmem %s1, 22
    %184 = vst.msk [vmem:[%s183] sm:$0x1] %vm182, %v181
    %s185 = scalar_lea.vmem %s1, 53
    %186 = vst.msk [vmem:[%s185] sm:$0x2] %vm182, %v181
    %v187 = vld [vmem:[#allocation0] sm:$0x3]
    %188 = vrot.lane.b32.xlu0 %v187, 36
    %v189 = vpop.permute.xlu0 %188
    %vm190 = vcmask 31744
    %s191 = scalar_lea.vmem %s1, 23
    %192 = vst.msk [vmem:[%s191] sm:$0x1] %vm190, %v189
    %s193 = scalar_lea.vmem %s1, 54
    %194 = vst.msk [vmem:[%s193] sm:$0x2] %vm190, %v189
    %v195 = vld [vmem:[#allocation0] sm:$0x3]
    %196 = vrot.lane.b32.xlu0 %v195, 32
    %v197 = vpop.permute.xlu0 %196
    %vm198 = vcmask 31744
    %s199 = scalar_lea.vmem %s1, 24
    %200 = vst.msk [vmem:[%s199] sm:$0x1] %vm198, %v197
    %s201 = scalar_lea.vmem %s1, 55
    %202 = vst.msk [vmem:[%s201] sm:$0x2] %vm198, %v197
    %v203 = vld [vmem:[#allocation0] sm:$0x3]
    %204 = vrot.lane.b32.xlu0 %v203, 28
    %v205 = vpop.permute.xlu0 %204
    %vm206 = vcmask 31744
    %s207 = scalar_lea.vmem %s1, 25
    %208 = vst.msk [vmem:[%s207] sm:$0x1] %vm206, %v205
    %s209 = scalar_lea.vmem %s1, 56
    %210 = vst.msk [vmem:[%s209] sm:$0x2] %vm206, %v205
    %v211 = vld [vmem:[#allocation0] sm:$0x3]
    %212 = vrot.lane.b32.xlu0 %v211, 24
    %v213 = vpop.permute.xlu0 %212
    %vm214 = vcmask 31744
    %s215 = scalar_lea.vmem %s1, 26
    %216 = vst.msk [vmem:[%s215] sm:$0x1] %vm214, %v213
    %s217 = scalar_lea.vmem %s1, 57
    %218 = vst.msk [vmem:[%s217] sm:$0x2] %vm214, %v213
    %v219 = vld [vmem:[#allocation0] sm:$0x3]
    %220 = vrot.lane.b32.xlu0 %v219, 20
    %v221 = vpop.permute.xlu0 %220
    %vm222 = vcmask 31744
    %s223 = scalar_lea.vmem %s1, 27
    %224 = vst.msk [vmem:[%s223] sm:$0x1] %vm222, %v221
    %s225 = scalar_lea.vmem %s1, 58
    %226 = vst.msk [vmem:[%s225] sm:$0x2] %vm222, %v221
    %v227 = vld [vmem:[#allocation0] sm:$0x3]
    %228 = vrot.lane.b32.xlu0 %v227, 16
    %v229 = vpop.permute.xlu0 %228
    %vm230 = vcmask 31744
    %s231 = scalar_lea.vmem %s1, 28
    %232 = vst.msk [vmem:[%s231] sm:$0x1] %vm230, %v229
    %s233 = scalar_lea.vmem %s1, 59
    %234 = vst.msk [vmem:[%s233] sm:$0x2] %vm230, %v229
    %v235 = vld [vmem:[#allocation0] sm:$0x3]
    %236 = vrot.lane.b32.xlu0 %v235, 12
    %v237 = vpop.permute.xlu0 %236
    %vm238 = vcmask 31744
    %s239 = scalar_lea.vmem %s1, 29
    %240 = vst.msk [vmem:[%s239] sm:$0x1] %vm238, %v237
    %s241 = scalar_lea.vmem %s1, 60
    %242 = vst.msk [vmem:[%s241] sm:$0x2] %vm238, %v237
    %v243 = vld [vmem:[#allocation0] sm:$0x3]
    %244 = vrot.lane.b32.xlu0 %v243, 8
    %v245 = vpop.permute.xlu0 %244
    %vm246 = vcmask 31744
    %s247 = scalar_lea.vmem %s1, 30
    %248 = vst.msk [vmem:[%s247] sm:$0x1] %vm246, %v245
    %s249 = scalar_lea.vmem %s1, 61
    %250 = vst.msk [vmem:[%s249] sm:$0x2] %vm246, %v245
    %v251 = vld [vmem:[#allocation0] sm:$0x3]
    %252 = vrot.lane.b32.xlu0 %v251, 4
    %v253 = vpop.permute.xlu0 %252
    %vm254 = vcmask 31744
    %s255 = scalar_lea.vmem %s1, 31
    %256 = vst.msk [vmem:[%s255] sm:$0x1] %vm254, %v253
    %s257 = scalar_lea.vmem %s1, 62
    %258 = vst.msk [vmem:[%s257] sm:$0x2] %vm254, %v253

// kernel: pallas_forward.1
$region0: #{pallas_forward.1}
  #allocation0 [shape = 'u32[]', space=smem, size = 0x4, offset = 0x4, fixed_abs, tag = 'smem constant byte address 0x4 - core index']
  #allocation1 [shape = 'u32[72,128]{1,0:T(1,128)}', space=vmem, size = 0x9000, scoped, tag = 'internal scratch']
  %s0 = inlined_call_operand.vmem [shape: bf16[16,128], index: 0, kind: input, shape index: {}]
  %s1 = inlined_call_operand.vmem [shape: bf16[16,128], index: 1, kind: input, shape index: {}]
  %s2 = inlined_call_operand.vmem [shape: bf16[2,128,512], index: 2, kind: input, shape index: {}]
  %s3 = inlined_call_operand.vmem [shape: bf16[2,128,512], index: 3, kind: input, shape index: {}]
  %s4 = inlined_call_operand.vmem [shape: bf16[2,128,512], index: 4, kind: input, shape index: {}]
  %s5 = inlined_call_operand.vmem [shape: bf16[2,128,512], index: 5, kind: input, shape index: {}]
  %s6 = inlined_call_operand.vmem [shape: f32[2,1,512], index: 6, kind: input, shape index: {}]
  %s7 = inlined_call_operand.vmem [shape: f32[2,1,512], index: 7, kind: input, shape index: {}]
  %s8 = inlined_call_operand.vmem [shape: bf16[128,128], index: 8, kind: input, shape index: {}]
  %s9 = inlined_call_operand.vmem [shape: bf16[128,128], index: 9, kind: input, shape index: {}]
  %s10 = inlined_call_operand.vmem [shape: f32[1,128], index: 10, kind: input, shape index: {}]
  %s11 = inlined_call_operand.vmem [shape: f32[32,128], index: 11, kind: output, shape index: {0}]
  %s12 = inlined_call_operand.vmem [shape: f32[8,128], index: 12, kind: output, shape index: {1}]
  %13 = xla_tuple %s11, %s12
  %s14 = sld [smem:[#allocation0]]
  $region62: #{pallas_forward.1} parent=0
    _
  %s16 = ssub.s32 1, %s14
  %s17 = scalar_select 0, %s16, %s14
  // Predicated region
  $region2: #{pallas_forward.1} parent=0 // pred_check
    _
  $region3: #{pallas_forward.1} parent=0 // pred_check_branch
    %19 = sbr.rel (0) target = $region5
  $region4: #{pallas_forward.1} parent=0 // pred_region
    _
  $region5: #{pallas_forward.1} parent=0 // pred_fallthru
    _
  // Predicated region
  $region6: #{pallas_forward.1} parent=0 // pred_check
    _
  $region7: #{pallas_forward.1} parent=0 // pred_check_branch
    %21 = sbr.rel (0) target = $region9
  $region8: #{pallas_forward.1} parent=0 // pred_region
    _
  $region9: #{pallas_forward.1} parent=0 // pred_fallthru
    _
  // Predicated region
  $region10: #{pallas_forward.1} parent=0 // pred_check
    _
  $region11: #{pallas_forward.1} parent=0 // pred_check_branch
    %23 = sbr.rel (0) target = $region13
  $region12: #{pallas_forward.1} parent=0 // pred_region
    _
  $region13: #{pallas_forward.1} parent=0 // pred_fallthru
    _
  // Predicated region
  $region14: #{pallas_forward.1} parent=0 // pred_check
    _
  $region15: #{pallas_forward.1} parent=0 // pred_check_branch
    %25 = sbr.rel (0) target = $region17
  $region16: #{pallas_forward.1} parent=0 // pred_region
    _
  $region17: #{pallas_forward.1} parent=0 // pred_fallthru
    _
  // Predicated region
  $region18: #{pallas_forward.1} parent=0 // pred_check
    _
  $region19: #{pallas_forward.1} parent=0 // pred_check_branch
    %27 = sbr.rel (0) target = $region21
  $region20: #{pallas_forward.1} parent=0 // pred_region
    _
  $region21: #{pallas_forward.1} parent=0 // pred_fallthru
    _
  // Predicated region
  $region22: #{pallas_forward.1} parent=0 // pred_check
    _
  $region23: #{pallas_forward.1} parent=0 // pred_check_branch
    %29 = sbr.rel (0) target = $region25
  $region24: #{pallas_forward.1} parent=0 // pred_region
    _
  $region25: #{pallas_forward.1} parent=0 // pred_fallthru
    _
  // Predicated region
  $region26: #{pallas_forward.1} parent=0 // pred_check
    _
  $region27: #{pallas_forward.1} parent=0 // pred_check_branch
    %31 = sbr.rel (0) target = $region29
  $region28: #{pallas_forward.1} parent=0 // pred_region
    _
  $region29: #{pallas_forward.1} parent=0 // pred_fallthru
    _
  // Predicated region
  $region30: #{pallas_forward.1} parent=0 // pred_check
    _
  $region31: #{pallas_forward.1} parent=0 // pred_check_branch
    %33 = sbr.rel (0) target = $region33
  $region32: #{pallas_forward.1} parent=0 // pred_region
    _
  $region33: #{pallas_forward.1} parent=0 // pred_fallthru
    _
  // Predicated region
  $region34: #{pallas_forward.1} parent=0 // pred_check
    _
  $region35: #{pallas_forward.1} parent=0 // pred_check_branch
    %35 = sbr.rel (0) target = $region37
  $region36: #{pallas_forward.1} parent=0 // pred_region
    _
  $region37: #{pallas_forward.1} parent=0 // pred_fallthru
    _
  // Predicated region
  $region38: #{pallas_forward.1} parent=0 // pred_check
    _
  $region39: #{pallas_forward.1} parent=0 // pred_check_branch
    %37 = sbr.rel (0) target = $region41
  $region40: #{pallas_forward.1} parent=0 // pred_region
    _
  $region41: #{pallas_forward.1} parent=0 // pred_fallthru
    _
  // Predicated region
  $region42: #{pallas_forward.1} parent=0 // pred_check
    _
  $region43: #{pallas_forward.1} parent=0 // pred_check_branch
    %39 = sbr.rel (0) target = $region45
  $region44: #{pallas_forward.1} parent=0 // pred_region
    _
  $region45: #{pallas_forward.1} parent=0 // pred_fallthru
    _
  %v41 = vld [vmem:[%s6] sm:$0xf]
  %v43 = vperm.slane %v41, 0
  %v44 = vperm.slane %v41, 1
  %v45 = vperm.slane %v41, 2
  %v46 = vperm.slane %v41, 3
  %s51 = scalar_lea.vmem %s6, 4
  %v52 = vld [vmem:[%s51] sm:$0xf]
  %v54 = vperm.slane %v52, 0
  %v55 = vperm.slane %v52, 1
  %v56 = vperm.slane %v52, 2
  %v57 = vperm.slane %v52, 3
  %v62 = vld [vmem:[%s7] sm:$0xf]
  %v64 = vperm.slane %v62, 0
  %v65 = vperm.slane %v62, 1
  %v66 = vperm.slane %v62, 2
  %v67 = vperm.slane %v62, 3
  %s72 = scalar_lea.vmem %s7, 4
  %v73 = vld [vmem:[%s72] sm:$0xf]
  %v75 = vperm.slane %v73, 0
  %v76 = vperm.slane %v73, 1
  %v77 = vperm.slane %v73, 2
  %v78 = vperm.slane %v73, 3
  %v83 = vld [vmem:[%s0] sm:$0xf]
  %v84 = vld [vmem:[%s0 + $0x4] sm:$0xf]
  %v85 = vld [vmem:[%s2] sm:$0xff]
  %v86 = vld [vmem:[%s2 + $0x8] sm:$0xff]
  %v87 = vld [vmem:[%s2 + $0x10] sm:$0xff]
  %v88 = vld [vmem:[%s2 + $0x18] sm:$0xff]
  %v89 = vld [vmem:[%s2 + $0x20] sm:$0xff]
  %v90 = vld [vmem:[%s2 + $0x28] sm:$0xff]
  %v91 = vld [vmem:[%s2 + $0x30] sm:$0xff]
  %v92 = vld [vmem:[%s2 + $0x38] sm:$0xff]
  %v93 = vld [vmem:[%s2 + $0x40] sm:$0xff]
  %v94 = vld [vmem:[%s2 + $0x48] sm:$0xff]
  %v95 = vld [vmem:[%s2 + $0x50] sm:$0xff]
  %v96 = vld [vmem:[%s2 + $0x58] sm:$0xff]
  %v97 = vld [vmem:[%s2 + $0x60] sm:$0xff]
  %v98 = vld [vmem:[%s2 + $0x68] sm:$0xff]
  %v99 = vld [vmem:[%s2 + $0x70] sm:$0xff]
  %v100 = vld [vmem:[%s2 + $0x78] sm:$0xff]
  %v101 = vld [vmem:[%s2 + $0x80] sm:$0xff]
  %v102 = vld [vmem:[%s2 + $0x88] sm:$0xff]
  %v103 = vld [vmem:[%s2 + $0x90] sm:$0xff]
  %v104 = vld [vmem:[%s2 + $0x98] sm:$0xff]
  %v105 = vld [vmem:[%s2 + $0xa0] sm:$0xff]
  %v106 = vld [vmem:[%s2 + $0xa8] sm:$0xff]
  %v107 = vld [vmem:[%s2 + $0xb0] sm:$0xff]
  %v108 = vld [vmem:[%s2 + $0xb8] sm:$0xff]
  %v109 = vld [vmem:[%s2 + $0xc0] sm:$0xff]
  %v110 = vld [vmem:[%s2 + $0xc8] sm:$0xff]
  %v111 = vld [vmem:[%s2 + $0xd0] sm:$0xff]
  %v112 = vld [vmem:[%s2 + $0xd8] sm:$0xff]
  %v113 = vld [vmem:[%s2 + $0xe0] sm:$0xff]
  %v114 = vld [vmem:[%s2 + $0xe8] sm:$0xff]
  %v115 = vld [vmem:[%s2 + $0xf0] sm:$0xff]
  %v116 = vld [vmem:[%s2 + $0xf8] sm:$0xff]
  %v119 = vunpack.c.l.b16 %v83
  %v120 = vunpack.c.l.b16 %v84
  %v121 = vpack.c.b16 %v120, %v119
  %v155 = vunpack.c.l.b16 %v85
  %v156 = vunpack.c.h.b16 %v85
  %v157 = vunpack.c.l.b16 %v86
  %v158 = vunpack.c.h.b16 %v86
  %v159 = vunpack.c.l.b16 %v87
  %v160 = vunpack.c.h.b16 %v87
  %v161 = vunpack.c.l.b16 %v88
  %v162 = vunpack.c.h.b16 %v88
  %v163 = vunpack.c.l.b16 %v89
  %v164 = vunpack.c.h.b16 %v89
  %v165 = vunpack.c.l.b16 %v90
  %v166 = vunpack.c.h.b16 %v90
  %v167 = vunpack.c.l.b16 %v91
  %v168 = vunpack.c.h.b16 %v91
  %v169 = vunpack.c.l.b16 %v92
  %v170 = vunpack.c.h.b16 %v92
  %v171 = vunpack.c.l.b16 %v93
  %v172 = vunpack.c.h.b16 %v93
  %v173 = vunpack.c.l.b16 %v94
  %v174 = vunpack.c.h.b16 %v94
  %v175 = vunpack.c.l.b16 %v95
  %v176 = vunpack.c.h.b16 %v95
  %v177 = vunpack.c.l.b16 %v96
  %v178 = vunpack.c.h.b16 %v96
  %v179 = vunpack.c.l.b16 %v97
  %v180 = vunpack.c.h.b16 %v97
  %v181 = vunpack.c.l.b16 %v98
  %v182 = vunpack.c.h.b16 %v98
  %v183 = vunpack.c.l.b16 %v99
  %v184 = vunpack.c.h.b16 %v99
  %v185 = vunpack.c.l.b16 %v100
  %v186 = vunpack.c.h.b16 %v100
  %v187 = vunpack.c.l.b16 %v101
  %v188 = vunpack.c.h.b16 %v101
  %v189 = vunpack.c.l.b16 %v102
  %v190 = vunpack.c.h.b16 %v102
  %v191 = vunpack.c.l.b16 %v103
  %v192 = vunpack.c.h.b16 %v103
  %v193 = vunpack.c.l.b16 %v104
  %v194 = vunpack.c.h.b16 %v104
  %v195 = vunpack.c.l.b16 %v105
  %v196 = vunpack.c.h.b16 %v105
  %v197 = vunpack.c.l.b16 %v106
  %v198 = vunpack.c.h.b16 %v106
  %v199 = vunpack.c.l.b16 %v107
  %v200 = vunpack.c.h.b16 %v107
  %v201 = vunpack.c.l.b16 %v108
  %v202 = vunpack.c.h.b16 %v108
  %v203 = vunpack.c.l.b16 %v109
  %v204 = vunpack.c.h.b16 %v109
  %v205 = vunpack.c.l.b16 %v110
  %v206 = vunpack.c.h.b16 %v110
  %v207 = vunpack.c.l.b16 %v111
  %v208 = vunpack.c.h.b16 %v111
  %v209 = vunpack.c.l.b16 %v112
  %v210 = vunpack.c.h.b16 %v112
  %v211 = vunpack.c.l.b16 %v113
  %v212 = vunpack.c.h.b16 %v113
  %v213 = vunpack.c.l.b16 %v114
  %v214 = vunpack.c.h.b16 %v114
  %v215 = vunpack.c.l.b16 %v115
  %v216 = vunpack.c.h.b16 %v115
  %v217 = vunpack.c.l.b16 %v116
  %v218 = vunpack.c.h.b16 %v116
  %v219 = vpack.c.b16 %v159, %v155
  %v220 = vpack.c.b16 %v160, %v156
  %v221 = vpack.c.b16 %v161, %v157
  %v222 = vpack.c.b16 %v162, %v158
  %v223 = vpack.c.b16 %v167, %v163
  %v224 = vpack.c.b16 %v168, %v164
  %v225 = vpack.c.b16 %v169, %v165
  %v226 = vpack.c.b16 %v170, %v166
  %v227 = vpack.c.b16 %v175, %v171
  %v228 = vpack.c.b16 %v176, %v172
  %v229 = vpack.c.b16 %v177, %v173
  %v230 = vpack.c.b16 %v178, %v174
  %v231 = vpack.c.b16 %v183, %v179
  %v232 = vpack.c.b16 %v184, %v180
  %v233 = vpack.c.b16 %v185, %v181
  %v234 = vpack.c.b16 %v186, %v182
  %v235 = vpack.c.b16 %v191, %v187
  %v236 = vpack.c.b16 %v192, %v188
  %v237 = vpack.c.b16 %v193, %v189
  %v238 = vpack.c.b16 %v194, %v190
  %v239 = vpack.c.b16 %v199, %v195
  %v240 = vpack.c.b16 %v200, %v196
  %v241 = vpack.c.b16 %v201, %v197
  %v242 = vpack.c.b16 %v202, %v198
  %v243 = vpack.c.b16 %v207, %v203
  %v244 = vpack.c.b16 %v208, %v204
  %v245 = vpack.c.b16 %v209, %v205
  %v246 = vpack.c.b16 %v210, %v206
  %v247 = vpack.c.b16 %v215, %v211
  %v248 = vpack.c.b16 %v216, %v212
  %v249 = vpack.c.b16 %v217, %v213
  %v250 = vpack.c.b16 %v218, %v214
  %283 = vmatpush.bf16.msra.mxu0 %v247
  %284 = vmatpush.bf16.msra.mxu0 %v243
  %285 = vmatpush.bf16.msra.mxu0 %v239
  %286 = vmatpush.bf16.msra.mxu0 %v235
  %287 = vmatpush.bf16.msra.mxu0 %v231
  %288 = vmatpush.bf16.msra.mxu0 %v227
  %289 = vmatpush.bf16.msra.mxu0 %v223
  %290 = vmatpush.bf16.msra.mxu0 %v219
  %291 = vmatmul.bf16.gmra.mxu0 %v121
  %v292 = vpop.f32.mrf.mxu0
  %v293 = vadd.f32 0.0, %v292
  %v294 = vpop.f32.mrf.mxu0
  %v295 = vadd.f32 0.0, %v294
  %296 = vdwg.mxu0
  %297 = vmatpush.bf16.msra.mxu0 %v248
  %298 = vmatpush.bf16.msra.mxu0 %v244
  %299 = vmatpush.bf16.msra.mxu0 %v240
  %300 = vmatpush.bf16.msra.mxu0 %v236
  %301 = vmatpush.bf16.msra.mxu0 %v232
  %302 = vmatpush.bf16.msra.mxu0 %v228
  %303 = vmatpush.bf16.msra.mxu0 %v224
  %304 = vmatpush.bf16.msra.mxu0 %v220
  %305 = vmatmul.bf16.gmra.mxu0 %v121
  %v306 = vpop.f32.mrf.mxu0
  %v307 = vadd.f32 0.0, %v306
  %v308 = vpop.f32.mrf.mxu0
  %v309 = vadd.f32 0.0, %v308
  %310 = vdwg.mxu0
  %311 = vmatpush.bf16.msra.mxu0 %v249
  %312 = vmatpush.bf16.msra.mxu0 %v245
  %313 = vmatpush.bf16.msra.mxu0 %v241
  %314 = vmatpush.bf16.msra.mxu0 %v237
  %315 = vmatpush.bf16.msra.mxu0 %v233
  %316 = vmatpush.bf16.msra.mxu0 %v229
  %317 = vmatpush.bf16.msra.mxu0 %v225
  %318 = vmatpush.bf16.msra.mxu0 %v221
  %319 = vmatmul.bf16.gmra.mxu0 %v121
  %v320 = vpop.f32.mrf.mxu0
  %v321 = vadd.f32 0.0, %v320
  %v322 = vpop.f32.mrf.mxu0
  %v323 = vadd.f32 0.0, %v322
  %324 = vdwg.mxu0
  %325 = vmatpush.bf16.msra.mxu0 %v250
  %326 = vmatpush.bf16.msra.mxu0 %v246
  %327 = vmatpush.bf16.msra.mxu0 %v242
  %328 = vmatpush.bf16.msra.mxu0 %v238
  %329 = vmatpush.bf16.msra.mxu0 %v234
  %330 = vmatpush.bf16.msra.mxu0 %v230
  %331 = vmatpush.bf16.msra.mxu0 %v226
  %332 = vmatpush.bf16.msra.mxu0 %v222
  %333 = vmatmul.bf16.gmra.mxu0 %v121
  %v334 = vpop.f32.mrf.mxu0
  %v335 = vadd.f32 0.0, %v334
  %v336 = vpop.f32.mrf.mxu0
  %v337 = vadd.f32 0.0, %v336
  %338 = vdwg.mxu0
  %v339 = vld [vmem:[%s3] sm:$0xff]
  %v340 = vld [vmem:[%s3 + $0x8] sm:$0xff]
  %v341 = vld [vmem:[%s3 + $0x10] sm:$0xff]
  %v342 = vld [vmem:[%s3 + $0x18] sm:$0xff]
  %v343 = vld [vmem:[%s3 + $0x20] sm:$0xff]
  %v344 = vld [vmem:[%s3 + $0x28] sm:$0xff]
  %v345 = vld [vmem:[%s3 + $0x30] sm:$0xff]
  %v346 = vld [vmem:[%s3 + $0x38] sm:$0xff]
  %v347 = vld [vmem:[%s3 + $0x40] sm:$0xff]
  %v348 = vld [vmem:[%s3 + $0x48] sm:$0xff]
  %v349 = vld [vmem:[%s3 + $0x50] sm:$0xff]
  %v350 = vld [vmem:[%s3 + $0x58] sm:$0xff]
  %v351 = vld [vmem:[%s3 + $0x60] sm:$0xff]
  %v352 = vld [vmem:[%s3 + $0x68] sm:$0xff]
  %v353 = vld [vmem:[%s3 + $0x70] sm:$0xff]
  %v354 = vld [vmem:[%s3 + $0x78] sm:$0xff]
  %v355 = vld [vmem:[%s3 + $0x80] sm:$0xff]
  %v356 = vld [vmem:[%s3 + $0x88] sm:$0xff]
  %v357 = vld [vmem:[%s3 + $0x90] sm:$0xff]
  %v358 = vld [vmem:[%s3 + $0x98] sm:$0xff]
  %v359 = vld [vmem:[%s3 + $0xa0] sm:$0xff]
  %v360 = vld [vmem:[%s3 + $0xa8] sm:$0xff]
  %v361 = vld [vmem:[%s3 + $0xb0] sm:$0xff]
  %v362 = vld [vmem:[%s3 + $0xb8] sm:$0xff]
  %v363 = vld [vmem:[%s3 + $0xc0] sm:$0xff]
  %v364 = vld [vmem:[%s3 + $0xc8] sm:$0xff]
  %v365 = vld [vmem:[%s3 + $0xd0] sm:$0xff]
  %v366 = vld [vmem:[%s3 + $0xd8] sm:$0xff]
  %v367 = vld [vmem:[%s3 + $0xe0] sm:$0xff]
  %v368 = vld [vmem:[%s3 + $0xe8] sm:$0xff]
  %v369 = vld [vmem:[%s3 + $0xf0] sm:$0xff]
  %v370 = vld [vmem:[%s3 + $0xf8] sm:$0xff]
  %v403 = vunpack.c.l.b16 %v339
  %v404 = vunpack.c.h.b16 %v339
  %v405 = vunpack.c.l.b16 %v340
  %v406 = vunpack.c.h.b16 %v340
  %v407 = vunpack.c.l.b16 %v341
  %v408 = vunpack.c.h.b16 %v341
  %v409 = vunpack.c.l.b16 %v342
  %v410 = vunpack.c.h.b16 %v342
  %v411 = vunpack.c.l.b16 %v343
  %v412 = vunpack.c.h.b16 %v343
  %v413 = vunpack.c.l.b16 %v344
  %v414 = vunpack.c.h.b16 %v344
  %v415 = vunpack.c.l.b16 %v345
  %v416 = vunpack.c.h.b16 %v345
  %v417 = vunpack.c.l.b16 %v346
  %v418 = vunpack.c.h.b16 %v346
  %v419 = vunpack.c.l.b16 %v347
  %v420 = vunpack.c.h.b16 %v347
  %v421 = vunpack.c.l.b16 %v348
  %v422 = vunpack.c.h.b16 %v348
  %v423 = vunpack.c.l.b16 %v349
  %v424 = vunpack.c.h.b16 %v349
  %v425 = vunpack.c.l.b16 %v350
  %v426 = vunpack.c.h.b16 %v350
  %v427 = vunpack.c.l.b16 %v351
  %v428 = vunpack.c.h.b16 %v351
  %v429 = vunpack.c.l.b16 %v352
  %v430 = vunpack.c.h.b16 %v352
  %v431 = vunpack.c.l.b16 %v353
  %v432 = vunpack.c.h.b16 %v353
  %v433 = vunpack.c.l.b16 %v354
  %v434 = vunpack.c.h.b16 %v354
  %v435 = vunpack.c.l.b16 %v355
  %v436 = vunpack.c.h.b16 %v355
  %v437 = vunpack.c.l.b16 %v356
  %v438 = vunpack.c.h.b16 %v356
  %v439 = vunpack.c.l.b16 %v357
  %v440 = vunpack.c.h.b16 %v357
  %v441 = vunpack.c.l.b16 %v358
  %v442 = vunpack.c.h.b16 %v358
  %v443 = vunpack.c.l.b16 %v359
  %v444 = vunpack.c.h.b16 %v359
  %v445 = vunpack.c.l.b16 %v360
  %v446 = vunpack.c.h.b16 %v360
  %v447 = vunpack.c.l.b16 %v361
  %v448 = vunpack.c.h.b16 %v361
  %v449 = vunpack.c.l.b16 %v362
  %v450 = vunpack.c.h.b16 %v362
  %v451 = vunpack.c.l.b16 %v363
  %v452 = vunpack.c.h.b16 %v363
  %v453 = vunpack.c.l.b16 %v364
  %v454 = vunpack.c.h.b16 %v364
  %v455 = vunpack.c.l.b16 %v365
  %v456 = vunpack.c.h.b16 %v365
  %v457 = vunpack.c.l.b16 %v366
  %v458 = vunpack.c.h.b16 %v366
  %v459 = vunpack.c.l.b16 %v367
  %v460 = vunpack.c.h.b16 %v367
  %v461 = vunpack.c.l.b16 %v368
  %v462 = vunpack.c.h.b16 %v368
  %v463 = vunpack.c.l.b16 %v369
  %v464 = vunpack.c.h.b16 %v369
  %v465 = vunpack.c.l.b16 %v370
  %v466 = vunpack.c.h.b16 %v370
  %v467 = vpack.c.b16 %v407, %v403
  %v468 = vpack.c.b16 %v408, %v404
  %v469 = vpack.c.b16 %v409, %v405
  %v470 = vpack.c.b16 %v410, %v406
  %v471 = vpack.c.b16 %v415, %v411
  %v472 = vpack.c.b16 %v416, %v412
  %v473 = vpack.c.b16 %v417, %v413
  %v474 = vpack.c.b16 %v418, %v414
  %v475 = vpack.c.b16 %v423, %v419
  %v476 = vpack.c.b16 %v424, %v420
  %v477 = vpack.c.b16 %v425, %v421
  %v478 = vpack.c.b16 %v426, %v422
  %v479 = vpack.c.b16 %v431, %v427
  %v480 = vpack.c.b16 %v432, %v428
  %v481 = vpack.c.b16 %v433, %v429
  %v482 = vpack.c.b16 %v434, %v430
  %v483 = vpack.c.b16 %v439, %v435
  %v484 = vpack.c.b16 %v440, %v436
  %v485 = vpack.c.b16 %v441, %v437
  %v486 = vpack.c.b16 %v442, %v438
  %v487 = vpack.c.b16 %v447, %v443
  %v488 = vpack.c.b16 %v448, %v444
  %v489 = vpack.c.b16 %v449, %v445
  %v490 = vpack.c.b16 %v450, %v446
  %v491 = vpack.c.b16 %v455, %v451
  %v492 = vpack.c.b16 %v456, %v452
  %v493 = vpack.c.b16 %v457, %v453
  %v494 = vpack.c.b16 %v458, %v454
  %v495 = vpack.c.b16 %v463, %v459
  %v496 = vpack.c.b16 %v464, %v460
  %v497 = vpack.c.b16 %v465, %v461
  %v498 = vpack.c.b16 %v466, %v462
  %531 = vmatpush.bf16.msra.mxu0 %v495
  %532 = vmatpush.bf16.msra.mxu0 %v491
  %533 = vmatpush.bf16.msra.mxu0 %v487
  %534 = vmatpush.bf16.msra.mxu0 %v483
  %535 = vmatpush.bf16.msra.mxu0 %v479
  %536 = vmatpush.bf16.msra.mxu0 %v475
  %537 = vmatpush.bf16.msra.mxu0 %v471
  %538 = vmatpush.bf16.msra.mxu0 %v467
  %539 = vmatmul.bf16.gmra.mxu0 0
  %v540 = vpop.f32.mrf.mxu0
  %v541 = vadd.f32 0.0, %v540
  %v542 = vpop.f32.mrf.mxu0
  %543 = vdwg.mxu0
  %544 = vmatpush.bf16.msra.mxu0 %v496
  %545 = vmatpush.bf16.msra.mxu0 %v492
  %546 = vmatpush.bf16.msra.mxu0 %v488
  %547 = vmatpush.bf16.msra.mxu0 %v484
  %548 = vmatpush.bf16.msra.mxu0 %v480
  %549 = vmatpush.bf16.msra.mxu0 %v476
  %550 = vmatpush.bf16.msra.mxu0 %v472
  %551 = vmatpush.bf16.msra.mxu0 %v468
  %552 = vmatmul.bf16.gmra.mxu0 0
  %v553 = vpop.f32.mrf.mxu0
  %v554 = vadd.f32 0.0, %v553
  %v555 = vpop.f32.mrf.mxu0
  %556 = vdwg.mxu0
  %557 = vmatpush.bf16.msra.mxu0 %v497
  %558 = vmatpush.bf16.msra.mxu0 %v493
  %559 = vmatpush.bf16.msra.mxu0 %v489
  %560 = vmatpush.bf16.msra.mxu0 %v485
  %561 = vmatpush.bf16.msra.mxu0 %v481
  %562 = vmatpush.bf16.msra.mxu0 %v477
  %563 = vmatpush.bf16.msra.mxu0 %v473
  %564 = vmatpush.bf16.msra.mxu0 %v469
  %565 = vmatmul.bf16.gmra.mxu0 0
  %v566 = vpop.f32.mrf.mxu0
  %v567 = vadd.f32 0.0, %v566
  %v568 = vpop.f32.mrf.mxu0
  %569 = vdwg.mxu0
  %570 = vmatpush.bf16.msra.mxu0 %v498
  %571 = vmatpush.bf16.msra.mxu0 %v494
  %572 = vmatpush.bf16.msra.mxu0 %v490
  %573 = vmatpush.bf16.msra.mxu0 %v486
  %574 = vmatpush.bf16.msra.mxu0 %v482
  %575 = vmatpush.bf16.msra.mxu0 %v478
  %576 = vmatpush.bf16.msra.mxu0 %v474
  %577 = vmatpush.bf16.msra.mxu0 %v470
  %578 = vmatmul.bf16.gmra.mxu0 0
  %v579 = vpop.f32.mrf.mxu0
  %v580 = vadd.f32 0.0, %v579
  %v581 = vpop.f32.mrf.mxu0
  %582 = vdwg.mxu0
  %v583 = vadd.f32 %v293, %v541
  %v584 = vadd.f32 %v307, %v554
  %v585 = vadd.f32 %v321, %v567
  %v586 = vadd.f32 %v335, %v580
  %v587 = vadd.f32 %v583, %v43
  %v588 = vadd.f32 %v584, %v44
  %v589 = vadd.f32 %v585, %v45
  %v590 = vadd.f32 %v586, %v46
  %v591 = vxor.u32 %v587, 2147483648
  %v592 = vxor.u32 %v588, 2147483648
  %v593 = vxor.u32 %v589, 2147483648
  %v594 = vmul.f32 %v591, 1.442695
  %v595 = vpow.pop %v594
  %v596 = vmul.f32 %v592, 1.442695
  %v597 = vpow.pop %v596
  %v598 = vmul.f32 %v593, 1.442695
  %v599 = vpow.pop %v598
  %v600 = vadd.f32 %v595, 1.0
  %v601 = vadd.f32 %v597, 1.0
  %v602 = vadd.f32 %v599, 1.0
  %v603 = vrcp.pop %v600
  %v604 = vmul.f32 %v600, %v603
  %v605 = vsub.f32 1.0, %v604
  %v606 = vmul.f32 %v603, %v605
  %v607 = vadd.f32 %v603, %v606
  %vm608 = vweird.f32 %v600
  %vm609 = vweird.f32 %v603
  %vm610 = vmor %vm608, %vm609
  %v611 = vsel %vm610, %v603, %v607
  %v612 = vand.u32 2147483647, %v600
  %vm613 = vcmp.eq.f32.partialorder %v612, 8.507059e+37
  %v614 = vand.u32 %v600, 2147483648
  %v615 = vor.u32 1.1754944e-38, %v614
  %v616 = vsel %vm613, %v615, %v611
  %v617 = vmul.f32 1.0, %v616
  %v618 = vrcp.pop %v601
  %v619 = vmul.f32 %v601, %v618
  %v620 = vsub.f32 1.0, %v619
  %v621 = vmul.f32 %v618, %v620
  %v622 = vadd.f32 %v618, %v621
  %vm623 = vweird.f32 %v601
  %vm624 = vweird.f32 %v618
  %vm625 = vmor %vm623, %vm624
  %v626 = vsel %vm625, %v618, %v622
  %v627 = vand.u32 2147483647, %v601
  %vm628 = vcmp.eq.f32.partialorder %v627, 8.507059e+37
  %v629 = vand.u32 %v601, 2147483648
  %v630 = vor.u32 1.1754944e-38, %v629
  %v631 = vsel %vm628, %v630, %v626
  %v632 = vmul.f32 1.0, %v631
  %v633 = vrcp.pop %v602
  %v634 = vmul.f32 %v602, %v633
  %v635 = vsub.f32 1.0, %v634
  %v636 = vmul.f32 %v633, %v635
  %v637 = vadd.f32 %v633, %v636
  %vm638 = vweird.f32 %v602
  %vm639 = vweird.f32 %v633
  %vm640 = vmor %vm638, %vm639
  %v641 = vsel %vm640, %v633, %v637
  %v642 = vand.u32 2147483647, %v602
  %vm643 = vcmp.eq.f32.partialorder %v642, 8.507059e+37
  %v644 = vand.u32 %v602, 2147483648
  %v645 = vor.u32 1.1754944e-38, %v644
  %v646 = vsel %vm643, %v645, %v641
  %v647 = vmul.f32 1.0, %v646
  %v648 = vtanh.pop %v590
  %v649 = vmul.f32 %v632, 0.0
  %v650 = vmul.f32 %v617, %v648
  %v651 = vadd.f32 %v649, %v650
  %v652 = vtanh.pop %v651
  %v653 = vmul.f32 %v647, %v652
  %v654 = vpack.c.bf16 %v653, %v653
  %s655 = scalar_lea.vmem %s2, 256
  %v656 = vld [vmem:[%s655] sm:$0xff]
  %v657 = vld [vmem:[%s655 + $0x8] sm:$0xff]
  %v658 = vld [vmem:[%s655 + $0x10] sm:$0xff]
  %v659 = vld [vmem:[%s655 + $0x18] sm:$0xff]
  %v660 = vld [vmem:[%s655 + $0x20] sm:$0xff]
  %v661 = vld [vmem:[%s655 + $0x28] sm:$0xff]
  %v662 = vld [vmem:[%s655 + $0x30] sm:$0xff]
  %v663 = vld [vmem:[%s655 + $0x38] sm:$0xff]
  %v664 = vld [vmem:[%s655 + $0x40] sm:$0xff]
  %v665 = vld [vmem:[%s655 + $0x48] sm:$0xff]
  %v666 = vld [vmem:[%s655 + $0x50] sm:$0xff]
  %v667 = vld [vmem:[%s655 + $0x58] sm:$0xff]
  %v668 = vld [vmem:[%s655 + $0x60] sm:$0xff]
  %v669 = vld [vmem:[%s655 + $0x68] sm:$0xff]
  %v670 = vld [vmem:[%s655 + $0x70] sm:$0xff]
  %v671 = vld [vmem:[%s655 + $0x78] sm:$0xff]
  %v672 = vld [vmem:[%s655 + $0x80] sm:$0xff]
  %v673 = vld [vmem:[%s655 + $0x88] sm:$0xff]
  %v674 = vld [vmem:[%s655 + $0x90] sm:$0xff]
  %v675 = vld [vmem:[%s655 + $0x98] sm:$0xff]
  %v676 = vld [vmem:[%s655 + $0xa0] sm:$0xff]
  %v677 = vld [vmem:[%s655 + $0xa8] sm:$0xff]
  %v678 = vld [vmem:[%s655 + $0xb0] sm:$0xff]
  %v679 = vld [vmem:[%s655 + $0xb8] sm:$0xff]
  %v680 = vld [vmem:[%s655 + $0xc0] sm:$0xff]
  %v681 = vld [vmem:[%s655 + $0xc8] sm:$0xff]
  %v682 = vld [vmem:[%s655 + $0xd0] sm:$0xff]
  %v683 = vld [vmem:[%s655 + $0xd8] sm:$0xff]
  %v684 = vld [vmem:[%s655 + $0xe0] sm:$0xff]
  %v685 = vld [vmem:[%s655 + $0xe8] sm:$0xff]
  %v686 = vld [vmem:[%s655 + $0xf0] sm:$0xff]
  %v687 = vld [vmem:[%s655 + $0xf8] sm:$0xff]
  %s688 = scalar_lea.vmem %s3, 256
  %v689 = vld [vmem:[%s688] sm:$0xff]
  %v690 = vld [vmem:[%s688 + $0x8] sm:$0xff]
  %v691 = vld [vmem:[%s688 + $0x10] sm:$0xff]
  %v692 = vld [vmem:[%s688 + $0x18] sm:$0xff]
  %v693 = vld [vmem:[%s688 + $0x20] sm:$0xff]
  %v694 = vld [vmem:[%s688 + $0x28] sm:$0xff]
  %v695 = vld [vmem:[%s688 + $0x30] sm:$0xff]
  %v696 = vld [vmem:[%s688 + $0x38] sm:$0xff]
  %v697 = vld [vmem:[%s688 + $0x40] sm:$0xff]
  %v698 = vld [vmem:[%s688 + $0x48] sm:$0xff]
  %v699 = vld [vmem:[%s688 + $0x50] sm:$0xff]
  %v700 = vld [vmem:[%s688 + $0x58] sm:$0xff]
  %v701 = vld [vmem:[%s688 + $0x60] sm:$0xff]
  %v702 = vld [vmem:[%s688 + $0x68] sm:$0xff]
  %v703 = vld [vmem:[%s688 + $0x70] sm:$0xff]
  %v704 = vld [vmem:[%s688 + $0x78] sm:$0xff]
  %v705 = vld [vmem:[%s688 + $0x80] sm:$0xff]
  %v706 = vld [vmem:[%s688 + $0x88] sm:$0xff]
  %v707 = vld [vmem:[%s688 + $0x90] sm:$0xff]
  %v708 = vld [vmem:[%s688 + $0x98] sm:$0xff]
  %v709 = vld [vmem:[%s688 + $0xa0] sm:$0xff]
  %v710 = vld [vmem:[%s688 + $0xa8] sm:$0xff]
  %v711 = vld [vmem:[%s688 + $0xb0] sm:$0xff]
  %v712 = vld [vmem:[%s688 + $0xb8] sm:$0xff]
  %v713 = vld [vmem:[%s688 + $0xc0] sm:$0xff]
  %v714 = vld [vmem:[%s688 + $0xc8] sm:$0xff]
  %v715 = vld [vmem:[%s688 + $0xd0] sm:$0xff]
  %v716 = vld [vmem:[%s688 + $0xd8] sm:$0xff]
  %v717 = vld [vmem:[%s688 + $0xe0] sm:$0xff]
  %v718 = vld [vmem:[%s688 + $0xe8] sm:$0xff]
  %v719 = vld [vmem:[%s688 + $0xf0] sm:$0xff]
  %v720 = vld [vmem:[%s688 + $0xf8] sm:$0xff]
  %v753 = vunpack.c.l.b16 %v689
  %v754 = vunpack.c.h.b16 %v689
  %v755 = vunpack.c.l.b16 %v690
  %v756 = vunpack.c.h.b16 %v690
  %v757 = vunpack.c.l.b16 %v691
  %v758 = vunpack.c.h.b16 %v691
  %v759 = vunpack.c.l.b16 %v692
  %v760 = vunpack.c.h.b16 %v692
  %v761 = vunpack.c.l.b16 %v693
  %v762 = vunpack.c.h.b16 %v693
  %v763 = vunpack.c.l.b16 %v694
  %v764 = vunpack.c.h.b16 %v694
  %v765 = vunpack.c.l.b16 %v695
  %v766 = vunpack.c.h.b16 %v695
  %v767 = vunpack.c.l.b16 %v696
  %v768 = vunpack.c.h.b16 %v696
  %v769 = vunpack.c.l.b16 %v697
  %v770 = vunpack.c.h.b16 %v697
  %v771 = vunpack.c.l.b16 %v698
  %v772 = vunpack.c.h.b16 %v698
  %v773 = vunpack.c.l.b16 %v699
  %v774 = vunpack.c.h.b16 %v699
  %v775 = vunpack.c.l.b16 %v700
  %v776 = vunpack.c.h.b16 %v700
  %v777 = vunpack.c.l.b16 %v701
  %v778 = vunpack.c.h.b16 %v701
  %v779 = vunpack.c.l.b16 %v702
  %v780 = vunpack.c.h.b16 %v702
  %v781 = vunpack.c.l.b16 %v703
  %v782 = vunpack.c.h.b16 %v703
  %v783 = vunpack.c.l.b16 %v704
  %v784 = vunpack.c.h.b16 %v704
  %v785 = vunpack.c.l.b16 %v705
  %v786 = vunpack.c.h.b16 %v705
  %v787 = vunpack.c.l.b16 %v706
  %v788 = vunpack.c.h.b16 %v706
  %v789 = vunpack.c.l.b16 %v707
  %v790 = vunpack.c.h.b16 %v707
  %v791 = vunpack.c.l.b16 %v708
  %v792 = vunpack.c.h.b16 %v708
  %v793 = vunpack.c.l.b16 %v709
  %v794 = vunpack.c.h.b16 %v709
  %v795 = vunpack.c.l.b16 %v710
  %v796 = vunpack.c.h.b16 %v710
  %v797 = vunpack.c.l.b16 %v711
  %v798 = vunpack.c.h.b16 %v711
  %v799 = vunpack.c.l.b16 %v712
  %v800 = vunpack.c.h.b16 %v712
  %v801 = vunpack.c.l.b16 %v713
  %v802 = vunpack.c.h.b16 %v713
  %v803 = vunpack.c.l.b16 %v714
  %v804 = vunpack.c.h.b16 %v714
  %v805 = vunpack.c.l.b16 %v715
  %v806 = vunpack.c.h.b16 %v715
  %v807 = vunpack.c.l.b16 %v716
  %v808 = vunpack.c.h.b16 %v716
  %v809 = vunpack.c.l.b16 %v717
  %v810 = vunpack.c.h.b16 %v717
  %v811 = vunpack.c.l.b16 %v718
  %v812 = vunpack.c.h.b16 %v718
  %v813 = vunpack.c.l.b16 %v719
  %v814 = vunpack.c.h.b16 %v719
  %v815 = vunpack.c.l.b16 %v720
  %v816 = vunpack.c.h.b16 %v720
  %v817 = vpack.c.b16 %v757, %v753
  %v818 = vpack.c.b16 %v758, %v754
  %v819 = vpack.c.b16 %v759, %v755
  %v820 = vpack.c.b16 %v760, %v756
  %v821 = vpack.c.b16 %v765, %v761
  %v822 = vpack.c.b16 %v766, %v762
  %v823 = vpack.c.b16 %v767, %v763
  %v824 = vpack.c.b16 %v768, %v764
  %v825 = vpack.c.b16 %v773, %v769
  %v826 = vpack.c.b16 %v774, %v770
  %v827 = vpack.c.b16 %v775, %v771
  %v828 = vpack.c.b16 %v776, %v772
  %v829 = vpack.c.b16 %v781, %v777
  %v830 = vpack.c.b16 %v782, %v778
  %v831 = vpack.c.b16 %v783, %v779
  %v832 = vpack.c.b16 %v784, %v780
  %v833 = vpack.c.b16 %v789, %v785
  %v834 = vpack.c.b16 %v790, %v786
  %v835 = vpack.c.b16 %v791, %v787
  %v836 = vpack.c.b16 %v792, %v788
  %v837 = vpack.c.b16 %v797, %v793
  %v838 = vpack.c.b16 %v798, %v794
  %v839 = vpack.c.b16 %v799, %v795
  %v840 = vpack.c.b16 %v800, %v796
  %v841 = vpack.c.b16 %v805, %v801
  %v842 = vpack.c.b16 %v806, %v802
  %v843 = vpack.c.b16 %v807, %v803
  %v844 = vpack.c.b16 %v808, %v804
  %v845 = vpack.c.b16 %v813, %v809
  %v846 = vpack.c.b16 %v814, %v810
  %v847 = vpack.c.b16 %v815, %v811
  %v848 = vpack.c.b16 %v816, %v812
  %881 = vmatpush.bf16.msra.mxu0 %v845
  %882 = vmatpush.bf16.msra.mxu0 %v841
  %883 = vmatpush.bf16.msra.mxu0 %v837
  %884 = vmatpush.bf16.msra.mxu0 %v833
  %885 = vmatpush.bf16.msra.mxu0 %v829
  %886 = vmatpush.bf16.msra.mxu0 %v825
  %887 = vmatpush.bf16.msra.mxu0 %v821
  %888 = vmatpush.bf16.msra.mxu0 %v817
  %889 = vmatmul.bf16.gmra.mxu0 0
  %v890 = vpop.f32.mrf.mxu0
  %v891 = vadd.f32 0.0, %v890
  %v892 = vpop.f32.mrf.mxu0
  %893 = vdwg.mxu0
  %894 = vmatpush.bf16.msra.mxu0 %v846
  %895 = vmatpush.bf16.msra.mxu0 %v842
  %896 = vmatpush.bf16.msra.mxu0 %v838
  %897 = vmatpush.bf16.msra.mxu0 %v834
  %898 = vmatpush.bf16.msra.mxu0 %v830
  %899 = vmatpush.bf16.msra.mxu0 %v826
  %900 = vmatpush.bf16.msra.mxu0 %v822
  %901 = vmatpush.bf16.msra.mxu0 %v818
  %902 = vmatmul.bf16.gmra.mxu0 0
  %v903 = vpop.f32.mrf.mxu0
  %v904 = vadd.f32 0.0, %v903
  %v905 = vpop.f32.mrf.mxu0
  %906 = vdwg.mxu0
  %907 = vmatpush.bf16.msra.mxu0 %v847
  %908 = vmatpush.bf16.msra.mxu0 %v843
  %909 = vmatpush.bf16.msra.mxu0 %v839
  %910 = vmatpush.bf16.msra.mxu0 %v835
  %911 = vmatpush.bf16.msra.mxu0 %v831
  %912 = vmatpush.bf16.msra.mxu0 %v827
  %913 = vmatpush.bf16.msra.mxu0 %v823
  %914 = vmatpush.bf16.msra.mxu0 %v819
  %915 = vmatmul.bf16.gmra.mxu0 0
  %v916 = vpop.f32.mrf.mxu0
  %v917 = vadd.f32 0.0, %v916
  %v918 = vpop.f32.mrf.mxu0
  %919 = vdwg.mxu0
  %920 = vmatpush.bf16.msra.mxu0 %v848
  %921 = vmatpush.bf16.msra.mxu0 %v844
  %922 = vmatpush.bf16.msra.mxu0 %v840
  %923 = vmatpush.bf16.msra.mxu0 %v836
  %924 = vmatpush.bf16.msra.mxu0 %v832
  %925 = vmatpush.bf16.msra.mxu0 %v828
  %926 = vmatpush.bf16.msra.mxu0 %v824
  %927 = vmatpush.bf16.msra.mxu0 %v820
  %928 = vmatmul.bf16.gmra.mxu0 0
  %v929 = vpop.f32.mrf.mxu0
  %v930 = vadd.f32 0.0, %v929
  %v931 = vpop.f32.mrf.mxu0
  %932 = vdwg.mxu0
  %v965 = vunpack.c.l.b16 %v656
  %v966 = vunpack.c.h.b16 %v656
  %v967 = vunpack.c.l.b16 %v657
  %v968 = vunpack.c.h.b16 %v657
  %v969 = vunpack.c.l.b16 %v658
  %v970 = vunpack.c.h.b16 %v658
  %v971 = vunpack.c.l.b16 %v659
  %v972 = vunpack.c.h.b16 %v659
  %v973 = vunpack.c.l.b16 %v660
  %v974 = vunpack.c.h.b16 %v660
  %v975 = vunpack.c.l.b16 %v661
  %v976 = vunpack.c.h.b16 %v661
  %v977 = vunpack.c.l.b16 %v662
  %v978 = vunpack.c.h.b16 %v662
  %v979 = vunpack.c.l.b16 %v663
  %v980 = vunpack.c.h.b16 %v663
  %v981 = vunpack.c.l.b16 %v664
  %v982 = vunpack.c.h.b16 %v664
  %v983 = vunpack.c.l.b16 %v665
  %v984 = vunpack.c.h.b16 %v665
  %v985 = vunpack.c.l.b16 %v666
  %v986 = vunpack.c.h.b16 %v666
  %v987 = vunpack.c.l.b16 %v667
  %v988 = vunpack.c.h.b16 %v667
  %v989 = vunpack.c.l.b16 %v668
  %v990 = vunpack.c.h.b16 %v668
  %v991 = vunpack.c.l.b16 %v669
  %v992 = vunpack.c.h.b16 %v669
  %v993 = vunpack.c.l.b16 %v670
  %v994 = vunpack.c.h.b16 %v670
  %v995 = vunpack.c.l.b16 %v671
  %v996 = vunpack.c.h.b16 %v671
  %v997 = vunpack.c.l.b16 %v672
  %v998 = vunpack.c.h.b16 %v672
  %v999 = vunpack.c.l.b16 %v673
  %v1000 = vunpack.c.h.b16 %v673
  %v1001 = vunpack.c.l.b16 %v674
  %v1002 = vunpack.c.h.b16 %v674
  %v1003 = vunpack.c.l.b16 %v675
  %v1004 = vunpack.c.h.b16 %v675
  %v1005 = vunpack.c.l.b16 %v676
  %v1006 = vunpack.c.h.b16 %v676
  %v1007 = vunpack.c.l.b16 %v677
  %v1008 = vunpack.c.h.b16 %v677
  %v1009 = vunpack.c.l.b16 %v678
  %v1010 = vunpack.c.h.b16 %v678
  %v1011 = vunpack.c.l.b16 %v679
  %v1012 = vunpack.c.h.b16 %v679
  %v1013 = vunpack.c.l.b16 %v680
  %v1014 = vunpack.c.h.b16 %v680
  %v1015 = vunpack.c.l.b16 %v681
  %v1016 = vunpack.c.h.b16 %v681
  %v1017 = vunpack.c.l.b16 %v682
  %v1018 = vunpack.c.h.b16 %v682
  %v1019 = vunpack.c.l.b16 %v683
  %v1020 = vunpack.c.h.b16 %v683
  %v1021 = vunpack.c.l.b16 %v684
  %v1022 = vunpack.c.h.b16 %v684
  %v1023 = vunpack.c.l.b16 %v685
  %v1024 = vunpack.c.h.b16 %v685
  %v1025 = vunpack.c.l.b16 %v686
  %v1026 = vunpack.c.h.b16 %v686
  %v1027 = vunpack.c.l.b16 %v687
  %v1028 = vunpack.c.h.b16 %v687
  %v1029 = vpack.c.b16 %v969, %v965
  %v1030 = vpack.c.b16 %v970, %v966
  %v1031 = vpack.c.b16 %v971, %v967
  %v1032 = vpack.c.b16 %v972, %v968
  %v1033 = vpack.c.b16 %v977, %v973
  %v1034 = vpack.c.b16 %v978, %v974
  %v1035 = vpack.c.b16 %v979, %v975
  %v1036 = vpack.c.b16 %v980, %v976
  %v1037 = vpack.c.b16 %v985, %v981
  %v1038 = vpack.c.b16 %v986, %v982
  %v1039 = vpack.c.b16 %v987, %v983
  %v1040 = vpack.c.b16 %v988, %v984
  %v1041 = vpack.c.b16 %v993, %v989
  %v1042 = vpack.c.b16 %v994, %v990
  %v1043 = vpack.c.b16 %v995, %v991
  %v1044 = vpack.c.b16 %v996, %v992
  %v1045 = vpack.c.b16 %v1001, %v997
  %v1046 = vpack.c.b16 %v1002, %v998
  %v1047 = vpack.c.b16 %v1003, %v999
  %v1048 = vpack.c.b16 %v1004, %v1000
  %v1049 = vpack.c.b16 %v1009, %v1005
  %v1050 = vpack.c.b16 %v1010, %v1006
  %v1051 = vpack.c.b16 %v1011, %v1007
  %v1052 = vpack.c.b16 %v1012, %v1008
  %v1053 = vpack.c.b16 %v1017, %v1013
  %v1054 = vpack.c.b16 %v1018, %v1014
  %v1055 = vpack.c.b16 %v1019, %v1015
  %v1056 = vpack.c.b16 %v1020, %v1016
  %v1057 = vpack.c.b16 %v1025, %v1021
  %v1058 = vpack.c.b16 %v1026, %v1022
  %v1059 = vpack.c.b16 %v1027, %v1023
  %v1060 = vpack.c.b16 %v1028, %v1024
  %1093 = vmatpush.bf16.msra.mxu0 %v1057
  %1094 = vmatpush.bf16.msra.mxu0 %v1053
  %1095 = vmatpush.bf16.msra.mxu0 %v1049
  %1096 = vmatpush.bf16.msra.mxu0 %v1045
  %1097 = vmatpush.bf16.msra.mxu0 %v1041
  %1098 = vmatpush.bf16.msra.mxu0 %v1037
  %1099 = vmatpush.bf16.msra.mxu0 %v1033
  %1100 = vmatpush.bf16.msra.mxu0 %v1029
  %1101 = vmatmul.bf16.gmra.mxu0 %v654
  %v1102 = vpop.f32.mrf.mxu0
  %v1103 = vadd.f32 %v891, %v1102
  %v1104 = vpop.f32.mrf.mxu0
  %1105 = vdwg.mxu0
  %1106 = vmatpush.bf16.msra.mxu0 %v1058
  %1107 = vmatpush.bf16.msra.mxu0 %v1054
  %1108 = vmatpush.bf16.msra.mxu0 %v1050
  %1109 = vmatpush.bf16.msra.mxu0 %v1046
  %1110 = vmatpush.bf16.msra.mxu0 %v1042
  %1111 = vmatpush.bf16.msra.mxu0 %v1038
  %1112 = vmatpush.bf16.msra.mxu0 %v1034
  %1113 = vmatpush.bf16.msra.mxu0 %v1030
  %1114 = vmatmul.bf16.gmra.mxu0 %v654
  %v1115 = vpop.f32.mrf.mxu0
  %v1116 = vadd.f32 %v904, %v1115
  %v1117 = vpop.f32.mrf.mxu0
  %1118 = vdwg.mxu0
  %1119 = vmatpush.bf16.msra.mxu0 %v1059
  %1120 = vmatpush.bf16.msra.mxu0 %v1055
  %1121 = vmatpush.bf16.msra.mxu0 %v1051
  %1122 = vmatpush.bf16.msra.mxu0 %v1047
  %1123 = vmatpush.bf16.msra.mxu0 %v1043
  %1124 = vmatpush.bf16.msra.mxu0 %v1039
  %1125 = vmatpush.bf16.msra.mxu0 %v1035
  %1126 = vmatpush.bf16.msra.mxu0 %v1031
  %1127 = vmatmul.bf16.gmra.mxu0 %v654
  %v1128 = vpop.f32.mrf.mxu0
  %v1129 = vadd.f32 %v917, %v1128
  %v1130 = vpop.f32.mrf.mxu0
  %1131 = vdwg.mxu0
  %1132 = vmatpush.bf16.msra.mxu0 %v1060
  %1133 = vmatpush.bf16.msra.mxu0 %v1056
  %1134 = vmatpush.bf16.msra.mxu0 %v1052
  %1135 = vmatpush.bf16.msra.mxu0 %v1048
  %1136 = vmatpush.bf16.msra.mxu0 %v1044
  %1137 = vmatpush.bf16.msra.mxu0 %v1040
  %1138 = vmatpush.bf16.msra.mxu0 %v1036
  %1139 = vmatpush.bf16.msra.mxu0 %v1032
  %1140 = vmatmul.bf16.gmra.mxu0 %v654
  %v1141 = vpop.f32.mrf.mxu0
  %v1142 = vadd.f32 %v930, %v1141
  %v1143 = vpop.f32.mrf.mxu0
  %1144 = vdwg.mxu0
  %v1145 = vadd.f32 %v1103, %v54
  %v1146 = vadd.f32 %v1116, %v55
  %v1147 = vadd.f32 %v1129, %v56
  %v1148 = vadd.f32 %v1142, %v57
  %v1149 = vxor.u32 %v1145, 2147483648
  %v1150 = vxor.u32 %v1146, 2147483648
  %v1151 = vxor.u32 %v1147, 2147483648
  %v1152 = vmul.f32 %v1149, 1.442695
  %v1153 = vpow.pop %v1152
  %v1154 = vmul.f32 %v1150, 1.442695
  %v1155 = vpow.pop %v1154
  %v1156 = vmul.f32 %v1151, 1.442695
  %v1157 = vpow.pop %v1156
  %v1158 = vadd.f32 %v1153, 1.0
  %v1159 = vadd.f32 %v1155, 1.0
  %v1160 = vadd.f32 %v1157, 1.0
  %v1161 = vrcp.pop %v1158
  %v1162 = vmul.f32 %v1158, %v1161
  %v1163 = vsub.f32 1.0, %v1162
  %v1164 = vmul.f32 %v1161, %v1163
  %v1165 = vadd.f32 %v1161, %v1164
  %vm1166 = vweird.f32 %v1158
  %vm1167 = vweird.f32 %v1161
  %vm1168 = vmor %vm1166, %vm1167
  %v1169 = vsel %vm1168, %v1161, %v1165
  %v1170 = vand.u32 2147483647, %v1158
  %vm1171 = vcmp.eq.f32.partialorder %v1170, 8.507059e+37
  %v1172 = vand.u32 %v1158, 2147483648
  %v1173 = vor.u32 1.1754944e-38, %v1172
  %v1174 = vsel %vm1171, %v1173, %v1169
  %v1175 = vmul.f32 1.0, %v1174
  %v1176 = vrcp.pop %v1159
  %v1177 = vmul.f32 %v1159, %v1176
  %v1178 = vsub.f32 1.0, %v1177
  %v1179 = vmul.f32 %v1176, %v1178
  %v1180 = vadd.f32 %v1176, %v1179
  %vm1181 = vweird.f32 %v1159
  %vm1182 = vweird.f32 %v1176
  %vm1183 = vmor %vm1181, %vm1182
  %v1184 = vsel %vm1183, %v1176, %v1180
  %v1185 = vand.u32 2147483647, %v1159
  %vm1186 = vcmp.eq.f32.partialorder %v1185, 8.507059e+37
  %v1187 = vand.u32 %v1159, 2147483648
  %v1188 = vor.u32 1.1754944e-38, %v1187
  %v1189 = vsel %vm1186, %v1188, %v1184
  %v1190 = vmul.f32 1.0, %v1189
  %v1191 = vrcp.pop %v1160
  %v1192 = vmul.f32 %v1160, %v1191
  %v1193 = vsub.f32 1.0, %v1192
  %v1194 = vmul.f32 %v1191, %v1193
  %v1195 = vadd.f32 %v1191, %v1194
  %vm1196 = vweird.f32 %v1160
  %vm1197 = vweird.f32 %v1191
  %vm1198 = vmor %vm1196, %vm1197
  %v1199 = vsel %vm1198, %v1191, %v1195
  %v1200 = vand.u32 2147483647, %v1160
  %vm1201 = vcmp.eq.f32.partialorder %v1200, 8.507059e+37
  %v1202 = vand.u32 %v1160, 2147483648
  %v1203 = vor.u32 1.1754944e-38, %v1202
  %v1204 = vsel %vm1201, %v1203, %v1199
  %v1205 = vmul.f32 1.0, %v1204
  %v1206 = vtanh.pop %v1148
  %v1207 = vmul.f32 %v1190, 0.0
  %v1208 = vmul.f32 %v1175, %v1206
  %v1209 = vadd.f32 %v1207, %v1208
  %v1210 = vtanh.pop %v1209
  %v1211 = vmul.f32 %v1205, %v1210
  %1212 = vmatpush.bf16.msra.mxu0 %v495
  %1213 = vmatpush.bf16.msra.mxu0 %v491
  %1214 = vmatpush.bf16.msra.mxu0 %v487
  %1215 = vmatpush.bf16.msra.mxu0 %v483
  %1216 = vmatpush.bf16.msra.mxu0 %v479
  %1217 = vmatpush.bf16.msra.mxu0 %v475
  %1218 = vmatpush.bf16.msra.mxu0 %v471
  %1219 = vmatpush.bf16.msra.mxu0 %v467
  %1220 = vmatmul.bf16.gmra.mxu0 %v654
  %v1221 = vpop.f32.mrf.mxu0
  %v1222 = vadd.f32 0.0, %v1221
  %v1223 = vpop.f32.mrf.mxu0
  %1224 = vdwg.mxu0
  %1225 = vmatpush.bf16.msra.mxu0 %v496
  %1226 = vmatpush.bf16.msra.mxu0 %v492
  %1227 = vmatpush.bf16.msra.mxu0 %v488
  %1228 = vmatpush.bf16.msra.mxu0 %v484
  %1229 = vmatpush.bf16.msra.mxu0 %v480
  %1230 = vmatpush.bf16.msra.mxu0 %v476
  %1231 = vmatpush.bf16.msra.mxu0 %v472
  %1232 = vmatpush.bf16.msra.mxu0 %v468
  %1233 = vmatmul.bf16.gmra.mxu0 %v654
  %v1234 = vpop.f32.mrf.mxu0
  %v1235 = vadd.f32 0.0, %v1234
  %v1236 = vpop.f32.mrf.mxu0
  %1237 = vdwg.mxu0
  %1238 = vmatpush.bf16.msra.mxu0 %v497
  %1239 = vmatpush.bf16.msra.mxu0 %v493
  %1240 = vmatpush.bf16.msra.mxu0 %v489
  %1241 = vmatpush.bf16.msra.mxu0 %v485
  %1242 = vmatpush.bf16.msra.mxu0 %v481
  %1243 = vmatpush.bf16.msra.mxu0 %v477
  %1244 = vmatpush.bf16.msra.mxu0 %v473
  %1245 = vmatpush.bf16.msra.mxu0 %v469
  %1246 = vmatmul.bf16.gmra.mxu0 %v654
  %v1247 = vpop.f32.mrf.mxu0
  %v1248 = vadd.f32 0.0, %v1247
  %v1249 = vpop.f32.mrf.mxu0
  %1250 = vdwg.mxu0
  %1251 = vmatpush.bf16.msra.mxu0 %v498
  %1252 = vmatpush.bf16.msra.mxu0 %v494
  %1253 = vmatpush.bf16.msra.mxu0 %v490
  %1254 = vmatpush.bf16.msra.mxu0 %v486
  %1255 = vmatpush.bf16.msra.mxu0 %v482
  %1256 = vmatpush.bf16.msra.mxu0 %v478
  %1257 = vmatpush.bf16.msra.mxu0 %v474
  %1258 = vmatpush.bf16.msra.mxu0 %v470
  %1259 = vmatmul.bf16.gmra.mxu0 %v654
  %v1260 = vpop.f32.mrf.mxu0
  %v1261 = vadd.f32 0.0, %v1260
  %v1262 = vpop.f32.mrf.mxu0
  %1263 = vdwg.mxu0
  %v1268 = vrot.slane %v1222, 4
  %v1269 = vrot.slane %v1235, 4
  %v1270 = vrot.slane %v1248, 4
  %v1271 = vrot.slane %v1261, 4
  %v1276 = vadd.f32 %v293, %v1268
  %v1277 = vadd.f32 %v307, %v1269
  %v1278 = vadd.f32 %v321, %v1270
  %v1279 = vadd.f32 %v335, %v1271
  %v1280 = vadd.f32 %v1276, %v43
  %v1281 = vadd.f32 %v1277, %v44
  %v1282 = vadd.f32 %v1278, %v45
  %v1283 = vadd.f32 %v1279, %v46
  %v1284 = vxor.u32 %v1280, 2147483648
  %v1285 = vxor.u32 %v1281, 2147483648
  %v1286 = vxor.u32 %v1282, 2147483648
  %v1287 = vmul.f32 %v1284, 1.442695
  %v1288 = vpow.pop %v1287
  %v1289 = vmul.f32 %v1285, 1.442695
  %v1290 = vpow.pop %v1289
  %v1291 = vmul.f32 %v1286, 1.442695
  %v1292 = vpow.pop %v1291
  %v1293 = vadd.f32 %v1288, 1.0
  %v1294 = vadd.f32 %v1290, 1.0
  %v1295 = vadd.f32 %v1292, 1.0
  %v1296 = vrcp.pop %v1293
  %v1297 = vmul.f32 %v1293, %v1296
  %v1298 = vsub.f32 1.0, %v1297
  %v1299 = vmul.f32 %v1296, %v1298
  %v1300 = vadd.f32 %v1296, %v1299
  %vm1301 = vweird.f32 %v1293
  %vm1302 = vweird.f32 %v1296
  %vm1303 = vmor %vm1301, %vm1302
  %v1304 = vsel %vm1303, %v1296, %v1300
  %v1305 = vand.u32 2147483647, %v1293
  %vm1306 = vcmp.eq.f32.partialorder %v1305, 8.507059e+37
  %v1307 = vand.u32 %v1293, 2147483648
  %v1308 = vor.u32 1.1754944e-38, %v1307
  %v1309 = vsel %vm1306, %v1308, %v1304
  %v1310 = vmul.f32 1.0, %v1309
  %v1311 = vrcp.pop %v1294
  %v1312 = vmul.f32 %v1294, %v1311
  %v1313 = vsub.f32 1.0, %v1312
  %v1314 = vmul.f32 %v1311, %v1313
  %v1315 = vadd.f32 %v1311, %v1314
  %vm1316 = vweird.f32 %v1294
  %vm1317 = vweird.f32 %v1311
  %vm1318 = vmor %vm1316, %vm1317
  %v1319 = vsel %vm1318, %v1311, %v1315
  %v1320 = vand.u32 2147483647, %v1294
  %vm1321 = vcmp.eq.f32.partialorder %v1320, 8.507059e+37
  %v1322 = vand.u32 %v1294, 2147483648
  %v1323 = vor.u32 1.1754944e-38, %v1322
  %v1324 = vsel %vm1321, %v1323, %v1319
  %v1325 = vmul.f32 1.0, %v1324
  %v1326 = vrcp.pop %v1295
  %v1327 = vmul.f32 %v1295, %v1326
  %v1328 = vsub.f32 1.0, %v1327
  %v1329 = vmul.f32 %v1326, %v1328
  %v1330 = vadd.f32 %v1326, %v1329
  %vm1331 = vweird.f32 %v1295
  %vm1332 = vweird.f32 %v1326
  %vm1333 = vmor %vm1331, %vm1332
  %v1334 = vsel %vm1333, %v1326, %v1330
  %v1335 = vand.u32 2147483647, %v1295
  %vm1336 = vcmp.eq.f32.partialorder %v1335, 8.507059e+37
  %v1337 = vand.u32 %v1295, 2147483648
  %v1338 = vor.u32 1.1754944e-38, %v1337
  %v1339 = vsel %vm1336, %v1338, %v1334
  %v1340 = vmul.f32 1.0, %v1339
  %v1341 = vtanh.pop %v1283
  %v1343 = vrot.slane %v651, 4
  %v1345 = vmul.f32 %v1325, %v1343
  %v1346 = vmul.f32 %v1310, %v1341
  %v1347 = vadd.f32 %v1345, %v1346
  %v1348 = vtanh.pop %v1347
  %v1349 = vmul.f32 %v1340, %v1348
  %v1350 = vpack.c.bf16 %v1349, %v1349
  %v1351 = vpack.c.bf16 %v1211, %v1211
  %1352 = vmatpush.bf16.msra.mxu0 %v845
  %1353 = vmatpush.bf16.msra.mxu0 %v841
  %1354 = vmatpush.bf16.msra.mxu0 %v837
  %1355 = vmatpush.bf16.msra.mxu0 %v833
  %1356 = vmatpush.bf16.msra.mxu0 %v829
  %1357 = vmatpush.bf16.msra.mxu0 %v825
  %1358 = vmatpush.bf16.msra.mxu0 %v821
  %1359 = vmatpush.bf16.msra.mxu0 %v817
  %1360 = vmatmul.bf16.gmra.mxu0 %v1351
  %v1361 = vpop.f32.mrf.mxu0
  %v1362 = vadd.f32 0.0, %v1361
  %v1363 = vpop.f32.mrf.mxu0
  %1364 = vdwg.mxu0
  %1365 = vmatpush.bf16.msra.mxu0 %v846
  %1366 = vmatpush.bf16.msra.mxu0 %v842
  %1367 = vmatpush.bf16.msra.mxu0 %v838
  %1368 = vmatpush.bf16.msra.mxu0 %v834
  %1369 = vmatpush.bf16.msra.mxu0 %v830
  %1370 = vmatpush.bf16.msra.mxu0 %v826
  %1371 = vmatpush.bf16.msra.mxu0 %v822
  %1372 = vmatpush.bf16.msra.mxu0 %v818
  %1373 = vmatmul.bf16.gmra.mxu0 %v1351
  %v1374 = vpop.f32.mrf.mxu0
  %v1375 = vadd.f32 0.0, %v1374
  %v1376 = vpop.f32.mrf.mxu0
  %1377 = vdwg.mxu0
  %1378 = vmatpush.bf16.msra.mxu0 %v847
  %1379 = vmatpush.bf16.msra.mxu0 %v843
  %1380 = vmatpush.bf16.msra.mxu0 %v839
  %1381 = vmatpush.bf16.msra.mxu0 %v835
  %1382 = vmatpush.bf16.msra.mxu0 %v831
  %1383 = vmatpush.bf16.msra.mxu0 %v827
  %1384 = vmatpush.bf16.msra.mxu0 %v823
  %1385 = vmatpush.bf16.msra.mxu0 %v819
  %1386 = vmatmul.bf16.gmra.mxu0 %v1351
  %v1387 = vpop.f32.mrf.mxu0
  %v1388 = vadd.f32 0.0, %v1387
  %v1389 = vpop.f32.mrf.mxu0
  %1390 = vdwg.mxu0
  %1391 = vmatpush.bf16.msra.mxu0 %v848
  %1392 = vmatpush.bf16.msra.mxu0 %v844
  %1393 = vmatpush.bf16.msra.mxu0 %v840
  %1394 = vmatpush.bf16.msra.mxu0 %v836
  %1395 = vmatpush.bf16.msra.mxu0 %v832
  %1396 = vmatpush.bf16.msra.mxu0 %v828
  %1397 = vmatpush.bf16.msra.mxu0 %v824
  %1398 = vmatpush.bf16.msra.mxu0 %v820
  %1399 = vmatmul.bf16.gmra.mxu0 %v1351
  %v1400 = vpop.f32.mrf.mxu0
  %v1401 = vadd.f32 0.0, %v1400
  %v1402 = vpop.f32.mrf.mxu0
  %1403 = vdwg.mxu0
  %v1405 = vrot.slane %v1350, 2
  %1407 = vmatpush.bf16.msra.mxu0 %v1057
  %1408 = vmatpush.bf16.msra.mxu0 %v1053
  %1409 = vmatpush.bf16.msra.mxu0 %v1049
  %1410 = vmatpush.bf16.msra.mxu0 %v1045
  %1411 = vmatpush.bf16.msra.mxu0 %v1041
  %1412 = vmatpush.bf16.msra.mxu0 %v1037
  %1413 = vmatpush.bf16.msra.mxu0 %v1033
  %1414 = vmatpush.bf16.msra.mxu0 %v1029
  %1415 = vmatmul.bf16.gmra.mxu0 %v1405
  %v1416 = vpop.f32.mrf.mxu0
  %v1417 = vadd.f32 %v1362, %v1416
  %v1418 = vpop.f32.mrf.mxu0
  %1419 = vdwg.mxu0
  %1420 = vmatpush.bf16.msra.mxu0 %v1058
  %1421 = vmatpush.bf16.msra.mxu0 %v1054
  %1422 = vmatpush.bf16.msra.mxu0 %v1050
  %1423 = vmatpush.bf16.msra.mxu0 %v1046
  %1424 = vmatpush.bf16.msra.mxu0 %v1042
  %1425 = vmatpush.bf16.msra.mxu0 %v1038
  %1426 = vmatpush.bf16.msra.mxu0 %v1034
  %1427 = vmatpush.bf16.msra.mxu0 %v1030
  %1428 = vmatmul.bf16.gmra.mxu0 %v1405
  %v1429 = vpop.f32.mrf.mxu0
  %v1430 = vadd.f32 %v1375, %v1429
  %v1431 = vpop.f32.mrf.mxu0
  %1432 = vdwg.mxu0
  %1433 = vmatpush.bf16.msra.mxu0 %v1059
  %1434 = vmatpush.bf16.msra.mxu0 %v1055
  %1435 = vmatpush.bf16.msra.mxu0 %v1051
  %1436 = vmatpush.bf16.msra.mxu0 %v1047
  %1437 = vmatpush.bf16.msra.mxu0 %v1043
  %1438 = vmatpush.bf16.msra.mxu0 %v1039
  %1439 = vmatpush.bf16.msra.mxu0 %v1035
  %1440 = vmatpush.bf16.msra.mxu0 %v1031
  %1441 = vmatmul.bf16.gmra.mxu0 %v1405
  %v1442 = vpop.f32.mrf.mxu0
  %v1443 = vadd.f32 %v1388, %v1442
  %v1444 = vpop.f32.mrf.mxu0
  %1445 = vdwg.mxu0
  %1446 = vmatpush.bf16.msra.mxu0 %v1060
  %1447 = vmatpush.bf16.msra.mxu0 %v1056
  %1448 = vmatpush.bf16.msra.mxu0 %v1052
  %1449 = vmatpush.bf16.msra.mxu0 %v1048
  %1450 = vmatpush.bf16.msra.mxu0 %v1044
  %1451 = vmatpush.bf16.msra.mxu0 %v1040
  %1452 = vmatpush.bf16.msra.mxu0 %v1036
  %1453 = vmatpush.bf16.msra.mxu0 %v1032
  %1454 = vmatmul.bf16.gmra.mxu0 %v1405
  %v1455 = vpop.f32.mrf.mxu0
  %v1456 = vadd.f32 %v1401, %v1455
  %v1457 = vpop.f32.mrf.mxu0
  %1458 = vdwg.mxu0
  %v1459 = vadd.f32 %v1417, %v54
  %v1460 = vadd.f32 %v1430, %v55
  %v1461 = vadd.f32 %v1443, %v56
  %v1462 = vadd.f32 %v1456, %v57
  %v1463 = vxor.u32 %v1459, 2147483648
  %v1464 = vxor.u32 %v1460, 2147483648
  %v1465 = vxor.u32 %v1461, 2147483648
  %v1466 = vmul.f32 %v1463, 1.442695
  %v1467 = vpow.pop %v1466
  %v1468 = vmul.f32 %v1464, 1.442695
  %v1469 = vpow.pop %v1468
  %v1470 = vmul.f32 %v1465, 1.442695
  %v1471 = vpow.pop %v1470
  %v1472 = vadd.f32 %v1467, 1.0
  %v1473 = vadd.f32 %v1469, 1.0
  %v1474 = vadd.f32 %v1471, 1.0
  %v1475 = vrcp.pop %v1472
  %v1476 = vmul.f32 %v1472, %v1475
  %v1477 = vsub.f32 1.0, %v1476
  %v1478 = vmul.f32 %v1475, %v1477
  %v1479 = vadd.f32 %v1475, %v1478
  %vm1480 = vweird.f32 %v1472
  %vm1481 = vweird.f32 %v1475
  %vm1482 = vmor %vm1480, %vm1481
  %v1483 = vsel %vm1482, %v1475, %v1479
  %v1484 = vand.u32 2147483647, %v1472
  %vm1485 = vcmp.eq.f32.partialorder %v1484, 8.507059e+37
  %v1486 = vand.u32 %v1472, 2147483648
  %v1487 = vor.u32 1.1754944e-38, %v1486
  %v1488 = vsel %vm1485, %v1487, %v1483
  %v1489 = vmul.f32 1.0, %v1488
  %v1490 = vrcp.pop %v1473
  %v1491 = vmul.f32 %v1473, %v1490
  %v1492 = vsub.f32 1.0, %v1491
  %v1493 = vmul.f32 %v1490, %v1492
  %v1494 = vadd.f32 %v1490, %v1493
  %vm1495 = vweird.f32 %v1473
  %vm1496 = vweird.f32 %v1490
  %vm1497 = vmor %vm1495, %vm1496
  %v1498 = vsel %vm1497, %v1490, %v1494
  %v1499 = vand.u32 2147483647, %v1473
  %vm1500 = vcmp.eq.f32.partialorder %v1499, 8.507059e+37
  %v1501 = vand.u32 %v1473, 2147483648
  %v1502 = vor.u32 1.1754944e-38, %v1501
  %v1503 = vsel %vm1500, %v1502, %v1498
  %v1504 = vmul.f32 1.0, %v1503
  %v1505 = vrcp.pop %v1474
  %v1506 = vmul.f32 %v1474, %v1505
  %v1507 = vsub.f32 1.0, %v1506
  %v1508 = vmul.f32 %v1505, %v1507
  %v1509 = vadd.f32 %v1505, %v1508
  %vm1510 = vweird.f32 %v1474
  %vm1511 = vweird.f32 %v1505
  %vm1512 = vmor %vm1510, %vm1511
  %v1513 = vsel %vm1512, %v1505, %v1509
  %v1514 = vand.u32 2147483647, %v1474
  %vm1515 = vcmp.eq.f32.partialorder %v1514, 8.507059e+37
  %v1516 = vand.u32 %v1474, 2147483648
  %v1517 = vor.u32 1.1754944e-38, %v1516
  %v1518 = vsel %vm1515, %v1517, %v1513
  %v1519 = vmul.f32 1.0, %v1518
  %v1520 = vtanh.pop %v1462
  %v1521 = vmul.f32 %v1504, %v1209
  %v1522 = vmul.f32 %v1489, %v1520
  %v1523 = vadd.f32 %v1521, %v1522
  %v1524 = vtanh.pop %v1523
  %v1525 = vmul.f32 %v1519, %v1524
  %1526 = vmatpush.bf16.msra.mxu0 %v495
  %1527 = vmatpush.bf16.msra.mxu0 %v491
  %1528 = vmatpush.bf16.msra.mxu0 %v487
  %1529 = vmatpush.bf16.msra.mxu0 %v483
  %1530 = vmatpush.bf16.msra.mxu0 %v479
  %1531 = vmatpush.bf16.msra.mxu0 %v475
  %1532 = vmatpush.bf16.msra.mxu0 %v471
  %1533 = vmatpush.bf16.msra.mxu0 %v467
  %1534 = vmatmul.bf16.gmra.mxu0 %v1405
  %v1535 = vpop.f32.mrf.mxu0
  %v1536 = vadd.f32 0.0, %v1535
  %v1537 = vpop.f32.mrf.mxu0
  %1538 = vdwg.mxu0
  %1539 = vmatpush.bf16.msra.mxu0 %v496
  %1540 = vmatpush.bf16.msra.mxu0 %v492
  %1541 = vmatpush.bf16.msra.mxu0 %v488
  %1542 = vmatpush.bf16.msra.mxu0 %v484
  %1543 = vmatpush.bf16.msra.mxu0 %v480
  %1544 = vmatpush.bf16.msra.mxu0 %v476
  %1545 = vmatpush.bf16.msra.mxu0 %v472
  %1546 = vmatpush.bf16.msra.mxu0 %v468
  %1547 = vmatmul.bf16.gmra.mxu0 %v1405
  %v1548 = vpop.f32.mrf.mxu0
  %v1549 = vadd.f32 0.0, %v1548
  %v1550 = vpop.f32.mrf.mxu0
  %1551 = vdwg.mxu0
  %1552 = vmatpush.bf16.msra.mxu0 %v497
  %1553 = vmatpush.bf16.msra.mxu0 %v493
  %1554 = vmatpush.bf16.msra.mxu0 %v489
  %1555 = vmatpush.bf16.msra.mxu0 %v485
  %1556 = vmatpush.bf16.msra.mxu0 %v481
  %1557 = vmatpush.bf16.msra.mxu0 %v477
  %1558 = vmatpush.bf16.msra.mxu0 %v473
  %1559 = vmatpush.bf16.msra.mxu0 %v469
  %1560 = vmatmul.bf16.gmra.mxu0 %v1405
  %v1561 = vpop.f32.mrf.mxu0
  %v1562 = vadd.f32 0.0, %v1561
  %v1563 = vpop.f32.mrf.mxu0
  %1564 = vdwg.mxu0
  %1565 = vmatpush.bf16.msra.mxu0 %v498
  %1566 = vmatpush.bf16.msra.mxu0 %v494
  %1567 = vmatpush.bf16.msra.mxu0 %v490
  %1568 = vmatpush.bf16.msra.mxu0 %v486
  %1569 = vmatpush.bf16.msra.mxu0 %v482
  %1570 = vmatpush.bf16.msra.mxu0 %v478
  %1571 = vmatpush.bf16.msra.mxu0 %v474
  %1572 = vmatpush.bf16.msra.mxu0 %v470
  %1573 = vmatmul.bf16.gmra.mxu0 %v1405
  %v1574 = vpop.f32.mrf.mxu0
  %v1575 = vadd.f32 0.0, %v1574
  %v1576 = vpop.f32.mrf.mxu0
  %1577 = vdwg.mxu0
  %v1578 = vadd.f32 %v295, %v1536
  %v1579 = vadd.f32 %v309, %v1549
  %v1580 = vadd.f32 %v323, %v1562
  %v1581 = vadd.f32 %v337, %v1575
  %v1582 = vadd.f32 %v1578, %v43
  %v1583 = vadd.f32 %v1579, %v44
  %v1584 = vadd.f32 %v1580, %v45
  %v1585 = vadd.f32 %v1581, %v46
  %v1586 = vxor.u32 %v1582, 2147483648
  %v1587 = vxor.u32 %v1583, 2147483648
  %v1588 = vxor.u32 %v1584, 2147483648
  %v1589 = vmul.f32 %v1586, 1.442695
  %v1590 = vpow.pop %v1589
  %v1591 = vmul.f32 %v1587, 1.442695
  %v1592 = vpow.pop %v1591
  %v1593 = vmul.f32 %v1588, 1.442695
  %v1594 = vpow.pop %v1593
  %v1595 = vadd.f32 %v1590, 1.0
  %v1596 = vadd.f32 %v1592, 1.0
  %v1597 = vadd.f32 %v1594, 1.0
  %v1598 = vrcp.pop %v1595
  %v1599 = vmul.f32 %v1595, %v1598
  %v1600 = vsub.f32 1.0, %v1599
  %v1601 = vmul.f32 %v1598, %v1600
  %v1602 = vadd.f32 %v1598, %v1601
  %vm1603 = vweird.f32 %v1595
  %vm1604 = vweird.f32 %v1598
  %vm1605 = vmor %vm1603, %vm1604
  %v1606 = vsel %vm1605, %v1598, %v1602
  %v1607 = vand.u32 2147483647, %v1595
  %vm1608 = vcmp.eq.f32.partialorder %v1607, 8.507059e+37
  %v1609 = vand.u32 %v1595, 2147483648
  %v1610 = vor.u32 1.1754944e-38, %v1609
  %v1611 = vsel %vm1608, %v1610, %v1606
  %v1612 = vmul.f32 1.0, %v1611
  %v1613 = vrcp.pop %v1596
  %v1614 = vmul.f32 %v1596, %v1613
  %v1615 = vsub.f32 1.0, %v1614
  %v1616 = vmul.f32 %v1613, %v1615
  %v1617 = vadd.f32 %v1613, %v1616
  %vm1618 = vweird.f32 %v1596
  %vm1619 = vweird.f32 %v1613
  %vm1620 = vmor %vm1618, %vm1619
  %v1621 = vsel %vm1620, %v1613, %v1617
  %v1622 = vand.u32 2147483647, %v1596
  %vm1623 = vcmp.eq.f32.partialorder %v1622, 8.507059e+37
  %v1624 = vand.u32 %v1596, 2147483648
  %v1625 = vor.u32 1.1754944e-38, %v1624
  %v1626 = vsel %vm1623, %v1625, %v1621
  %v1627 = vmul.f32 1.0, %v1626
  %v1628 = vrcp.pop %v1597
  %v1629 = vmul.f32 %v1597, %v1628
  %v1630 = vsub.f32 1.0, %v1629
  %v1631 = vmul.f32 %v1628, %v1630
  %v1632 = vadd.f32 %v1628, %v1631
  %vm1633 = vweird.f32 %v1597
  %vm1634 = vweird.f32 %v1628
  %vm1635 = vmor %vm1633, %vm1634
  %v1636 = vsel %vm1635, %v1628, %v1632
  %v1637 = vand.u32 2147483647, %v1597
  %vm1638 = vcmp.eq.f32.partialorder %v1637, 8.507059e+37
  %v1639 = vand.u32 %v1597, 2147483648
  %v1640 = vor.u32 1.1754944e-38, %v1639
  %v1641 = vsel %vm1638, %v1640, %v1636
  %v1642 = vmul.f32 1.0, %v1641
  %v1643 = vtanh.pop %v1585
  %v1645 = vrot.slane %v1347, 4
  %v1647 = vmul.f32 %v1627, %v1645
  %v1648 = vmul.f32 %v1612, %v1643
  %v1649 = vadd.f32 %v1647, %v1648
  %v1650 = vtanh.pop %v1649
  %v1651 = vmul.f32 %v1642, %v1650
  %v1652 = vpack.c.bf16 %v1651, %v1651
  %v1653 = vpack.c.bf16 %v1525, %v1525
  %1654 = vmatpush.bf16.msra.mxu0 %v845
  %1655 = vmatpush.bf16.msra.mxu0 %v841
  %1656 = vmatpush.bf16.msra.mxu0 %v837
  %1657 = vmatpush.bf16.msra.mxu0 %v833
  %1658 = vmatpush.bf16.msra.mxu0 %v829
  %1659 = vmatpush.bf16.msra.mxu0 %v825
  %1660 = vmatpush.bf16.msra.mxu0 %v821
  %1661 = vmatpush.bf16.msra.mxu0 %v817
  %1662 = vmatmul.bf16.gmra.mxu0 %v1653
  %v1663 = vpop.f32.mrf.mxu0
  %v1664 = vadd.f32 0.0, %v1663
  %v1665 = vpop.f32.mrf.mxu0
  %1666 = vdwg.mxu0
  %1667 = vmatpush.bf16.msra.mxu0 %v846
  %1668 = vmatpush.bf16.msra.mxu0 %v842
  %1669 = vmatpush.bf16.msra.mxu0 %v838
  %1670 = vmatpush.bf16.msra.mxu0 %v834
  %1671 = vmatpush.bf16.msra.mxu0 %v830
  %1672 = vmatpush.bf16.msra.mxu0 %v826
  %1673 = vmatpush.bf16.msra.mxu0 %v822
  %1674 = vmatpush.bf16.msra.mxu0 %v818
  %1675 = vmatmul.bf16.gmra.mxu0 %v1653
  %v1676 = vpop.f32.mrf.mxu0
  %v1677 = vadd.f32 0.0, %v1676
  %v1678 = vpop.f32.mrf.mxu0
  %1679 = vdwg.mxu0
  %1680 = vmatpush.bf16.msra.mxu0 %v847
  %1681 = vmatpush.bf16.msra.mxu0 %v843
  %1682 = vmatpush.bf16.msra.mxu0 %v839
  %1683 = vmatpush.bf16.msra.mxu0 %v835
  %1684 = vmatpush.bf16.msra.mxu0 %v831
  %1685 = vmatpush.bf16.msra.mxu0 %v827
  %1686 = vmatpush.bf16.msra.mxu0 %v823
  %1687 = vmatpush.bf16.msra.mxu0 %v819
  %1688 = vmatmul.bf16.gmra.mxu0 %v1653
  %v1689 = vpop.f32.mrf.mxu0
  %v1690 = vadd.f32 0.0, %v1689
  %v1691 = vpop.f32.mrf.mxu0
  %1692 = vdwg.mxu0
  %1693 = vmatpush.bf16.msra.mxu0 %v848
  %1694 = vmatpush.bf16.msra.mxu0 %v844
  %1695 = vmatpush.bf16.msra.mxu0 %v840
  %1696 = vmatpush.bf16.msra.mxu0 %v836
  %1697 = vmatpush.bf16.msra.mxu0 %v832
  %1698 = vmatpush.bf16.msra.mxu0 %v828
  %1699 = vmatpush.bf16.msra.mxu0 %v824
  %1700 = vmatpush.bf16.msra.mxu0 %v820
  %1701 = vmatmul.bf16.gmra.mxu0 %v1653
  %v1702 = vpop.f32.mrf.mxu0
  %v1703 = vadd.f32 0.0, %v1702
  %v1704 = vpop.f32.mrf.mxu0
  %1705 = vdwg.mxu0
  %1706 = vmatpush.bf16.msra.mxu0 %v1057
  %1707 = vmatpush.bf16.msra.mxu0 %v1053
  %1708 = vmatpush.bf16.msra.mxu0 %v1049
  %1709 = vmatpush.bf16.msra.mxu0 %v1045
  %1710 = vmatpush.bf16.msra.mxu0 %v1041
  %1711 = vmatpush.bf16.msra.mxu0 %v1037
  %1712 = vmatpush.bf16.msra.mxu0 %v1033
  %1713 = vmatpush.bf16.msra.mxu0 %v1029
  %1714 = vmatmul.bf16.gmra.mxu0 %v1652
  %v1715 = vpop.f32.mrf.mxu0
  %v1716 = vadd.f32 %v1664, %v1715
  %v1717 = vpop.f32.mrf.mxu0
  %1718 = vdwg.mxu0
  %1719 = vmatpush.bf16.msra.mxu0 %v1058
  %1720 = vmatpush.bf16.msra.mxu0 %v1054
  %1721 = vmatpush.bf16.msra.mxu0 %v1050
  %1722 = vmatpush.bf16.msra.mxu0 %v1046
  %1723 = vmatpush.bf16.msra.mxu0 %v1042
  %1724 = vmatpush.bf16.msra.mxu0 %v1038
  %1725 = vmatpush.bf16.msra.mxu0 %v1034
  %1726 = vmatpush.bf16.msra.mxu0 %v1030
  %1727 = vmatmul.bf16.gmra.mxu0 %v1652
  %v1728 = vpop.f32.mrf.mxu0
  %v1729 = vadd.f32 %v1677, %v1728
  %v1730 = vpop.f32.mrf.mxu0
  %1731 = vdwg.mxu0
  %1732 = vmatpush.bf16.msra.mxu0 %v1059
  %1733 = vmatpush.bf16.msra.mxu0 %v1055
  %1734 = vmatpush.bf16.msra.mxu0 %v1051
  %1735 = vmatpush.bf16.msra.mxu0 %v1047
  %1736 = vmatpush.bf16.msra.mxu0 %v1043
  %1737 = vmatpush.bf16.msra.mxu0 %v1039
  %1738 = vmatpush.bf16.msra.mxu0 %v1035
  %1739 = vmatpush.bf16.msra.mxu0 %v1031
  %1740 = vmatmul.bf16.gmra.mxu0 %v1652
  %v1741 = vpop.f32.mrf.mxu0
  %v1742 = vadd.f32 %v1690, %v1741
  %v1743 = vpop.f32.mrf.mxu0
  %1744 = vdwg.mxu0
  %1745 = vmatpush.bf16.msra.mxu0 %v1060
  %1746 = vmatpush.bf16.msra.mxu0 %v1056
  %1747 = vmatpush.bf16.msra.mxu0 %v1052
  %1748 = vmatpush.bf16.msra.mxu0 %v1048
  %1749 = vmatpush.bf16.msra.mxu0 %v1044
  %1750 = vmatpush.bf16.msra.mxu0 %v1040
  %1751 = vmatpush.bf16.msra.mxu0 %v1036
  %1752 = vmatpush.bf16.msra.mxu0 %v1032
  %1753 = vmatmul.bf16.gmra.mxu0 %v1652
  %v1754 = vpop.f32.mrf.mxu0
  %v1755 = vadd.f32 %v1703, %v1754
  %v1756 = vpop.f32.mrf.mxu0
  %1757 = vdwg.mxu0
  %v1758 = vadd.f32 %v1716, %v54
  %v1759 = vadd.f32 %v1729, %v55
  %v1760 = vadd.f32 %v1742, %v56
  %v1761 = vadd.f32 %v1755, %v57
  %v1762 = vxor.u32 %v1758, 2147483648
  %v1763 = vxor.u32 %v1759, 2147483648
  %v1764 = vxor.u32 %v1760, 2147483648
  %v1765 = vmul.f32 %v1762, 1.442695
  %v1766 = vpow.pop %v1765
  %v1767 = vmul.f32 %v1763, 1.442695
  %v1768 = vpow.pop %v1767
  %v1769 = vmul.f32 %v1764, 1.442695
  %v1770 = vpow.pop %v1769
  %v1771 = vadd.f32 %v1766, 1.0
  %v1772 = vadd.f32 %v1768, 1.0
  %v1773 = vadd.f32 %v1770, 1.0
  %v1774 = vrcp.pop %v1771
  %v1775 = vmul.f32 %v1771, %v1774
  %v1776 = vsub.f32 1.0, %v1775
  %v1777 = vmul.f32 %v1774, %v1776
  %v1778 = vadd.f32 %v1774, %v1777
  %vm1779 = vweird.f32 %v1771
  %vm1780 = vweird.f32 %v1774
  %vm1781 = vmor %vm1779, %vm1780
  %v1782 = vsel %vm1781, %v1774, %v1778
  %v1783 = vand.u32 2147483647, %v1771
  %vm1784 = vcmp.eq.f32.partialorder %v1783, 8.507059e+37
  %v1785 = vand.u32 %v1771, 2147483648
  %v1786 = vor.u32 1.1754944e-38, %v1785
  %v1787 = vsel %vm1784, %v1786, %v1782
  %v1788 = vmul.f32 1.0, %v1787
  %v1789 = vrcp.pop %v1772
  %v1790 = vmul.f32 %v1772, %v1789
  %v1791 = vsub.f32 1.0, %v1790
  %v1792 = vmul.f32 %v1789, %v1791
  %v1793 = vadd.f32 %v1789, %v1792
  %vm1794 = vweird.f32 %v1772
  %vm1795 = vweird.f32 %v1789
  %vm1796 = vmor %vm1794, %vm1795
  %v1797 = vsel %vm1796, %v1789, %v1793
  %v1798 = vand.u32 2147483647, %v1772
  %vm1799 = vcmp.eq.f32.partialorder %v1798, 8.507059e+37
  %v1800 = vand.u32 %v1772, 2147483648
  %v1801 = vor.u32 1.1754944e-38, %v1800
  %v1802 = vsel %vm1799, %v1801, %v1797
  %v1803 = vmul.f32 1.0, %v1802
  %v1804 = vrcp.pop %v1773
  %v1805 = vmul.f32 %v1773, %v1804
  %v1806 = vsub.f32 1.0, %v1805
  %v1807 = vmul.f32 %v1804, %v1806
  %v1808 = vadd.f32 %v1804, %v1807
  %vm1809 = vweird.f32 %v1773
  %vm1810 = vweird.f32 %v1804
  %vm1811 = vmor %vm1809, %vm1810
  %v1812 = vsel %vm1811, %v1804, %v1808
  %v1813 = vand.u32 2147483647, %v1773
  %vm1814 = vcmp.eq.f32.partialorder %v1813, 8.507059e+37
  %v1815 = vand.u32 %v1773, 2147483648
  %v1816 = vor.u32 1.1754944e-38, %v1815
  %v1817 = vsel %vm1814, %v1816, %v1812
  %v1818 = vmul.f32 1.0, %v1817
  %v1819 = vtanh.pop %v1761
  %v1820 = vmul.f32 %v1803, %v1523
  %v1821 = vmul.f32 %v1788, %v1819
  %v1822 = vadd.f32 %v1820, %v1821
  %v1823 = vtanh.pop %v1822
  %v1824 = vmul.f32 %v1818, %v1823
  %1825 = vmatpush.bf16.msra.mxu0 %v495
  %1826 = vmatpush.bf16.msra.mxu0 %v491
  %1827 = vmatpush.bf16.msra.mxu0 %v487
  %1828 = vmatpush.bf16.msra.mxu0 %v483
  %1829 = vmatpush.bf16.msra.mxu0 %v479
  %1830 = vmatpush.bf16.msra.mxu0 %v475
  %1831 = vmatpush.bf16.msra.mxu0 %v471
  %1832 = vmatpush.bf16.msra.mxu0 %v467
  %1833 = vmatmul.bf16.gmra.mxu0 %v1652
  %v1834 = vpop.f32.mrf.mxu0
  %v1835 = vadd.f32 0.0, %v1834
  %v1836 = vpop.f32.mrf.mxu0
  %1837 = vdwg.mxu0
  %1838 = vmatpush.bf16.msra.mxu0 %v496
  %1839 = vmatpush.bf16.msra.mxu0 %v492
  %1840 = vmatpush.bf16.msra.mxu0 %v488
  %1841 = vmatpush.bf16.msra.mxu0 %v484
  %1842 = vmatpush.bf16.msra.mxu0 %v480
  %1843 = vmatpush.bf16.msra.mxu0 %v476
  %1844 = vmatpush.bf16.msra.mxu0 %v472
  %1845 = vmatpush.bf16.msra.mxu0 %v468
  %1846 = vmatmul.bf16.gmra.mxu0 %v1652
  %v1847 = vpop.f32.mrf.mxu0
  %v1848 = vadd.f32 0.0, %v1847
  %v1849 = vpop.f32.mrf.mxu0
  %1850 = vdwg.mxu0
  %1851 = vmatpush.bf16.msra.mxu0 %v497
  %1852 = vmatpush.bf16.msra.mxu0 %v493
  %1853 = vmatpush.bf16.msra.mxu0 %v489
  %1854 = vmatpush.bf16.msra.mxu0 %v485
  %1855 = vmatpush.bf16.msra.mxu0 %v481
  %1856 = vmatpush.bf16.msra.mxu0 %v477
  %1857 = vmatpush.bf16.msra.mxu0 %v473
  %1858 = vmatpush.bf16.msra.mxu0 %v469
  %1859 = vmatmul.bf16.gmra.mxu0 %v1652
  %v1860 = vpop.f32.mrf.mxu0
  %v1861 = vadd.f32 0.0, %v1860
  %v1862 = vpop.f32.mrf.mxu0
  %1863 = vdwg.mxu0
  %1864 = vmatpush.bf16.msra.mxu0 %v498
  %1865 = vmatpush.bf16.msra.mxu0 %v494
  %1866 = vmatpush.bf16.msra.mxu0 %v490
  %1867 = vmatpush.bf16.msra.mxu0 %v486
  %1868 = vmatpush.bf16.msra.mxu0 %v482
  %1869 = vmatpush.bf16.msra.mxu0 %v478
  %1870 = vmatpush.bf16.msra.mxu0 %v474
  %1871 = vmatpush.bf16.msra.mxu0 %v470
  %1872 = vmatmul.bf16.gmra.mxu0 %v1652
  %v1873 = vpop.f32.mrf.mxu0
  %v1874 = vadd.f32 0.0, %v1873
  %v1875 = vpop.f32.mrf.mxu0
  %1876 = vdwg.mxu0
  %v1881 = vrot.slane %v1835, 4
  %v1882 = vrot.slane %v1848, 4
  %v1883 = vrot.slane %v1861, 4
  %v1884 = vrot.slane %v1874, 4
  %v1889 = vadd.f32 %v295, %v1881
  %v1890 = vadd.f32 %v309, %v1882
  %v1891 = vadd.f32 %v323, %v1883
  %v1892 = vadd.f32 %v337, %v1884
  %v1893 = vadd.f32 %v1889, %v43
  %v1894 = vadd.f32 %v1890, %v44
  %v1895 = vadd.f32 %v1891, %v45
  %v1896 = vadd.f32 %v1892, %v46
  %v1897 = vxor.u32 %v1893, 2147483648
  %v1898 = vxor.u32 %v1894, 2147483648
  %v1899 = vxor.u32 %v1895, 2147483648
  %v1900 = vmul.f32 %v1897, 1.442695
  %v1901 = vpow.pop %v1900
  %v1902 = vmul.f32 %v1898, 1.442695
  %v1903 = vpow.pop %v1902
  %v1904 = vmul.f32 %v1899, 1.442695
  %v1905 = vpow.pop %v1904
  %v1906 = vadd.f32 %v1901, 1.0
  %v1907 = vadd.f32 %v1903, 1.0
  %v1908 = vadd.f32 %v1905, 1.0
  %v1909 = vrcp.pop %v1906
  %v1910 = vmul.f32 %v1906, %v1909
  %v1911 = vsub.f32 1.0, %v1910
  %v1912 = vmul.f32 %v1909, %v1911
  %v1913 = vadd.f32 %v1909, %v1912
  %vm1914 = vweird.f32 %v1906
  %vm1915 = vweird.f32 %v1909
  %vm1916 = vmor %vm1914, %vm1915
  %v1917 = vsel %vm1916, %v1909, %v1913
  %v1918 = vand.u32 2147483647, %v1906
  %vm1919 = vcmp.eq.f32.partialorder %v1918, 8.507059e+37
  %v1920 = vand.u32 %v1906, 2147483648
  %v1921 = vor.u32 1.1754944e-38, %v1920
  %v1922 = vsel %vm1919, %v1921, %v1917
  %v1923 = vmul.f32 1.0, %v1922
  %v1924 = vrcp.pop %v1907
  %v1925 = vmul.f32 %v1907, %v1924
  %v1926 = vsub.f32 1.0, %v1925
  %v1927 = vmul.f32 %v1924, %v1926
  %v1928 = vadd.f32 %v1924, %v1927
  %vm1929 = vweird.f32 %v1907
  %vm1930 = vweird.f32 %v1924
  %vm1931 = vmor %vm1929, %vm1930
  %v1932 = vsel %vm1931, %v1924, %v1928
  %v1933 = vand.u32 2147483647, %v1907
  %vm1934 = vcmp.eq.f32.partialorder %v1933, 8.507059e+37
  %v1935 = vand.u32 %v1907, 2147483648
  %v1936 = vor.u32 1.1754944e-38, %v1935
  %v1937 = vsel %vm1934, %v1936, %v1932
  %v1938 = vmul.f32 1.0, %v1937
  %v1939 = vrcp.pop %v1908
  %v1940 = vmul.f32 %v1908, %v1939
  %v1941 = vsub.f32 1.0, %v1940
  %v1942 = vmul.f32 %v1939, %v1941
  %v1943 = vadd.f32 %v1939, %v1942
  %vm1944 = vweird.f32 %v1908
  %vm1945 = vweird.f32 %v1939
  %vm1946 = vmor %vm1944, %vm1945
  %v1947 = vsel %vm1946, %v1939, %v1943
  %v1948 = vand.u32 2147483647, %v1908
  %vm1949 = vcmp.eq.f32.partialorder %v1948, 8.507059e+37
  %v1950 = vand.u32 %v1908, 2147483648
  %v1951 = vor.u32 1.1754944e-38, %v1950
  %v1952 = vsel %vm1949, %v1951, %v1947
  %v1953 = vmul.f32 1.0, %v1952
  %v1954 = vtanh.pop %v1896
  %v1956 = vrot.slane %v1649, 4
  %v1958 = vmul.f32 %v1938, %v1956
  %v1959 = vmul.f32 %v1923, %v1954
  %v1960 = vadd.f32 %v1958, %v1959
  %v1961 = vtanh.pop %v1960
  %v1962 = vmul.f32 %v1953, %v1961
  %v1963 = vpack.c.bf16 %v1962, %v1962
  %v1964 = vpack.c.bf16 %v1824, %v1824
  %1965 = vmatpush.bf16.msra.mxu0 %v845
  %1966 = vmatpush.bf16.msra.mxu0 %v841
  %1967 = vmatpush.bf16.msra.mxu0 %v837
  %1968 = vmatpush.bf16.msra.mxu0 %v833
  %1969 = vmatpush.bf16.msra.mxu0 %v829
  %1970 = vmatpush.bf16.msra.mxu0 %v825
  %1971 = vmatpush.bf16.msra.mxu0 %v821
  %1972 = vmatpush.bf16.msra.mxu0 %v817
  %1973 = vmatmul.bf16.gmra.mxu0 %v1964
  %v1974 = vpop.f32.mrf.mxu0
  %v1975 = vadd.f32 0.0, %v1974
  %v1976 = vpop.f32.mrf.mxu0
  %1977 = vdwg.mxu0
  %1978 = vmatpush.bf16.msra.mxu0 %v846
  %1979 = vmatpush.bf16.msra.mxu0 %v842
  %1980 = vmatpush.bf16.msra.mxu0 %v838
  %1981 = vmatpush.bf16.msra.mxu0 %v834
  %1982 = vmatpush.bf16.msra.mxu0 %v830
  %1983 = vmatpush.bf16.msra.mxu0 %v826
  %1984 = vmatpush.bf16.msra.mxu0 %v822
  %1985 = vmatpush.bf16.msra.mxu0 %v818
  %1986 = vmatmul.bf16.gmra.mxu0 %v1964
  %v1987 = vpop.f32.mrf.mxu0
  %v1988 = vadd.f32 0.0, %v1987
  %v1989 = vpop.f32.mrf.mxu0
  %1990 = vdwg.mxu0
  %1991 = vmatpush.bf16.msra.mxu0 %v847
  %1992 = vmatpush.bf16.msra.mxu0 %v843
  %1993 = vmatpush.bf16.msra.mxu0 %v839
  %1994 = vmatpush.bf16.msra.mxu0 %v835
  %1995 = vmatpush.bf16.msra.mxu0 %v831
  %1996 = vmatpush.bf16.msra.mxu0 %v827
  %1997 = vmatpush.bf16.msra.mxu0 %v823
  %1998 = vmatpush.bf16.msra.mxu0 %v819
  %1999 = vmatmul.bf16.gmra.mxu0 %v1964
  %v2000 = vpop.f32.mrf.mxu0
  %v2001 = vadd.f32 0.0, %v2000
  %v2002 = vpop.f32.mrf.mxu0
  %2003 = vdwg.mxu0
  %2004 = vmatpush.bf16.msra.mxu0 %v848
  %2005 = vmatpush.bf16.msra.mxu0 %v844
  %2006 = vmatpush.bf16.msra.mxu0 %v840
  %2007 = vmatpush.bf16.msra.mxu0 %v836
  %2008 = vmatpush.bf16.msra.mxu0 %v832
  %2009 = vmatpush.bf16.msra.mxu0 %v828
  %2010 = vmatpush.bf16.msra.mxu0 %v824
  %2011 = vmatpush.bf16.msra.mxu0 %v820
  %2012 = vmatmul.bf16.gmra.mxu0 %v1964
  %v2013 = vpop.f32.mrf.mxu0
  %v2014 = vadd.f32 0.0, %v2013
  %v2015 = vpop.f32.mrf.mxu0
  %2016 = vdwg.mxu0
  %v2018 = vrot.slane %v1963, 2
  %2020 = vmatpush.bf16.msra.mxu0 %v1057
  %2021 = vmatpush.bf16.msra.mxu0 %v1053
  %2022 = vmatpush.bf16.msra.mxu0 %v1049
  %2023 = vmatpush.bf16.msra.mxu0 %v1045
  %2024 = vmatpush.bf16.msra.mxu0 %v1041
  %2025 = vmatpush.bf16.msra.mxu0 %v1037
  %2026 = vmatpush.bf16.msra.mxu0 %v1033
  %2027 = vmatpush.bf16.msra.mxu0 %v1029
  %2028 = vmatmul.bf16.gmra.mxu0 %v2018
  %v2029 = vpop.f32.mrf.mxu0
  %v2030 = vadd.f32 %v1975, %v2029
  %v2031 = vpop.f32.mrf.mxu0
  %2032 = vdwg.mxu0
  %2033 = vmatpush.bf16.msra.mxu0 %v1058
  %2034 = vmatpush.bf16.msra.mxu0 %v1054
  %2035 = vmatpush.bf16.msra.mxu0 %v1050
  %2036 = vmatpush.bf16.msra.mxu0 %v1046
  %2037 = vmatpush.bf16.msra.mxu0 %v1042
  %2038 = vmatpush.bf16.msra.mxu0 %v1038
  %2039 = vmatpush.bf16.msra.mxu0 %v1034
  %2040 = vmatpush.bf16.msra.mxu0 %v1030
  %2041 = vmatmul.bf16.gmra.mxu0 %v2018
  %v2042 = vpop.f32.mrf.mxu0
  %v2043 = vadd.f32 %v1988, %v2042
  %v2044 = vpop.f32.mrf.mxu0
  %2045 = vdwg.mxu0
  %2046 = vmatpush.bf16.msra.mxu0 %v1059
  %2047 = vmatpush.bf16.msra.mxu0 %v1055
  %2048 = vmatpush.bf16.msra.mxu0 %v1051
  %2049 = vmatpush.bf16.msra.mxu0 %v1047
  %2050 = vmatpush.bf16.msra.mxu0 %v1043
  %2051 = vmatpush.bf16.msra.mxu0 %v1039
  %2052 = vmatpush.bf16.msra.mxu0 %v1035
  %2053 = vmatpush.bf16.msra.mxu0 %v1031
  %2054 = vmatmul.bf16.gmra.mxu0 %v2018
  %v2055 = vpop.f32.mrf.mxu0
  %v2056 = vadd.f32 %v2001, %v2055
  %v2057 = vpop.f32.mrf.mxu0
  %2058 = vdwg.mxu0
  %2059 = vmatpush.bf16.msra.mxu0 %v1060
  %2060 = vmatpush.bf16.msra.mxu0 %v1056
  %2061 = vmatpush.bf16.msra.mxu0 %v1052
  %2062 = vmatpush.bf16.msra.mxu0 %v1048
  %2063 = vmatpush.bf16.msra.mxu0 %v1044
  %2064 = vmatpush.bf16.msra.mxu0 %v1040
  %2065 = vmatpush.bf16.msra.mxu0 %v1036
  %2066 = vmatpush.bf16.msra.mxu0 %v1032
  %2067 = vmatmul.bf16.gmra.mxu0 %v2018
  %v2068 = vpop.f32.mrf.mxu0
  %v2069 = vadd.f32 %v2014, %v2068
  %v2070 = vpop.f32.mrf.mxu0
  %2071 = vdwg.mxu0
  %v2072 = vadd.f32 %v2030, %v54
  %v2073 = vadd.f32 %v2043, %v55
  %v2074 = vadd.f32 %v2056, %v56
  %v2075 = vadd.f32 %v2069, %v57
  %v2076 = vxor.u32 %v2072, 2147483648
  %v2077 = vxor.u32 %v2073, 2147483648
  %v2078 = vxor.u32 %v2074, 2147483648
  %v2079 = vmul.f32 %v2076, 1.442695
  %v2080 = vpow.pop %v2079
  %v2081 = vmul.f32 %v2077, 1.442695
  %v2082 = vpow.pop %v2081
  %v2083 = vmul.f32 %v2078, 1.442695
  %v2084 = vpow.pop %v2083
  %v2085 = vadd.f32 %v2080, 1.0
  %v2086 = vadd.f32 %v2082, 1.0
  %v2087 = vadd.f32 %v2084, 1.0
  %v2088 = vrcp.pop %v2085
  %v2089 = vmul.f32 %v2085, %v2088
  %v2090 = vsub.f32 1.0, %v2089
  %v2091 = vmul.f32 %v2088, %v2090
  %v2092 = vadd.f32 %v2088, %v2091
  %vm2093 = vweird.f32 %v2085
  %vm2094 = vweird.f32 %v2088
  %vm2095 = vmor %vm2093, %vm2094
  %v2096 = vsel %vm2095, %v2088, %v2092
  %v2097 = vand.u32 2147483647, %v2085
  %vm2098 = vcmp.eq.f32.partialorder %v2097, 8.507059e+37
  %v2099 = vand.u32 %v2085, 2147483648
  %v2100 = vor.u32 1.1754944e-38, %v2099
  %v2101 = vsel %vm2098, %v2100, %v2096
  %v2102 = vmul.f32 1.0, %v2101
  %v2103 = vrcp.pop %v2086
  %v2104 = vmul.f32 %v2086, %v2103
  %v2105 = vsub.f32 1.0, %v2104
  %v2106 = vmul.f32 %v2103, %v2105
  %v2107 = vadd.f32 %v2103, %v2106
  %vm2108 = vweird.f32 %v2086
  %vm2109 = vweird.f32 %v2103
  %vm2110 = vmor %vm2108, %vm2109
  %v2111 = vsel %vm2110, %v2103, %v2107
  %v2112 = vand.u32 2147483647, %v2086
  %vm2113 = vcmp.eq.f32.partialorder %v2112, 8.507059e+37
  %v2114 = vand.u32 %v2086, 2147483648
  %v2115 = vor.u32 1.1754944e-38, %v2114
  %v2116 = vsel %vm2113, %v2115, %v2111
  %v2117 = vmul.f32 1.0, %v2116
  %v2118 = vrcp.pop %v2087
  %v2119 = vmul.f32 %v2087, %v2118
  %v2120 = vsub.f32 1.0, %v2119
  %v2121 = vmul.f32 %v2118, %v2120
  %v2122 = vadd.f32 %v2118, %v2121
  %vm2123 = vweird.f32 %v2087
  %vm2124 = vweird.f32 %v2118
  %vm2125 = vmor %vm2123, %vm2124
  %v2126 = vsel %vm2125, %v2118, %v2122
  %v2127 = vand.u32 2147483647, %v2087
  %vm2128 = vcmp.eq.f32.partialorder %v2127, 8.507059e+37
  %v2129 = vand.u32 %v2087, 2147483648
  %v2130 = vor.u32 1.1754944e-38, %v2129
  %v2131 = vsel %vm2128, %v2130, %v2126
  %v2132 = vmul.f32 1.0, %v2131
  %v2133 = vtanh.pop %v2075
  %v2134 = vmul.f32 %v2117, %v1822
  %v2135 = vmul.f32 %v2102, %v2133
  %v2136 = vadd.f32 %v2134, %v2135
  %v2137 = vtanh.pop %v2136
  %v2138 = vmul.f32 %v2132, %v2137
  %v2139 = vld [vmem:[%s1] sm:$0xf]
  %v2140 = vld [vmem:[%s1 + $0x4] sm:$0xf]
  %v2141 = vld [vmem:[%s4] sm:$0xff]
  %v2142 = vld [vmem:[%s4 + $0x8] sm:$0xff]
  %v2143 = vld [vmem:[%s4 + $0x10] sm:$0xff]
  %v2144 = vld [vmem:[%s4 + $0x18] sm:$0xff]
  %v2145 = vld [vmem:[%s4 + $0x20] sm:$0xff]
  %v2146 = vld [vmem:[%s4 + $0x28] sm:$0xff]
  %v2147 = vld [vmem:[%s4 + $0x30] sm:$0xff]
  %v2148 = vld [vmem:[%s4 + $0x38] sm:$0xff]
  %v2149 = vld [vmem:[%s4 + $0x40] sm:$0xff]
  %v2150 = vld [vmem:[%s4 + $0x48] sm:$0xff]
  %v2151 = vld [vmem:[%s4 + $0x50] sm:$0xff]
  %v2152 = vld [vmem:[%s4 + $0x58] sm:$0xff]
  %v2153 = vld [vmem:[%s4 + $0x60] sm:$0xff]
  %v2154 = vld [vmem:[%s4 + $0x68] sm:$0xff]
  %v2155 = vld [vmem:[%s4 + $0x70] sm:$0xff]
  %v2156 = vld [vmem:[%s4 + $0x78] sm:$0xff]
  %v2157 = vld [vmem:[%s4 + $0x80] sm:$0xff]
  %v2158 = vld [vmem:[%s4 + $0x88] sm:$0xff]
  %v2159 = vld [vmem:[%s4 + $0x90] sm:$0xff]
  %v2160 = vld [vmem:[%s4 + $0x98] sm:$0xff]
  %v2161 = vld [vmem:[%s4 + $0xa0] sm:$0xff]
  %v2162 = vld [vmem:[%s4 + $0xa8] sm:$0xff]
  %v2163 = vld [vmem:[%s4 + $0xb0] sm:$0xff]
  %v2164 = vld [vmem:[%s4 + $0xb8] sm:$0xff]
  %v2165 = vld [vmem:[%s4 + $0xc0] sm:$0xff]
  %v2166 = vld [vmem:[%s4 + $0xc8] sm:$0xff]
  %v2167 = vld [vmem:[%s4 + $0xd0] sm:$0xff]
  %v2168 = vld [vmem:[%s4 + $0xd8] sm:$0xff]
  %v2169 = vld [vmem:[%s4 + $0xe0] sm:$0xff]
  %v2170 = vld [vmem:[%s4 + $0xe8] sm:$0xff]
  %v2171 = vld [vmem:[%s4 + $0xf0] sm:$0xff]
  %v2172 = vld [vmem:[%s4 + $0xf8] sm:$0xff]
  %v2175 = vunpack.c.l.b16 %v2139
  %v2176 = vunpack.c.l.b16 %v2140
  %v2177 = vpack.c.b16 %v2176, %v2175
  %v2211 = vunpack.c.l.b16 %v2141
  %v2212 = vunpack.c.h.b16 %v2141
  %v2213 = vunpack.c.l.b16 %v2142
  %v2214 = vunpack.c.h.b16 %v2142
  %v2215 = vunpack.c.l.b16 %v2143
  %v2216 = vunpack.c.h.b16 %v2143
  %v2217 = vunpack.c.l.b16 %v2144
  %v2218 = vunpack.c.h.b16 %v2144
  %v2219 = vunpack.c.l.b16 %v2145
  %v2220 = vunpack.c.h.b16 %v2145
  %v2221 = vunpack.c.l.b16 %v2146
  %v2222 = vunpack.c.h.b16 %v2146
  %v2223 = vunpack.c.l.b16 %v2147
  %v2224 = vunpack.c.h.b16 %v2147
  %v2225 = vunpack.c.l.b16 %v2148
  %v2226 = vunpack.c.h.b16 %v2148
  %v2227 = vunpack.c.l.b16 %v2149
  %v2228 = vunpack.c.h.b16 %v2149
  %v2229 = vunpack.c.l.b16 %v2150
  %v2230 = vunpack.c.h.b16 %v2150
  %v2231 = vunpack.c.l.b16 %v2151
  %v2232 = vunpack.c.h.b16 %v2151
  %v2233 = vunpack.c.l.b16 %v2152
  %v2234 = vunpack.c.h.b16 %v2152
  %v2235 = vunpack.c.l.b16 %v2153
  %v2236 = vunpack.c.h.b16 %v2153
  %v2237 = vunpack.c.l.b16 %v2154
  %v2238 = vunpack.c.h.b16 %v2154
  %v2239 = vunpack.c.l.b16 %v2155
  %v2240 = vunpack.c.h.b16 %v2155
  %v2241 = vunpack.c.l.b16 %v2156
  %v2242 = vunpack.c.h.b16 %v2156
  %v2243 = vunpack.c.l.b16 %v2157
  %v2244 = vunpack.c.h.b16 %v2157
  %v2245 = vunpack.c.l.b16 %v2158
  %v2246 = vunpack.c.h.b16 %v2158
  %v2247 = vunpack.c.l.b16 %v2159
  %v2248 = vunpack.c.h.b16 %v2159
  %v2249 = vunpack.c.l.b16 %v2160
  %v2250 = vunpack.c.h.b16 %v2160
  %v2251 = vunpack.c.l.b16 %v2161
  %v2252 = vunpack.c.h.b16 %v2161
  %v2253 = vunpack.c.l.b16 %v2162
  %v2254 = vunpack.c.h.b16 %v2162
  %v2255 = vunpack.c.l.b16 %v2163
  %v2256 = vunpack.c.h.b16 %v2163
  %v2257 = vunpack.c.l.b16 %v2164
  %v2258 = vunpack.c.h.b16 %v2164
  %v2259 = vunpack.c.l.b16 %v2165
  %v2260 = vunpack.c.h.b16 %v2165
  %v2261 = vunpack.c.l.b16 %v2166
  %v2262 = vunpack.c.h.b16 %v2166
  %v2263 = vunpack.c.l.b16 %v2167
  %v2264 = vunpack.c.h.b16 %v2167
  %v2265 = vunpack.c.l.b16 %v2168
  %v2266 = vunpack.c.h.b16 %v2168
  %v2267 = vunpack.c.l.b16 %v2169
  %v2268 = vunpack.c.h.b16 %v2169
  %v2269 = vunpack.c.l.b16 %v2170
  %v2270 = vunpack.c.h.b16 %v2170
  %v2271 = vunpack.c.l.b16 %v2171
  %v2272 = vunpack.c.h.b16 %v2171
  %v2273 = vunpack.c.l.b16 %v2172
  %v2274 = vunpack.c.h.b16 %v2172
  %v2275 = vpack.c.b16 %v2215, %v2211
  %v2276 = vpack.c.b16 %v2216, %v2212
  %v2277 = vpack.c.b16 %v2217, %v2213
  %v2278 = vpack.c.b16 %v2218, %v2214
  %v2279 = vpack.c.b16 %v2223, %v2219
  %v2280 = vpack.c.b16 %v2224, %v2220
  %v2281 = vpack.c.b16 %v2225, %v2221
  %v2282 = vpack.c.b16 %v2226, %v2222
  %v2283 = vpack.c.b16 %v2231, %v2227
  %v2284 = vpack.c.b16 %v2232, %v2228
  %v2285 = vpack.c.b16 %v2233, %v2229
  %v2286 = vpack.c.b16 %v2234, %v2230
  %v2287 = vpack.c.b16 %v2239, %v2235
  %v2288 = vpack.c.b16 %v2240, %v2236
  %v2289 = vpack.c.b16 %v2241, %v2237
  %v2290 = vpack.c.b16 %v2242, %v2238
  %v2291 = vpack.c.b16 %v2247, %v2243
  %v2292 = vpack.c.b16 %v2248, %v2244
  %v2293 = vpack.c.b16 %v2249, %v2245
  %v2294 = vpack.c.b16 %v2250, %v2246
  %v2295 = vpack.c.b16 %v2255, %v2251
  %v2296 = vpack.c.b16 %v2256, %v2252
  %v2297 = vpack.c.b16 %v2257, %v2253
  %v2298 = vpack.c.b16 %v2258, %v2254
  %v2299 = vpack.c.b16 %v2263, %v2259
  %v2300 = vpack.c.b16 %v2264, %v2260
  %v2301 = vpack.c.b16 %v2265, %v2261
  %v2302 = vpack.c.b16 %v2266, %v2262
  %v2303 = vpack.c.b16 %v2271, %v2267
  %v2304 = vpack.c.b16 %v2272, %v2268
  %v2305 = vpack.c.b16 %v2273, %v2269
  %v2306 = vpack.c.b16 %v2274, %v2270
  %2339 = vmatpush.bf16.msra.mxu0 %v2303
  %2340 = vmatpush.bf16.msra.mxu0 %v2299
  %2341 = vmatpush.bf16.msra.mxu0 %v2295
  %2342 = vmatpush.bf16.msra.mxu0 %v2291
  %2343 = vmatpush.bf16.msra.mxu0 %v2287
  %2344 = vmatpush.bf16.msra.mxu0 %v2283
  %2345 = vmatpush.bf16.msra.mxu0 %v2279
  %2346 = vmatpush.bf16.msra.mxu0 %v2275
  %2347 = vmatmul.bf16.gmra.mxu0 %v2177
  %v2348 = vpop.f32.mrf.mxu0
  %v2349 = vadd.f32 0.0, %v2348
  %v2350 = vpop.f32.mrf.mxu0
  %v2351 = vadd.f32 0.0, %v2350
  %2352 = vdwg.mxu0
  %2353 = vmatpush.bf16.msra.mxu0 %v2304
  %2354 = vmatpush.bf16.msra.mxu0 %v2300
  %2355 = vmatpush.bf16.msra.mxu0 %v2296
  %2356 = vmatpush.bf16.msra.mxu0 %v2292
  %2357 = vmatpush.bf16.msra.mxu0 %v2288
  %2358 = vmatpush.bf16.msra.mxu0 %v2284
  %2359 = vmatpush.bf16.msra.mxu0 %v2280
  %2360 = vmatpush.bf16.msra.mxu0 %v2276
  %2361 = vmatmul.bf16.gmra.mxu0 %v2177
  %v2362 = vpop.f32.mrf.mxu0
  %v2363 = vadd.f32 0.0, %v2362
  %v2364 = vpop.f32.mrf.mxu0
  %v2365 = vadd.f32 0.0, %v2364
  %2366 = vdwg.mxu0
  %2367 = vmatpush.bf16.msra.mxu0 %v2305
  %2368 = vmatpush.bf16.msra.mxu0 %v2301
  %2369 = vmatpush.bf16.msra.mxu0 %v2297
  %2370 = vmatpush.bf16.msra.mxu0 %v2293
  %2371 = vmatpush.bf16.msra.mxu0 %v2289
  %2372 = vmatpush.bf16.msra.mxu0 %v2285
  %2373 = vmatpush.bf16.msra.mxu0 %v2281
  %2374 = vmatpush.bf16.msra.mxu0 %v2277
  %2375 = vmatmul.bf16.gmra.mxu0 %v2177
  %v2376 = vpop.f32.mrf.mxu0
  %v2377 = vadd.f32 0.0, %v2376
  %v2378 = vpop.f32.mrf.mxu0
  %v2379 = vadd.f32 0.0, %v2378
  %2380 = vdwg.mxu0
  %2381 = vmatpush.bf16.msra.mxu0 %v2306
  %2382 = vmatpush.bf16.msra.mxu0 %v2302
  %2383 = vmatpush.bf16.msra.mxu0 %v2298
  %2384 = vmatpush.bf16.msra.mxu0 %v2294
  %2385 = vmatpush.bf16.msra.mxu0 %v2290
  %2386 = vmatpush.bf16.msra.mxu0 %v2286
  %2387 = vmatpush.bf16.msra.mxu0 %v2282
  %2388 = vmatpush.bf16.msra.mxu0 %v2278
  %2389 = vmatmul.bf16.gmra.mxu0 %v2177
  %v2390 = vpop.f32.mrf.mxu0
  %v2391 = vadd.f32 0.0, %v2390
  %v2392 = vpop.f32.mrf.mxu0
  %v2393 = vadd.f32 0.0, %v2392
  %2394 = vdwg.mxu0
  %v2395 = vld [vmem:[%s5] sm:$0xff]
  %v2396 = vld [vmem:[%s5 + $0x8] sm:$0xff]
  %v2397 = vld [vmem:[%s5 + $0x10] sm:$0xff]
  %v2398 = vld [vmem:[%s5 + $0x18] sm:$0xff]
  %v2399 = vld [vmem:[%s5 + $0x20] sm:$0xff]
  %v2400 = vld [vmem:[%s5 + $0x28] sm:$0xff]
  %v2401 = vld [vmem:[%s5 + $0x30] sm:$0xff]
  %v2402 = vld [vmem:[%s5 + $0x38] sm:$0xff]
  %v2403 = vld [vmem:[%s5 + $0x40] sm:$0xff]
  %v2404 = vld [vmem:[%s5 + $0x48] sm:$0xff]
  %v2405 = vld [vmem:[%s5 + $0x50] sm:$0xff]
  %v2406 = vld [vmem:[%s5 + $0x58] sm:$0xff]
  %v2407 = vld [vmem:[%s5 + $0x60] sm:$0xff]
  %v2408 = vld [vmem:[%s5 + $0x68] sm:$0xff]
  %v2409 = vld [vmem:[%s5 + $0x70] sm:$0xff]
  %v2410 = vld [vmem:[%s5 + $0x78] sm:$0xff]
  %v2411 = vld [vmem:[%s5 + $0x80] sm:$0xff]
  %v2412 = vld [vmem:[%s5 + $0x88] sm:$0xff]
  %v2413 = vld [vmem:[%s5 + $0x90] sm:$0xff]
  %v2414 = vld [vmem:[%s5 + $0x98] sm:$0xff]
  %v2415 = vld [vmem:[%s5 + $0xa0] sm:$0xff]
  %v2416 = vld [vmem:[%s5 + $0xa8] sm:$0xff]
  %v2417 = vld [vmem:[%s5 + $0xb0] sm:$0xff]
  %v2418 = vld [vmem:[%s5 + $0xb8] sm:$0xff]
  %v2419 = vld [vmem:[%s5 + $0xc0] sm:$0xff]
  %v2420 = vld [vmem:[%s5 + $0xc8] sm:$0xff]
  %v2421 = vld [vmem:[%s5 + $0xd0] sm:$0xff]
  %v2422 = vld [vmem:[%s5 + $0xd8] sm:$0xff]
  %v2423 = vld [vmem:[%s5 + $0xe0] sm:$0xff]
  %v2424 = vld [vmem:[%s5 + $0xe8] sm:$0xff]
  %v2425 = vld [vmem:[%s5 + $0xf0] sm:$0xff]
  %v2426 = vld [vmem:[%s5 + $0xf8] sm:$0xff]
  %v2459 = vunpack.c.l.b16 %v2395
  %v2460 = vunpack.c.h.b16 %v2395
  %v2461 = vunpack.c.l.b16 %v2396
  %v2462 = vunpack.c.h.b16 %v2396
  %v2463 = vunpack.c.l.b16 %v2397
  %v2464 = vunpack.c.h.b16 %v2397
  %v2465 = vunpack.c.l.b16 %v2398
  %v2466 = vunpack.c.h.b16 %v2398
  %v2467 = vunpack.c.l.b16 %v2399
  %v2468 = vunpack.c.h.b16 %v2399
  %v2469 = vunpack.c.l.b16 %v2400
  %v2470 = vunpack.c.h.b16 %v2400
  %v2471 = vunpack.c.l.b16 %v2401
  %v2472 = vunpack.c.h.b16 %v2401
  %v2473 = vunpack.c.l.b16 %v2402
  %v2474 = vunpack.c.h.b16 %v2402
  %v2475 = vunpack.c.l.b16 %v2403
  %v2476 = vunpack.c.h.b16 %v2403
  %v2477 = vunpack.c.l.b16 %v2404
  %v2478 = vunpack.c.h.b16 %v2404
  %v2479 = vunpack.c.l.b16 %v2405
  %v2480 = vunpack.c.h.b16 %v2405
  %v2481 = vunpack.c.l.b16 %v2406
  %v2482 = vunpack.c.h.b16 %v2406
  %v2483 = vunpack.c.l.b16 %v2407
  %v2484 = vunpack.c.h.b16 %v2407
  %v2485 = vunpack.c.l.b16 %v2408
  %v2486 = vunpack.c.h.b16 %v2408
  %v2487 = vunpack.c.l.b16 %v2409
  %v2488 = vunpack.c.h.b16 %v2409
  %v2489 = vunpack.c.l.b16 %v2410
  %v2490 = vunpack.c.h.b16 %v2410
  %v2491 = vunpack.c.l.b16 %v2411
  %v2492 = vunpack.c.h.b16 %v2411
  %v2493 = vunpack.c.l.b16 %v2412
  %v2494 = vunpack.c.h.b16 %v2412
  %v2495 = vunpack.c.l.b16 %v2413
  %v2496 = vunpack.c.h.b16 %v2413
  %v2497 = vunpack.c.l.b16 %v2414
  %v2498 = vunpack.c.h.b16 %v2414
  %v2499 = vunpack.c.l.b16 %v2415
  %v2500 = vunpack.c.h.b16 %v2415
  %v2501 = vunpack.c.l.b16 %v2416
  %v2502 = vunpack.c.h.b16 %v2416
  %v2503 = vunpack.c.l.b16 %v2417
  %v2504 = vunpack.c.h.b16 %v2417
  %v2505 = vunpack.c.l.b16 %v2418
  %v2506 = vunpack.c.h.b16 %v2418
  %v2507 = vunpack.c.l.b16 %v2419
  %v2508 = vunpack.c.h.b16 %v2419
  %v2509 = vunpack.c.l.b16 %v2420
  %v2510 = vunpack.c.h.b16 %v2420
  %v2511 = vunpack.c.l.b16 %v2421
  %v2512 = vunpack.c.h.b16 %v2421
  %v2513 = vunpack.c.l.b16 %v2422
  %v2514 = vunpack.c.h.b16 %v2422
  %v2515 = vunpack.c.l.b16 %v2423
  %v2516 = vunpack.c.h.b16 %v2423
  %v2517 = vunpack.c.l.b16 %v2424
  %v2518 = vunpack.c.h.b16 %v2424
  %v2519 = vunpack.c.l.b16 %v2425
  %v2520 = vunpack.c.h.b16 %v2425
  %v2521 = vunpack.c.l.b16 %v2426
  %v2522 = vunpack.c.h.b16 %v2426
  %v2523 = vpack.c.b16 %v2463, %v2459
  %v2524 = vpack.c.b16 %v2464, %v2460
  %v2525 = vpack.c.b16 %v2465, %v2461
  %v2526 = vpack.c.b16 %v2466, %v2462
  %v2527 = vpack.c.b16 %v2471, %v2467
  %v2528 = vpack.c.b16 %v2472, %v2468
  %v2529 = vpack.c.b16 %v2473, %v2469
  %v2530 = vpack.c.b16 %v2474, %v2470
  %v2531 = vpack.c.b16 %v2479, %v2475
  %v2532 = vpack.c.b16 %v2480, %v2476
  %v2533 = vpack.c.b16 %v2481, %v2477
  %v2534 = vpack.c.b16 %v2482, %v2478
  %v2535 = vpack.c.b16 %v2487, %v2483
  %v2536 = vpack.c.b16 %v2488, %v2484
  %v2537 = vpack.c.b16 %v2489, %v2485
  %v2538 = vpack.c.b16 %v2490, %v2486
  %v2539 = vpack.c.b16 %v2495, %v2491
  %v2540 = vpack.c.b16 %v2496, %v2492
  %v2541 = vpack.c.b16 %v2497, %v2493
  %v2542 = vpack.c.b16 %v2498, %v2494
  %v2543 = vpack.c.b16 %v2503, %v2499
  %v2544 = vpack.c.b16 %v2504, %v2500
  %v2545 = vpack.c.b16 %v2505, %v2501
  %v2546 = vpack.c.b16 %v2506, %v2502
  %v2547 = vpack.c.b16 %v2511, %v2507
  %v2548 = vpack.c.b16 %v2512, %v2508
  %v2549 = vpack.c.b16 %v2513, %v2509
  %v2550 = vpack.c.b16 %v2514, %v2510
  %v2551 = vpack.c.b16 %v2519, %v2515
  %v2552 = vpack.c.b16 %v2520, %v2516
  %v2553 = vpack.c.b16 %v2521, %v2517
  %v2554 = vpack.c.b16 %v2522, %v2518
  %2587 = vmatpush.bf16.msra.mxu0 %v2551
  %2588 = vmatpush.bf16.msra.mxu0 %v2547
  %2589 = vmatpush.bf16.msra.mxu0 %v2543
  %2590 = vmatpush.bf16.msra.mxu0 %v2539
  %2591 = vmatpush.bf16.msra.mxu0 %v2535
  %2592 = vmatpush.bf16.msra.mxu0 %v2531
  %2593 = vmatpush.bf16.msra.mxu0 %v2527
  %2594 = vmatpush.bf16.msra.mxu0 %v2523
  %2595 = vmatmul.bf16.gmra.mxu0 %v2018
  %v2596 = vpop.f32.mrf.mxu0
  %v2597 = vadd.f32 0.0, %v2596
  %v2598 = vpop.f32.mrf.mxu0
  %2599 = vdwg.mxu0
  %2600 = vmatpush.bf16.msra.mxu0 %v2552
  %2601 = vmatpush.bf16.msra.mxu0 %v2548
  %2602 = vmatpush.bf16.msra.mxu0 %v2544
  %2603 = vmatpush.bf16.msra.mxu0 %v2540
  %2604 = vmatpush.bf16.msra.mxu0 %v2536
  %2605 = vmatpush.bf16.msra.mxu0 %v2532
  %2606 = vmatpush.bf16.msra.mxu0 %v2528
  %2607 = vmatpush.bf16.msra.mxu0 %v2524
  %2608 = vmatmul.bf16.gmra.mxu0 %v2018
  %v2609 = vpop.f32.mrf.mxu0
  %v2610 = vadd.f32 0.0, %v2609
  %v2611 = vpop.f32.mrf.mxu0
  %2612 = vdwg.mxu0
  %2613 = vmatpush.bf16.msra.mxu0 %v2553
  %2614 = vmatpush.bf16.msra.mxu0 %v2549
  %2615 = vmatpush.bf16.msra.mxu0 %v2545
  %2616 = vmatpush.bf16.msra.mxu0 %v2541
  %2617 = vmatpush.bf16.msra.mxu0 %v2537
  %2618 = vmatpush.bf16.msra.mxu0 %v2533
  %2619 = vmatpush.bf16.msra.mxu0 %v2529
  %2620 = vmatpush.bf16.msra.mxu0 %v2525
  %2621 = vmatmul.bf16.gmra.mxu0 %v2018
  %v2622 = vpop.f32.mrf.mxu0
  %v2623 = vadd.f32 0.0, %v2622
  %v2624 = vpop.f32.mrf.mxu0
  %2625 = vdwg.mxu0
  %2626 = vmatpush.bf16.msra.mxu0 %v2554
  %2627 = vmatpush.bf16.msra.mxu0 %v2550
  %2628 = vmatpush.bf16.msra.mxu0 %v2546
  %2629 = vmatpush.bf16.msra.mxu0 %v2542
  %2630 = vmatpush.bf16.msra.mxu0 %v2538
  %2631 = vmatpush.bf16.msra.mxu0 %v2534
  %2632 = vmatpush.bf16.msra.mxu0 %v2530
  %2633 = vmatpush.bf16.msra.mxu0 %v2526
  %2634 = vmatmul.bf16.gmra.mxu0 %v2018
  %v2635 = vpop.f32.mrf.mxu0
  %v2636 = vadd.f32 0.0, %v2635
  %v2637 = vpop.f32.mrf.mxu0
  %2638 = vdwg.mxu0
  %v2639 = vadd.f32 %v2349, %v2597
  %v2640 = vadd.f32 %v2363, %v2610
  %v2641 = vadd.f32 %v2377, %v2623
  %v2642 = vadd.f32 %v2391, %v2636
  %v2643 = vadd.f32 %v2639, %v64
  %v2644 = vadd.f32 %v2640, %v65
  %v2645 = vadd.f32 %v2641, %v66
  %v2646 = vadd.f32 %v2642, %v67
  %v2647 = vxor.u32 %v2643, 2147483648
  %v2648 = vxor.u32 %v2644, 2147483648
  %v2649 = vxor.u32 %v2645, 2147483648
  %v2650 = vmul.f32 %v2647, 1.442695
  %v2651 = vpow.pop %v2650
  %v2652 = vmul.f32 %v2648, 1.442695
  %v2653 = vpow.pop %v2652
  %v2654 = vmul.f32 %v2649, 1.442695
  %v2655 = vpow.pop %v2654
  %v2656 = vadd.f32 %v2651, 1.0
  %v2657 = vadd.f32 %v2653, 1.0
  %v2658 = vadd.f32 %v2655, 1.0
  %v2659 = vrcp.pop %v2656
  %v2660 = vmul.f32 %v2656, %v2659
  %v2661 = vsub.f32 1.0, %v2660
  %v2662 = vmul.f32 %v2659, %v2661
  %v2663 = vadd.f32 %v2659, %v2662
  %vm2664 = vweird.f32 %v2656
  %vm2665 = vweird.f32 %v2659
  %vm2666 = vmor %vm2664, %vm2665
  %v2667 = vsel %vm2666, %v2659, %v2663
  %v2668 = vand.u32 2147483647, %v2656
  %vm2669 = vcmp.eq.f32.partialorder %v2668, 8.507059e+37
  %v2670 = vand.u32 %v2656, 2147483648
  %v2671 = vor.u32 1.1754944e-38, %v2670
  %v2672 = vsel %vm2669, %v2671, %v2667
  %v2673 = vmul.f32 1.0, %v2672
  %v2674 = vrcp.pop %v2657
  %v2675 = vmul.f32 %v2657, %v2674
  %v2676 = vsub.f32 1.0, %v2675
  %v2677 = vmul.f32 %v2674, %v2676
  %v2678 = vadd.f32 %v2674, %v2677
  %vm2679 = vweird.f32 %v2657
  %vm2680 = vweird.f32 %v2674
  %vm2681 = vmor %vm2679, %vm2680
  %v2682 = vsel %vm2681, %v2674, %v2678
  %v2683 = vand.u32 2147483647, %v2657
  %vm2684 = vcmp.eq.f32.partialorder %v2683, 8.507059e+37
  %v2685 = vand.u32 %v2657, 2147483648
  %v2686 = vor.u32 1.1754944e-38, %v2685
  %v2687 = vsel %vm2684, %v2686, %v2682
  %v2688 = vmul.f32 1.0, %v2687
  %v2689 = vrcp.pop %v2658
  %v2690 = vmul.f32 %v2658, %v2689
  %v2691 = vsub.f32 1.0, %v2690
  %v2692 = vmul.f32 %v2689, %v2691
  %v2693 = vadd.f32 %v2689, %v2692
  %vm2694 = vweird.f32 %v2658
  %vm2695 = vweird.f32 %v2689
  %vm2696 = vmor %vm2694, %vm2695
  %v2697 = vsel %vm2696, %v2689, %v2693
  %v2698 = vand.u32 2147483647, %v2658
  %vm2699 = vcmp.eq.f32.partialorder %v2698, 8.507059e+37
  %v2700 = vand.u32 %v2658, 2147483648
  %v2701 = vor.u32 1.1754944e-38, %v2700
  %v2702 = vsel %vm2699, %v2701, %v2697
  %v2703 = vmul.f32 1.0, %v2702
  %v2704 = vtanh.pop %v2646
  %v2706 = vrot.slane %v1960, 4
  %v2708 = vmul.f32 %v2688, %v2706
  %v2709 = vmul.f32 %v2673, %v2704
  %v2710 = vadd.f32 %v2708, %v2709
  %v2711 = vtanh.pop %v2710
  %v2712 = vmul.f32 %v2703, %v2711
  %v2713 = vpack.c.bf16 %v2712, %v2712
  %s2714 = scalar_lea.vmem %s4, 256
  %v2715 = vld [vmem:[%s2714] sm:$0xff]
  %v2716 = vld [vmem:[%s2714 + $0x8] sm:$0xff]
  %v2717 = vld [vmem:[%s2714 + $0x10] sm:$0xff]
  %v2718 = vld [vmem:[%s2714 + $0x18] sm:$0xff]
  %v2719 = vld [vmem:[%s2714 + $0x20] sm:$0xff]
  %v2720 = vld [vmem:[%s2714 + $0x28] sm:$0xff]
  %v2721 = vld [vmem:[%s2714 + $0x30] sm:$0xff]
  %v2722 = vld [vmem:[%s2714 + $0x38] sm:$0xff]
  %v2723 = vld [vmem:[%s2714 + $0x40] sm:$0xff]
  %v2724 = vld [vmem:[%s2714 + $0x48] sm:$0xff]
  %v2725 = vld [vmem:[%s2714 + $0x50] sm:$0xff]
  %v2726 = vld [vmem:[%s2714 + $0x58] sm:$0xff]
  %v2727 = vld [vmem:[%s2714 + $0x60] sm:$0xff]
  %v2728 = vld [vmem:[%s2714 + $0x68] sm:$0xff]
  %v2729 = vld [vmem:[%s2714 + $0x70] sm:$0xff]
  %v2730 = vld [vmem:[%s2714 + $0x78] sm:$0xff]
  %v2731 = vld [vmem:[%s2714 + $0x80] sm:$0xff]
  %v2732 = vld [vmem:[%s2714 + $0x88] sm:$0xff]
  %v2733 = vld [vmem:[%s2714 + $0x90] sm:$0xff]
  %v2734 = vld [vmem:[%s2714 + $0x98] sm:$0xff]
  %v2735 = vld [vmem:[%s2714 + $0xa0] sm:$0xff]
  %v2736 = vld [vmem:[%s2714 + $0xa8] sm:$0xff]
  %v2737 = vld [vmem:[%s2714 + $0xb0] sm:$0xff]
  %v2738 = vld [vmem:[%s2714 + $0xb8] sm:$0xff]
  %v2739 = vld [vmem:[%s2714 + $0xc0] sm:$0xff]
  %v2740 = vld [vmem:[%s2714 + $0xc8] sm:$0xff]
  %v2741 = vld [vmem:[%s2714 + $0xd0] sm:$0xff]
  %v2742 = vld [vmem:[%s2714 + $0xd8] sm:$0xff]
  %v2743 = vld [vmem:[%s2714 + $0xe0] sm:$0xff]
  %v2744 = vld [vmem:[%s2714 + $0xe8] sm:$0xff]
  %v2745 = vld [vmem:[%s2714 + $0xf0] sm:$0xff]
  %v2746 = vld [vmem:[%s2714 + $0xf8] sm:$0xff]
  %v2747 = vpack.c.bf16 %v2138, %v2138
  %s2748 = scalar_lea.vmem %s5, 256
  %v2749 = vld [vmem:[%s2748] sm:$0xff]
  %v2750 = vld [vmem:[%s2748 + $0x8] sm:$0xff]
  %v2751 = vld [vmem:[%s2748 + $0x10] sm:$0xff]
  %v2752 = vld [vmem:[%s2748 + $0x18] sm:$0xff]
  %v2753 = vld [vmem:[%s2748 + $0x20] sm:$0xff]
  %v2754 = vld [vmem:[%s2748 + $0x28] sm:$0xff]
  %v2755 = vld [vmem:[%s2748 + $0x30] sm:$0xff]
  %v2756 = vld [vmem:[%s2748 + $0x38] sm:$0xff]
  %v2757 = vld [vmem:[%s2748 + $0x40] sm:$0xff]
  %v2758 = vld [vmem:[%s2748 + $0x48] sm:$0xff]
  %v2759 = vld [vmem:[%s2748 + $0x50] sm:$0xff]
  %v2760 = vld [vmem:[%s2748 + $0x58] sm:$0xff]
  %v2761 = vld [vmem:[%s2748 + $0x60] sm:$0xff]
  %v2762 = vld [vmem:[%s2748 + $0x68] sm:$0xff]
  %v2763 = vld [vmem:[%s2748 + $0x70] sm:$0xff]
  %v2764 = vld [vmem:[%s2748 + $0x78] sm:$0xff]
  %v2765 = vld [vmem:[%s2748 + $0x80] sm:$0xff]
  %v2766 = vld [vmem:[%s2748 + $0x88] sm:$0xff]
  %v2767 = vld [vmem:[%s2748 + $0x90] sm:$0xff]
  %v2768 = vld [vmem:[%s2748 + $0x98] sm:$0xff]
  %v2769 = vld [vmem:[%s2748 + $0xa0] sm:$0xff]
  %v2770 = vld [vmem:[%s2748 + $0xa8] sm:$0xff]
  %v2771 = vld [vmem:[%s2748 + $0xb0] sm:$0xff]
  %v2772 = vld [vmem:[%s2748 + $0xb8] sm:$0xff]
  %v2773 = vld [vmem:[%s2748 + $0xc0] sm:$0xff]
  %v2774 = vld [vmem:[%s2748 + $0xc8] sm:$0xff]
  %v2775 = vld [vmem:[%s2748 + $0xd0] sm:$0xff]
  %v2776 = vld [vmem:[%s2748 + $0xd8] sm:$0xff]
  %v2777 = vld [vmem:[%s2748 + $0xe0] sm:$0xff]
  %v2778 = vld [vmem:[%s2748 + $0xe8] sm:$0xff]
  %v2779 = vld [vmem:[%s2748 + $0xf0] sm:$0xff]
  %v2780 = vld [vmem:[%s2748 + $0xf8] sm:$0xff]
  %v2813 = vunpack.c.l.b16 %v2749
  %v2814 = vunpack.c.h.b16 %v2749
  %v2815 = vunpack.c.l.b16 %v2750
  %v2816 = vunpack.c.h.b16 %v2750
  %v2817 = vunpack.c.l.b16 %v2751
  %v2818 = vunpack.c.h.b16 %v2751
  %v2819 = vunpack.c.l.b16 %v2752
  %v2820 = vunpack.c.h.b16 %v2752
  %v2821 = vunpack.c.l.b16 %v2753
  %v2822 = vunpack.c.h.b16 %v2753
  %v2823 = vunpack.c.l.b16 %v2754
  %v2824 = vunpack.c.h.b16 %v2754
  %v2825 = vunpack.c.l.b16 %v2755
  %v2826 = vunpack.c.h.b16 %v2755
  %v2827 = vunpack.c.l.b16 %v2756
  %v2828 = vunpack.c.h.b16 %v2756
  %v2829 = vunpack.c.l.b16 %v2757
  %v2830 = vunpack.c.h.b16 %v2757
  %v2831 = vunpack.c.l.b16 %v2758
  %v2832 = vunpack.c.h.b16 %v2758
  %v2833 = vunpack.c.l.b16 %v2759
  %v2834 = vunpack.c.h.b16 %v2759
  %v2835 = vunpack.c.l.b16 %v2760
  %v2836 = vunpack.c.h.b16 %v2760
  %v2837 = vunpack.c.l.b16 %v2761
  %v2838 = vunpack.c.h.b16 %v2761
  %v2839 = vunpack.c.l.b16 %v2762
  %v2840 = vunpack.c.h.b16 %v2762
  %v2841 = vunpack.c.l.b16 %v2763
  %v2842 = vunpack.c.h.b16 %v2763
  %v2843 = vunpack.c.l.b16 %v2764
  %v2844 = vunpack.c.h.b16 %v2764
  %v2845 = vunpack.c.l.b16 %v2765
  %v2846 = vunpack.c.h.b16 %v2765
  %v2847 = vunpack.c.l.b16 %v2766
  %v2848 = vunpack.c.h.b16 %v2766
  %v2849 = vunpack.c.l.b16 %v2767
  %v2850 = vunpack.c.h.b16 %v2767
  %v2851 = vunpack.c.l.b16 %v2768
  %v2852 = vunpack.c.h.b16 %v2768
  %v2853 = vunpack.c.l.b16 %v2769
  %v2854 = vunpack.c.h.b16 %v2769
  %v2855 = vunpack.c.l.b16 %v2770
  %v2856 = vunpack.c.h.b16 %v2770
  %v2857 = vunpack.c.l.b16 %v2771
  %v2858 = vunpack.c.h.b16 %v2771
  %v2859 = vunpack.c.l.b16 %v2772
  %v2860 = vunpack.c.h.b16 %v2772
  %v2861 = vunpack.c.l.b16 %v2773
  %v2862 = vunpack.c.h.b16 %v2773
  %v2863 = vunpack.c.l.b16 %v2774
  %v2864 = vunpack.c.h.b16 %v2774
  %v2865 = vunpack.c.l.b16 %v2775
  %v2866 = vunpack.c.h.b16 %v2775
  %v2867 = vunpack.c.l.b16 %v2776
  %v2868 = vunpack.c.h.b16 %v2776
  %v2869 = vunpack.c.l.b16 %v2777
  %v2870 = vunpack.c.h.b16 %v2777
  %v2871 = vunpack.c.l.b16 %v2778
  %v2872 = vunpack.c.h.b16 %v2778
  %v2873 = vunpack.c.l.b16 %v2779
  %v2874 = vunpack.c.h.b16 %v2779
  %v2875 = vunpack.c.l.b16 %v2780
  %v2876 = vunpack.c.h.b16 %v2780
  %v2877 = vpack.c.b16 %v2817, %v2813
  %v2878 = vpack.c.b16 %v2818, %v2814
  %v2879 = vpack.c.b16 %v2819, %v2815
  %v2880 = vpack.c.b16 %v2820, %v2816
  %v2881 = vpack.c.b16 %v2825, %v2821
  %v2882 = vpack.c.b16 %v2826, %v2822
  %v2883 = vpack.c.b16 %v2827, %v2823
  %v2884 = vpack.c.b16 %v2828, %v2824
  %v2885 = vpack.c.b16 %v2833, %v2829
  %v2886 = vpack.c.b16 %v2834, %v2830
  %v2887 = vpack.c.b16 %v2835, %v2831
  %v2888 = vpack.c.b16 %v2836, %v2832
  %v2889 = vpack.c.b16 %v2841, %v2837
  %v2890 = vpack.c.b16 %v2842, %v2838
  %v2891 = vpack.c.b16 %v2843, %v2839
  %v2892 = vpack.c.b16 %v2844, %v2840
  %v2893 = vpack.c.b16 %v2849, %v2845
  %v2894 = vpack.c.b16 %v2850, %v2846
  %v2895 = vpack.c.b16 %v2851, %v2847
  %v2896 = vpack.c.b16 %v2852, %v2848
  %v2897 = vpack.c.b16 %v2857, %v2853
  %v2898 = vpack.c.b16 %v2858, %v2854
  %v2899 = vpack.c.b16 %v2859, %v2855
  %v2900 = vpack.c.b16 %v2860, %v2856
  %v2901 = vpack.c.b16 %v2865, %v2861
  %v2902 = vpack.c.b16 %v2866, %v2862
  %v2903 = vpack.c.b16 %v2867, %v2863
  %v2904 = vpack.c.b16 %v2868, %v2864
  %v2905 = vpack.c.b16 %v2873, %v2869
  %v2906 = vpack.c.b16 %v2874, %v2870
  %v2907 = vpack.c.b16 %v2875, %v2871
  %v2908 = vpack.c.b16 %v2876, %v2872
  %2941 = vmatpush.bf16.msra.mxu0 %v2905
  %2942 = vmatpush.bf16.msra.mxu0 %v2901
  %2943 = vmatpush.bf16.msra.mxu0 %v2897
  %2944 = vmatpush.bf16.msra.mxu0 %v2893
  %2945 = vmatpush.bf16.msra.mxu0 %v2889
  %2946 = vmatpush.bf16.msra.mxu0 %v2885
  %2947 = vmatpush.bf16.msra.mxu0 %v2881
  %2948 = vmatpush.bf16.msra.mxu0 %v2877
  %2949 = vmatmul.bf16.gmra.mxu0 %v2747
  %v2950 = vpop.f32.mrf.mxu0
  %v2951 = vadd.f32 0.0, %v2950
  %v2952 = vpop.f32.mrf.mxu0
  %2953 = vdwg.mxu0
  %2954 = vmatpush.bf16.msra.mxu0 %v2906
  %2955 = vmatpush.bf16.msra.mxu0 %v2902
  %2956 = vmatpush.bf16.msra.mxu0 %v2898
  %2957 = vmatpush.bf16.msra.mxu0 %v2894
  %2958 = vmatpush.bf16.msra.mxu0 %v2890
  %2959 = vmatpush.bf16.msra.mxu0 %v2886
  %2960 = vmatpush.bf16.msra.mxu0 %v2882
  %2961 = vmatpush.bf16.msra.mxu0 %v2878
  %2962 = vmatmul.bf16.gmra.mxu0 %v2747
  %v2963 = vpop.f32.mrf.mxu0
  %v2964 = vadd.f32 0.0, %v2963
  %v2965 = vpop.f32.mrf.mxu0
  %2966 = vdwg.mxu0
  %2967 = vmatpush.bf16.msra.mxu0 %v2907
  %2968 = vmatpush.bf16.msra.mxu0 %v2903
  %2969 = vmatpush.bf16.msra.mxu0 %v2899
  %2970 = vmatpush.bf16.msra.mxu0 %v2895
  %2971 = vmatpush.bf16.msra.mxu0 %v2891
  %2972 = vmatpush.bf16.msra.mxu0 %v2887
  %2973 = vmatpush.bf16.msra.mxu0 %v2883
  %2974 = vmatpush.bf16.msra.mxu0 %v2879
  %2975 = vmatmul.bf16.gmra.mxu0 %v2747
  %v2976 = vpop.f32.mrf.mxu0
  %v2977 = vadd.f32 0.0, %v2976
  %v2978 = vpop.f32.mrf.mxu0
  %2979 = vdwg.mxu0
  %2980 = vmatpush.bf16.msra.mxu0 %v2908
  %2981 = vmatpush.bf16.msra.mxu0 %v2904
  %2982 = vmatpush.bf16.msra.mxu0 %v2900
  %2983 = vmatpush.bf16.msra.mxu0 %v2896
  %2984 = vmatpush.bf16.msra.mxu0 %v2892
  %2985 = vmatpush.bf16.msra.mxu0 %v2888
  %2986 = vmatpush.bf16.msra.mxu0 %v2884
  %2987 = vmatpush.bf16.msra.mxu0 %v2880
  %2988 = vmatmul.bf16.gmra.mxu0 %v2747
  %v2989 = vpop.f32.mrf.mxu0
  %v2990 = vadd.f32 0.0, %v2989
  %v2991 = vpop.f32.mrf.mxu0
  %2992 = vdwg.mxu0
  %v3025 = vunpack.c.l.b16 %v2715
  %v3026 = vunpack.c.h.b16 %v2715
  %v3027 = vunpack.c.l.b16 %v2716
  %v3028 = vunpack.c.h.b16 %v2716
  %v3029 = vunpack.c.l.b16 %v2717
  %v3030 = vunpack.c.h.b16 %v2717
  %v3031 = vunpack.c.l.b16 %v2718
  %v3032 = vunpack.c.h.b16 %v2718
  %v3033 = vunpack.c.l.b16 %v2719
  %v3034 = vunpack.c.h.b16 %v2719
  %v3035 = vunpack.c.l.b16 %v2720
  %v3036 = vunpack.c.h.b16 %v2720
  %v3037 = vunpack.c.l.b16 %v2721
  %v3038 = vunpack.c.h.b16 %v2721
  %v3039 = vunpack.c.l.b16 %v2722
  %v3040 = vunpack.c.h.b16 %v2722
  %v3041 = vunpack.c.l.b16 %v2723
  %v3042 = vunpack.c.h.b16 %v2723
  %v3043 = vunpack.c.l.b16 %v2724
  %v3044 = vunpack.c.h.b16 %v2724
  %v3045 = vunpack.c.l.b16 %v2725
  %v3046 = vunpack.c.h.b16 %v2725
  %v3047 = vunpack.c.l.b16 %v2726
  %v3048 = vunpack.c.h.b16 %v2726
  %v3049 = vunpack.c.l.b16 %v2727
  %v3050 = vunpack.c.h.b16 %v2727
  %v3051 = vunpack.c.l.b16 %v2728
  %v3052 = vunpack.c.h.b16 %v2728
  %v3053 = vunpack.c.l.b16 %v2729
  %v3054 = vunpack.c.h.b16 %v2729
  %v3055 = vunpack.c.l.b16 %v2730
  %v3056 = vunpack.c.h.b16 %v2730
  %v3057 = vunpack.c.l.b16 %v2731
  %v3058 = vunpack.c.h.b16 %v2731
  %v3059 = vunpack.c.l.b16 %v2732
  %v3060 = vunpack.c.h.b16 %v2732
  %v3061 = vunpack.c.l.b16 %v2733
  %v3062 = vunpack.c.h.b16 %v2733
  %v3063 = vunpack.c.l.b16 %v2734
  %v3064 = vunpack.c.h.b16 %v2734
  %v3065 = vunpack.c.l.b16 %v2735
  %v3066 = vunpack.c.h.b16 %v2735
  %v3067 = vunpack.c.l.b16 %v2736
  %v3068 = vunpack.c.h.b16 %v2736
  %v3069 = vunpack.c.l.b16 %v2737
  %v3070 = vunpack.c.h.b16 %v2737
  %v3071 = vunpack.c.l.b16 %v2738
  %v3072 = vunpack.c.h.b16 %v2738
  %v3073 = vunpack.c.l.b16 %v2739
  %v3074 = vunpack.c.h.b16 %v2739
  %v3075 = vunpack.c.l.b16 %v2740
  %v3076 = vunpack.c.h.b16 %v2740
  %v3077 = vunpack.c.l.b16 %v2741
  %v3078 = vunpack.c.h.b16 %v2741
  %v3079 = vunpack.c.l.b16 %v2742
  %v3080 = vunpack.c.h.b16 %v2742
  %v3081 = vunpack.c.l.b16 %v2743
  %v3082 = vunpack.c.h.b16 %v2743
  %v3083 = vunpack.c.l.b16 %v2744
  %v3084 = vunpack.c.h.b16 %v2744
  %v3085 = vunpack.c.l.b16 %v2745
  %v3086 = vunpack.c.h.b16 %v2745
  %v3087 = vunpack.c.l.b16 %v2746
  %v3088 = vunpack.c.h.b16 %v2746
  %v3089 = vpack.c.b16 %v3029, %v3025
  %v3090 = vpack.c.b16 %v3030, %v3026
  %v3091 = vpack.c.b16 %v3031, %v3027
  %v3092 = vpack.c.b16 %v3032, %v3028
  %v3093 = vpack.c.b16 %v3037, %v3033
  %v3094 = vpack.c.b16 %v3038, %v3034
  %v3095 = vpack.c.b16 %v3039, %v3035
  %v3096 = vpack.c.b16 %v3040, %v3036
  %v3097 = vpack.c.b16 %v3045, %v3041
  %v3098 = vpack.c.b16 %v3046, %v3042
  %v3099 = vpack.c.b16 %v3047, %v3043
  %v3100 = vpack.c.b16 %v3048, %v3044
  %v3101 = vpack.c.b16 %v3053, %v3049
  %v3102 = vpack.c.b16 %v3054, %v3050
  %v3103 = vpack.c.b16 %v3055, %v3051
  %v3104 = vpack.c.b16 %v3056, %v3052
  %v3105 = vpack.c.b16 %v3061, %v3057
  %v3106 = vpack.c.b16 %v3062, %v3058
  %v3107 = vpack.c.b16 %v3063, %v3059
  %v3108 = vpack.c.b16 %v3064, %v3060
  %v3109 = vpack.c.b16 %v3069, %v3065
  %v3110 = vpack.c.b16 %v3070, %v3066
  %v3111 = vpack.c.b16 %v3071, %v3067
  %v3112 = vpack.c.b16 %v3072, %v3068
  %v3113 = vpack.c.b16 %v3077, %v3073
  %v3114 = vpack.c.b16 %v3078, %v3074
  %v3115 = vpack.c.b16 %v3079, %v3075
  %v3116 = vpack.c.b16 %v3080, %v3076
  %v3117 = vpack.c.b16 %v3085, %v3081
  %v3118 = vpack.c.b16 %v3086, %v3082
  %v3119 = vpack.c.b16 %v3087, %v3083
  %v3120 = vpack.c.b16 %v3088, %v3084
  %3153 = vmatpush.bf16.msra.mxu0 %v3117
  %3154 = vmatpush.bf16.msra.mxu0 %v3113
  %3155 = vmatpush.bf16.msra.mxu0 %v3109
  %3156 = vmatpush.bf16.msra.mxu0 %v3105
  %3157 = vmatpush.bf16.msra.mxu0 %v3101
  %3158 = vmatpush.bf16.msra.mxu0 %v3097
  %3159 = vmatpush.bf16.msra.mxu0 %v3093
  %3160 = vmatpush.bf16.msra.mxu0 %v3089
  %3161 = vmatmul.bf16.gmra.mxu0 %v2713
  %v3162 = vpop.f32.mrf.mxu0
  %v3163 = vadd.f32 %v2951, %v3162
  %v3164 = vpop.f32.mrf.mxu0
  %3165 = vdwg.mxu0
  %3166 = vmatpush.bf16.msra.mxu0 %v3118
  %3167 = vmatpush.bf16.msra.mxu0 %v3114
  %3168 = vmatpush.bf16.msra.mxu0 %v3110
  %3169 = vmatpush.bf16.msra.mxu0 %v3106
  %3170 = vmatpush.bf16.msra.mxu0 %v3102
  %3171 = vmatpush.bf16.msra.mxu0 %v3098
  %3172 = vmatpush.bf16.msra.mxu0 %v3094
  %3173 = vmatpush.bf16.msra.mxu0 %v3090
  %3174 = vmatmul.bf16.gmra.mxu0 %v2713
  %v3175 = vpop.f32.mrf.mxu0
  %v3176 = vadd.f32 %v2964, %v3175
  %v3177 = vpop.f32.mrf.mxu0
  %3178 = vdwg.mxu0
  %3179 = vmatpush.bf16.msra.mxu0 %v3119
  %3180 = vmatpush.bf16.msra.mxu0 %v3115
  %3181 = vmatpush.bf16.msra.mxu0 %v3111
  %3182 = vmatpush.bf16.msra.mxu0 %v3107
  %3183 = vmatpush.bf16.msra.mxu0 %v3103
  %3184 = vmatpush.bf16.msra.mxu0 %v3099
  %3185 = vmatpush.bf16.msra.mxu0 %v3095
  %3186 = vmatpush.bf16.msra.mxu0 %v3091
  %3187 = vmatmul.bf16.gmra.mxu0 %v2713
  %v3188 = vpop.f32.mrf.mxu0
  %v3189 = vadd.f32 %v2977, %v3188
  %v3190 = vpop.f32.mrf.mxu0
  %3191 = vdwg.mxu0
  %3192 = vmatpush.bf16.msra.mxu0 %v3120
  %3193 = vmatpush.bf16.msra.mxu0 %v3116
  %3194 = vmatpush.bf16.msra.mxu0 %v3112
  %3195 = vmatpush.bf16.msra.mxu0 %v3108
  %3196 = vmatpush.bf16.msra.mxu0 %v3104
  %3197 = vmatpush.bf16.msra.mxu0 %v3100
  %3198 = vmatpush.bf16.msra.mxu0 %v3096
  %3199 = vmatpush.bf16.msra.mxu0 %v3092
  %3200 = vmatmul.bf16.gmra.mxu0 %v2713
  %v3201 = vpop.f32.mrf.mxu0
  %v3202 = vadd.f32 %v2990, %v3201
  %v3203 = vpop.f32.mrf.mxu0
  %3204 = vdwg.mxu0
  %v3205 = vadd.f32 %v3163, %v75
  %v3206 = vadd.f32 %v3176, %v76
  %v3207 = vadd.f32 %v3189, %v77
  %v3208 = vadd.f32 %v3202, %v78
  %v3209 = vxor.u32 %v3205, 2147483648
  %v3210 = vxor.u32 %v3206, 2147483648
  %v3211 = vxor.u32 %v3207, 2147483648
  %v3212 = vmul.f32 %v3209, 1.442695
  %v3213 = vpow.pop %v3212
  %v3214 = vmul.f32 %v3210, 1.442695
  %v3215 = vpow.pop %v3214
  %v3216 = vmul.f32 %v3211, 1.442695
  %v3217 = vpow.pop %v3216
  %v3218 = vadd.f32 %v3213, 1.0
  %v3219 = vadd.f32 %v3215, 1.0
  %v3220 = vadd.f32 %v3217, 1.0
  %v3221 = vrcp.pop %v3218
  %v3222 = vmul.f32 %v3218, %v3221
  %v3223 = vsub.f32 1.0, %v3222
  %v3224 = vmul.f32 %v3221, %v3223
  %v3225 = vadd.f32 %v3221, %v3224
  %vm3226 = vweird.f32 %v3218
  %vm3227 = vweird.f32 %v3221
  %vm3228 = vmor %vm3226, %vm3227
  %v3229 = vsel %vm3228, %v3221, %v3225
  %v3230 = vand.u32 2147483647, %v3218
  %vm3231 = vcmp.eq.f32.partialorder %v3230, 8.507059e+37
  %v3232 = vand.u32 %v3218, 2147483648
  %v3233 = vor.u32 1.1754944e-38, %v3232
  %v3234 = vsel %vm3231, %v3233, %v3229
  %v3235 = vmul.f32 1.0, %v3234
  %v3236 = vrcp.pop %v3219
  %v3237 = vmul.f32 %v3219, %v3236
  %v3238 = vsub.f32 1.0, %v3237
  %v3239 = vmul.f32 %v3236, %v3238
  %v3240 = vadd.f32 %v3236, %v3239
  %vm3241 = vweird.f32 %v3219
  %vm3242 = vweird.f32 %v3236
  %vm3243 = vmor %vm3241, %vm3242
  %v3244 = vsel %vm3243, %v3236, %v3240
  %v3245 = vand.u32 2147483647, %v3219
  %vm3246 = vcmp.eq.f32.partialorder %v3245, 8.507059e+37
  %v3247 = vand.u32 %v3219, 2147483648
  %v3248 = vor.u32 1.1754944e-38, %v3247
  %v3249 = vsel %vm3246, %v3248, %v3244
  %v3250 = vmul.f32 1.0, %v3249
  %v3251 = vrcp.pop %v3220
  %v3252 = vmul.f32 %v3220, %v3251
  %v3253 = vsub.f32 1.0, %v3252
  %v3254 = vmul.f32 %v3251, %v3253
  %v3255 = vadd.f32 %v3251, %v3254
  %vm3256 = vweird.f32 %v3220
  %vm3257 = vweird.f32 %v3251
  %vm3258 = vmor %vm3256, %vm3257
  %v3259 = vsel %vm3258, %v3251, %v3255
  %v3260 = vand.u32 2147483647, %v3220
  %vm3261 = vcmp.eq.f32.partialorder %v3260, 8.507059e+37
  %v3262 = vand.u32 %v3220, 2147483648
  %v3263 = vor.u32 1.1754944e-38, %v3262
  %v3264 = vsel %vm3261, %v3263, %v3259
  %v3265 = vmul.f32 1.0, %v3264
  %v3266 = vtanh.pop %v3208
  %v3267 = vmul.f32 %v3250, %v2136
  %v3268 = vmul.f32 %v3235, %v3266
  %v3269 = vadd.f32 %v3267, %v3268
  %v3270 = vtanh.pop %v3269
  %v3271 = vmul.f32 %v3265, %v3270
  %3272 = vmatpush.bf16.msra.mxu0 %v2551
  %3273 = vmatpush.bf16.msra.mxu0 %v2547
  %3274 = vmatpush.bf16.msra.mxu0 %v2543
  %3275 = vmatpush.bf16.msra.mxu0 %v2539
  %3276 = vmatpush.bf16.msra.mxu0 %v2535
  %3277 = vmatpush.bf16.msra.mxu0 %v2531
  %3278 = vmatpush.bf16.msra.mxu0 %v2527
  %3279 = vmatpush.bf16.msra.mxu0 %v2523
  %3280 = vmatmul.bf16.gmra.mxu0 %v2713
  %v3281 = vpop.f32.mrf.mxu0
  %v3282 = vadd.f32 0.0, %v3281
  %v3283 = vpop.f32.mrf.mxu0
  %3284 = vdwg.mxu0
  %3285 = vmatpush.bf16.msra.mxu0 %v2552
  %3286 = vmatpush.bf16.msra.mxu0 %v2548
  %3287 = vmatpush.bf16.msra.mxu0 %v2544
  %3288 = vmatpush.bf16.msra.mxu0 %v2540
  %3289 = vmatpush.bf16.msra.mxu0 %v2536
  %3290 = vmatpush.bf16.msra.mxu0 %v2532
  %3291 = vmatpush.bf16.msra.mxu0 %v2528
  %3292 = vmatpush.bf16.msra.mxu0 %v2524
  %3293 = vmatmul.bf16.gmra.mxu0 %v2713
  %v3294 = vpop.f32.mrf.mxu0
  %v3295 = vadd.f32 0.0, %v3294
  %v3296 = vpop.f32.mrf.mxu0
  %3297 = vdwg.mxu0
  %3298 = vmatpush.bf16.msra.mxu0 %v2553
  %3299 = vmatpush.bf16.msra.mxu0 %v2549
  %3300 = vmatpush.bf16.msra.mxu0 %v2545
  %3301 = vmatpush.bf16.msra.mxu0 %v2541
  %3302 = vmatpush.bf16.msra.mxu0 %v2537
  %3303 = vmatpush.bf16.msra.mxu0 %v2533
  %3304 = vmatpush.bf16.msra.mxu0 %v2529
  %3305 = vmatpush.bf16.msra.mxu0 %v2525
  %3306 = vmatmul.bf16.gmra.mxu0 %v2713
  %v3307 = vpop.f32.mrf.mxu0
  %v3308 = vadd.f32 0.0, %v3307
  %v3309 = vpop.f32.mrf.mxu0
  %3310 = vdwg.mxu0
  %3311 = vmatpush.bf16.msra.mxu0 %v2554
  %3312 = vmatpush.bf16.msra.mxu0 %v2550
  %3313 = vmatpush.bf16.msra.mxu0 %v2546
  %3314 = vmatpush.bf16.msra.mxu0 %v2542
  %3315 = vmatpush.bf16.msra.mxu0 %v2538
  %3316 = vmatpush.bf16.msra.mxu0 %v2534
  %3317 = vmatpush.bf16.msra.mxu0 %v2530
  %3318 = vmatpush.bf16.msra.mxu0 %v2526
  %3319 = vmatmul.bf16.gmra.mxu0 %v2713
  %v3320 = vpop.f32.mrf.mxu0
  %v3321 = vadd.f32 0.0, %v3320
  %v3322 = vpop.f32.mrf.mxu0
  %3323 = vdwg.mxu0
  %v3328 = vrot.slane %v3282, 4
  %v3329 = vrot.slane %v3295, 4
  %v3330 = vrot.slane %v3308, 4
  %v3331 = vrot.slane %v3321, 4
  %v3336 = vadd.f32 %v2349, %v3328
  %v3337 = vadd.f32 %v2363, %v3329
  %v3338 = vadd.f32 %v2377, %v3330
  %v3339 = vadd.f32 %v2391, %v3331
  %v3340 = vadd.f32 %v3336, %v64
  %v3341 = vadd.f32 %v3337, %v65
  %v3342 = vadd.f32 %v3338, %v66
  %v3343 = vadd.f32 %v3339, %v67
  %v3344 = vxor.u32 %v3340, 2147483648
  %v3345 = vxor.u32 %v3341, 2147483648
  %v3346 = vxor.u32 %v3342, 2147483648
  %v3347 = vmul.f32 %v3344, 1.442695
  %v3348 = vpow.pop %v3347
  %v3349 = vmul.f32 %v3345, 1.442695
  %v3350 = vpow.pop %v3349
  %v3351 = vmul.f32 %v3346, 1.442695
  %v3352 = vpow.pop %v3351
  %v3353 = vadd.f32 %v3348, 1.0
  %v3354 = vadd.f32 %v3350, 1.0
  %v3355 = vadd.f32 %v3352, 1.0
  %v3356 = vrcp.pop %v3353
  %v3357 = vmul.f32 %v3353, %v3356
  %v3358 = vsub.f32 1.0, %v3357
  %v3359 = vmul.f32 %v3356, %v3358
  %v3360 = vadd.f32 %v3356, %v3359
  %vm3361 = vweird.f32 %v3353
  %vm3362 = vweird.f32 %v3356
  %vm3363 = vmor %vm3361, %vm3362
  %v3364 = vsel %vm3363, %v3356, %v3360
  %v3365 = vand.u32 2147483647, %v3353
  %vm3366 = vcmp.eq.f32.partialorder %v3365, 8.507059e+37
  %v3367 = vand.u32 %v3353, 2147483648
  %v3368 = vor.u32 1.1754944e-38, %v3367
  %v3369 = vsel %vm3366, %v3368, %v3364
  %v3370 = vmul.f32 1.0, %v3369
  %v3371 = vrcp.pop %v3354
  %v3372 = vmul.f32 %v3354, %v3371
  %v3373 = vsub.f32 1.0, %v3372
  %v3374 = vmul.f32 %v3371, %v3373
  %v3375 = vadd.f32 %v3371, %v3374
  %vm3376 = vweird.f32 %v3354
  %vm3377 = vweird.f32 %v3371
  %vm3378 = vmor %vm3376, %vm3377
  %v3379 = vsel %vm3378, %v3371, %v3375
  %v3380 = vand.u32 2147483647, %v3354
  %vm3381 = vcmp.eq.f32.partialorder %v3380, 8.507059e+37
  %v3382 = vand.u32 %v3354, 2147483648
  %v3383 = vor.u32 1.1754944e-38, %v3382
  %v3384 = vsel %vm3381, %v3383, %v3379
  %v3385 = vmul.f32 1.0, %v3384
  %v3386 = vrcp.pop %v3355
  %v3387 = vmul.f32 %v3355, %v3386
  %v3388 = vsub.f32 1.0, %v3387
  %v3389 = vmul.f32 %v3386, %v3388
  %v3390 = vadd.f32 %v3386, %v3389
  %vm3391 = vweird.f32 %v3355
  %vm3392 = vweird.f32 %v3386
  %vm3393 = vmor %vm3391, %vm3392
  %v3394 = vsel %vm3393, %v3386, %v3390
  %v3395 = vand.u32 2147483647, %v3355
  %vm3396 = vcmp.eq.f32.partialorder %v3395, 8.507059e+37
  %v3397 = vand.u32 %v3355, 2147483648
  %v3398 = vor.u32 1.1754944e-38, %v3397
  %v3399 = vsel %vm3396, %v3398, %v3394
  %v3400 = vmul.f32 1.0, %v3399
  %v3401 = vtanh.pop %v3343
  %v3403 = vrot.slane %v2710, 4
  %v3405 = vmul.f32 %v3385, %v3403
  %v3406 = vmul.f32 %v3370, %v3401
  %v3407 = vadd.f32 %v3405, %v3406
  %v3408 = vtanh.pop %v3407
  %v3409 = vmul.f32 %v3400, %v3408
  %v3410 = vpack.c.bf16 %v3409, %v3409
  %v3411 = vpack.c.bf16 %v3271, %v3271
  %3412 = vmatpush.bf16.msra.mxu0 %v2905
  %3413 = vmatpush.bf16.msra.mxu0 %v2901
  %3414 = vmatpush.bf16.msra.mxu0 %v2897
  %3415 = vmatpush.bf16.msra.mxu0 %v2893
  %3416 = vmatpush.bf16.msra.mxu0 %v2889
  %3417 = vmatpush.bf16.msra.mxu0 %v2885
  %3418 = vmatpush.bf16.msra.mxu0 %v2881
  %3419 = vmatpush.bf16.msra.mxu0 %v2877
  %3420 = vmatmul.bf16.gmra.mxu0 %v3411
  %v3421 = vpop.f32.mrf.mxu0
  %v3422 = vadd.f32 0.0, %v3421
  %v3423 = vpop.f32.mrf.mxu0
  %3424 = vdwg.mxu0
  %3425 = vmatpush.bf16.msra.mxu0 %v2906
  %3426 = vmatpush.bf16.msra.mxu0 %v2902
  %3427 = vmatpush.bf16.msra.mxu0 %v2898
  %3428 = vmatpush.bf16.msra.mxu0 %v2894
  %3429 = vmatpush.bf16.msra.mxu0 %v2890
  %3430 = vmatpush.bf16.msra.mxu0 %v2886
  %3431 = vmatpush.bf16.msra.mxu0 %v2882
  %3432 = vmatpush.bf16.msra.mxu0 %v2878
  %3433 = vmatmul.bf16.gmra.mxu0 %v3411
  %v3434 = vpop.f32.mrf.mxu0
  %v3435 = vadd.f32 0.0, %v3434
  %v3436 = vpop.f32.mrf.mxu0
  %3437 = vdwg.mxu0
  %3438 = vmatpush.bf16.msra.mxu0 %v2907
  %3439 = vmatpush.bf16.msra.mxu0 %v2903
  %3440 = vmatpush.bf16.msra.mxu0 %v2899
  %3441 = vmatpush.bf16.msra.mxu0 %v2895
  %3442 = vmatpush.bf16.msra.mxu0 %v2891
  %3443 = vmatpush.bf16.msra.mxu0 %v2887
  %3444 = vmatpush.bf16.msra.mxu0 %v2883
  %3445 = vmatpush.bf16.msra.mxu0 %v2879
  %3446 = vmatmul.bf16.gmra.mxu0 %v3411
  %v3447 = vpop.f32.mrf.mxu0
  %v3448 = vadd.f32 0.0, %v3447
  %v3449 = vpop.f32.mrf.mxu0
  %3450 = vdwg.mxu0
  %3451 = vmatpush.bf16.msra.mxu0 %v2908
  %3452 = vmatpush.bf16.msra.mxu0 %v2904
  %3453 = vmatpush.bf16.msra.mxu0 %v2900
  %3454 = vmatpush.bf16.msra.mxu0 %v2896
  %3455 = vmatpush.bf16.msra.mxu0 %v2892
  %3456 = vmatpush.bf16.msra.mxu0 %v2888
  %3457 = vmatpush.bf16.msra.mxu0 %v2884
  %3458 = vmatpush.bf16.msra.mxu0 %v2880
  %3459 = vmatmul.bf16.gmra.mxu0 %v3411
  %v3460 = vpop.f32.mrf.mxu0
  %v3461 = vadd.f32 0.0, %v3460
  %v3462 = vpop.f32.mrf.mxu0
  %3463 = vdwg.mxu0
  %v3465 = vrot.slane %v3410, 2
  %3467 = vmatpush.bf16.msra.mxu0 %v3117
  %3468 = vmatpush.bf16.msra.mxu0 %v3113
  %3469 = vmatpush.bf16.msra.mxu0 %v3109
  %3470 = vmatpush.bf16.msra.mxu0 %v3105
  %3471 = vmatpush.bf16.msra.mxu0 %v3101
  %3472 = vmatpush.bf16.msra.mxu0 %v3097
  %3473 = vmatpush.bf16.msra.mxu0 %v3093
  %3474 = vmatpush.bf16.msra.mxu0 %v3089
  %3475 = vmatmul.bf16.gmra.mxu0 %v3465
  %v3476 = vpop.f32.mrf.mxu0
  %v3477 = vadd.f32 %v3422, %v3476
  %v3478 = vpop.f32.mrf.mxu0
  %3479 = vdwg.mxu0
  %3480 = vmatpush.bf16.msra.mxu0 %v3118
  %3481 = vmatpush.bf16.msra.mxu0 %v3114
  %3482 = vmatpush.bf16.msra.mxu0 %v3110
  %3483 = vmatpush.bf16.msra.mxu0 %v3106
  %3484 = vmatpush.bf16.msra.mxu0 %v3102
  %3485 = vmatpush.bf16.msra.mxu0 %v3098
  %3486 = vmatpush.bf16.msra.mxu0 %v3094
  %3487 = vmatpush.bf16.msra.mxu0 %v3090
  %3488 = vmatmul.bf16.gmra.mxu0 %v3465
  %v3489 = vpop.f32.mrf.mxu0
  %v3490 = vadd.f32 %v3435, %v3489
  %v3491 = vpop.f32.mrf.mxu0
  %3492 = vdwg.mxu0
  %3493 = vmatpush.bf16.msra.mxu0 %v3119
  %3494 = vmatpush.bf16.msra.mxu0 %v3115
  %3495 = vmatpush.bf16.msra.mxu0 %v3111
  %3496 = vmatpush.bf16.msra.mxu0 %v3107
  %3497 = vmatpush.bf16.msra.mxu0 %v3103
  %3498 = vmatpush.bf16.msra.mxu0 %v3099
  %3499 = vmatpush.bf16.msra.mxu0 %v3095
  %3500 = vmatpush.bf16.msra.mxu0 %v3091
  %3501 = vmatmul.bf16.gmra.mxu0 %v3465
  %v3502 = vpop.f32.mrf.mxu0
  %v3503 = vadd.f32 %v3448, %v3502
  %v3504 = vpop.f32.mrf.mxu0
  %3505 = vdwg.mxu0
  %3506 = vmatpush.bf16.msra.mxu0 %v3120
  %3507 = vmatpush.bf16.msra.mxu0 %v3116
  %3508 = vmatpush.bf16.msra.mxu0 %v3112
  %3509 = vmatpush.bf16.msra.mxu0 %v3108
  %3510 = vmatpush.bf16.msra.mxu0 %v3104
  %3511 = vmatpush.bf16.msra.mxu0 %v3100
  %3512 = vmatpush.bf16.msra.mxu0 %v3096
  %3513 = vmatpush.bf16.msra.mxu0 %v3092
  %3514 = vmatmul.bf16.gmra.mxu0 %v3465
  %v3515 = vpop.f32.mrf.mxu0
  %v3516 = vadd.f32 %v3461, %v3515
  %v3517 = vpop.f32.mrf.mxu0
  %3518 = vdwg.mxu0
  %v3519 = vadd.f32 %v3477, %v75
  %v3520 = vadd.f32 %v3490, %v76
  %v3521 = vadd.f32 %v3503, %v77
  %v3522 = vadd.f32 %v3516, %v78
  %v3523 = vxor.u32 %v3519, 2147483648
  %v3524 = vxor.u32 %v3520, 2147483648
  %v3525 = vxor.u32 %v3521, 2147483648
  %v3526 = vmul.f32 %v3523, 1.442695
  %v3527 = vpow.pop %v3526
  %v3528 = vmul.f32 %v3524, 1.442695
  %v3529 = vpow.pop %v3528
  %v3530 = vmul.f32 %v3525, 1.442695
  %v3531 = vpow.pop %v3530
  %v3532 = vadd.f32 %v3527, 1.0
  %v3533 = vadd.f32 %v3529, 1.0
  %v3534 = vadd.f32 %v3531, 1.0
  %v3535 = vrcp.pop %v3532
  %v3536 = vmul.f32 %v3532, %v3535
  %v3537 = vsub.f32 1.0, %v3536
  %v3538 = vmul.f32 %v3535, %v3537
  %v3539 = vadd.f32 %v3535, %v3538
  %vm3540 = vweird.f32 %v3532
  %vm3541 = vweird.f32 %v3535
  %vm3542 = vmor %vm3540, %vm3541
  %v3543 = vsel %vm3542, %v3535, %v3539
  %v3544 = vand.u32 2147483647, %v3532
  %vm3545 = vcmp.eq.f32.partialorder %v3544, 8.507059e+37
  %v3546 = vand.u32 %v3532, 2147483648
  %v3547 = vor.u32 1.1754944e-38, %v3546
  %v3548 = vsel %vm3545, %v3547, %v3543
  %v3549 = vmul.f32 1.0, %v3548
  %v3550 = vrcp.pop %v3533
  %v3551 = vmul.f32 %v3533, %v3550
  %v3552 = vsub.f32 1.0, %v3551
  %v3553 = vmul.f32 %v3550, %v3552
  %v3554 = vadd.f32 %v3550, %v3553
  %vm3555 = vweird.f32 %v3533
  %vm3556 = vweird.f32 %v3550
  %vm3557 = vmor %vm3555, %vm3556
  %v3558 = vsel %vm3557, %v3550, %v3554
  %v3559 = vand.u32 2147483647, %v3533
  %vm3560 = vcmp.eq.f32.partialorder %v3559, 8.507059e+37
  %v3561 = vand.u32 %v3533, 2147483648
  %v3562 = vor.u32 1.1754944e-38, %v3561
  %v3563 = vsel %vm3560, %v3562, %v3558
  %v3564 = vmul.f32 1.0, %v3563
  %v3565 = vrcp.pop %v3534
  %v3566 = vmul.f32 %v3534, %v3565
  %v3567 = vsub.f32 1.0, %v3566
  %v3568 = vmul.f32 %v3565, %v3567
  %v3569 = vadd.f32 %v3565, %v3568
  %vm3570 = vweird.f32 %v3534
  %vm3571 = vweird.f32 %v3565
  %vm3572 = vmor %vm3570, %vm3571
  %v3573 = vsel %vm3572, %v3565, %v3569
  %v3574 = vand.u32 2147483647, %v3534
  %vm3575 = vcmp.eq.f32.partialorder %v3574, 8.507059e+37
  %v3576 = vand.u32 %v3534, 2147483648
  %v3577 = vor.u32 1.1754944e-38, %v3576
  %v3578 = vsel %vm3575, %v3577, %v3573
  %v3579 = vmul.f32 1.0, %v3578
  %v3580 = vtanh.pop %v3522
  %v3581 = vmul.f32 %v3564, %v3269
  %v3582 = vmul.f32 %v3549, %v3580
  %v3583 = vadd.f32 %v3581, %v3582
  %v3584 = vtanh.pop %v3583
  %v3585 = vmul.f32 %v3579, %v3584
  %3586 = vmatpush.bf16.msra.mxu0 %v2551
  %3587 = vmatpush.bf16.msra.mxu0 %v2547
  %3588 = vmatpush.bf16.msra.mxu0 %v2543
  %3589 = vmatpush.bf16.msra.mxu0 %v2539
  %3590 = vmatpush.bf16.msra.mxu0 %v2535
  %3591 = vmatpush.bf16.msra.mxu0 %v2531
  %3592 = vmatpush.bf16.msra.mxu0 %v2527
  %3593 = vmatpush.bf16.msra.mxu0 %v2523
  %3594 = vmatmul.bf16.gmra.mxu0 %v3465
  %v3595 = vpop.f32.mrf.mxu0
  %v3596 = vadd.f32 0.0, %v3595
  %v3597 = vpop.f32.mrf.mxu0
  %3598 = vdwg.mxu0
  %3599 = vmatpush.bf16.msra.mxu0 %v2552
  %3600 = vmatpush.bf16.msra.mxu0 %v2548
  %3601 = vmatpush.bf16.msra.mxu0 %v2544
  %3602 = vmatpush.bf16.msra.mxu0 %v2540
  %3603 = vmatpush.bf16.msra.mxu0 %v2536
  %3604 = vmatpush.bf16.msra.mxu0 %v2532
  %3605 = vmatpush.bf16.msra.mxu0 %v2528
  %3606 = vmatpush.bf16.msra.mxu0 %v2524
  %3607 = vmatmul.bf16.gmra.mxu0 %v3465
  %v3608 = vpop.f32.mrf.mxu0
  %v3609 = vadd.f32 0.0, %v3608
  %v3610 = vpop.f32.mrf.mxu0
  %3611 = vdwg.mxu0
  %3612 = vmatpush.bf16.msra.mxu0 %v2553
  %3613 = vmatpush.bf16.msra.mxu0 %v2549
  %3614 = vmatpush.bf16.msra.mxu0 %v2545
  %3615 = vmatpush.bf16.msra.mxu0 %v2541
  %3616 = vmatpush.bf16.msra.mxu0 %v2537
  %3617 = vmatpush.bf16.msra.mxu0 %v2533
  %3618 = vmatpush.bf16.msra.mxu0 %v2529
  %3619 = vmatpush.bf16.msra.mxu0 %v2525
  %3620 = vmatmul.bf16.gmra.mxu0 %v3465
  %v3621 = vpop.f32.mrf.mxu0
  %v3622 = vadd.f32 0.0, %v3621
  %v3623 = vpop.f32.mrf.mxu0
  %3624 = vdwg.mxu0
  %3625 = vmatpush.bf16.msra.mxu0 %v2554
  %3626 = vmatpush.bf16.msra.mxu0 %v2550
  %3627 = vmatpush.bf16.msra.mxu0 %v2546
  %3628 = vmatpush.bf16.msra.mxu0 %v2542
  %3629 = vmatpush.bf16.msra.mxu0 %v2538
  %3630 = vmatpush.bf16.msra.mxu0 %v2534
  %3631 = vmatpush.bf16.msra.mxu0 %v2530
  %3632 = vmatpush.bf16.msra.mxu0 %v2526
  %3633 = vmatmul.bf16.gmra.mxu0 %v3465
  %v3634 = vpop.f32.mrf.mxu0
  %v3635 = vadd.f32 0.0, %v3634
  %v3636 = vpop.f32.mrf.mxu0
  %3637 = vdwg.mxu0
  %v3638 = vadd.f32 %v2351, %v3596
  %v3639 = vadd.f32 %v2365, %v3609
  %v3640 = vadd.f32 %v2379, %v3622
  %v3641 = vadd.f32 %v2393, %v3635
  %v3642 = vadd.f32 %v3638, %v64
  %v3643 = vadd.f32 %v3639, %v65
  %v3644 = vadd.f32 %v3640, %v66
  %v3645 = vadd.f32 %v3641, %v67
  %v3646 = vxor.u32 %v3642, 2147483648
  %v3647 = vxor.u32 %v3643, 2147483648
  %v3648 = vxor.u32 %v3644, 2147483648
  %v3649 = vmul.f32 %v3646, 1.442695
  %v3650 = vpow.pop %v3649
  %v3651 = vmul.f32 %v3647, 1.442695
  %v3652 = vpow.pop %v3651
  %v3653 = vmul.f32 %v3648, 1.442695
  %v3654 = vpow.pop %v3653
  %v3655 = vadd.f32 %v3650, 1.0
  %v3656 = vadd.f32 %v3652, 1.0
  %v3657 = vadd.f32 %v3654, 1.0
  %v3658 = vrcp.pop %v3655
  %v3659 = vmul.f32 %v3655, %v3658
  %v3660 = vsub.f32 1.0, %v3659
  %v3661 = vmul.f32 %v3658, %v3660
  %v3662 = vadd.f32 %v3658, %v3661
  %vm3663 = vweird.f32 %v3655
  %vm3664 = vweird.f32 %v3658
  %vm3665 = vmor %vm3663, %vm3664
  %v3666 = vsel %vm3665, %v3658, %v3662
  %v3667 = vand.u32 2147483647, %v3655
  %vm3668 = vcmp.eq.f32.partialorder %v3667, 8.507059e+37
  %v3669 = vand.u32 %v3655, 2147483648
  %v3670 = vor.u32 1.1754944e-38, %v3669
  %v3671 = vsel %vm3668, %v3670, %v3666
  %v3672 = vmul.f32 1.0, %v3671
  %v3673 = vrcp.pop %v3656
  %v3674 = vmul.f32 %v3656, %v3673
  %v3675 = vsub.f32 1.0, %v3674
  %v3676 = vmul.f32 %v3673, %v3675
  %v3677 = vadd.f32 %v3673, %v3676
  %vm3678 = vweird.f32 %v3656
  %vm3679 = vweird.f32 %v3673
  %vm3680 = vmor %vm3678, %vm3679
  %v3681 = vsel %vm3680, %v3673, %v3677
  %v3682 = vand.u32 2147483647, %v3656
  %vm3683 = vcmp.eq.f32.partialorder %v3682, 8.507059e+37
  %v3684 = vand.u32 %v3656, 2147483648
  %v3685 = vor.u32 1.1754944e-38, %v3684
  %v3686 = vsel %vm3683, %v3685, %v3681
  %v3687 = vmul.f32 1.0, %v3686
  %v3688 = vrcp.pop %v3657
  %v3689 = vmul.f32 %v3657, %v3688
  %v3690 = vsub.f32 1.0, %v3689
  %v3691 = vmul.f32 %v3688, %v3690
  %v3692 = vadd.f32 %v3688, %v3691
  %vm3693 = vweird.f32 %v3657
  %vm3694 = vweird.f32 %v3688
  %vm3695 = vmor %vm3693, %vm3694
  %v3696 = vsel %vm3695, %v3688, %v3692
  %v3697 = vand.u32 2147483647, %v3657
  %vm3698 = vcmp.eq.f32.partialorder %v3697, 8.507059e+37
  %v3699 = vand.u32 %v3657, 2147483648
  %v3700 = vor.u32 1.1754944e-38, %v3699
  %v3701 = vsel %vm3698, %v3700, %v3696
  %v3702 = vmul.f32 1.0, %v3701
  %v3703 = vtanh.pop %v3645
  %v3705 = vrot.slane %v3407, 4
  %v3707 = vmul.f32 %v3687, %v3705
  %v3708 = vmul.f32 %v3672, %v3703
  %v3709 = vadd.f32 %v3707, %v3708
  %v3710 = vtanh.pop %v3709
  %v3711 = vmul.f32 %v3702, %v3710
  %v3712 = vpack.c.bf16 %v3711, %v3711
  %v3713 = vpack.c.bf16 %v3585, %v3585
  %3714 = vmatpush.bf16.msra.mxu0 %v2905
  %3715 = vmatpush.bf16.msra.mxu0 %v2901
  %3716 = vmatpush.bf16.msra.mxu0 %v2897
  %3717 = vmatpush.bf16.msra.mxu0 %v2893
  %3718 = vmatpush.bf16.msra.mxu0 %v2889
  %3719 = vmatpush.bf16.msra.mxu0 %v2885
  %3720 = vmatpush.bf16.msra.mxu0 %v2881
  %3721 = vmatpush.bf16.msra.mxu0 %v2877
  %3722 = vmatmul.bf16.gmra.mxu0 %v3713
  %v3723 = vpop.f32.mrf.mxu0
  %v3724 = vadd.f32 0.0, %v3723
  %v3725 = vpop.f32.mrf.mxu0
  %3726 = vdwg.mxu0
  %3727 = vmatpush.bf16.msra.mxu0 %v2906
  %3728 = vmatpush.bf16.msra.mxu0 %v2902
  %3729 = vmatpush.bf16.msra.mxu0 %v2898
  %3730 = vmatpush.bf16.msra.mxu0 %v2894
  %3731 = vmatpush.bf16.msra.mxu0 %v2890
  %3732 = vmatpush.bf16.msra.mxu0 %v2886
  %3733 = vmatpush.bf16.msra.mxu0 %v2882
  %3734 = vmatpush.bf16.msra.mxu0 %v2878
  %3735 = vmatmul.bf16.gmra.mxu0 %v3713
  %v3736 = vpop.f32.mrf.mxu0
  %v3737 = vadd.f32 0.0, %v3736
  %v3738 = vpop.f32.mrf.mxu0
  %3739 = vdwg.mxu0
  %3740 = vmatpush.bf16.msra.mxu0 %v2907
  %3741 = vmatpush.bf16.msra.mxu0 %v2903
  %3742 = vmatpush.bf16.msra.mxu0 %v2899
  %3743 = vmatpush.bf16.msra.mxu0 %v2895
  %3744 = vmatpush.bf16.msra.mxu0 %v2891
  %3745 = vmatpush.bf16.msra.mxu0 %v2887
  %3746 = vmatpush.bf16.msra.mxu0 %v2883
  %3747 = vmatpush.bf16.msra.mxu0 %v2879
  %3748 = vmatmul.bf16.gmra.mxu0 %v3713
  %v3749 = vpop.f32.mrf.mxu0
  %v3750 = vadd.f32 0.0, %v3749
  %v3751 = vpop.f32.mrf.mxu0
  %3752 = vdwg.mxu0
  %3753 = vmatpush.bf16.msra.mxu0 %v2908
  %3754 = vmatpush.bf16.msra.mxu0 %v2904
  %3755 = vmatpush.bf16.msra.mxu0 %v2900
  %3756 = vmatpush.bf16.msra.mxu0 %v2896
  %3757 = vmatpush.bf16.msra.mxu0 %v2892
  %3758 = vmatpush.bf16.msra.mxu0 %v2888
  %3759 = vmatpush.bf16.msra.mxu0 %v2884
  %3760 = vmatpush.bf16.msra.mxu0 %v2880
  %3761 = vmatmul.bf16.gmra.mxu0 %v3713
  %v3762 = vpop.f32.mrf.mxu0
  %v3763 = vadd.f32 0.0, %v3762
  %v3764 = vpop.f32.mrf.mxu0
  %3765 = vdwg.mxu0
  %3766 = vmatpush.bf16.msra.mxu0 %v3117
  %3767 = vmatpush.bf16.msra.mxu0 %v3113
  %3768 = vmatpush.bf16.msra.mxu0 %v3109
  %3769 = vmatpush.bf16.msra.mxu0 %v3105
  %3770 = vmatpush.bf16.msra.mxu0 %v3101
  %3771 = vmatpush.bf16.msra.mxu0 %v3097
  %3772 = vmatpush.bf16.msra.mxu0 %v3093
  %3773 = vmatpush.bf16.msra.mxu0 %v3089
  %3774 = vmatmul.bf16.gmra.mxu0 %v3712
  %v3775 = vpop.f32.mrf.mxu0
  %v3776 = vadd.f32 %v3724, %v3775
  %v3777 = vpop.f32.mrf.mxu0
  %3778 = vdwg.mxu0
  %3779 = vmatpush.bf16.msra.mxu0 %v3118
  %3780 = vmatpush.bf16.msra.mxu0 %v3114
  %3781 = vmatpush.bf16.msra.mxu0 %v3110
  %3782 = vmatpush.bf16.msra.mxu0 %v3106
  %3783 = vmatpush.bf16.msra.mxu0 %v3102
  %3784 = vmatpush.bf16.msra.mxu0 %v3098
  %3785 = vmatpush.bf16.msra.mxu0 %v3094
  %3786 = vmatpush.bf16.msra.mxu0 %v3090
  %3787 = vmatmul.bf16.gmra.mxu0 %v3712
  %v3788 = vpop.f32.mrf.mxu0
  %v3789 = vadd.f32 %v3737, %v3788
  %v3790 = vpop.f32.mrf.mxu0
  %3791 = vdwg.mxu0
  %3792 = vmatpush.bf16.msra.mxu0 %v3119
  %3793 = vmatpush.bf16.msra.mxu0 %v3115
  %3794 = vmatpush.bf16.msra.mxu0 %v3111
  %3795 = vmatpush.bf16.msra.mxu0 %v3107
  %3796 = vmatpush.bf16.msra.mxu0 %v3103
  %3797 = vmatpush.bf16.msra.mxu0 %v3099
  %3798 = vmatpush.bf16.msra.mxu0 %v3095
  %3799 = vmatpush.bf16.msra.mxu0 %v3091
  %3800 = vmatmul.bf16.gmra.mxu0 %v3712
  %v3801 = vpop.f32.mrf.mxu0
  %v3802 = vadd.f32 %v3750, %v3801
  %v3803 = vpop.f32.mrf.mxu0
  %3804 = vdwg.mxu0
  %3805 = vmatpush.bf16.msra.mxu0 %v3120
  %3806 = vmatpush.bf16.msra.mxu0 %v3116
  %3807 = vmatpush.bf16.msra.mxu0 %v3112
  %3808 = vmatpush.bf16.msra.mxu0 %v3108
  %3809 = vmatpush.bf16.msra.mxu0 %v3104
  %3810 = vmatpush.bf16.msra.mxu0 %v3100
  %3811 = vmatpush.bf16.msra.mxu0 %v3096
  %3812 = vmatpush.bf16.msra.mxu0 %v3092
  %3813 = vmatmul.bf16.gmra.mxu0 %v3712
  %v3814 = vpop.f32.mrf.mxu0
  %v3815 = vadd.f32 %v3763, %v3814
  %v3816 = vpop.f32.mrf.mxu0
  %3817 = vdwg.mxu0
  %v3818 = vadd.f32 %v3776, %v75
  %v3819 = vadd.f32 %v3789, %v76
  %v3820 = vadd.f32 %v3802, %v77
  %v3821 = vadd.f32 %v3815, %v78
  %v3822 = vxor.u32 %v3818, 2147483648
  %v3823 = vxor.u32 %v3819, 2147483648
  %v3824 = vxor.u32 %v3820, 2147483648
  %v3825 = vmul.f32 %v3822, 1.442695
  %v3826 = vpow.pop %v3825
  %v3827 = vmul.f32 %v3823, 1.442695
  %v3828 = vpow.pop %v3827
  %v3829 = vmul.f32 %v3824, 1.442695
  %v3830 = vpow.pop %v3829
  %v3831 = vadd.f32 %v3826, 1.0
  %v3832 = vadd.f32 %v3828, 1.0
  %v3833 = vadd.f32 %v3830, 1.0
  %v3834 = vrcp.pop %v3831
  %v3835 = vmul.f32 %v3831, %v3834
  %v3836 = vsub.f32 1.0, %v3835
  %v3837 = vmul.f32 %v3834, %v3836
  %v3838 = vadd.f32 %v3834, %v3837
  %vm3839 = vweird.f32 %v3831
  %vm3840 = vweird.f32 %v3834
  %vm3841 = vmor %vm3839, %vm3840
  %v3842 = vsel %vm3841, %v3834, %v3838
  %v3843 = vand.u32 2147483647, %v3831
  %vm3844 = vcmp.eq.f32.partialorder %v3843, 8.507059e+37
  %v3845 = vand.u32 %v3831, 2147483648
  %v3846 = vor.u32 1.1754944e-38, %v3845
  %v3847 = vsel %vm3844, %v3846, %v3842
  %v3848 = vmul.f32 1.0, %v3847
  %v3849 = vrcp.pop %v3832
  %v3850 = vmul.f32 %v3832, %v3849
  %v3851 = vsub.f32 1.0, %v3850
  %v3852 = vmul.f32 %v3849, %v3851
  %v3853 = vadd.f32 %v3849, %v3852
  %vm3854 = vweird.f32 %v3832
  %vm3855 = vweird.f32 %v3849
  %vm3856 = vmor %vm3854, %vm3855
  %v3857 = vsel %vm3856, %v3849, %v3853
  %v3858 = vand.u32 2147483647, %v3832
  %vm3859 = vcmp.eq.f32.partialorder %v3858, 8.507059e+37
  %v3860 = vand.u32 %v3832, 2147483648
  %v3861 = vor.u32 1.1754944e-38, %v3860
  %v3862 = vsel %vm3859, %v3861, %v3857
  %v3863 = vmul.f32 1.0, %v3862
  %v3864 = vrcp.pop %v3833
  %v3865 = vmul.f32 %v3833, %v3864
  %v3866 = vsub.f32 1.0, %v3865
  %v3867 = vmul.f32 %v3864, %v3866
  %v3868 = vadd.f32 %v3864, %v3867
  %vm3869 = vweird.f32 %v3833
  %vm3870 = vweird.f32 %v3864
  %vm3871 = vmor %vm3869, %vm3870
  %v3872 = vsel %vm3871, %v3864, %v3868
  %v3873 = vand.u32 2147483647, %v3833
  %vm3874 = vcmp.eq.f32.partialorder %v3873, 8.507059e+37
  %v3875 = vand.u32 %v3833, 2147483648
  %v3876 = vor.u32 1.1754944e-38, %v3875
  %v3877 = vsel %vm3874, %v3876, %v3872
  %v3878 = vmul.f32 1.0, %v3877
  %v3879 = vtanh.pop %v3821
  %v3880 = vmul.f32 %v3863, %v3583
  %v3881 = vmul.f32 %v3848, %v3879
  %v3882 = vadd.f32 %v3880, %v3881
  %v3883 = vtanh.pop %v3882
  %v3884 = vmul.f32 %v3878, %v3883
  %3885 = vmatpush.bf16.msra.mxu0 %v2551
  %3886 = vmatpush.bf16.msra.mxu0 %v2547
  %3887 = vmatpush.bf16.msra.mxu0 %v2543
  %3888 = vmatpush.bf16.msra.mxu0 %v2539
  %3889 = vmatpush.bf16.msra.mxu0 %v2535
  %3890 = vmatpush.bf16.msra.mxu0 %v2531
  %3891 = vmatpush.bf16.msra.mxu0 %v2527
  %3892 = vmatpush.bf16.msra.mxu0 %v2523
  %3893 = vmatmul.bf16.gmra.mxu0 %v3712
  %v3894 = vpop.f32.mrf.mxu0
  %v3895 = vadd.f32 0.0, %v3894
  %v3896 = vpop.f32.mrf.mxu0
  %3897 = vdwg.mxu0
  %3898 = vmatpush.bf16.msra.mxu0 %v2552
  %3899 = vmatpush.bf16.msra.mxu0 %v2548
  %3900 = vmatpush.bf16.msra.mxu0 %v2544
  %3901 = vmatpush.bf16.msra.mxu0 %v2540
  %3902 = vmatpush.bf16.msra.mxu0 %v2536
  %3903 = vmatpush.bf16.msra.mxu0 %v2532
  %3904 = vmatpush.bf16.msra.mxu0 %v2528
  %3905 = vmatpush.bf16.msra.mxu0 %v2524
  %3906 = vmatmul.bf16.gmra.mxu0 %v3712
  %v3907 = vpop.f32.mrf.mxu0
  %v3908 = vadd.f32 0.0, %v3907
  %v3909 = vpop.f32.mrf.mxu0
  %3910 = vdwg.mxu0
  %3911 = vmatpush.bf16.msra.mxu0 %v2553
  %3912 = vmatpush.bf16.msra.mxu0 %v2549
  %3913 = vmatpush.bf16.msra.mxu0 %v2545
  %3914 = vmatpush.bf16.msra.mxu0 %v2541
  %3915 = vmatpush.bf16.msra.mxu0 %v2537
  %3916 = vmatpush.bf16.msra.mxu0 %v2533
  %3917 = vmatpush.bf16.msra.mxu0 %v2529
  %3918 = vmatpush.bf16.msra.mxu0 %v2525
  %3919 = vmatmul.bf16.gmra.mxu0 %v3712
  %v3920 = vpop.f32.mrf.mxu0
  %v3921 = vadd.f32 0.0, %v3920
  %v3922 = vpop.f32.mrf.mxu0
  %3923 = vdwg.mxu0
  %3924 = vmatpush.bf16.msra.mxu0 %v2554
  %3925 = vmatpush.bf16.msra.mxu0 %v2550
  %3926 = vmatpush.bf16.msra.mxu0 %v2546
  %3927 = vmatpush.bf16.msra.mxu0 %v2542
  %3928 = vmatpush.bf16.msra.mxu0 %v2538
  %3929 = vmatpush.bf16.msra.mxu0 %v2534
  %3930 = vmatpush.bf16.msra.mxu0 %v2530
  %3931 = vmatpush.bf16.msra.mxu0 %v2526
  %3932 = vmatmul.bf16.gmra.mxu0 %v3712
  %v3933 = vpop.f32.mrf.mxu0
  %v3934 = vadd.f32 0.0, %v3933
  %v3935 = vpop.f32.mrf.mxu0
  %3936 = vdwg.mxu0
  %v3941 = vrot.slane %v3895, 4
  %v3942 = vrot.slane %v3908, 4
  %v3943 = vrot.slane %v3921, 4
  %v3944 = vrot.slane %v3934, 4
  %v3949 = vadd.f32 %v2351, %v3941
  %v3950 = vadd.f32 %v2365, %v3942
  %v3951 = vadd.f32 %v2379, %v3943
  %v3952 = vadd.f32 %v2393, %v3944
  %v3953 = vadd.f32 %v3949, %v64
  %v3954 = vadd.f32 %v3950, %v65
  %v3955 = vadd.f32 %v3951, %v66
  %v3956 = vadd.f32 %v3952, %v67
  %v3957 = vxor.u32 %v3953, 2147483648
  %v3958 = vxor.u32 %v3954, 2147483648
  %v3959 = vxor.u32 %v3955, 2147483648
  %v3960 = vmul.f32 %v3957, 1.442695
  %v3961 = vpow.pop %v3960
  %v3962 = vmul.f32 %v3958, 1.442695
  %v3963 = vpow.pop %v3962
  %v3964 = vmul.f32 %v3959, 1.442695
  %v3965 = vpow.pop %v3964
  %v3966 = vadd.f32 %v3961, 1.0
  %v3967 = vadd.f32 %v3963, 1.0
  %v3968 = vadd.f32 %v3965, 1.0
  %v3969 = vrcp.pop %v3966
  %v3970 = vmul.f32 %v3966, %v3969
  %v3971 = vsub.f32 1.0, %v3970
  %v3972 = vmul.f32 %v3969, %v3971
  %v3973 = vadd.f32 %v3969, %v3972
  %vm3974 = vweird.f32 %v3966
  %vm3975 = vweird.f32 %v3969
  %vm3976 = vmor %vm3974, %vm3975
  %v3977 = vsel %vm3976, %v3969, %v3973
  %v3978 = vand.u32 2147483647, %v3966
  %vm3979 = vcmp.eq.f32.partialorder %v3978, 8.507059e+37
  %v3980 = vand.u32 %v3966, 2147483648
  %v3981 = vor.u32 1.1754944e-38, %v3980
  %v3982 = vsel %vm3979, %v3981, %v3977
  %v3983 = vmul.f32 1.0, %v3982
  %v3984 = vrcp.pop %v3967
  %v3985 = vmul.f32 %v3967, %v3984
  %v3986 = vsub.f32 1.0, %v3985
  %v3987 = vmul.f32 %v3984, %v3986
  %v3988 = vadd.f32 %v3984, %v3987
  %vm3989 = vweird.f32 %v3967
  %vm3990 = vweird.f32 %v3984
  %vm3991 = vmor %vm3989, %vm3990
  %v3992 = vsel %vm3991, %v3984, %v3988
  %v3993 = vand.u32 2147483647, %v3967
  %vm3994 = vcmp.eq.f32.partialorder %v3993, 8.507059e+37
  %v3995 = vand.u32 %v3967, 2147483648
  %v3996 = vor.u32 1.1754944e-38, %v3995
  %v3997 = vsel %vm3994, %v3996, %v3992
  %v3998 = vmul.f32 1.0, %v3997
  %v3999 = vrcp.pop %v3968
  %v4000 = vmul.f32 %v3968, %v3999
  %v4001 = vsub.f32 1.0, %v4000
  %v4002 = vmul.f32 %v3999, %v4001
  %v4003 = vadd.f32 %v3999, %v4002
  %vm4004 = vweird.f32 %v3968
  %vm4005 = vweird.f32 %v3999
  %vm4006 = vmor %vm4004, %vm4005
  %v4007 = vsel %vm4006, %v3999, %v4003
  %v4008 = vand.u32 2147483647, %v3968
  %vm4009 = vcmp.eq.f32.partialorder %v4008, 8.507059e+37
  %v4010 = vand.u32 %v3968, 2147483648
  %v4011 = vor.u32 1.1754944e-38, %v4010
  %v4012 = vsel %vm4009, %v4011, %v4007
  %v4013 = vmul.f32 1.0, %v4012
  %v4014 = vtanh.pop %v3956
  %v4016 = vrot.slane %v3709, 4
  %v4018 = vmul.f32 %v3998, %v4016
  %v4019 = vmul.f32 %v3983, %v4014
  %v4020 = vadd.f32 %v4018, %v4019
  %v4021 = vtanh.pop %v4020
  %v4022 = vmul.f32 %v4013, %v4021
  %v4023 = vpack.c.bf16 %v4022, %v4022
  %v4024 = vpack.c.bf16 %v3884, %v3884
  %4025 = vmatpush.bf16.msra.mxu0 %v2905
  %4026 = vmatpush.bf16.msra.mxu0 %v2901
  %4027 = vmatpush.bf16.msra.mxu0 %v2897
  %4028 = vmatpush.bf16.msra.mxu0 %v2893
  %4029 = vmatpush.bf16.msra.mxu0 %v2889
  %4030 = vmatpush.bf16.msra.mxu0 %v2885
  %4031 = vmatpush.bf16.msra.mxu0 %v2881
  %4032 = vmatpush.bf16.msra.mxu0 %v2877
  %4033 = vmatmul.bf16.gmra.mxu0 %v4024
  %v4034 = vpop.f32.mrf.mxu0
  %v4035 = vadd.f32 0.0, %v4034
  %v4036 = vpop.f32.mrf.mxu0
  %4037 = vdwg.mxu0
  %4038 = vmatpush.bf16.msra.mxu0 %v2906
  %4039 = vmatpush.bf16.msra.mxu0 %v2902
  %4040 = vmatpush.bf16.msra.mxu0 %v2898
  %4041 = vmatpush.bf16.msra.mxu0 %v2894
  %4042 = vmatpush.bf16.msra.mxu0 %v2890
  %4043 = vmatpush.bf16.msra.mxu0 %v2886
  %4044 = vmatpush.bf16.msra.mxu0 %v2882
  %4045 = vmatpush.bf16.msra.mxu0 %v2878
  %4046 = vmatmul.bf16.gmra.mxu0 %v4024
  %v4047 = vpop.f32.mrf.mxu0
  %v4048 = vadd.f32 0.0, %v4047
  %v4049 = vpop.f32.mrf.mxu0
  %4050 = vdwg.mxu0
  %4051 = vmatpush.bf16.msra.mxu0 %v2907
  %4052 = vmatpush.bf16.msra.mxu0 %v2903
  %4053 = vmatpush.bf16.msra.mxu0 %v2899
  %4054 = vmatpush.bf16.msra.mxu0 %v2895
  %4055 = vmatpush.bf16.msra.mxu0 %v2891
  %4056 = vmatpush.bf16.msra.mxu0 %v2887
  %4057 = vmatpush.bf16.msra.mxu0 %v2883
  %4058 = vmatpush.bf16.msra.mxu0 %v2879
  %4059 = vmatmul.bf16.gmra.mxu0 %v4024
  %v4060 = vpop.f32.mrf.mxu0
  %v4061 = vadd.f32 0.0, %v4060
  %v4062 = vpop.f32.mrf.mxu0
  %4063 = vdwg.mxu0
  %4064 = vmatpush.bf16.msra.mxu0 %v2908
  %4065 = vmatpush.bf16.msra.mxu0 %v2904
  %4066 = vmatpush.bf16.msra.mxu0 %v2900
  %4067 = vmatpush.bf16.msra.mxu0 %v2896
  %4068 = vmatpush.bf16.msra.mxu0 %v2892
  %4069 = vmatpush.bf16.msra.mxu0 %v2888
  %4070 = vmatpush.bf16.msra.mxu0 %v2884
  %4071 = vmatpush.bf16.msra.mxu0 %v2880
  %4072 = vmatmul.bf16.gmra.mxu0 %v4024
  %v4073 = vpop.f32.mrf.mxu0
  %v4074 = vadd.f32 0.0, %v4073
  %v4075 = vpop.f32.mrf.mxu0
  %4076 = vdwg.mxu0
  %v4078 = vrot.slane %v4023, 2
  %4080 = vmatpush.bf16.msra.mxu0 %v3117
  %4081 = vmatpush.bf16.msra.mxu0 %v3113
  %4082 = vmatpush.bf16.msra.mxu0 %v3109
  %4083 = vmatpush.bf16.msra.mxu0 %v3105
  %4084 = vmatpush.bf16.msra.mxu0 %v3101
  %4085 = vmatpush.bf16.msra.mxu0 %v3097
  %4086 = vmatpush.bf16.msra.mxu0 %v3093
  %4087 = vmatpush.bf16.msra.mxu0 %v3089
  %4088 = vmatmul.bf16.gmra.mxu0 %v4078
  %v4089 = vpop.f32.mrf.mxu0
  %v4090 = vadd.f32 %v4035, %v4089
  %v4091 = vpop.f32.mrf.mxu0
  %4092 = vdwg.mxu0
  %4093 = vmatpush.bf16.msra.mxu0 %v3118
  %4094 = vmatpush.bf16.msra.mxu0 %v3114
  %4095 = vmatpush.bf16.msra.mxu0 %v3110
  %4096 = vmatpush.bf16.msra.mxu0 %v3106
  %4097 = vmatpush.bf16.msra.mxu0 %v3102
  %4098 = vmatpush.bf16.msra.mxu0 %v3098
  %4099 = vmatpush.bf16.msra.mxu0 %v3094
  %4100 = vmatpush.bf16.msra.mxu0 %v3090
  %4101 = vmatmul.bf16.gmra.mxu0 %v4078
  %v4102 = vpop.f32.mrf.mxu0
  %v4103 = vadd.f32 %v4048, %v4102
  %v4104 = vpop.f32.mrf.mxu0
  %4105 = vdwg.mxu0
  %4106 = vmatpush.bf16.msra.mxu0 %v3119
  %4107 = vmatpush.bf16.msra.mxu0 %v3115
  %4108 = vmatpush.bf16.msra.mxu0 %v3111
  %4109 = vmatpush.bf16.msra.mxu0 %v3107
  %4110 = vmatpush.bf16.msra.mxu0 %v3103
  %4111 = vmatpush.bf16.msra.mxu0 %v3099
  %4112 = vmatpush.bf16.msra.mxu0 %v3095
  %4113 = vmatpush.bf16.msra.mxu0 %v3091
  %4114 = vmatmul.bf16.gmra.mxu0 %v4078
  %v4115 = vpop.f32.mrf.mxu0
  %v4116 = vadd.f32 %v4061, %v4115
  %v4117 = vpop.f32.mrf.mxu0
  %4118 = vdwg.mxu0
  %4119 = vmatpush.bf16.msra.mxu0 %v3120
  %4120 = vmatpush.bf16.msra.mxu0 %v3116
  %4121 = vmatpush.bf16.msra.mxu0 %v3112
  %4122 = vmatpush.bf16.msra.mxu0 %v3108
  %4123 = vmatpush.bf16.msra.mxu0 %v3104
  %4124 = vmatpush.bf16.msra.mxu0 %v3100
  %4125 = vmatpush.bf16.msra.mxu0 %v3096
  %4126 = vmatpush.bf16.msra.mxu0 %v3092
  %4127 = vmatmul.bf16.gmra.mxu0 %v4078
  %v4128 = vpop.f32.mrf.mxu0
  %v4129 = vadd.f32 %v4074, %v4128
  %v4130 = vpop.f32.mrf.mxu0
  %4131 = vdwg.mxu0
  %v4132 = vadd.f32 %v4090, %v75
  %v4133 = vadd.f32 %v4103, %v76
  %v4134 = vadd.f32 %v4116, %v77
  %v4135 = vadd.f32 %v4129, %v78
  %v4136 = vxor.u32 %v4132, 2147483648
  %v4137 = vxor.u32 %v4133, 2147483648
  %v4138 = vxor.u32 %v4134, 2147483648
  %v4139 = vmul.f32 %v4136, 1.442695
  %v4140 = vpow.pop %v4139
  %v4141 = vmul.f32 %v4137, 1.442695
  %v4142 = vpow.pop %v4141
  %v4143 = vmul.f32 %v4138, 1.442695
  %v4144 = vpow.pop %v4143
  %v4145 = vadd.f32 %v4140, 1.0
  %v4146 = vadd.f32 %v4142, 1.0
  %v4147 = vadd.f32 %v4144, 1.0
  %v4148 = vrcp.pop %v4145
  %v4149 = vmul.f32 %v4145, %v4148
  %v4150 = vsub.f32 1.0, %v4149
  %v4151 = vmul.f32 %v4148, %v4150
  %v4152 = vadd.f32 %v4148, %v4151
  %vm4153 = vweird.f32 %v4145
  %vm4154 = vweird.f32 %v4148
  %vm4155 = vmor %vm4153, %vm4154
  %v4156 = vsel %vm4155, %v4148, %v4152
  %v4157 = vand.u32 2147483647, %v4145
  %vm4158 = vcmp.eq.f32.partialorder %v4157, 8.507059e+37
  %v4159 = vand.u32 %v4145, 2147483648
  %v4160 = vor.u32 1.1754944e-38, %v4159
  %v4161 = vsel %vm4158, %v4160, %v4156
  %v4162 = vmul.f32 1.0, %v4161
  %v4163 = vrcp.pop %v4146
  %v4164 = vmul.f32 %v4146, %v4163
  %v4165 = vsub.f32 1.0, %v4164
  %v4166 = vmul.f32 %v4163, %v4165
  %v4167 = vadd.f32 %v4163, %v4166
  %vm4168 = vweird.f32 %v4146
  %vm4169 = vweird.f32 %v4163
  %vm4170 = vmor %vm4168, %vm4169
  %v4171 = vsel %vm4170, %v4163, %v4167
  %v4172 = vand.u32 2147483647, %v4146
  %vm4173 = vcmp.eq.f32.partialorder %v4172, 8.507059e+37
  %v4174 = vand.u32 %v4146, 2147483648
  %v4175 = vor.u32 1.1754944e-38, %v4174
  %v4176 = vsel %vm4173, %v4175, %v4171
  %v4177 = vmul.f32 1.0, %v4176
  %v4178 = vrcp.pop %v4147
  %v4179 = vmul.f32 %v4147, %v4178
  %v4180 = vsub.f32 1.0, %v4179
  %v4181 = vmul.f32 %v4178, %v4180
  %v4182 = vadd.f32 %v4178, %v4181
  %vm4183 = vweird.f32 %v4147
  %vm4184 = vweird.f32 %v4178
  %vm4185 = vmor %vm4183, %vm4184
  %v4186 = vsel %vm4185, %v4178, %v4182
  %v4187 = vand.u32 2147483647, %v4147
  %vm4188 = vcmp.eq.f32.partialorder %v4187, 8.507059e+37
  %v4189 = vand.u32 %v4147, 2147483648
  %v4190 = vor.u32 1.1754944e-38, %v4189
  %v4191 = vsel %vm4188, %v4190, %v4186
  %v4192 = vmul.f32 1.0, %v4191
  %v4193 = vtanh.pop %v4135
  %v4194 = vmul.f32 %v4177, %v3882
  %v4195 = vmul.f32 %v4162, %v4193
  %v4196 = vadd.f32 %v4194, %v4195
  %v4197 = vtanh.pop %v4196
  %v4198 = vmul.f32 %v4192, %v4197
  %v4199 = vpack.c.bf16 %v4198, %v4198
  %4200 = vmatpush.bf16.msra.mxu0 %v2551
  %4201 = vmatpush.bf16.msra.mxu0 %v2547
  %4202 = vmatpush.bf16.msra.mxu0 %v2543
  %4203 = vmatpush.bf16.msra.mxu0 %v2539
  %4204 = vmatpush.bf16.msra.mxu0 %v2535
  %4205 = vmatpush.bf16.msra.mxu0 %v2531
  %4206 = vmatpush.bf16.msra.mxu0 %v2527
  %4207 = vmatpush.bf16.msra.mxu0 %v2523
  %4208 = vmatmul.bf16.gmra.mxu0 %v4078
  %v4209 = vpop.f32.mrf.mxu0
  %v4210 = vadd.f32 0.0, %v4209
  %v4211 = vpop.f32.mrf.mxu0
  %4212 = vdwg.mxu0
  %4213 = vmatpush.bf16.msra.mxu0 %v2552
  %4214 = vmatpush.bf16.msra.mxu0 %v2548
  %4215 = vmatpush.bf16.msra.mxu0 %v2544
  %4216 = vmatpush.bf16.msra.mxu0 %v2540
  %4217 = vmatpush.bf16.msra.mxu0 %v2536
  %4218 = vmatpush.bf16.msra.mxu0 %v2532
  %4219 = vmatpush.bf16.msra.mxu0 %v2528
  %4220 = vmatpush.bf16.msra.mxu0 %v2524
  %4221 = vmatmul.bf16.gmra.mxu0 %v4078
  %v4222 = vpop.f32.mrf.mxu0
  %v4223 = vadd.f32 0.0, %v4222
  %v4224 = vpop.f32.mrf.mxu0
  %4225 = vdwg.mxu0
  %4226 = vmatpush.bf16.msra.mxu0 %v2553
  %4227 = vmatpush.bf16.msra.mxu0 %v2549
  %4228 = vmatpush.bf16.msra.mxu0 %v2545
  %4229 = vmatpush.bf16.msra.mxu0 %v2541
  %4230 = vmatpush.bf16.msra.mxu0 %v2537
  %4231 = vmatpush.bf16.msra.mxu0 %v2533
  %4232 = vmatpush.bf16.msra.mxu0 %v2529
  %4233 = vmatpush.bf16.msra.mxu0 %v2525
  %4234 = vmatmul.bf16.gmra.mxu0 %v4078
  %v4235 = vpop.f32.mrf.mxu0
  %v4236 = vadd.f32 0.0, %v4235
  %v4237 = vpop.f32.mrf.mxu0
  %4238 = vdwg.mxu0
  %4239 = vmatpush.bf16.msra.mxu0 %v2554
  %4240 = vmatpush.bf16.msra.mxu0 %v2550
  %4241 = vmatpush.bf16.msra.mxu0 %v2546
  %4242 = vmatpush.bf16.msra.mxu0 %v2542
  %4243 = vmatpush.bf16.msra.mxu0 %v2538
  %4244 = vmatpush.bf16.msra.mxu0 %v2534
  %4245 = vmatpush.bf16.msra.mxu0 %v2530
  %4246 = vmatpush.bf16.msra.mxu0 %v2526
  %4247 = vmatmul.bf16.gmra.mxu0 %v4078
  %v4248 = vpop.f32.mrf.mxu0
  %v4249 = vadd.f32 0.0, %v4248
  %v4250 = vpop.f32.mrf.mxu0
  %4251 = vdwg.mxu0
  %4252 = vmatpush.bf16.msra.mxu0 %v2303
  %4253 = vmatpush.bf16.msra.mxu0 %v2299
  %4254 = vmatpush.bf16.msra.mxu0 %v2295
  %4255 = vmatpush.bf16.msra.mxu0 %v2291
  %4256 = vmatpush.bf16.msra.mxu0 %v2287
  %4257 = vmatpush.bf16.msra.mxu0 %v2283
  %4258 = vmatpush.bf16.msra.mxu0 %v2279
  %4259 = vmatpush.bf16.msra.mxu0 %v2275
  %4260 = vmatmul.bf16.gmra.mxu0 %v4199
  %v4261 = vpop.f32.mrf.mxu0
  %v4262 = vadd.f32 %v4210, %v4261
  %v4263 = vpop.f32.mrf.mxu0
  %4264 = vdwg.mxu0
  %4265 = vmatpush.bf16.msra.mxu0 %v2304
  %4266 = vmatpush.bf16.msra.mxu0 %v2300
  %4267 = vmatpush.bf16.msra.mxu0 %v2296
  %4268 = vmatpush.bf16.msra.mxu0 %v2292
  %4269 = vmatpush.bf16.msra.mxu0 %v2288
  %4270 = vmatpush.bf16.msra.mxu0 %v2284
  %4271 = vmatpush.bf16.msra.mxu0 %v2280
  %4272 = vmatpush.bf16.msra.mxu0 %v2276
  %4273 = vmatmul.bf16.gmra.mxu0 %v4199
  %v4274 = vpop.f32.mrf.mxu0
  %v4275 = vadd.f32 %v4223, %v4274
  %v4276 = vpop.f32.mrf.mxu0
  %4277 = vdwg.mxu0
  %4278 = vmatpush.bf16.msra.mxu0 %v2305
  %4279 = vmatpush.bf16.msra.mxu0 %v2301
  %4280 = vmatpush.bf16.msra.mxu0 %v2297
  %4281 = vmatpush.bf16.msra.mxu0 %v2293
  %4282 = vmatpush.bf16.msra.mxu0 %v2289
  %4283 = vmatpush.bf16.msra.mxu0 %v2285
  %4284 = vmatpush.bf16.msra.mxu0 %v2281
  %4285 = vmatpush.bf16.msra.mxu0 %v2277
  %4286 = vmatmul.bf16.gmra.mxu0 %v4199
  %v4287 = vpop.f32.mrf.mxu0
  %v4288 = vadd.f32 %v4236, %v4287
  %v4289 = vpop.f32.mrf.mxu0
  %4290 = vdwg.mxu0
  %4291 = vmatpush.bf16.msra.mxu0 %v2306
  %4292 = vmatpush.bf16.msra.mxu0 %v2302
  %4293 = vmatpush.bf16.msra.mxu0 %v2298
  %4294 = vmatpush.bf16.msra.mxu0 %v2294
  %4295 = vmatpush.bf16.msra.mxu0 %v2290
  %4296 = vmatpush.bf16.msra.mxu0 %v2286
  %4297 = vmatpush.bf16.msra.mxu0 %v2282
  %4298 = vmatpush.bf16.msra.mxu0 %v2278
  %4299 = vmatmul.bf16.gmra.mxu0 %v4199
  %v4300 = vpop.f32.mrf.mxu0
  %v4301 = vadd.f32 %v4249, %v4300
  %v4302 = vpop.f32.mrf.mxu0
  %4303 = vdwg.mxu0
  %v4304 = vadd.f32 %v4262, %v64
  %v4305 = vadd.f32 %v4275, %v65
  %v4306 = vadd.f32 %v4288, %v66
  %v4307 = vadd.f32 %v4301, %v67
  %v4308 = vxor.u32 %v4304, 2147483648
  %v4309 = vxor.u32 %v4305, 2147483648
  %v4310 = vxor.u32 %v4306, 2147483648
  %v4311 = vmul.f32 %v4308, 1.442695
  %v4312 = vpow.pop %v4311
  %v4313 = vmul.f32 %v4309, 1.442695
  %v4314 = vpow.pop %v4313
  %v4315 = vmul.f32 %v4310, 1.442695
  %v4316 = vpow.pop %v4315
  %v4317 = vadd.f32 %v4312, 1.0
  %v4318 = vadd.f32 %v4314, 1.0
  %v4319 = vadd.f32 %v4316, 1.0
  %v4320 = vrcp.pop %v4317
  %v4321 = vmul.f32 %v4317, %v4320
  %v4322 = vsub.f32 1.0, %v4321
  %v4323 = vmul.f32 %v4320, %v4322
  %v4324 = vadd.f32 %v4320, %v4323
  %vm4325 = vweird.f32 %v4317
  %vm4326 = vweird.f32 %v4320
  %vm4327 = vmor %vm4325, %vm4326
  %v4328 = vsel %vm4327, %v4320, %v4324
  %v4329 = vand.u32 2147483647, %v4317
  %vm4330 = vcmp.eq.f32.partialorder %v4329, 8.507059e+37
  %v4331 = vand.u32 %v4317, 2147483648
  %v4332 = vor.u32 1.1754944e-38, %v4331
  %v4333 = vsel %vm4330, %v4332, %v4328
  %v4334 = vmul.f32 1.0, %v4333
  %v4335 = vrcp.pop %v4318
  %v4336 = vmul.f32 %v4318, %v4335
  %v4337 = vsub.f32 1.0, %v4336
  %v4338 = vmul.f32 %v4335, %v4337
  %v4339 = vadd.f32 %v4335, %v4338
  %vm4340 = vweird.f32 %v4318
  %vm4341 = vweird.f32 %v4335
  %vm4342 = vmor %vm4340, %vm4341
  %v4343 = vsel %vm4342, %v4335, %v4339
  %v4344 = vand.u32 2147483647, %v4318
  %vm4345 = vcmp.eq.f32.partialorder %v4344, 8.507059e+37
  %v4346 = vand.u32 %v4318, 2147483648
  %v4347 = vor.u32 1.1754944e-38, %v4346
  %v4348 = vsel %vm4345, %v4347, %v4343
  %v4349 = vmul.f32 1.0, %v4348
  %v4350 = vrcp.pop %v4319
  %v4351 = vmul.f32 %v4319, %v4350
  %v4352 = vsub.f32 1.0, %v4351
  %v4353 = vmul.f32 %v4350, %v4352
  %v4354 = vadd.f32 %v4350, %v4353
  %vm4355 = vweird.f32 %v4319
  %vm4356 = vweird.f32 %v4350
  %vm4357 = vmor %vm4355, %vm4356
  %v4358 = vsel %vm4357, %v4350, %v4354
  %v4359 = vand.u32 2147483647, %v4319
  %vm4360 = vcmp.eq.f32.partialorder %v4359, 8.507059e+37
  %v4361 = vand.u32 %v4319, 2147483648
  %v4362 = vor.u32 1.1754944e-38, %v4361
  %v4363 = vsel %vm4360, %v4362, %v4358
  %v4364 = vmul.f32 1.0, %v4363
  %v4365 = vtanh.pop %v4307
  %v4367 = vrot.slane %v4020, 4
  %v4369 = vmul.f32 %v4349, %v4367
  %v4370 = vmul.f32 %v4334, %v4365
  %v4371 = vadd.f32 %v4369, %v4370
  %v4372 = vtanh.pop %v4371
  %v4373 = vmul.f32 %v4364, %v4372
  %v4374 = vpack.c.bf16 %v4373, %v4373
  %4375 = vmatpush.bf16.msra.mxu0 %v2905
  %4376 = vmatpush.bf16.msra.mxu0 %v2901
  %4377 = vmatpush.bf16.msra.mxu0 %v2897
  %4378 = vmatpush.bf16.msra.mxu0 %v2893
  %4379 = vmatpush.bf16.msra.mxu0 %v2889
  %4380 = vmatpush.bf16.msra.mxu0 %v2885
  %4381 = vmatpush.bf16.msra.mxu0 %v2881
  %4382 = vmatpush.bf16.msra.mxu0 %v2877
  %4383 = vmatmul.bf16.gmra.mxu0 %v4199
  %v4384 = vpop.f32.mrf.mxu0
  %v4385 = vadd.f32 0.0, %v4384
  %v4386 = vpop.f32.mrf.mxu0
  %4387 = vdwg.mxu0
  %4388 = vmatpush.bf16.msra.mxu0 %v2906
  %4389 = vmatpush.bf16.msra.mxu0 %v2902
  %4390 = vmatpush.bf16.msra.mxu0 %v2898
  %4391 = vmatpush.bf16.msra.mxu0 %v2894
  %4392 = vmatpush.bf16.msra.mxu0 %v2890
  %4393 = vmatpush.bf16.msra.mxu0 %v2886
  %4394 = vmatpush.bf16.msra.mxu0 %v2882
  %4395 = vmatpush.bf16.msra.mxu0 %v2878
  %4396 = vmatmul.bf16.gmra.mxu0 %v4199
  %v4397 = vpop.f32.mrf.mxu0
  %v4398 = vadd.f32 0.0, %v4397
  %v4399 = vpop.f32.mrf.mxu0
  %4400 = vdwg.mxu0
  %4401 = vmatpush.bf16.msra.mxu0 %v2907
  %4402 = vmatpush.bf16.msra.mxu0 %v2903
  %4403 = vmatpush.bf16.msra.mxu0 %v2899
  %4404 = vmatpush.bf16.msra.mxu0 %v2895
  %4405 = vmatpush.bf16.msra.mxu0 %v2891
  %4406 = vmatpush.bf16.msra.mxu0 %v2887
  %4407 = vmatpush.bf16.msra.mxu0 %v2883
  %4408 = vmatpush.bf16.msra.mxu0 %v2879
  %4409 = vmatmul.bf16.gmra.mxu0 %v4199
  %v4410 = vpop.f32.mrf.mxu0
  %v4411 = vadd.f32 0.0, %v4410
  %v4412 = vpop.f32.mrf.mxu0
  %4413 = vdwg.mxu0
  %4414 = vmatpush.bf16.msra.mxu0 %v2908
  %4415 = vmatpush.bf16.msra.mxu0 %v2904
  %4416 = vmatpush.bf16.msra.mxu0 %v2900
  %4417 = vmatpush.bf16.msra.mxu0 %v2896
  %4418 = vmatpush.bf16.msra.mxu0 %v2892
  %4419 = vmatpush.bf16.msra.mxu0 %v2888
  %4420 = vmatpush.bf16.msra.mxu0 %v2884
  %4421 = vmatpush.bf16.msra.mxu0 %v2880
  %4422 = vmatmul.bf16.gmra.mxu0 %v4199
  %v4423 = vpop.f32.mrf.mxu0
  %v4424 = vadd.f32 0.0, %v4423
  %v4425 = vpop.f32.mrf.mxu0
  %4426 = vdwg.mxu0
  %4427 = vmatpush.bf16.msra.mxu0 %v3117
  %4428 = vmatpush.bf16.msra.mxu0 %v3113
  %4429 = vmatpush.bf16.msra.mxu0 %v3109
  %4430 = vmatpush.bf16.msra.mxu0 %v3105
  %4431 = vmatpush.bf16.msra.mxu0 %v3101
  %4432 = vmatpush.bf16.msra.mxu0 %v3097
  %4433 = vmatpush.bf16.msra.mxu0 %v3093
  %4434 = vmatpush.bf16.msra.mxu0 %v3089
  %4435 = vmatmul.bf16.gmra.mxu0 %v4374
  %v4436 = vpop.f32.mrf.mxu0
  %v4437 = vadd.f32 %v4385, %v4436
  %v4438 = vpop.f32.mrf.mxu0
  %4439 = vdwg.mxu0
  %4440 = vmatpush.bf16.msra.mxu0 %v3118
  %4441 = vmatpush.bf16.msra.mxu0 %v3114
  %4442 = vmatpush.bf16.msra.mxu0 %v3110
  %4443 = vmatpush.bf16.msra.mxu0 %v3106
  %4444 = vmatpush.bf16.msra.mxu0 %v3102
  %4445 = vmatpush.bf16.msra.mxu0 %v3098
  %4446 = vmatpush.bf16.msra.mxu0 %v3094
  %4447 = vmatpush.bf16.msra.mxu0 %v3090
  %4448 = vmatmul.bf16.gmra.mxu0 %v4374
  %v4449 = vpop.f32.mrf.mxu0
  %v4450 = vadd.f32 %v4398, %v4449
  %v4451 = vpop.f32.mrf.mxu0
  %4452 = vdwg.mxu0
  %4453 = vmatpush.bf16.msra.mxu0 %v3119
  %4454 = vmatpush.bf16.msra.mxu0 %v3115
  %4455 = vmatpush.bf16.msra.mxu0 %v3111
  %4456 = vmatpush.bf16.msra.mxu0 %v3107
  %4457 = vmatpush.bf16.msra.mxu0 %v3103
  %4458 = vmatpush.bf16.msra.mxu0 %v3099
  %4459 = vmatpush.bf16.msra.mxu0 %v3095
  %4460 = vmatpush.bf16.msra.mxu0 %v3091
  %4461 = vmatmul.bf16.gmra.mxu0 %v4374
  %v4462 = vpop.f32.mrf.mxu0
  %v4463 = vadd.f32 %v4411, %v4462
  %v4464 = vpop.f32.mrf.mxu0
  %4465 = vdwg.mxu0
  %4466 = vmatpush.bf16.msra.mxu0 %v3120
  %4467 = vmatpush.bf16.msra.mxu0 %v3116
  %4468 = vmatpush.bf16.msra.mxu0 %v3112
  %4469 = vmatpush.bf16.msra.mxu0 %v3108
  %4470 = vmatpush.bf16.msra.mxu0 %v3104
  %4471 = vmatpush.bf16.msra.mxu0 %v3100
  %4472 = vmatpush.bf16.msra.mxu0 %v3096
  %4473 = vmatpush.bf16.msra.mxu0 %v3092
  %4474 = vmatmul.bf16.gmra.mxu0 %v4374
  %v4475 = vpop.f32.mrf.mxu0
  %v4476 = vadd.f32 %v4424, %v4475
  %v4477 = vpop.f32.mrf.mxu0
  %4478 = vdwg.mxu0
  %v4479 = vadd.f32 %v4437, %v75
  %v4480 = vadd.f32 %v4450, %v76
  %v4481 = vadd.f32 %v4463, %v77
  %v4482 = vadd.f32 %v4476, %v78
  %v4483 = vxor.u32 %v4479, 2147483648
  %v4484 = vxor.u32 %v4480, 2147483648
  %v4485 = vxor.u32 %v4481, 2147483648
  %v4486 = vmul.f32 %v4483, 1.442695
  %v4487 = vpow.pop %v4486
  %v4488 = vmul.f32 %v4484, 1.442695
  %v4489 = vpow.pop %v4488
  %v4490 = vmul.f32 %v4485, 1.442695
  %v4491 = vpow.pop %v4490
  %v4492 = vadd.f32 %v4487, 1.0
  %v4493 = vadd.f32 %v4489, 1.0
  %v4494 = vadd.f32 %v4491, 1.0
  %v4495 = vrcp.pop %v4492
  %v4496 = vmul.f32 %v4492, %v4495
  %v4497 = vsub.f32 1.0, %v4496
  %v4498 = vmul.f32 %v4495, %v4497
  %v4499 = vadd.f32 %v4495, %v4498
  %vm4500 = vweird.f32 %v4492
  %vm4501 = vweird.f32 %v4495
  %vm4502 = vmor %vm4500, %vm4501
  %v4503 = vsel %vm4502, %v4495, %v4499
  %v4504 = vand.u32 2147483647, %v4492
  %vm4505 = vcmp.eq.f32.partialorder %v4504, 8.507059e+37
  %v4506 = vand.u32 %v4492, 2147483648
  %v4507 = vor.u32 1.1754944e-38, %v4506
  %v4508 = vsel %vm4505, %v4507, %v4503
  %v4509 = vmul.f32 1.0, %v4508
  %v4510 = vrcp.pop %v4493
  %v4511 = vmul.f32 %v4493, %v4510
  %v4512 = vsub.f32 1.0, %v4511
  %v4513 = vmul.f32 %v4510, %v4512
  %v4514 = vadd.f32 %v4510, %v4513
  %vm4515 = vweird.f32 %v4493
  %vm4516 = vweird.f32 %v4510
  %vm4517 = vmor %vm4515, %vm4516
  %v4518 = vsel %vm4517, %v4510, %v4514
  %v4519 = vand.u32 2147483647, %v4493
  %vm4520 = vcmp.eq.f32.partialorder %v4519, 8.507059e+37
  %v4521 = vand.u32 %v4493, 2147483648
  %v4522 = vor.u32 1.1754944e-38, %v4521
  %v4523 = vsel %vm4520, %v4522, %v4518
  %v4524 = vmul.f32 1.0, %v4523
  %v4525 = vrcp.pop %v4494
  %v4526 = vmul.f32 %v4494, %v4525
  %v4527 = vsub.f32 1.0, %v4526
  %v4528 = vmul.f32 %v4525, %v4527
  %v4529 = vadd.f32 %v4525, %v4528
  %vm4530 = vweird.f32 %v4494
  %vm4531 = vweird.f32 %v4525
  %vm4532 = vmor %vm4530, %vm4531
  %v4533 = vsel %vm4532, %v4525, %v4529
  %v4534 = vand.u32 2147483647, %v4494
  %vm4535 = vcmp.eq.f32.partialorder %v4534, 8.507059e+37
  %v4536 = vand.u32 %v4494, 2147483648
  %v4537 = vor.u32 1.1754944e-38, %v4536
  %v4538 = vsel %vm4535, %v4537, %v4533
  %v4539 = vmul.f32 1.0, %v4538
  %v4540 = vtanh.pop %v4482
  %v4541 = vmul.f32 %v4524, %v4196
  %v4542 = vmul.f32 %v4509, %v4540
  %v4543 = vadd.f32 %v4541, %v4542
  %v4544 = vtanh.pop %v4543
  %v4545 = vmul.f32 %v4539, %v4544
  %v4546 = vpack.c.bf16 %v4545, %v4545
  %4547 = vmatpush.bf16.msra.mxu0 %v2551
  %4548 = vmatpush.bf16.msra.mxu0 %v2547
  %4549 = vmatpush.bf16.msra.mxu0 %v2543
  %4550 = vmatpush.bf16.msra.mxu0 %v2539
  %4551 = vmatpush.bf16.msra.mxu0 %v2535
  %4552 = vmatpush.bf16.msra.mxu0 %v2531
  %4553 = vmatpush.bf16.msra.mxu0 %v2527
  %4554 = vmatpush.bf16.msra.mxu0 %v2523
  %4555 = vmatmul.bf16.gmra.mxu0 %v4374
  %v4556 = vpop.f32.mrf.mxu0
  %v4557 = vadd.f32 0.0, %v4556
  %v4558 = vpop.f32.mrf.mxu0
  %4559 = vdwg.mxu0
  %4560 = vmatpush.bf16.msra.mxu0 %v2552
  %4561 = vmatpush.bf16.msra.mxu0 %v2548
  %4562 = vmatpush.bf16.msra.mxu0 %v2544
  %4563 = vmatpush.bf16.msra.mxu0 %v2540
  %4564 = vmatpush.bf16.msra.mxu0 %v2536
  %4565 = vmatpush.bf16.msra.mxu0 %v2532
  %4566 = vmatpush.bf16.msra.mxu0 %v2528
  %4567 = vmatpush.bf16.msra.mxu0 %v2524
  %4568 = vmatmul.bf16.gmra.mxu0 %v4374
  %v4569 = vpop.f32.mrf.mxu0
  %v4570 = vadd.f32 0.0, %v4569
  %v4571 = vpop.f32.mrf.mxu0
  %4572 = vdwg.mxu0
  %4573 = vmatpush.bf16.msra.mxu0 %v2553
  %4574 = vmatpush.bf16.msra.mxu0 %v2549
  %4575 = vmatpush.bf16.msra.mxu0 %v2545
  %4576 = vmatpush.bf16.msra.mxu0 %v2541
  %4577 = vmatpush.bf16.msra.mxu0 %v2537
  %4578 = vmatpush.bf16.msra.mxu0 %v2533
  %4579 = vmatpush.bf16.msra.mxu0 %v2529
  %4580 = vmatpush.bf16.msra.mxu0 %v2525
  %4581 = vmatmul.bf16.gmra.mxu0 %v4374
  %v4582 = vpop.f32.mrf.mxu0
  %v4583 = vadd.f32 0.0, %v4582
  %v4584 = vpop.f32.mrf.mxu0
  %4585 = vdwg.mxu0
  %4586 = vmatpush.bf16.msra.mxu0 %v2554
  %4587 = vmatpush.bf16.msra.mxu0 %v2550
  %4588 = vmatpush.bf16.msra.mxu0 %v2546
  %4589 = vmatpush.bf16.msra.mxu0 %v2542
  %4590 = vmatpush.bf16.msra.mxu0 %v2538
  %4591 = vmatpush.bf16.msra.mxu0 %v2534
  %4592 = vmatpush.bf16.msra.mxu0 %v2530
  %4593 = vmatpush.bf16.msra.mxu0 %v2526
  %4594 = vmatmul.bf16.gmra.mxu0 %v4374
  %v4595 = vpop.f32.mrf.mxu0
  %v4596 = vadd.f32 0.0, %v4595
  %v4597 = vpop.f32.mrf.mxu0
  %4598 = vdwg.mxu0
  %4599 = vmatpush.bf16.msra.mxu0 %v2303
  %4600 = vmatpush.bf16.msra.mxu0 %v2299
  %4601 = vmatpush.bf16.msra.mxu0 %v2295
  %4602 = vmatpush.bf16.msra.mxu0 %v2291
  %4603 = vmatpush.bf16.msra.mxu0 %v2287
  %4604 = vmatpush.bf16.msra.mxu0 %v2283
  %4605 = vmatpush.bf16.msra.mxu0 %v2279
  %4606 = vmatpush.bf16.msra.mxu0 %v2275
  %4607 = vmatmul.bf16.gmra.mxu0 %v4546
  %v4608 = vpop.f32.mrf.mxu0
  %v4609 = vadd.f32 %v4557, %v4608
  %v4610 = vpop.f32.mrf.mxu0
  %4611 = vdwg.mxu0
  %4612 = vmatpush.bf16.msra.mxu0 %v2304
  %4613 = vmatpush.bf16.msra.mxu0 %v2300
  %4614 = vmatpush.bf16.msra.mxu0 %v2296
  %4615 = vmatpush.bf16.msra.mxu0 %v2292
  %4616 = vmatpush.bf16.msra.mxu0 %v2288
  %4617 = vmatpush.bf16.msra.mxu0 %v2284
  %4618 = vmatpush.bf16.msra.mxu0 %v2280
  %4619 = vmatpush.bf16.msra.mxu0 %v2276
  %4620 = vmatmul.bf16.gmra.mxu0 %v4546
  %v4621 = vpop.f32.mrf.mxu0
  %v4622 = vadd.f32 %v4570, %v4621
  %v4623 = vpop.f32.mrf.mxu0
  %4624 = vdwg.mxu0
  %4625 = vmatpush.bf16.msra.mxu0 %v2305
  %4626 = vmatpush.bf16.msra.mxu0 %v2301
  %4627 = vmatpush.bf16.msra.mxu0 %v2297
  %4628 = vmatpush.bf16.msra.mxu0 %v2293
  %4629 = vmatpush.bf16.msra.mxu0 %v2289
  %4630 = vmatpush.bf16.msra.mxu0 %v2285
  %4631 = vmatpush.bf16.msra.mxu0 %v2281
  %4632 = vmatpush.bf16.msra.mxu0 %v2277
  %4633 = vmatmul.bf16.gmra.mxu0 %v4546
  %v4634 = vpop.f32.mrf.mxu0
  %v4635 = vadd.f32 %v4583, %v4634
  %v4636 = vpop.f32.mrf.mxu0
  %4637 = vdwg.mxu0
  %4638 = vmatpush.bf16.msra.mxu0 %v2306
  %4639 = vmatpush.bf16.msra.mxu0 %v2302
  %4640 = vmatpush.bf16.msra.mxu0 %v2298
  %4641 = vmatpush.bf16.msra.mxu0 %v2294
  %4642 = vmatpush.bf16.msra.mxu0 %v2290
  %4643 = vmatpush.bf16.msra.mxu0 %v2286
  %4644 = vmatpush.bf16.msra.mxu0 %v2282
  %4645 = vmatpush.bf16.msra.mxu0 %v2278
  %4646 = vmatmul.bf16.gmra.mxu0 %v4546
  %v4647 = vpop.f32.mrf.mxu0
  %v4648 = vadd.f32 %v4596, %v4647
  %v4649 = vpop.f32.mrf.mxu0
  %4650 = vdwg.mxu0
  %v4651 = vadd.f32 %v4609, %v64
  %v4652 = vadd.f32 %v4622, %v65
  %v4653 = vadd.f32 %v4635, %v66
  %v4654 = vadd.f32 %v4648, %v67
  %v4655 = vxor.u32 %v4651, 2147483648
  %v4656 = vxor.u32 %v4652, 2147483648
  %v4657 = vxor.u32 %v4653, 2147483648
  %v4658 = vmul.f32 %v4655, 1.442695
  %v4659 = vpow.pop %v4658
  %v4660 = vmul.f32 %v4656, 1.442695
  %v4661 = vpow.pop %v4660
  %v4662 = vmul.f32 %v4657, 1.442695
  %v4663 = vpow.pop %v4662
  %v4664 = vadd.f32 %v4659, 1.0
  %v4665 = vadd.f32 %v4661, 1.0
  %v4666 = vadd.f32 %v4663, 1.0
  %v4667 = vrcp.pop %v4664
  %v4668 = vmul.f32 %v4664, %v4667
  %v4669 = vsub.f32 1.0, %v4668
  %v4670 = vmul.f32 %v4667, %v4669
  %v4671 = vadd.f32 %v4667, %v4670
  %vm4672 = vweird.f32 %v4664
  %vm4673 = vweird.f32 %v4667
  %vm4674 = vmor %vm4672, %vm4673
  %v4675 = vsel %vm4674, %v4667, %v4671
  %v4676 = vand.u32 2147483647, %v4664
  %vm4677 = vcmp.eq.f32.partialorder %v4676, 8.507059e+37
  %v4678 = vand.u32 %v4664, 2147483648
  %v4679 = vor.u32 1.1754944e-38, %v4678
  %v4680 = vsel %vm4677, %v4679, %v4675
  %v4681 = vmul.f32 1.0, %v4680
  %v4682 = vrcp.pop %v4665
  %v4683 = vmul.f32 %v4665, %v4682
  %v4684 = vsub.f32 1.0, %v4683
  %v4685 = vmul.f32 %v4682, %v4684
  %v4686 = vadd.f32 %v4682, %v4685
  %vm4687 = vweird.f32 %v4665
  %vm4688 = vweird.f32 %v4682
  %vm4689 = vmor %vm4687, %vm4688
  %v4690 = vsel %vm4689, %v4682, %v4686
  %v4691 = vand.u32 2147483647, %v4665
  %vm4692 = vcmp.eq.f32.partialorder %v4691, 8.507059e+37
  %v4693 = vand.u32 %v4665, 2147483648
  %v4694 = vor.u32 1.1754944e-38, %v4693
  %v4695 = vsel %vm4692, %v4694, %v4690
  %v4696 = vmul.f32 1.0, %v4695
  %v4697 = vrcp.pop %v4666
  %v4698 = vmul.f32 %v4666, %v4697
  %v4699 = vsub.f32 1.0, %v4698
  %v4700 = vmul.f32 %v4697, %v4699
  %v4701 = vadd.f32 %v4697, %v4700
  %vm4702 = vweird.f32 %v4666
  %vm4703 = vweird.f32 %v4697
  %vm4704 = vmor %vm4702, %vm4703
  %v4705 = vsel %vm4704, %v4697, %v4701
  %v4706 = vand.u32 2147483647, %v4666
  %vm4707 = vcmp.eq.f32.partialorder %v4706, 8.507059e+37
  %v4708 = vand.u32 %v4666, 2147483648
  %v4709 = vor.u32 1.1754944e-38, %v4708
  %v4710 = vsel %vm4707, %v4709, %v4705
  %v4711 = vmul.f32 1.0, %v4710
  %v4712 = vtanh.pop %v4654
  %v4713 = vmul.f32 %v4696, %v4371
  %v4714 = vmul.f32 %v4681, %v4712
  %v4715 = vadd.f32 %v4713, %v4714
  %v4716 = vtanh.pop %v4715
  %v4717 = vmul.f32 %v4711, %v4716
  %v4718 = vpack.c.bf16 %v4717, %v4717
  %4719 = vmatpush.bf16.msra.mxu0 %v2905
  %4720 = vmatpush.bf16.msra.mxu0 %v2901
  %4721 = vmatpush.bf16.msra.mxu0 %v2897
  %4722 = vmatpush.bf16.msra.mxu0 %v2893
  %4723 = vmatpush.bf16.msra.mxu0 %v2889
  %4724 = vmatpush.bf16.msra.mxu0 %v2885
  %4725 = vmatpush.bf16.msra.mxu0 %v2881
  %4726 = vmatpush.bf16.msra.mxu0 %v2877
  %4727 = vmatmul.bf16.gmra.mxu0 %v4546
  %v4728 = vpop.f32.mrf.mxu0
  %v4729 = vadd.f32 0.0, %v4728
  %v4730 = vpop.f32.mrf.mxu0
  %4731 = vdwg.mxu0
  %4732 = vmatpush.bf16.msra.mxu0 %v2906
  %4733 = vmatpush.bf16.msra.mxu0 %v2902
  %4734 = vmatpush.bf16.msra.mxu0 %v2898
  %4735 = vmatpush.bf16.msra.mxu0 %v2894
  %4736 = vmatpush.bf16.msra.mxu0 %v2890
  %4737 = vmatpush.bf16.msra.mxu0 %v2886
  %4738 = vmatpush.bf16.msra.mxu0 %v2882
  %4739 = vmatpush.bf16.msra.mxu0 %v2878
  %4740 = vmatmul.bf16.gmra.mxu0 %v4546
  %v4741 = vpop.f32.mrf.mxu0
  %v4742 = vadd.f32 0.0, %v4741
  %v4743 = vpop.f32.mrf.mxu0
  %4744 = vdwg.mxu0
  %4745 = vmatpush.bf16.msra.mxu0 %v2907
  %4746 = vmatpush.bf16.msra.mxu0 %v2903
  %4747 = vmatpush.bf16.msra.mxu0 %v2899
  %4748 = vmatpush.bf16.msra.mxu0 %v2895
  %4749 = vmatpush.bf16.msra.mxu0 %v2891
  %4750 = vmatpush.bf16.msra.mxu0 %v2887
  %4751 = vmatpush.bf16.msra.mxu0 %v2883
  %4752 = vmatpush.bf16.msra.mxu0 %v2879
  %4753 = vmatmul.bf16.gmra.mxu0 %v4546
  %v4754 = vpop.f32.mrf.mxu0
  %v4755 = vadd.f32 0.0, %v4754
  %v4756 = vpop.f32.mrf.mxu0
  %4757 = vdwg.mxu0
  %4758 = vmatpush.bf16.msra.mxu0 %v2908
  %4759 = vmatpush.bf16.msra.mxu0 %v2904
  %4760 = vmatpush.bf16.msra.mxu0 %v2900
  %4761 = vmatpush.bf16.msra.mxu0 %v2896
  %4762 = vmatpush.bf16.msra.mxu0 %v2892
  %4763 = vmatpush.bf16.msra.mxu0 %v2888
  %4764 = vmatpush.bf16.msra.mxu0 %v2884
  %4765 = vmatpush.bf16.msra.mxu0 %v2880
  %4766 = vmatmul.bf16.gmra.mxu0 %v4546
  %v4767 = vpop.f32.mrf.mxu0
  %v4768 = vadd.f32 0.0, %v4767
  %v4769 = vpop.f32.mrf.mxu0
  %4770 = vdwg.mxu0
  %4771 = vmatpush.bf16.msra.mxu0 %v3117
  %4772 = vmatpush.bf16.msra.mxu0 %v3113
  %4773 = vmatpush.bf16.msra.mxu0 %v3109
  %4774 = vmatpush.bf16.msra.mxu0 %v3105
  %4775 = vmatpush.bf16.msra.mxu0 %v3101
  %4776 = vmatpush.bf16.msra.mxu0 %v3097
  %4777 = vmatpush.bf16.msra.mxu0 %v3093
  %4778 = vmatpush.bf16.msra.mxu0 %v3089
  %4779 = vmatmul.bf16.gmra.mxu0 %v4718
  %v4780 = vpop.f32.mrf.mxu0
  %v4781 = vadd.f32 %v4729, %v4780
  %v4782 = vpop.f32.mrf.mxu0
  %4783 = vdwg.mxu0
  %4784 = vmatpush.bf16.msra.mxu0 %v3118
  %4785 = vmatpush.bf16.msra.mxu0 %v3114
  %4786 = vmatpush.bf16.msra.mxu0 %v3110
  %4787 = vmatpush.bf16.msra.mxu0 %v3106
  %4788 = vmatpush.bf16.msra.mxu0 %v3102
  %4789 = vmatpush.bf16.msra.mxu0 %v3098
  %4790 = vmatpush.bf16.msra.mxu0 %v3094
  %4791 = vmatpush.bf16.msra.mxu0 %v3090
  %4792 = vmatmul.bf16.gmra.mxu0 %v4718
  %v4793 = vpop.f32.mrf.mxu0
  %v4794 = vadd.f32 %v4742, %v4793
  %v4795 = vpop.f32.mrf.mxu0
  %4796 = vdwg.mxu0
  %4797 = vmatpush.bf16.msra.mxu0 %v3119
  %4798 = vmatpush.bf16.msra.mxu0 %v3115
  %4799 = vmatpush.bf16.msra.mxu0 %v3111
  %4800 = vmatpush.bf16.msra.mxu0 %v3107
  %4801 = vmatpush.bf16.msra.mxu0 %v3103
  %4802 = vmatpush.bf16.msra.mxu0 %v3099
  %4803 = vmatpush.bf16.msra.mxu0 %v3095
  %4804 = vmatpush.bf16.msra.mxu0 %v3091
  %4805 = vmatmul.bf16.gmra.mxu0 %v4718
  %v4806 = vpop.f32.mrf.mxu0
  %v4807 = vadd.f32 %v4755, %v4806
  %v4808 = vpop.f32.mrf.mxu0
  %4809 = vdwg.mxu0
  %4810 = vmatpush.bf16.msra.mxu0 %v3120
  %4811 = vmatpush.bf16.msra.mxu0 %v3116
  %4812 = vmatpush.bf16.msra.mxu0 %v3112
  %4813 = vmatpush.bf16.msra.mxu0 %v3108
  %4814 = vmatpush.bf16.msra.mxu0 %v3104
  %4815 = vmatpush.bf16.msra.mxu0 %v3100
  %4816 = vmatpush.bf16.msra.mxu0 %v3096
  %4817 = vmatpush.bf16.msra.mxu0 %v3092
  %4818 = vmatmul.bf16.gmra.mxu0 %v4718
  %v4819 = vpop.f32.mrf.mxu0
  %v4820 = vadd.f32 %v4768, %v4819
  %v4821 = vpop.f32.mrf.mxu0
  %4822 = vdwg.mxu0
  %v4823 = vadd.f32 %v4781, %v75
  %v4824 = vadd.f32 %v4794, %v76
  %v4825 = vadd.f32 %v4807, %v77
  %v4826 = vadd.f32 %v4820, %v78
  %v4827 = vxor.u32 %v4823, 2147483648
  %v4828 = vxor.u32 %v4824, 2147483648
  %v4829 = vxor.u32 %v4825, 2147483648
  %v4830 = vmul.f32 %v4827, 1.442695
  %v4831 = vpow.pop %v4830
  %v4832 = vmul.f32 %v4828, 1.442695
  %v4833 = vpow.pop %v4832
  %v4834 = vmul.f32 %v4829, 1.442695
  %v4835 = vpow.pop %v4834
  %v4836 = vadd.f32 %v4831, 1.0
  %v4837 = vadd.f32 %v4833, 1.0
  %v4838 = vadd.f32 %v4835, 1.0
  %v4839 = vrcp.pop %v4836
  %v4840 = vmul.f32 %v4836, %v4839
  %v4841 = vsub.f32 1.0, %v4840
  %v4842 = vmul.f32 %v4839, %v4841
  %v4843 = vadd.f32 %v4839, %v4842
  %vm4844 = vweird.f32 %v4836
  %vm4845 = vweird.f32 %v4839
  %vm4846 = vmor %vm4844, %vm4845
  %v4847 = vsel %vm4846, %v4839, %v4843
  %v4848 = vand.u32 2147483647, %v4836
  %vm4849 = vcmp.eq.f32.partialorder %v4848, 8.507059e+37
  %v4850 = vand.u32 %v4836, 2147483648
  %v4851 = vor.u32 1.1754944e-38, %v4850
  %v4852 = vsel %vm4849, %v4851, %v4847
  %v4853 = vmul.f32 1.0, %v4852
  %v4854 = vrcp.pop %v4837
  %v4855 = vmul.f32 %v4837, %v4854
  %v4856 = vsub.f32 1.0, %v4855
  %v4857 = vmul.f32 %v4854, %v4856
  %v4858 = vadd.f32 %v4854, %v4857
  %vm4859 = vweird.f32 %v4837
  %vm4860 = vweird.f32 %v4854
  %vm4861 = vmor %vm4859, %vm4860
  %v4862 = vsel %vm4861, %v4854, %v4858
  %v4863 = vand.u32 2147483647, %v4837
  %vm4864 = vcmp.eq.f32.partialorder %v4863, 8.507059e+37
  %v4865 = vand.u32 %v4837, 2147483648
  %v4866 = vor.u32 1.1754944e-38, %v4865
  %v4867 = vsel %vm4864, %v4866, %v4862
  %v4868 = vmul.f32 1.0, %v4867
  %v4869 = vrcp.pop %v4838
  %v4870 = vmul.f32 %v4838, %v4869
  %v4871 = vsub.f32 1.0, %v4870
  %v4872 = vmul.f32 %v4869, %v4871
  %v4873 = vadd.f32 %v4869, %v4872
  %vm4874 = vweird.f32 %v4838
  %vm4875 = vweird.f32 %v4869
  %vm4876 = vmor %vm4874, %vm4875
  %v4877 = vsel %vm4876, %v4869, %v4873
  %v4878 = vand.u32 2147483647, %v4838
  %vm4879 = vcmp.eq.f32.partialorder %v4878, 8.507059e+37
  %v4880 = vand.u32 %v4838, 2147483648
  %v4881 = vor.u32 1.1754944e-38, %v4880
  %v4882 = vsel %vm4879, %v4881, %v4877
  %v4883 = vmul.f32 1.0, %v4882
  %v4884 = vtanh.pop %v4826
  %v4885 = vmul.f32 %v4868, %v4543
  %v4886 = vmul.f32 %v4853, %v4884
  %v4887 = vadd.f32 %v4885, %v4886
  %v4888 = vtanh.pop %v4887
  %v4889 = vmul.f32 %v4883, %v4888
  %v4890 = vpack.c.bf16 %v4889, %v4889
  %4891 = vmatpush.bf16.msra.mxu0 %v2551
  %4892 = vmatpush.bf16.msra.mxu0 %v2547
  %4893 = vmatpush.bf16.msra.mxu0 %v2543
  %4894 = vmatpush.bf16.msra.mxu0 %v2539
  %4895 = vmatpush.bf16.msra.mxu0 %v2535
  %4896 = vmatpush.bf16.msra.mxu0 %v2531
  %4897 = vmatpush.bf16.msra.mxu0 %v2527
  %4898 = vmatpush.bf16.msra.mxu0 %v2523
  %4899 = vmatmul.bf16.gmra.mxu0 %v4718
  %v4900 = vpop.f32.mrf.mxu0
  %v4901 = vadd.f32 0.0, %v4900
  %v4902 = vpop.f32.mrf.mxu0
  %4903 = vdwg.mxu0
  %4904 = vmatpush.bf16.msra.mxu0 %v2552
  %4905 = vmatpush.bf16.msra.mxu0 %v2548
  %4906 = vmatpush.bf16.msra.mxu0 %v2544
  %4907 = vmatpush.bf16.msra.mxu0 %v2540
  %4908 = vmatpush.bf16.msra.mxu0 %v2536
  %4909 = vmatpush.bf16.msra.mxu0 %v2532
  %4910 = vmatpush.bf16.msra.mxu0 %v2528
  %4911 = vmatpush.bf16.msra.mxu0 %v2524
  %4912 = vmatmul.bf16.gmra.mxu0 %v4718
  %v4913 = vpop.f32.mrf.mxu0
  %v4914 = vadd.f32 0.0, %v4913
  %v4915 = vpop.f32.mrf.mxu0
  %4916 = vdwg.mxu0
  %4917 = vmatpush.bf16.msra.mxu0 %v2553
  %4918 = vmatpush.bf16.msra.mxu0 %v2549
  %4919 = vmatpush.bf16.msra.mxu0 %v2545
  %4920 = vmatpush.bf16.msra.mxu0 %v2541
  %4921 = vmatpush.bf16.msra.mxu0 %v2537
  %4922 = vmatpush.bf16.msra.mxu0 %v2533
  %4923 = vmatpush.bf16.msra.mxu0 %v2529
  %4924 = vmatpush.bf16.msra.mxu0 %v2525
  %4925 = vmatmul.bf16.gmra.mxu0 %v4718
  %v4926 = vpop.f32.mrf.mxu0
  %v4927 = vadd.f32 0.0, %v4926
  %v4928 = vpop.f32.mrf.mxu0
  %4929 = vdwg.mxu0
  %4930 = vmatpush.bf16.msra.mxu0 %v2554
  %4931 = vmatpush.bf16.msra.mxu0 %v2550
  %4932 = vmatpush.bf16.msra.mxu0 %v2546
  %4933 = vmatpush.bf16.msra.mxu0 %v2542
  %4934 = vmatpush.bf16.msra.mxu0 %v2538
  %4935 = vmatpush.bf16.msra.mxu0 %v2534
  %4936 = vmatpush.bf16.msra.mxu0 %v2530
  %4937 = vmatpush.bf16.msra.mxu0 %v2526
  %4938 = vmatmul.bf16.gmra.mxu0 %v4718
  %v4939 = vpop.f32.mrf.mxu0
  %v4940 = vadd.f32 0.0, %v4939
  %v4941 = vpop.f32.mrf.mxu0
  %4942 = vdwg.mxu0
  %4943 = vmatpush.bf16.msra.mxu0 %v2303
  %4944 = vmatpush.bf16.msra.mxu0 %v2299
  %4945 = vmatpush.bf16.msra.mxu0 %v2295
  %4946 = vmatpush.bf16.msra.mxu0 %v2291
  %4947 = vmatpush.bf16.msra.mxu0 %v2287
  %4948 = vmatpush.bf16.msra.mxu0 %v2283
  %4949 = vmatpush.bf16.msra.mxu0 %v2279
  %4950 = vmatpush.bf16.msra.mxu0 %v2275
  %4951 = vmatmul.bf16.gmra.mxu0 %v4890
  %v4952 = vpop.f32.mrf.mxu0
  %v4953 = vadd.f32 %v4901, %v4952
  %v4954 = vpop.f32.mrf.mxu0
  %4955 = vdwg.mxu0
  %4956 = vmatpush.bf16.msra.mxu0 %v2304
  %4957 = vmatpush.bf16.msra.mxu0 %v2300
  %4958 = vmatpush.bf16.msra.mxu0 %v2296
  %4959 = vmatpush.bf16.msra.mxu0 %v2292
  %4960 = vmatpush.bf16.msra.mxu0 %v2288
  %4961 = vmatpush.bf16.msra.mxu0 %v2284
  %4962 = vmatpush.bf16.msra.mxu0 %v2280
  %4963 = vmatpush.bf16.msra.mxu0 %v2276
  %4964 = vmatmul.bf16.gmra.mxu0 %v4890
  %v4965 = vpop.f32.mrf.mxu0
  %v4966 = vadd.f32 %v4914, %v4965
  %v4967 = vpop.f32.mrf.mxu0
  %4968 = vdwg.mxu0
  %4969 = vmatpush.bf16.msra.mxu0 %v2305
  %4970 = vmatpush.bf16.msra.mxu0 %v2301
  %4971 = vmatpush.bf16.msra.mxu0 %v2297
  %4972 = vmatpush.bf16.msra.mxu0 %v2293
  %4973 = vmatpush.bf16.msra.mxu0 %v2289
  %4974 = vmatpush.bf16.msra.mxu0 %v2285
  %4975 = vmatpush.bf16.msra.mxu0 %v2281
  %4976 = vmatpush.bf16.msra.mxu0 %v2277
  %4977 = vmatmul.bf16.gmra.mxu0 %v4890
  %v4978 = vpop.f32.mrf.mxu0
  %v4979 = vadd.f32 %v4927, %v4978
  %v4980 = vpop.f32.mrf.mxu0
  %4981 = vdwg.mxu0
  %4982 = vmatpush.bf16.msra.mxu0 %v2306
  %4983 = vmatpush.bf16.msra.mxu0 %v2302
  %4984 = vmatpush.bf16.msra.mxu0 %v2298
  %4985 = vmatpush.bf16.msra.mxu0 %v2294
  %4986 = vmatpush.bf16.msra.mxu0 %v2290
  %4987 = vmatpush.bf16.msra.mxu0 %v2286
  %4988 = vmatpush.bf16.msra.mxu0 %v2282
  %4989 = vmatpush.bf16.msra.mxu0 %v2278
  %4990 = vmatmul.bf16.gmra.mxu0 %v4890
  %v4991 = vpop.f32.mrf.mxu0
  %v4992 = vadd.f32 %v4940, %v4991
  %v4993 = vpop.f32.mrf.mxu0
  %4994 = vdwg.mxu0
  %v4995 = vadd.f32 %v4953, %v64
  %v4996 = vadd.f32 %v4966, %v65
  %v4997 = vadd.f32 %v4979, %v66
  %v4998 = vadd.f32 %v4992, %v67
  %v4999 = vxor.u32 %v4995, 2147483648
  %v5000 = vxor.u32 %v4996, 2147483648
  %v5001 = vxor.u32 %v4997, 2147483648
  %v5002 = vmul.f32 %v4999, 1.442695
  %v5003 = vpow.pop %v5002
  %v5004 = vmul.f32 %v5000, 1.442695
  %v5005 = vpow.pop %v5004
  %v5006 = vmul.f32 %v5001, 1.442695
  %v5007 = vpow.pop %v5006
  %v5008 = vadd.f32 %v5003, 1.0
  %v5009 = vadd.f32 %v5005, 1.0
  %v5010 = vadd.f32 %v5007, 1.0
  %v5011 = vrcp.pop %v5008
  %v5012 = vmul.f32 %v5008, %v5011
  %v5013 = vsub.f32 1.0, %v5012
  %v5014 = vmul.f32 %v5011, %v5013
  %v5015 = vadd.f32 %v5011, %v5014
  %vm5016 = vweird.f32 %v5008
  %vm5017 = vweird.f32 %v5011
  %vm5018 = vmor %vm5016, %vm5017
  %v5019 = vsel %vm5018, %v5011, %v5015
  %v5020 = vand.u32 2147483647, %v5008
  %vm5021 = vcmp.eq.f32.partialorder %v5020, 8.507059e+37
  %v5022 = vand.u32 %v5008, 2147483648
  %v5023 = vor.u32 1.1754944e-38, %v5022
  %v5024 = vsel %vm5021, %v5023, %v5019
  %v5025 = vmul.f32 1.0, %v5024
  %v5026 = vrcp.pop %v5009
  %v5027 = vmul.f32 %v5009, %v5026
  %v5028 = vsub.f32 1.0, %v5027
  %v5029 = vmul.f32 %v5026, %v5028
  %v5030 = vadd.f32 %v5026, %v5029
  %vm5031 = vweird.f32 %v5009
  %vm5032 = vweird.f32 %v5026
  %vm5033 = vmor %vm5031, %vm5032
  %v5034 = vsel %vm5033, %v5026, %v5030
  %v5035 = vand.u32 2147483647, %v5009
  %vm5036 = vcmp.eq.f32.partialorder %v5035, 8.507059e+37
  %v5037 = vand.u32 %v5009, 2147483648
  %v5038 = vor.u32 1.1754944e-38, %v5037
  %v5039 = vsel %vm5036, %v5038, %v5034
  %v5040 = vmul.f32 1.0, %v5039
  %v5041 = vrcp.pop %v5010
  %v5042 = vmul.f32 %v5010, %v5041
  %v5043 = vsub.f32 1.0, %v5042
  %v5044 = vmul.f32 %v5041, %v5043
  %v5045 = vadd.f32 %v5041, %v5044
  %vm5046 = vweird.f32 %v5010
  %vm5047 = vweird.f32 %v5041
  %vm5048 = vmor %vm5046, %vm5047
  %v5049 = vsel %vm5048, %v5041, %v5045
  %v5050 = vand.u32 2147483647, %v5010
  %vm5051 = vcmp.eq.f32.partialorder %v5050, 8.507059e+37
  %v5052 = vand.u32 %v5010, 2147483648
  %v5053 = vor.u32 1.1754944e-38, %v5052
  %v5054 = vsel %vm5051, %v5053, %v5049
  %v5055 = vmul.f32 1.0, %v5054
  %v5056 = vtanh.pop %v4998
  %v5057 = vmul.f32 %v5040, %v4715
  %v5058 = vmul.f32 %v5025, %v5056
  %v5059 = vadd.f32 %v5057, %v5058
  %v5060 = vtanh.pop %v5059
  %v5061 = vmul.f32 %v5055, %v5060
  %v5062 = vpack.c.bf16 %v5061, %v5061
  %5063 = vmatpush.bf16.msra.mxu0 %v2905
  %5064 = vmatpush.bf16.msra.mxu0 %v2901
  %5065 = vmatpush.bf16.msra.mxu0 %v2897
  %5066 = vmatpush.bf16.msra.mxu0 %v2893
  %5067 = vmatpush.bf16.msra.mxu0 %v2889
  %5068 = vmatpush.bf16.msra.mxu0 %v2885
  %5069 = vmatpush.bf16.msra.mxu0 %v2881
  %5070 = vmatpush.bf16.msra.mxu0 %v2877
  %5071 = vmatmul.bf16.gmra.mxu0 %v4890
  %v5072 = vpop.f32.mrf.mxu0
  %v5073 = vadd.f32 0.0, %v5072
  %v5074 = vpop.f32.mrf.mxu0
  %5075 = vdwg.mxu0
  %5076 = vmatpush.bf16.msra.mxu0 %v2906
  %5077 = vmatpush.bf16.msra.mxu0 %v2902
  %5078 = vmatpush.bf16.msra.mxu0 %v2898
  %5079 = vmatpush.bf16.msra.mxu0 %v2894
  %5080 = vmatpush.bf16.msra.mxu0 %v2890
  %5081 = vmatpush.bf16.msra.mxu0 %v2886
  %5082 = vmatpush.bf16.msra.mxu0 %v2882
  %5083 = vmatpush.bf16.msra.mxu0 %v2878
  %5084 = vmatmul.bf16.gmra.mxu0 %v4890
  %v5085 = vpop.f32.mrf.mxu0
  %v5086 = vadd.f32 0.0, %v5085
  %v5087 = vpop.f32.mrf.mxu0
  %5088 = vdwg.mxu0
  %5089 = vmatpush.bf16.msra.mxu0 %v2907
  %5090 = vmatpush.bf16.msra.mxu0 %v2903
  %5091 = vmatpush.bf16.msra.mxu0 %v2899
  %5092 = vmatpush.bf16.msra.mxu0 %v2895
  %5093 = vmatpush.bf16.msra.mxu0 %v2891
  %5094 = vmatpush.bf16.msra.mxu0 %v2887
  %5095 = vmatpush.bf16.msra.mxu0 %v2883
  %5096 = vmatpush.bf16.msra.mxu0 %v2879
  %5097 = vmatmul.bf16.gmra.mxu0 %v4890
  %v5098 = vpop.f32.mrf.mxu0
  %v5099 = vadd.f32 0.0, %v5098
  %v5100 = vpop.f32.mrf.mxu0
  %5101 = vdwg.mxu0
  %5102 = vmatpush.bf16.msra.mxu0 %v2908
  %5103 = vmatpush.bf16.msra.mxu0 %v2904
  %5104 = vmatpush.bf16.msra.mxu0 %v2900
  %5105 = vmatpush.bf16.msra.mxu0 %v2896
  %5106 = vmatpush.bf16.msra.mxu0 %v2892
  %5107 = vmatpush.bf16.msra.mxu0 %v2888
  %5108 = vmatpush.bf16.msra.mxu0 %v2884
  %5109 = vmatpush.bf16.msra.mxu0 %v2880
  %5110 = vmatmul.bf16.gmra.mxu0 %v4890
  %v5111 = vpop.f32.mrf.mxu0
  %v5112 = vadd.f32 0.0, %v5111
  %v5113 = vpop.f32.mrf.mxu0
  %5114 = vdwg.mxu0
  %5115 = vmatpush.bf16.msra.mxu0 %v3117
  %5116 = vmatpush.bf16.msra.mxu0 %v3113
  %5117 = vmatpush.bf16.msra.mxu0 %v3109
  %5118 = vmatpush.bf16.msra.mxu0 %v3105
  %5119 = vmatpush.bf16.msra.mxu0 %v3101
  %5120 = vmatpush.bf16.msra.mxu0 %v3097
  %5121 = vmatpush.bf16.msra.mxu0 %v3093
  %5122 = vmatpush.bf16.msra.mxu0 %v3089
  %5123 = vmatmul.bf16.gmra.mxu0 %v5062
  %v5124 = vpop.f32.mrf.mxu0
  %v5125 = vadd.f32 %v5073, %v5124
  %v5126 = vpop.f32.mrf.mxu0
  %5127 = vdwg.mxu0
  %5128 = vmatpush.bf16.msra.mxu0 %v3118
  %5129 = vmatpush.bf16.msra.mxu0 %v3114
  %5130 = vmatpush.bf16.msra.mxu0 %v3110
  %5131 = vmatpush.bf16.msra.mxu0 %v3106
  %5132 = vmatpush.bf16.msra.mxu0 %v3102
  %5133 = vmatpush.bf16.msra.mxu0 %v3098
  %5134 = vmatpush.bf16.msra.mxu0 %v3094
  %5135 = vmatpush.bf16.msra.mxu0 %v3090
  %5136 = vmatmul.bf16.gmra.mxu0 %v5062
  %v5137 = vpop.f32.mrf.mxu0
  %v5138 = vadd.f32 %v5086, %v5137
  %v5139 = vpop.f32.mrf.mxu0
  %5140 = vdwg.mxu0
  %5141 = vmatpush.bf16.msra.mxu0 %v3119
  %5142 = vmatpush.bf16.msra.mxu0 %v3115
  %5143 = vmatpush.bf16.msra.mxu0 %v3111
  %5144 = vmatpush.bf16.msra.mxu0 %v3107
  %5145 = vmatpush.bf16.msra.mxu0 %v3103
  %5146 = vmatpush.bf16.msra.mxu0 %v3099
  %5147 = vmatpush.bf16.msra.mxu0 %v3095
  %5148 = vmatpush.bf16.msra.mxu0 %v3091
  %5149 = vmatmul.bf16.gmra.mxu0 %v5062
  %v5150 = vpop.f32.mrf.mxu0
  %v5151 = vadd.f32 %v5099, %v5150
  %v5152 = vpop.f32.mrf.mxu0
  %5153 = vdwg.mxu0
  %5154 = vmatpush.bf16.msra.mxu0 %v3120
  %5155 = vmatpush.bf16.msra.mxu0 %v3116
  %5156 = vmatpush.bf16.msra.mxu0 %v3112
  %5157 = vmatpush.bf16.msra.mxu0 %v3108
  %5158 = vmatpush.bf16.msra.mxu0 %v3104
  %5159 = vmatpush.bf16.msra.mxu0 %v3100
  %5160 = vmatpush.bf16.msra.mxu0 %v3096
  %5161 = vmatpush.bf16.msra.mxu0 %v3092
  %5162 = vmatmul.bf16.gmra.mxu0 %v5062
  %v5163 = vpop.f32.mrf.mxu0
  %v5164 = vadd.f32 %v5112, %v5163
  %v5165 = vpop.f32.mrf.mxu0
  %5166 = vdwg.mxu0
  %v5167 = vadd.f32 %v5125, %v75
  %v5168 = vadd.f32 %v5138, %v76
  %v5169 = vadd.f32 %v5151, %v77
  %v5170 = vadd.f32 %v5164, %v78
  %v5171 = vxor.u32 %v5167, 2147483648
  %v5172 = vxor.u32 %v5168, 2147483648
  %v5173 = vxor.u32 %v5169, 2147483648
  %v5174 = vmul.f32 %v5171, 1.442695
  %v5175 = vpow.pop %v5174
  %v5176 = vmul.f32 %v5172, 1.442695
  %v5177 = vpow.pop %v5176
  %v5178 = vmul.f32 %v5173, 1.442695
  %v5179 = vpow.pop %v5178
  %v5180 = vadd.f32 %v5175, 1.0
  %v5181 = vadd.f32 %v5177, 1.0
  %v5182 = vadd.f32 %v5179, 1.0
  %v5183 = vrcp.pop %v5180
  %v5184 = vmul.f32 %v5180, %v5183
  %v5185 = vsub.f32 1.0, %v5184
  %v5186 = vmul.f32 %v5183, %v5185
  %v5187 = vadd.f32 %v5183, %v5186
  %vm5188 = vweird.f32 %v5180
  %vm5189 = vweird.f32 %v5183
  %vm5190 = vmor %vm5188, %vm5189
  %v5191 = vsel %vm5190, %v5183, %v5187
  %v5192 = vand.u32 2147483647, %v5180
  %vm5193 = vcmp.eq.f32.partialorder %v5192, 8.507059e+37
  %v5194 = vand.u32 %v5180, 2147483648
  %v5195 = vor.u32 1.1754944e-38, %v5194
  %v5196 = vsel %vm5193, %v5195, %v5191
  %v5197 = vmul.f32 1.0, %v5196
  %v5198 = vrcp.pop %v5181
  %v5199 = vmul.f32 %v5181, %v5198
  %v5200 = vsub.f32 1.0, %v5199
  %v5201 = vmul.f32 %v5198, %v5200
  %v5202 = vadd.f32 %v5198, %v5201
  %vm5203 = vweird.f32 %v5181
  %vm5204 = vweird.f32 %v5198
  %vm5205 = vmor %vm5203, %vm5204
  %v5206 = vsel %vm5205, %v5198, %v5202
  %v5207 = vand.u32 2147483647, %v5181
  %vm5208 = vcmp.eq.f32.partialorder %v5207, 8.507059e+37
  %v5209 = vand.u32 %v5181, 2147483648
  %v5210 = vor.u32 1.1754944e-38, %v5209
  %v5211 = vsel %vm5208, %v5210, %v5206
  %v5212 = vmul.f32 1.0, %v5211
  %v5213 = vrcp.pop %v5182
  %v5214 = vmul.f32 %v5182, %v5213
  %v5215 = vsub.f32 1.0, %v5214
  %v5216 = vmul.f32 %v5213, %v5215
  %v5217 = vadd.f32 %v5213, %v5216
  %vm5218 = vweird.f32 %v5182
  %vm5219 = vweird.f32 %v5213
  %vm5220 = vmor %vm5218, %vm5219
  %v5221 = vsel %vm5220, %v5213, %v5217
  %v5222 = vand.u32 2147483647, %v5182
  %vm5223 = vcmp.eq.f32.partialorder %v5222, 8.507059e+37
  %v5224 = vand.u32 %v5182, 2147483648
  %v5225 = vor.u32 1.1754944e-38, %v5224
  %v5226 = vsel %vm5223, %v5225, %v5221
  %v5227 = vmul.f32 1.0, %v5226
  %v5228 = vtanh.pop %v5170
  %v5229 = vmul.f32 %v5212, %v4887
  %v5230 = vmul.f32 %v5197, %v5228
  %v5231 = vadd.f32 %v5229, %v5230
  %v5232 = vtanh.pop %v5231
  %v5233 = vmul.f32 %v5227, %v5232
  %v5234 = vpack.c.bf16 %v5233, %v5233
  %5235 = vmatpush.bf16.msra.mxu0 %v2551
  %5236 = vmatpush.bf16.msra.mxu0 %v2547
  %5237 = vmatpush.bf16.msra.mxu0 %v2543
  %5238 = vmatpush.bf16.msra.mxu0 %v2539
  %5239 = vmatpush.bf16.msra.mxu0 %v2535
  %5240 = vmatpush.bf16.msra.mxu0 %v2531
  %5241 = vmatpush.bf16.msra.mxu0 %v2527
  %5242 = vmatpush.bf16.msra.mxu0 %v2523
  %5243 = vmatmul.bf16.gmra.mxu0 %v5062
  %v5244 = vpop.f32.mrf.mxu0
  %v5245 = vadd.f32 0.0, %v5244
  %v5246 = vpop.f32.mrf.mxu0
  %5247 = vdwg.mxu0
  %5248 = vmatpush.bf16.msra.mxu0 %v2552
  %5249 = vmatpush.bf16.msra.mxu0 %v2548
  %5250 = vmatpush.bf16.msra.mxu0 %v2544
  %5251 = vmatpush.bf16.msra.mxu0 %v2540
  %5252 = vmatpush.bf16.msra.mxu0 %v2536
  %5253 = vmatpush.bf16.msra.mxu0 %v2532
  %5254 = vmatpush.bf16.msra.mxu0 %v2528
  %5255 = vmatpush.bf16.msra.mxu0 %v2524
  %5256 = vmatmul.bf16.gmra.mxu0 %v5062
  %v5257 = vpop.f32.mrf.mxu0
  %v5258 = vadd.f32 0.0, %v5257
  %v5259 = vpop.f32.mrf.mxu0
  %5260 = vdwg.mxu0
  %5261 = vmatpush.bf16.msra.mxu0 %v2553
  %5262 = vmatpush.bf16.msra.mxu0 %v2549
  %5263 = vmatpush.bf16.msra.mxu0 %v2545
  %5264 = vmatpush.bf16.msra.mxu0 %v2541
  %5265 = vmatpush.bf16.msra.mxu0 %v2537
  %5266 = vmatpush.bf16.msra.mxu0 %v2533
  %5267 = vmatpush.bf16.msra.mxu0 %v2529
  %5268 = vmatpush.bf16.msra.mxu0 %v2525
  %5269 = vmatmul.bf16.gmra.mxu0 %v5062
  %v5270 = vpop.f32.mrf.mxu0
  %v5271 = vadd.f32 0.0, %v5270
  %v5272 = vpop.f32.mrf.mxu0
  %5273 = vdwg.mxu0
  %5274 = vmatpush.bf16.msra.mxu0 %v2554
  %5275 = vmatpush.bf16.msra.mxu0 %v2550
  %5276 = vmatpush.bf16.msra.mxu0 %v2546
  %5277 = vmatpush.bf16.msra.mxu0 %v2542
  %5278 = vmatpush.bf16.msra.mxu0 %v2538
  %5279 = vmatpush.bf16.msra.mxu0 %v2534
  %5280 = vmatpush.bf16.msra.mxu0 %v2530
  %5281 = vmatpush.bf16.msra.mxu0 %v2526
  %5282 = vmatmul.bf16.gmra.mxu0 %v5062
  %v5283 = vpop.f32.mrf.mxu0
  %v5284 = vadd.f32 0.0, %v5283
  %v5285 = vpop.f32.mrf.mxu0
  %5286 = vdwg.mxu0
  %5287 = vmatpush.bf16.msra.mxu0 %v2303
  %5288 = vmatpush.bf16.msra.mxu0 %v2299
  %5289 = vmatpush.bf16.msra.mxu0 %v2295
  %5290 = vmatpush.bf16.msra.mxu0 %v2291
  %5291 = vmatpush.bf16.msra.mxu0 %v2287
  %5292 = vmatpush.bf16.msra.mxu0 %v2283
  %5293 = vmatpush.bf16.msra.mxu0 %v2279
  %5294 = vmatpush.bf16.msra.mxu0 %v2275
  %5295 = vmatmul.bf16.gmra.mxu0 %v5234
  %v5296 = vpop.f32.mrf.mxu0
  %v5297 = vadd.f32 %v5245, %v5296
  %v5298 = vpop.f32.mrf.mxu0
  %5299 = vdwg.mxu0
  %5300 = vmatpush.bf16.msra.mxu0 %v2304
  %5301 = vmatpush.bf16.msra.mxu0 %v2300
  %5302 = vmatpush.bf16.msra.mxu0 %v2296
  %5303 = vmatpush.bf16.msra.mxu0 %v2292
  %5304 = vmatpush.bf16.msra.mxu0 %v2288
  %5305 = vmatpush.bf16.msra.mxu0 %v2284
  %5306 = vmatpush.bf16.msra.mxu0 %v2280
  %5307 = vmatpush.bf16.msra.mxu0 %v2276
  %5308 = vmatmul.bf16.gmra.mxu0 %v5234
  %v5309 = vpop.f32.mrf.mxu0
  %v5310 = vadd.f32 %v5258, %v5309
  %v5311 = vpop.f32.mrf.mxu0
  %5312 = vdwg.mxu0
  %5313 = vmatpush.bf16.msra.mxu0 %v2305
  %5314 = vmatpush.bf16.msra.mxu0 %v2301
  %5315 = vmatpush.bf16.msra.mxu0 %v2297
  %5316 = vmatpush.bf16.msra.mxu0 %v2293
  %5317 = vmatpush.bf16.msra.mxu0 %v2289
  %5318 = vmatpush.bf16.msra.mxu0 %v2285
  %5319 = vmatpush.bf16.msra.mxu0 %v2281
  %5320 = vmatpush.bf16.msra.mxu0 %v2277
  %5321 = vmatmul.bf16.gmra.mxu0 %v5234
  %v5322 = vpop.f32.mrf.mxu0
  %v5323 = vadd.f32 %v5271, %v5322
  %v5324 = vpop.f32.mrf.mxu0
  %5325 = vdwg.mxu0
  %5326 = vmatpush.bf16.msra.mxu0 %v2306
  %5327 = vmatpush.bf16.msra.mxu0 %v2302
  %5328 = vmatpush.bf16.msra.mxu0 %v2298
  %5329 = vmatpush.bf16.msra.mxu0 %v2294
  %5330 = vmatpush.bf16.msra.mxu0 %v2290
  %5331 = vmatpush.bf16.msra.mxu0 %v2286
  %5332 = vmatpush.bf16.msra.mxu0 %v2282
  %5333 = vmatpush.bf16.msra.mxu0 %v2278
  %5334 = vmatmul.bf16.gmra.mxu0 %v5234
  %v5335 = vpop.f32.mrf.mxu0
  %v5336 = vadd.f32 %v5284, %v5335
  %v5337 = vpop.f32.mrf.mxu0
  %5338 = vdwg.mxu0
  %v5339 = vadd.f32 %v5297, %v64
  %v5340 = vadd.f32 %v5310, %v65
  %v5341 = vadd.f32 %v5323, %v66
  %v5342 = vadd.f32 %v5336, %v67
  %v5343 = vxor.u32 %v5339, 2147483648
  %v5344 = vxor.u32 %v5340, 2147483648
  %v5345 = vxor.u32 %v5341, 2147483648
  %v5346 = vmul.f32 %v5343, 1.442695
  %v5347 = vpow.pop %v5346
  %v5348 = vmul.f32 %v5344, 1.442695
  %v5349 = vpow.pop %v5348
  %v5350 = vmul.f32 %v5345, 1.442695
  %v5351 = vpow.pop %v5350
  %v5352 = vadd.f32 %v5347, 1.0
  %v5353 = vadd.f32 %v5349, 1.0
  %v5354 = vadd.f32 %v5351, 1.0
  %v5355 = vrcp.pop %v5352
  %v5356 = vmul.f32 %v5352, %v5355
  %v5357 = vsub.f32 1.0, %v5356
  %v5358 = vmul.f32 %v5355, %v5357
  %v5359 = vadd.f32 %v5355, %v5358
  %vm5360 = vweird.f32 %v5352
  %vm5361 = vweird.f32 %v5355
  %vm5362 = vmor %vm5360, %vm5361
  %v5363 = vsel %vm5362, %v5355, %v5359
  %v5364 = vand.u32 2147483647, %v5352
  %vm5365 = vcmp.eq.f32.partialorder %v5364, 8.507059e+37
  %v5366 = vand.u32 %v5352, 2147483648
  %v5367 = vor.u32 1.1754944e-38, %v5366
  %v5368 = vsel %vm5365, %v5367, %v5363
  %v5369 = vmul.f32 1.0, %v5368
  %v5370 = vrcp.pop %v5353
  %v5371 = vmul.f32 %v5353, %v5370
  %v5372 = vsub.f32 1.0, %v5371
  %v5373 = vmul.f32 %v5370, %v5372
  %v5374 = vadd.f32 %v5370, %v5373
  %vm5375 = vweird.f32 %v5353
  %vm5376 = vweird.f32 %v5370
  %vm5377 = vmor %vm5375, %vm5376
  %v5378 = vsel %vm5377, %v5370, %v5374
  %v5379 = vand.u32 2147483647, %v5353
  %vm5380 = vcmp.eq.f32.partialorder %v5379, 8.507059e+37
  %v5381 = vand.u32 %v5353, 2147483648
  %v5382 = vor.u32 1.1754944e-38, %v5381
  %v5383 = vsel %vm5380, %v5382, %v5378
  %v5384 = vmul.f32 1.0, %v5383
  %v5385 = vrcp.pop %v5354
  %v5386 = vmul.f32 %v5354, %v5385
  %v5387 = vsub.f32 1.0, %v5386
  %v5388 = vmul.f32 %v5385, %v5387
  %v5389 = vadd.f32 %v5385, %v5388
  %vm5390 = vweird.f32 %v5354
  %vm5391 = vweird.f32 %v5385
  %vm5392 = vmor %vm5390, %vm5391
  %v5393 = vsel %vm5392, %v5385, %v5389
  %v5394 = vand.u32 2147483647, %v5354
  %vm5395 = vcmp.eq.f32.partialorder %v5394, 8.507059e+37
  %v5396 = vand.u32 %v5354, 2147483648
  %v5397 = vor.u32 1.1754944e-38, %v5396
  %v5398 = vsel %vm5395, %v5397, %v5393
  %v5399 = vmul.f32 1.0, %v5398
  %v5400 = vtanh.pop %v5342
  %v5401 = vmul.f32 %v5384, %v5059
  %v5402 = vmul.f32 %v5369, %v5400
  %v5403 = vadd.f32 %v5401, %v5402
  %v5404 = vtanh.pop %v5403
  %v5405 = vmul.f32 %v5399, %v5404
  %v5406 = vpack.c.bf16 %v5405, %v5405
  %5407 = vmatpush.bf16.msra.mxu0 %v2905
  %5408 = vmatpush.bf16.msra.mxu0 %v2901
  %5409 = vmatpush.bf16.msra.mxu0 %v2897
  %5410 = vmatpush.bf16.msra.mxu0 %v2893
  %5411 = vmatpush.bf16.msra.mxu0 %v2889
  %5412 = vmatpush.bf16.msra.mxu0 %v2885
  %5413 = vmatpush.bf16.msra.mxu0 %v2881
  %5414 = vmatpush.bf16.msra.mxu0 %v2877
  %5415 = vmatmul.bf16.gmra.mxu0 %v5234
  %v5416 = vpop.f32.mrf.mxu0
  %v5417 = vadd.f32 0.0, %v5416
  %v5418 = vpop.f32.mrf.mxu0
  %5419 = vdwg.mxu0
  %5420 = vmatpush.bf16.msra.mxu0 %v2906
  %5421 = vmatpush.bf16.msra.mxu0 %v2902
  %5422 = vmatpush.bf16.msra.mxu0 %v2898
  %5423 = vmatpush.bf16.msra.mxu0 %v2894
  %5424 = vmatpush.bf16.msra.mxu0 %v2890
  %5425 = vmatpush.bf16.msra.mxu0 %v2886
  %5426 = vmatpush.bf16.msra.mxu0 %v2882
  %5427 = vmatpush.bf16.msra.mxu0 %v2878
  %5428 = vmatmul.bf16.gmra.mxu0 %v5234
  %v5429 = vpop.f32.mrf.mxu0
  %v5430 = vadd.f32 0.0, %v5429
  %v5431 = vpop.f32.mrf.mxu0
  %5432 = vdwg.mxu0
  %5433 = vmatpush.bf16.msra.mxu0 %v2907
  %5434 = vmatpush.bf16.msra.mxu0 %v2903
  %5435 = vmatpush.bf16.msra.mxu0 %v2899
  %5436 = vmatpush.bf16.msra.mxu0 %v2895
  %5437 = vmatpush.bf16.msra.mxu0 %v2891
  %5438 = vmatpush.bf16.msra.mxu0 %v2887
  %5439 = vmatpush.bf16.msra.mxu0 %v2883
  %5440 = vmatpush.bf16.msra.mxu0 %v2879
  %5441 = vmatmul.bf16.gmra.mxu0 %v5234
  %v5442 = vpop.f32.mrf.mxu0
  %v5443 = vadd.f32 0.0, %v5442
  %v5444 = vpop.f32.mrf.mxu0
  %5445 = vdwg.mxu0
  %5446 = vmatpush.bf16.msra.mxu0 %v2908
  %5447 = vmatpush.bf16.msra.mxu0 %v2904
  %5448 = vmatpush.bf16.msra.mxu0 %v2900
  %5449 = vmatpush.bf16.msra.mxu0 %v2896
  %5450 = vmatpush.bf16.msra.mxu0 %v2892
  %5451 = vmatpush.bf16.msra.mxu0 %v2888
  %5452 = vmatpush.bf16.msra.mxu0 %v2884
  %5453 = vmatpush.bf16.msra.mxu0 %v2880
  %5454 = vmatmul.bf16.gmra.mxu0 %v5234
  %v5455 = vpop.f32.mrf.mxu0
  %v5456 = vadd.f32 0.0, %v5455
  %v5457 = vpop.f32.mrf.mxu0
  %5458 = vdwg.mxu0
  %5459 = vmatpush.bf16.msra.mxu0 %v3117
  %5460 = vmatpush.bf16.msra.mxu0 %v3113
  %5461 = vmatpush.bf16.msra.mxu0 %v3109
  %5462 = vmatpush.bf16.msra.mxu0 %v3105
  %5463 = vmatpush.bf16.msra.mxu0 %v3101
  %5464 = vmatpush.bf16.msra.mxu0 %v3097
  %5465 = vmatpush.bf16.msra.mxu0 %v3093
  %5466 = vmatpush.bf16.msra.mxu0 %v3089
  %5467 = vmatmul.bf16.gmra.mxu0 %v5406
  %v5468 = vpop.f32.mrf.mxu0
  %v5469 = vadd.f32 %v5417, %v5468
  %v5470 = vpop.f32.mrf.mxu0
  %5471 = vdwg.mxu0
  %5472 = vmatpush.bf16.msra.mxu0 %v3118
  %5473 = vmatpush.bf16.msra.mxu0 %v3114
  %5474 = vmatpush.bf16.msra.mxu0 %v3110
  %5475 = vmatpush.bf16.msra.mxu0 %v3106
  %5476 = vmatpush.bf16.msra.mxu0 %v3102
  %5477 = vmatpush.bf16.msra.mxu0 %v3098
  %5478 = vmatpush.bf16.msra.mxu0 %v3094
  %5479 = vmatpush.bf16.msra.mxu0 %v3090
  %5480 = vmatmul.bf16.gmra.mxu0 %v5406
  %v5481 = vpop.f32.mrf.mxu0
  %v5482 = vadd.f32 %v5430, %v5481
  %v5483 = vpop.f32.mrf.mxu0
  %5484 = vdwg.mxu0
  %5485 = vmatpush.bf16.msra.mxu0 %v3119
  %5486 = vmatpush.bf16.msra.mxu0 %v3115
  %5487 = vmatpush.bf16.msra.mxu0 %v3111
  %5488 = vmatpush.bf16.msra.mxu0 %v3107
  %5489 = vmatpush.bf16.msra.mxu0 %v3103
  %5490 = vmatpush.bf16.msra.mxu0 %v3099
  %5491 = vmatpush.bf16.msra.mxu0 %v3095
  %5492 = vmatpush.bf16.msra.mxu0 %v3091
  %5493 = vmatmul.bf16.gmra.mxu0 %v5406
  %v5494 = vpop.f32.mrf.mxu0
  %v5495 = vadd.f32 %v5443, %v5494
  %v5496 = vpop.f32.mrf.mxu0
  %5497 = vdwg.mxu0
  %5498 = vmatpush.bf16.msra.mxu0 %v3120
  %5499 = vmatpush.bf16.msra.mxu0 %v3116
  %5500 = vmatpush.bf16.msra.mxu0 %v3112
  %5501 = vmatpush.bf16.msra.mxu0 %v3108
  %5502 = vmatpush.bf16.msra.mxu0 %v3104
  %5503 = vmatpush.bf16.msra.mxu0 %v3100
  %5504 = vmatpush.bf16.msra.mxu0 %v3096
  %5505 = vmatpush.bf16.msra.mxu0 %v3092
  %5506 = vmatmul.bf16.gmra.mxu0 %v5406
  %v5507 = vpop.f32.mrf.mxu0
  %v5508 = vadd.f32 %v5456, %v5507
  %v5509 = vpop.f32.mrf.mxu0
  %5510 = vdwg.mxu0
  %v5511 = vadd.f32 %v5469, %v75
  %v5512 = vadd.f32 %v5482, %v76
  %v5513 = vadd.f32 %v5495, %v77
  %v5514 = vadd.f32 %v5508, %v78
  %v5515 = vxor.u32 %v5511, 2147483648
  %v5516 = vxor.u32 %v5512, 2147483648
  %v5517 = vxor.u32 %v5513, 2147483648
  %v5518 = vmul.f32 %v5515, 1.442695
  %v5519 = vpow.pop %v5518
  %v5520 = vmul.f32 %v5516, 1.442695
  %v5521 = vpow.pop %v5520
  %v5522 = vmul.f32 %v5517, 1.442695
  %v5523 = vpow.pop %v5522
  %v5524 = vadd.f32 %v5519, 1.0
  %v5525 = vadd.f32 %v5521, 1.0
  %v5526 = vadd.f32 %v5523, 1.0
  %v5527 = vrcp.pop %v5524
  %v5528 = vmul.f32 %v5524, %v5527
  %v5529 = vsub.f32 1.0, %v5528
  %v5530 = vmul.f32 %v5527, %v5529
  %v5531 = vadd.f32 %v5527, %v5530
  %vm5532 = vweird.f32 %v5524
  %vm5533 = vweird.f32 %v5527
  %vm5534 = vmor %vm5532, %vm5533
  %v5535 = vsel %vm5534, %v5527, %v5531
  %v5536 = vand.u32 2147483647, %v5524
  %vm5537 = vcmp.eq.f32.partialorder %v5536, 8.507059e+37
  %v5538 = vand.u32 %v5524, 2147483648
  %v5539 = vor.u32 1.1754944e-38, %v5538
  %v5540 = vsel %vm5537, %v5539, %v5535
  %v5541 = vmul.f32 1.0, %v5540
  %v5542 = vrcp.pop %v5525
  %v5543 = vmul.f32 %v5525, %v5542
  %v5544 = vsub.f32 1.0, %v5543
  %v5545 = vmul.f32 %v5542, %v5544
  %v5546 = vadd.f32 %v5542, %v5545
  %vm5547 = vweird.f32 %v5525
  %vm5548 = vweird.f32 %v5542
  %vm5549 = vmor %vm5547, %vm5548
  %v5550 = vsel %vm5549, %v5542, %v5546
  %v5551 = vand.u32 2147483647, %v5525
  %vm5552 = vcmp.eq.f32.partialorder %v5551, 8.507059e+37
  %v5553 = vand.u32 %v5525, 2147483648
  %v5554 = vor.u32 1.1754944e-38, %v5553
  %v5555 = vsel %vm5552, %v5554, %v5550
  %v5556 = vmul.f32 1.0, %v5555
  %v5557 = vrcp.pop %v5526
  %v5558 = vmul.f32 %v5526, %v5557
  %v5559 = vsub.f32 1.0, %v5558
  %v5560 = vmul.f32 %v5557, %v5559
  %v5561 = vadd.f32 %v5557, %v5560
  %vm5562 = vweird.f32 %v5526
  %vm5563 = vweird.f32 %v5557
  %vm5564 = vmor %vm5562, %vm5563
  %v5565 = vsel %vm5564, %v5557, %v5561
  %v5566 = vand.u32 2147483647, %v5526
  %vm5567 = vcmp.eq.f32.partialorder %v5566, 8.507059e+37
  %v5568 = vand.u32 %v5526, 2147483648
  %v5569 = vor.u32 1.1754944e-38, %v5568
  %v5570 = vsel %vm5567, %v5569, %v5565
  %v5571 = vmul.f32 1.0, %v5570
  %v5572 = vtanh.pop %v5514
  %v5573 = vmul.f32 %v5556, %v5231
  %v5574 = vmul.f32 %v5541, %v5572
  %v5575 = vadd.f32 %v5573, %v5574
  %v5576 = vtanh.pop %v5575
  %v5577 = vmul.f32 %v5571, %v5576
  %v5578 = vpack.c.bf16 %v5577, %v5577
  %5579 = vmatpush.bf16.msra.mxu0 %v2551
  %5580 = vmatpush.bf16.msra.mxu0 %v2547
  %5581 = vmatpush.bf16.msra.mxu0 %v2543
  %5582 = vmatpush.bf16.msra.mxu0 %v2539
  %5583 = vmatpush.bf16.msra.mxu0 %v2535
  %5584 = vmatpush.bf16.msra.mxu0 %v2531
  %5585 = vmatpush.bf16.msra.mxu0 %v2527
  %5586 = vmatpush.bf16.msra.mxu0 %v2523
  %5587 = vmatmul.bf16.gmra.mxu0 %v5406
  %v5588 = vpop.f32.mrf.mxu0
  %v5589 = vadd.f32 0.0, %v5588
  %v5590 = vpop.f32.mrf.mxu0
  %5591 = vdwg.mxu0
  %5592 = vmatpush.bf16.msra.mxu0 %v2552
  %5593 = vmatpush.bf16.msra.mxu0 %v2548
  %5594 = vmatpush.bf16.msra.mxu0 %v2544
  %5595 = vmatpush.bf16.msra.mxu0 %v2540
  %5596 = vmatpush.bf16.msra.mxu0 %v2536
  %5597 = vmatpush.bf16.msra.mxu0 %v2532
  %5598 = vmatpush.bf16.msra.mxu0 %v2528
  %5599 = vmatpush.bf16.msra.mxu0 %v2524
  %5600 = vmatmul.bf16.gmra.mxu0 %v5406
  %v5601 = vpop.f32.mrf.mxu0
  %v5602 = vadd.f32 0.0, %v5601
  %v5603 = vpop.f32.mrf.mxu0
  %5604 = vdwg.mxu0
  %5605 = vmatpush.bf16.msra.mxu0 %v2553
  %5606 = vmatpush.bf16.msra.mxu0 %v2549
  %5607 = vmatpush.bf16.msra.mxu0 %v2545
  %5608 = vmatpush.bf16.msra.mxu0 %v2541
  %5609 = vmatpush.bf16.msra.mxu0 %v2537
  %5610 = vmatpush.bf16.msra.mxu0 %v2533
  %5611 = vmatpush.bf16.msra.mxu0 %v2529
  %5612 = vmatpush.bf16.msra.mxu0 %v2525
  %5613 = vmatmul.bf16.gmra.mxu0 %v5406
  %v5614 = vpop.f32.mrf.mxu0
  %v5615 = vadd.f32 0.0, %v5614
  %v5616 = vpop.f32.mrf.mxu0
  %5617 = vdwg.mxu0
  %5618 = vmatpush.bf16.msra.mxu0 %v2554
  %5619 = vmatpush.bf16.msra.mxu0 %v2550
  %5620 = vmatpush.bf16.msra.mxu0 %v2546
  %5621 = vmatpush.bf16.msra.mxu0 %v2542
  %5622 = vmatpush.bf16.msra.mxu0 %v2538
  %5623 = vmatpush.bf16.msra.mxu0 %v2534
  %5624 = vmatpush.bf16.msra.mxu0 %v2530
  %5625 = vmatpush.bf16.msra.mxu0 %v2526
  %5626 = vmatmul.bf16.gmra.mxu0 %v5406
  %v5627 = vpop.f32.mrf.mxu0
  %v5628 = vadd.f32 0.0, %v5627
  %v5629 = vpop.f32.mrf.mxu0
  %5630 = vdwg.mxu0
  %5631 = vmatpush.bf16.msra.mxu0 %v2303
  %5632 = vmatpush.bf16.msra.mxu0 %v2299
  %5633 = vmatpush.bf16.msra.mxu0 %v2295
  %5634 = vmatpush.bf16.msra.mxu0 %v2291
  %5635 = vmatpush.bf16.msra.mxu0 %v2287
  %5636 = vmatpush.bf16.msra.mxu0 %v2283
  %5637 = vmatpush.bf16.msra.mxu0 %v2279
  %5638 = vmatpush.bf16.msra.mxu0 %v2275
  %5639 = vmatmul.bf16.gmra.mxu0 %v5578
  %v5640 = vpop.f32.mrf.mxu0
  %v5641 = vadd.f32 %v5589, %v5640
  %v5642 = vpop.f32.mrf.mxu0
  %5643 = vdwg.mxu0
  %5644 = vmatpush.bf16.msra.mxu0 %v2304
  %5645 = vmatpush.bf16.msra.mxu0 %v2300
  %5646 = vmatpush.bf16.msra.mxu0 %v2296
  %5647 = vmatpush.bf16.msra.mxu0 %v2292
  %5648 = vmatpush.bf16.msra.mxu0 %v2288
  %5649 = vmatpush.bf16.msra.mxu0 %v2284
  %5650 = vmatpush.bf16.msra.mxu0 %v2280
  %5651 = vmatpush.bf16.msra.mxu0 %v2276
  %5652 = vmatmul.bf16.gmra.mxu0 %v5578
  %v5653 = vpop.f32.mrf.mxu0
  %v5654 = vadd.f32 %v5602, %v5653
  %v5655 = vpop.f32.mrf.mxu0
  %5656 = vdwg.mxu0
  %5657 = vmatpush.bf16.msra.mxu0 %v2305
  %5658 = vmatpush.bf16.msra.mxu0 %v2301
  %5659 = vmatpush.bf16.msra.mxu0 %v2297
  %5660 = vmatpush.bf16.msra.mxu0 %v2293
  %5661 = vmatpush.bf16.msra.mxu0 %v2289
  %5662 = vmatpush.bf16.msra.mxu0 %v2285
  %5663 = vmatpush.bf16.msra.mxu0 %v2281
  %5664 = vmatpush.bf16.msra.mxu0 %v2277
  %5665 = vmatmul.bf16.gmra.mxu0 %v5578
  %v5666 = vpop.f32.mrf.mxu0
  %v5667 = vadd.f32 %v5615, %v5666
  %v5668 = vpop.f32.mrf.mxu0
  %5669 = vdwg.mxu0
  %5670 = vmatpush.bf16.msra.mxu0 %v2306
  %5671 = vmatpush.bf16.msra.mxu0 %v2302
  %5672 = vmatpush.bf16.msra.mxu0 %v2298
  %5673 = vmatpush.bf16.msra.mxu0 %v2294
  %5674 = vmatpush.bf16.msra.mxu0 %v2290
  %5675 = vmatpush.bf16.msra.mxu0 %v2286
  %5676 = vmatpush.bf16.msra.mxu0 %v2282
  %5677 = vmatpush.bf16.msra.mxu0 %v2278
  %5678 = vmatmul.bf16.gmra.mxu0 %v5578
  %v5679 = vpop.f32.mrf.mxu0
  %v5680 = vadd.f32 %v5628, %v5679
  %v5681 = vpop.f32.mrf.mxu0
  %5682 = vdwg.mxu0
  %v5683 = vadd.f32 %v5641, %v64
  %v5684 = vadd.f32 %v5654, %v65
  %v5685 = vadd.f32 %v5667, %v66
  %v5686 = vadd.f32 %v5680, %v67
  %v5687 = vxor.u32 %v5683, 2147483648
  %v5688 = vxor.u32 %v5684, 2147483648
  %v5689 = vxor.u32 %v5685, 2147483648
  %v5690 = vmul.f32 %v5687, 1.442695
  %v5691 = vpow.pop %v5690
  %v5692 = vmul.f32 %v5688, 1.442695
  %v5693 = vpow.pop %v5692
  %v5694 = vmul.f32 %v5689, 1.442695
  %v5695 = vpow.pop %v5694
  %v5696 = vadd.f32 %v5691, 1.0
  %v5697 = vadd.f32 %v5693, 1.0
  %v5698 = vadd.f32 %v5695, 1.0
  %v5699 = vrcp.pop %v5696
  %v5700 = vmul.f32 %v5696, %v5699
  %v5701 = vsub.f32 1.0, %v5700
  %v5702 = vmul.f32 %v5699, %v5701
  %v5703 = vadd.f32 %v5699, %v5702
  %vm5704 = vweird.f32 %v5696
  %vm5705 = vweird.f32 %v5699
  %vm5706 = vmor %vm5704, %vm5705
  %v5707 = vsel %vm5706, %v5699, %v5703
  %v5708 = vand.u32 2147483647, %v5696
  %vm5709 = vcmp.eq.f32.partialorder %v5708, 8.507059e+37
  %v5710 = vand.u32 %v5696, 2147483648
  %v5711 = vor.u32 1.1754944e-38, %v5710
  %v5712 = vsel %vm5709, %v5711, %v5707
  %v5713 = vmul.f32 1.0, %v5712
  %v5714 = vrcp.pop %v5697
  %v5715 = vmul.f32 %v5697, %v5714
  %v5716 = vsub.f32 1.0, %v5715
  %v5717 = vmul.f32 %v5714, %v5716
  %v5718 = vadd.f32 %v5714, %v5717
  %vm5719 = vweird.f32 %v5697
  %vm5720 = vweird.f32 %v5714
  %vm5721 = vmor %vm5719, %vm5720
  %v5722 = vsel %vm5721, %v5714, %v5718
  %v5723 = vand.u32 2147483647, %v5697
  %vm5724 = vcmp.eq.f32.partialorder %v5723, 8.507059e+37
  %v5725 = vand.u32 %v5697, 2147483648
  %v5726 = vor.u32 1.1754944e-38, %v5725
  %v5727 = vsel %vm5724, %v5726, %v5722
  %v5728 = vmul.f32 1.0, %v5727
  %v5729 = vrcp.pop %v5698
  %v5730 = vmul.f32 %v5698, %v5729
  %v5731 = vsub.f32 1.0, %v5730
  %v5732 = vmul.f32 %v5729, %v5731
  %v5733 = vadd.f32 %v5729, %v5732
  %vm5734 = vweird.f32 %v5698
  %vm5735 = vweird.f32 %v5729
  %vm5736 = vmor %vm5734, %vm5735
  %v5737 = vsel %vm5736, %v5729, %v5733
  %v5738 = vand.u32 2147483647, %v5698
  %vm5739 = vcmp.eq.f32.partialorder %v5738, 8.507059e+37
  %v5740 = vand.u32 %v5698, 2147483648
  %v5741 = vor.u32 1.1754944e-38, %v5740
  %v5742 = vsel %vm5739, %v5741, %v5737
  %v5743 = vmul.f32 1.0, %v5742
  %v5744 = vtanh.pop %v5686
  %v5745 = vmul.f32 %v5728, %v5403
  %v5746 = vmul.f32 %v5713, %v5744
  %v5747 = vadd.f32 %v5745, %v5746
  %v5748 = vtanh.pop %v5747
  %v5749 = vmul.f32 %v5743, %v5748
  %v5750 = vpack.c.bf16 %v5749, %v5749
  %5751 = vmatpush.bf16.msra.mxu0 %v2905
  %5752 = vmatpush.bf16.msra.mxu0 %v2901
  %5753 = vmatpush.bf16.msra.mxu0 %v2897
  %5754 = vmatpush.bf16.msra.mxu0 %v2893
  %5755 = vmatpush.bf16.msra.mxu0 %v2889
  %5756 = vmatpush.bf16.msra.mxu0 %v2885
  %5757 = vmatpush.bf16.msra.mxu0 %v2881
  %5758 = vmatpush.bf16.msra.mxu0 %v2877
  %5759 = vmatmul.bf16.gmra.mxu0 %v5578
  %v5760 = vpop.f32.mrf.mxu0
  %v5761 = vadd.f32 0.0, %v5760
  %v5762 = vpop.f32.mrf.mxu0
  %5763 = vdwg.mxu0
  %5764 = vmatpush.bf16.msra.mxu0 %v2906
  %5765 = vmatpush.bf16.msra.mxu0 %v2902
  %5766 = vmatpush.bf16.msra.mxu0 %v2898
  %5767 = vmatpush.bf16.msra.mxu0 %v2894
  %5768 = vmatpush.bf16.msra.mxu0 %v2890
  %5769 = vmatpush.bf16.msra.mxu0 %v2886
  %5770 = vmatpush.bf16.msra.mxu0 %v2882
  %5771 = vmatpush.bf16.msra.mxu0 %v2878
  %5772 = vmatmul.bf16.gmra.mxu0 %v5578
  %v5773 = vpop.f32.mrf.mxu0
  %v5774 = vadd.f32 0.0, %v5773
  %v5775 = vpop.f32.mrf.mxu0
  %5776 = vdwg.mxu0
  %5777 = vmatpush.bf16.msra.mxu0 %v2907
  %5778 = vmatpush.bf16.msra.mxu0 %v2903
  %5779 = vmatpush.bf16.msra.mxu0 %v2899
  %5780 = vmatpush.bf16.msra.mxu0 %v2895
  %5781 = vmatpush.bf16.msra.mxu0 %v2891
  %5782 = vmatpush.bf16.msra.mxu0 %v2887
  %5783 = vmatpush.bf16.msra.mxu0 %v2883
  %5784 = vmatpush.bf16.msra.mxu0 %v2879
  %5785 = vmatmul.bf16.gmra.mxu0 %v5578
  %v5786 = vpop.f32.mrf.mxu0
  %v5787 = vadd.f32 0.0, %v5786
  %v5788 = vpop.f32.mrf.mxu0
  %5789 = vdwg.mxu0
  %5790 = vmatpush.bf16.msra.mxu0 %v2908
  %5791 = vmatpush.bf16.msra.mxu0 %v2904
  %5792 = vmatpush.bf16.msra.mxu0 %v2900
  %5793 = vmatpush.bf16.msra.mxu0 %v2896
  %5794 = vmatpush.bf16.msra.mxu0 %v2892
  %5795 = vmatpush.bf16.msra.mxu0 %v2888
  %5796 = vmatpush.bf16.msra.mxu0 %v2884
  %5797 = vmatpush.bf16.msra.mxu0 %v2880
  %5798 = vmatmul.bf16.gmra.mxu0 %v5578
  %v5799 = vpop.f32.mrf.mxu0
  %v5800 = vadd.f32 0.0, %v5799
  %v5801 = vpop.f32.mrf.mxu0
  %5802 = vdwg.mxu0
  %5803 = vmatpush.bf16.msra.mxu0 %v3117
  %5804 = vmatpush.bf16.msra.mxu0 %v3113
  %5805 = vmatpush.bf16.msra.mxu0 %v3109
  %5806 = vmatpush.bf16.msra.mxu0 %v3105
  %5807 = vmatpush.bf16.msra.mxu0 %v3101
  %5808 = vmatpush.bf16.msra.mxu0 %v3097
  %5809 = vmatpush.bf16.msra.mxu0 %v3093
  %5810 = vmatpush.bf16.msra.mxu0 %v3089
  %5811 = vmatmul.bf16.gmra.mxu0 %v5750
  %v5812 = vpop.f32.mrf.mxu0
  %v5813 = vadd.f32 %v5761, %v5812
  %v5814 = vpop.f32.mrf.mxu0
  %5815 = vdwg.mxu0
  %5816 = vmatpush.bf16.msra.mxu0 %v3118
  %5817 = vmatpush.bf16.msra.mxu0 %v3114
  %5818 = vmatpush.bf16.msra.mxu0 %v3110
  %5819 = vmatpush.bf16.msra.mxu0 %v3106
  %5820 = vmatpush.bf16.msra.mxu0 %v3102
  %5821 = vmatpush.bf16.msra.mxu0 %v3098
  %5822 = vmatpush.bf16.msra.mxu0 %v3094
  %5823 = vmatpush.bf16.msra.mxu0 %v3090
  %5824 = vmatmul.bf16.gmra.mxu0 %v5750
  %v5825 = vpop.f32.mrf.mxu0
  %v5826 = vadd.f32 %v5774, %v5825
  %v5827 = vpop.f32.mrf.mxu0
  %5828 = vdwg.mxu0
  %5829 = vmatpush.bf16.msra.mxu0 %v3119
  %5830 = vmatpush.bf16.msra.mxu0 %v3115
  %5831 = vmatpush.bf16.msra.mxu0 %v3111
  %5832 = vmatpush.bf16.msra.mxu0 %v3107
  %5833 = vmatpush.bf16.msra.mxu0 %v3103
  %5834 = vmatpush.bf16.msra.mxu0 %v3099
  %5835 = vmatpush.bf16.msra.mxu0 %v3095
  %5836 = vmatpush.bf16.msra.mxu0 %v3091
  %5837 = vmatmul.bf16.gmra.mxu0 %v5750
  %v5838 = vpop.f32.mrf.mxu0
  %v5839 = vadd.f32 %v5787, %v5838
  %v5840 = vpop.f32.mrf.mxu0
  %5841 = vdwg.mxu0
  %5842 = vmatpush.bf16.msra.mxu0 %v3120
  %5843 = vmatpush.bf16.msra.mxu0 %v3116
  %5844 = vmatpush.bf16.msra.mxu0 %v3112
  %5845 = vmatpush.bf16.msra.mxu0 %v3108
  %5846 = vmatpush.bf16.msra.mxu0 %v3104
  %5847 = vmatpush.bf16.msra.mxu0 %v3100
  %5848 = vmatpush.bf16.msra.mxu0 %v3096
  %5849 = vmatpush.bf16.msra.mxu0 %v3092
  %5850 = vmatmul.bf16.gmra.mxu0 %v5750
  %v5851 = vpop.f32.mrf.mxu0
  %v5852 = vadd.f32 %v5800, %v5851
  %v5853 = vpop.f32.mrf.mxu0
  %5854 = vdwg.mxu0
  %v5855 = vadd.f32 %v5813, %v75
  %v5856 = vadd.f32 %v5826, %v76
  %v5857 = vadd.f32 %v5839, %v77
  %v5858 = vadd.f32 %v5852, %v78
  %v5859 = vxor.u32 %v5855, 2147483648
  %v5860 = vxor.u32 %v5856, 2147483648
  %v5861 = vxor.u32 %v5857, 2147483648
  %v5862 = vmul.f32 %v5859, 1.442695
  %v5863 = vpow.pop %v5862
  %v5864 = vmul.f32 %v5860, 1.442695
  %v5865 = vpow.pop %v5864
  %v5866 = vmul.f32 %v5861, 1.442695
  %v5867 = vpow.pop %v5866
  %v5868 = vadd.f32 %v5863, 1.0
  %v5869 = vadd.f32 %v5865, 1.0
  %v5870 = vadd.f32 %v5867, 1.0
  %v5871 = vrcp.pop %v5868
  %v5872 = vmul.f32 %v5868, %v5871
  %v5873 = vsub.f32 1.0, %v5872
  %v5874 = vmul.f32 %v5871, %v5873
  %v5875 = vadd.f32 %v5871, %v5874
  %vm5876 = vweird.f32 %v5868
  %vm5877 = vweird.f32 %v5871
  %vm5878 = vmor %vm5876, %vm5877
  %v5879 = vsel %vm5878, %v5871, %v5875
  %v5880 = vand.u32 2147483647, %v5868
  %vm5881 = vcmp.eq.f32.partialorder %v5880, 8.507059e+37
  %v5882 = vand.u32 %v5868, 2147483648
  %v5883 = vor.u32 1.1754944e-38, %v5882
  %v5884 = vsel %vm5881, %v5883, %v5879
  %v5885 = vmul.f32 1.0, %v5884
  %v5886 = vrcp.pop %v5869
  %v5887 = vmul.f32 %v5869, %v5886
  %v5888 = vsub.f32 1.0, %v5887
  %v5889 = vmul.f32 %v5886, %v5888
  %v5890 = vadd.f32 %v5886, %v5889
  %vm5891 = vweird.f32 %v5869
  %vm5892 = vweird.f32 %v5886
  %vm5893 = vmor %vm5891, %vm5892
  %v5894 = vsel %vm5893, %v5886, %v5890
  %v5895 = vand.u32 2147483647, %v5869
  %vm5896 = vcmp.eq.f32.partialorder %v5895, 8.507059e+37
  %v5897 = vand.u32 %v5869, 2147483648
  %v5898 = vor.u32 1.1754944e-38, %v5897
  %v5899 = vsel %vm5896, %v5898, %v5894
  %v5900 = vmul.f32 1.0, %v5899
  %v5901 = vrcp.pop %v5870
  %v5902 = vmul.f32 %v5870, %v5901
  %v5903 = vsub.f32 1.0, %v5902
  %v5904 = vmul.f32 %v5901, %v5903
  %v5905 = vadd.f32 %v5901, %v5904
  %vm5906 = vweird.f32 %v5870
  %vm5907 = vweird.f32 %v5901
  %vm5908 = vmor %vm5906, %vm5907
  %v5909 = vsel %vm5908, %v5901, %v5905
  %v5910 = vand.u32 2147483647, %v5870
  %vm5911 = vcmp.eq.f32.partialorder %v5910, 8.507059e+37
  %v5912 = vand.u32 %v5870, 2147483648
  %v5913 = vor.u32 1.1754944e-38, %v5912
  %v5914 = vsel %vm5911, %v5913, %v5909
  %v5915 = vmul.f32 1.0, %v5914
  %v5916 = vtanh.pop %v5858
  %v5917 = vmul.f32 %v5900, %v5575
  %v5918 = vmul.f32 %v5885, %v5916
  %v5919 = vadd.f32 %v5917, %v5918
  %v5920 = vtanh.pop %v5919
  %v5921 = vmul.f32 %v5915, %v5920
  %v5922 = vpack.c.bf16 %v5921, %v5921
  %5923 = vmatpush.bf16.msra.mxu0 %v2551
  %5924 = vmatpush.bf16.msra.mxu0 %v2547
  %5925 = vmatpush.bf16.msra.mxu0 %v2543
  %5926 = vmatpush.bf16.msra.mxu0 %v2539
  %5927 = vmatpush.bf16.msra.mxu0 %v2535
  %5928 = vmatpush.bf16.msra.mxu0 %v2531
  %5929 = vmatpush.bf16.msra.mxu0 %v2527
  %5930 = vmatpush.bf16.msra.mxu0 %v2523
  %5931 = vmatmul.bf16.gmra.mxu0 %v5750
  %v5932 = vpop.f32.mrf.mxu0
  %v5933 = vadd.f32 0.0, %v5932
  %v5934 = vpop.f32.mrf.mxu0
  %5935 = vdwg.mxu0
  %5936 = vmatpush.bf16.msra.mxu0 %v2552
  %5937 = vmatpush.bf16.msra.mxu0 %v2548
  %5938 = vmatpush.bf16.msra.mxu0 %v2544
  %5939 = vmatpush.bf16.msra.mxu0 %v2540
  %5940 = vmatpush.bf16.msra.mxu0 %v2536
  %5941 = vmatpush.bf16.msra.mxu0 %v2532
  %5942 = vmatpush.bf16.msra.mxu0 %v2528
  %5943 = vmatpush.bf16.msra.mxu0 %v2524
  %5944 = vmatmul.bf16.gmra.mxu0 %v5750
  %v5945 = vpop.f32.mrf.mxu0
  %v5946 = vadd.f32 0.0, %v5945
  %v5947 = vpop.f32.mrf.mxu0
  %5948 = vdwg.mxu0
  %5949 = vmatpush.bf16.msra.mxu0 %v2553
  %5950 = vmatpush.bf16.msra.mxu0 %v2549
  %5951 = vmatpush.bf16.msra.mxu0 %v2545
  %5952 = vmatpush.bf16.msra.mxu0 %v2541
  %5953 = vmatpush.bf16.msra.mxu0 %v2537
  %5954 = vmatpush.bf16.msra.mxu0 %v2533
  %5955 = vmatpush.bf16.msra.mxu0 %v2529
  %5956 = vmatpush.bf16.msra.mxu0 %v2525
  %5957 = vmatmul.bf16.gmra.mxu0 %v5750
  %v5958 = vpop.f32.mrf.mxu0
  %v5959 = vadd.f32 0.0, %v5958
  %v5960 = vpop.f32.mrf.mxu0
  %5961 = vdwg.mxu0
  %5962 = vmatpush.bf16.msra.mxu0 %v2554
  %5963 = vmatpush.bf16.msra.mxu0 %v2550
  %5964 = vmatpush.bf16.msra.mxu0 %v2546
  %5965 = vmatpush.bf16.msra.mxu0 %v2542
  %5966 = vmatpush.bf16.msra.mxu0 %v2538
  %5967 = vmatpush.bf16.msra.mxu0 %v2534
  %5968 = vmatpush.bf16.msra.mxu0 %v2530
  %5969 = vmatpush.bf16.msra.mxu0 %v2526
  %5970 = vmatmul.bf16.gmra.mxu0 %v5750
  %v5971 = vpop.f32.mrf.mxu0
  %v5972 = vadd.f32 0.0, %v5971
  %v5973 = vpop.f32.mrf.mxu0
  %5974 = vdwg.mxu0
  %5975 = vmatpush.bf16.msra.mxu0 %v2303
  %5976 = vmatpush.bf16.msra.mxu0 %v2299
  %5977 = vmatpush.bf16.msra.mxu0 %v2295
  %5978 = vmatpush.bf16.msra.mxu0 %v2291
  %5979 = vmatpush.bf16.msra.mxu0 %v2287
  %5980 = vmatpush.bf16.msra.mxu0 %v2283
  %5981 = vmatpush.bf16.msra.mxu0 %v2279
  %5982 = vmatpush.bf16.msra.mxu0 %v2275
  %5983 = vmatmul.bf16.gmra.mxu0 %v5922
  %v5984 = vpop.f32.mrf.mxu0
  %v5985 = vadd.f32 %v5933, %v5984
  %v5986 = vpop.f32.mrf.mxu0
  %5987 = vdwg.mxu0
  %5988 = vmatpush.bf16.msra.mxu0 %v2304
  %5989 = vmatpush.bf16.msra.mxu0 %v2300
  %5990 = vmatpush.bf16.msra.mxu0 %v2296
  %5991 = vmatpush.bf16.msra.mxu0 %v2292
  %5992 = vmatpush.bf16.msra.mxu0 %v2288
  %5993 = vmatpush.bf16.msra.mxu0 %v2284
  %5994 = vmatpush.bf16.msra.mxu0 %v2280
  %5995 = vmatpush.bf16.msra.mxu0 %v2276
  %5996 = vmatmul.bf16.gmra.mxu0 %v5922
  %v5997 = vpop.f32.mrf.mxu0
  %v5998 = vadd.f32 %v5946, %v5997
  %v5999 = vpop.f32.mrf.mxu0
  %6000 = vdwg.mxu0
  %6001 = vmatpush.bf16.msra.mxu0 %v2305
  %6002 = vmatpush.bf16.msra.mxu0 %v2301
  %6003 = vmatpush.bf16.msra.mxu0 %v2297
  %6004 = vmatpush.bf16.msra.mxu0 %v2293
  %6005 = vmatpush.bf16.msra.mxu0 %v2289
  %6006 = vmatpush.bf16.msra.mxu0 %v2285
  %6007 = vmatpush.bf16.msra.mxu0 %v2281
  %6008 = vmatpush.bf16.msra.mxu0 %v2277
  %6009 = vmatmul.bf16.gmra.mxu0 %v5922
  %v6010 = vpop.f32.mrf.mxu0
  %v6011 = vadd.f32 %v5959, %v6010
  %v6012 = vpop.f32.mrf.mxu0
  %6013 = vdwg.mxu0
  %6014 = vmatpush.bf16.msra.mxu0 %v2306
  %6015 = vmatpush.bf16.msra.mxu0 %v2302
  %6016 = vmatpush.bf16.msra.mxu0 %v2298
  %6017 = vmatpush.bf16.msra.mxu0 %v2294
  %6018 = vmatpush.bf16.msra.mxu0 %v2290
  %6019 = vmatpush.bf16.msra.mxu0 %v2286
  %6020 = vmatpush.bf16.msra.mxu0 %v2282
  %6021 = vmatpush.bf16.msra.mxu0 %v2278
  %6022 = vmatmul.bf16.gmra.mxu0 %v5922
  %v6023 = vpop.f32.mrf.mxu0
  %v6024 = vadd.f32 %v5972, %v6023
  %v6025 = vpop.f32.mrf.mxu0
  %6026 = vdwg.mxu0
  %v6027 = vadd.f32 %v5985, %v64
  %v6028 = vadd.f32 %v5998, %v65
  %v6029 = vadd.f32 %v6011, %v66
  %v6030 = vadd.f32 %v6024, %v67
  %v6031 = vxor.u32 %v6027, 2147483648
  %v6032 = vxor.u32 %v6028, 2147483648
  %v6033 = vxor.u32 %v6029, 2147483648
  %v6034 = vmul.f32 %v6031, 1.442695
  %v6035 = vpow.pop %v6034
  %v6036 = vmul.f32 %v6032, 1.442695
  %v6037 = vpow.pop %v6036
  %v6038 = vmul.f32 %v6033, 1.442695
  %v6039 = vpow.pop %v6038
  %v6040 = vadd.f32 %v6035, 1.0
  %v6041 = vadd.f32 %v6037, 1.0
  %v6042 = vadd.f32 %v6039, 1.0
  %v6043 = vrcp.pop %v6040
  %v6044 = vmul.f32 %v6040, %v6043
  %v6045 = vsub.f32 1.0, %v6044
  %v6046 = vmul.f32 %v6043, %v6045
  %v6047 = vadd.f32 %v6043, %v6046
  %vm6048 = vweird.f32 %v6040
  %vm6049 = vweird.f32 %v6043
  %vm6050 = vmor %vm6048, %vm6049
  %v6051 = vsel %vm6050, %v6043, %v6047
  %v6052 = vand.u32 2147483647, %v6040
  %vm6053 = vcmp.eq.f32.partialorder %v6052, 8.507059e+37
  %v6054 = vand.u32 %v6040, 2147483648
  %v6055 = vor.u32 1.1754944e-38, %v6054
  %v6056 = vsel %vm6053, %v6055, %v6051
  %v6057 = vmul.f32 1.0, %v6056
  %v6058 = vrcp.pop %v6041
  %v6059 = vmul.f32 %v6041, %v6058
  %v6060 = vsub.f32 1.0, %v6059
  %v6061 = vmul.f32 %v6058, %v6060
  %v6062 = vadd.f32 %v6058, %v6061
  %vm6063 = vweird.f32 %v6041
  %vm6064 = vweird.f32 %v6058
  %vm6065 = vmor %vm6063, %vm6064
  %v6066 = vsel %vm6065, %v6058, %v6062
  %v6067 = vand.u32 2147483647, %v6041
  %vm6068 = vcmp.eq.f32.partialorder %v6067, 8.507059e+37
  %v6069 = vand.u32 %v6041, 2147483648
  %v6070 = vor.u32 1.1754944e-38, %v6069
  %v6071 = vsel %vm6068, %v6070, %v6066
  %v6072 = vmul.f32 1.0, %v6071
  %v6073 = vrcp.pop %v6042
  %v6074 = vmul.f32 %v6042, %v6073
  %v6075 = vsub.f32 1.0, %v6074
  %v6076 = vmul.f32 %v6073, %v6075
  %v6077 = vadd.f32 %v6073, %v6076
  %vm6078 = vweird.f32 %v6042
  %vm6079 = vweird.f32 %v6073
  %vm6080 = vmor %vm6078, %vm6079
  %v6081 = vsel %vm6080, %v6073, %v6077
  %v6082 = vand.u32 2147483647, %v6042
  %vm6083 = vcmp.eq.f32.partialorder %v6082, 8.507059e+37
  %v6084 = vand.u32 %v6042, 2147483648
  %v6085 = vor.u32 1.1754944e-38, %v6084
  %v6086 = vsel %vm6083, %v6085, %v6081
  %v6087 = vmul.f32 1.0, %v6086
  %v6088 = vtanh.pop %v6030
  %v6089 = vmul.f32 %v6072, %v5747
  %v6090 = vmul.f32 %v6057, %v6088
  %v6091 = vadd.f32 %v6089, %v6090
  %v6092 = vtanh.pop %v6091
  %v6093 = vmul.f32 %v6087, %v6092
  %v6094 = vpack.c.bf16 %v6093, %v6093
  %6095 = vmatpush.bf16.msra.mxu0 %v2905
  %6096 = vmatpush.bf16.msra.mxu0 %v2901
  %6097 = vmatpush.bf16.msra.mxu0 %v2897
  %6098 = vmatpush.bf16.msra.mxu0 %v2893
  %6099 = vmatpush.bf16.msra.mxu0 %v2889
  %6100 = vmatpush.bf16.msra.mxu0 %v2885
  %6101 = vmatpush.bf16.msra.mxu0 %v2881
  %6102 = vmatpush.bf16.msra.mxu0 %v2877
  %6103 = vmatmul.bf16.gmra.mxu0 %v5922
  %v6104 = vpop.f32.mrf.mxu0
  %v6105 = vadd.f32 0.0, %v6104
  %v6106 = vpop.f32.mrf.mxu0
  %6107 = vdwg.mxu0
  %6108 = vmatpush.bf16.msra.mxu0 %v2906
  %6109 = vmatpush.bf16.msra.mxu0 %v2902
  %6110 = vmatpush.bf16.msra.mxu0 %v2898
  %6111 = vmatpush.bf16.msra.mxu0 %v2894
  %6112 = vmatpush.bf16.msra.mxu0 %v2890
  %6113 = vmatpush.bf16.msra.mxu0 %v2886
  %6114 = vmatpush.bf16.msra.mxu0 %v2882
  %6115 = vmatpush.bf16.msra.mxu0 %v2878
  %6116 = vmatmul.bf16.gmra.mxu0 %v5922
  %v6117 = vpop.f32.mrf.mxu0
  %v6118 = vadd.f32 0.0, %v6117
  %v6119 = vpop.f32.mrf.mxu0
  %6120 = vdwg.mxu0
  %6121 = vmatpush.bf16.msra.mxu0 %v2907
  %6122 = vmatpush.bf16.msra.mxu0 %v2903
  %6123 = vmatpush.bf16.msra.mxu0 %v2899
  %6124 = vmatpush.bf16.msra.mxu0 %v2895
  %6125 = vmatpush.bf16.msra.mxu0 %v2891
  %6126 = vmatpush.bf16.msra.mxu0 %v2887
  %6127 = vmatpush.bf16.msra.mxu0 %v2883
  %6128 = vmatpush.bf16.msra.mxu0 %v2879
  %6129 = vmatmul.bf16.gmra.mxu0 %v5922
  %v6130 = vpop.f32.mrf.mxu0
  %v6131 = vadd.f32 0.0, %v6130
  %v6132 = vpop.f32.mrf.mxu0
  %6133 = vdwg.mxu0
  %6134 = vmatpush.bf16.msra.mxu0 %v2908
  %6135 = vmatpush.bf16.msra.mxu0 %v2904
  %6136 = vmatpush.bf16.msra.mxu0 %v2900
  %6137 = vmatpush.bf16.msra.mxu0 %v2896
  %6138 = vmatpush.bf16.msra.mxu0 %v2892
  %6139 = vmatpush.bf16.msra.mxu0 %v2888
  %6140 = vmatpush.bf16.msra.mxu0 %v2884
  %6141 = vmatpush.bf16.msra.mxu0 %v2880
  %6142 = vmatmul.bf16.gmra.mxu0 %v5922
  %v6143 = vpop.f32.mrf.mxu0
  %v6144 = vadd.f32 0.0, %v6143
  %v6145 = vpop.f32.mrf.mxu0
  %6146 = vdwg.mxu0
  %6147 = vmatpush.bf16.msra.mxu0 %v3117
  %6148 = vmatpush.bf16.msra.mxu0 %v3113
  %6149 = vmatpush.bf16.msra.mxu0 %v3109
  %6150 = vmatpush.bf16.msra.mxu0 %v3105
  %6151 = vmatpush.bf16.msra.mxu0 %v3101
  %6152 = vmatpush.bf16.msra.mxu0 %v3097
  %6153 = vmatpush.bf16.msra.mxu0 %v3093
  %6154 = vmatpush.bf16.msra.mxu0 %v3089
  %6155 = vmatmul.bf16.gmra.mxu0 %v6094
  %v6156 = vpop.f32.mrf.mxu0
  %v6157 = vadd.f32 %v6105, %v6156
  %v6158 = vpop.f32.mrf.mxu0
  %6159 = vdwg.mxu0
  %6160 = vmatpush.bf16.msra.mxu0 %v3118
  %6161 = vmatpush.bf16.msra.mxu0 %v3114
  %6162 = vmatpush.bf16.msra.mxu0 %v3110
  %6163 = vmatpush.bf16.msra.mxu0 %v3106
  %6164 = vmatpush.bf16.msra.mxu0 %v3102
  %6165 = vmatpush.bf16.msra.mxu0 %v3098
  %6166 = vmatpush.bf16.msra.mxu0 %v3094
  %6167 = vmatpush.bf16.msra.mxu0 %v3090
  %6168 = vmatmul.bf16.gmra.mxu0 %v6094
  %v6169 = vpop.f32.mrf.mxu0
  %v6170 = vadd.f32 %v6118, %v6169
  %v6171 = vpop.f32.mrf.mxu0
  %6172 = vdwg.mxu0
  %6173 = vmatpush.bf16.msra.mxu0 %v3119
  %6174 = vmatpush.bf16.msra.mxu0 %v3115
  %6175 = vmatpush.bf16.msra.mxu0 %v3111
  %6176 = vmatpush.bf16.msra.mxu0 %v3107
  %6177 = vmatpush.bf16.msra.mxu0 %v3103
  %6178 = vmatpush.bf16.msra.mxu0 %v3099
  %6179 = vmatpush.bf16.msra.mxu0 %v3095
  %6180 = vmatpush.bf16.msra.mxu0 %v3091
  %6181 = vmatmul.bf16.gmra.mxu0 %v6094
  %v6182 = vpop.f32.mrf.mxu0
  %v6183 = vadd.f32 %v6131, %v6182
  %v6184 = vpop.f32.mrf.mxu0
  %6185 = vdwg.mxu0
  %6186 = vmatpush.bf16.msra.mxu0 %v3120
  %6187 = vmatpush.bf16.msra.mxu0 %v3116
  %6188 = vmatpush.bf16.msra.mxu0 %v3112
  %6189 = vmatpush.bf16.msra.mxu0 %v3108
  %6190 = vmatpush.bf16.msra.mxu0 %v3104
  %6191 = vmatpush.bf16.msra.mxu0 %v3100
  %6192 = vmatpush.bf16.msra.mxu0 %v3096
  %6193 = vmatpush.bf16.msra.mxu0 %v3092
  %6194 = vmatmul.bf16.gmra.mxu0 %v6094
  %v6195 = vpop.f32.mrf.mxu0
  %v6196 = vadd.f32 %v6144, %v6195
  %v6197 = vpop.f32.mrf.mxu0
  %6198 = vdwg.mxu0
  %v6199 = vadd.f32 %v6157, %v75
  %v6200 = vadd.f32 %v6170, %v76
  %v6201 = vadd.f32 %v6183, %v77
  %v6202 = vadd.f32 %v6196, %v78
  %v6203 = vxor.u32 %v6199, 2147483648
  %v6204 = vxor.u32 %v6200, 2147483648
  %v6205 = vxor.u32 %v6201, 2147483648
  %v6206 = vmul.f32 %v6203, 1.442695
  %v6207 = vpow.pop %v6206
  %v6208 = vmul.f32 %v6204, 1.442695
  %v6209 = vpow.pop %v6208
  %v6210 = vmul.f32 %v6205, 1.442695
  %v6211 = vpow.pop %v6210
  %v6212 = vadd.f32 %v6207, 1.0
  %v6213 = vadd.f32 %v6209, 1.0
  %v6214 = vadd.f32 %v6211, 1.0
  %v6215 = vrcp.pop %v6212
  %v6216 = vmul.f32 %v6212, %v6215
  %v6217 = vsub.f32 1.0, %v6216
  %v6218 = vmul.f32 %v6215, %v6217
  %v6219 = vadd.f32 %v6215, %v6218
  %vm6220 = vweird.f32 %v6212
  %vm6221 = vweird.f32 %v6215
  %vm6222 = vmor %vm6220, %vm6221
  %v6223 = vsel %vm6222, %v6215, %v6219
  %v6224 = vand.u32 2147483647, %v6212
  %vm6225 = vcmp.eq.f32.partialorder %v6224, 8.507059e+37
  %v6226 = vand.u32 %v6212, 2147483648
  %v6227 = vor.u32 1.1754944e-38, %v6226
  %v6228 = vsel %vm6225, %v6227, %v6223
  %v6229 = vmul.f32 1.0, %v6228
  %v6230 = vrcp.pop %v6213
  %v6231 = vmul.f32 %v6213, %v6230
  %v6232 = vsub.f32 1.0, %v6231
  %v6233 = vmul.f32 %v6230, %v6232
  %v6234 = vadd.f32 %v6230, %v6233
  %vm6235 = vweird.f32 %v6213
  %vm6236 = vweird.f32 %v6230
  %vm6237 = vmor %vm6235, %vm6236
  %v6238 = vsel %vm6237, %v6230, %v6234
  %v6239 = vand.u32 2147483647, %v6213
  %vm6240 = vcmp.eq.f32.partialorder %v6239, 8.507059e+37
  %v6241 = vand.u32 %v6213, 2147483648
  %v6242 = vor.u32 1.1754944e-38, %v6241
  %v6243 = vsel %vm6240, %v6242, %v6238
  %v6244 = vmul.f32 1.0, %v6243
  %v6245 = vrcp.pop %v6214
  %v6246 = vmul.f32 %v6214, %v6245
  %v6247 = vsub.f32 1.0, %v6246
  %v6248 = vmul.f32 %v6245, %v6247
  %v6249 = vadd.f32 %v6245, %v6248
  %vm6250 = vweird.f32 %v6214
  %vm6251 = vweird.f32 %v6245
  %vm6252 = vmor %vm6250, %vm6251
  %v6253 = vsel %vm6252, %v6245, %v6249
  %v6254 = vand.u32 2147483647, %v6214
  %vm6255 = vcmp.eq.f32.partialorder %v6254, 8.507059e+37
  %v6256 = vand.u32 %v6214, 2147483648
  %v6257 = vor.u32 1.1754944e-38, %v6256
  %v6258 = vsel %vm6255, %v6257, %v6253
  %v6259 = vmul.f32 1.0, %v6258
  %v6260 = vtanh.pop %v6202
  %v6261 = vmul.f32 %v6244, %v5919
  %v6262 = vmul.f32 %v6229, %v6260
  %v6263 = vadd.f32 %v6261, %v6262
  %v6264 = vtanh.pop %v6263
  %v6265 = vmul.f32 %v6259, %v6264
  %v6266 = vpack.c.bf16 %v6265, %v6265
  %6267 = vmatpush.bf16.msra.mxu0 %v2551
  %6268 = vmatpush.bf16.msra.mxu0 %v2547
  %6269 = vmatpush.bf16.msra.mxu0 %v2543
  %6270 = vmatpush.bf16.msra.mxu0 %v2539
  %6271 = vmatpush.bf16.msra.mxu0 %v2535
  %6272 = vmatpush.bf16.msra.mxu0 %v2531
  %6273 = vmatpush.bf16.msra.mxu0 %v2527
  %6274 = vmatpush.bf16.msra.mxu0 %v2523
  %6275 = vmatmul.bf16.gmra.mxu0 %v6094
  %v6276 = vpop.f32.mrf.mxu0
  %v6277 = vadd.f32 0.0, %v6276
  %v6278 = vpop.f32.mrf.mxu0
  %6279 = vdwg.mxu0
  %6280 = vmatpush.bf16.msra.mxu0 %v2552
  %6281 = vmatpush.bf16.msra.mxu0 %v2548
  %6282 = vmatpush.bf16.msra.mxu0 %v2544
  %6283 = vmatpush.bf16.msra.mxu0 %v2540
  %6284 = vmatpush.bf16.msra.mxu0 %v2536
  %6285 = vmatpush.bf16.msra.mxu0 %v2532
  %6286 = vmatpush.bf16.msra.mxu0 %v2528
  %6287 = vmatpush.bf16.msra.mxu0 %v2524
  %6288 = vmatmul.bf16.gmra.mxu0 %v6094
  %v6289 = vpop.f32.mrf.mxu0
  %v6290 = vadd.f32 0.0, %v6289
  %v6291 = vpop.f32.mrf.mxu0
  %6292 = vdwg.mxu0
  %6293 = vmatpush.bf16.msra.mxu0 %v2553
  %6294 = vmatpush.bf16.msra.mxu0 %v2549
  %6295 = vmatpush.bf16.msra.mxu0 %v2545
  %6296 = vmatpush.bf16.msra.mxu0 %v2541
  %6297 = vmatpush.bf16.msra.mxu0 %v2537
  %6298 = vmatpush.bf16.msra.mxu0 %v2533
  %6299 = vmatpush.bf16.msra.mxu0 %v2529
  %6300 = vmatpush.bf16.msra.mxu0 %v2525
  %6301 = vmatmul.bf16.gmra.mxu0 %v6094
  %v6302 = vpop.f32.mrf.mxu0
  %v6303 = vadd.f32 0.0, %v6302
  %v6304 = vpop.f32.mrf.mxu0
  %6305 = vdwg.mxu0
  %6306 = vmatpush.bf16.msra.mxu0 %v2554
  %6307 = vmatpush.bf16.msra.mxu0 %v2550
  %6308 = vmatpush.bf16.msra.mxu0 %v2546
  %6309 = vmatpush.bf16.msra.mxu0 %v2542
  %6310 = vmatpush.bf16.msra.mxu0 %v2538
  %6311 = vmatpush.bf16.msra.mxu0 %v2534
  %6312 = vmatpush.bf16.msra.mxu0 %v2530
  %6313 = vmatpush.bf16.msra.mxu0 %v2526
  %6314 = vmatmul.bf16.gmra.mxu0 %v6094
  %v6315 = vpop.f32.mrf.mxu0
  %v6316 = vadd.f32 0.0, %v6315
  %v6317 = vpop.f32.mrf.mxu0
  %6318 = vdwg.mxu0
  %6319 = vmatpush.bf16.msra.mxu0 %v2303
  %6320 = vmatpush.bf16.msra.mxu0 %v2299
  %6321 = vmatpush.bf16.msra.mxu0 %v2295
  %6322 = vmatpush.bf16.msra.mxu0 %v2291
  %6323 = vmatpush.bf16.msra.mxu0 %v2287
  %6324 = vmatpush.bf16.msra.mxu0 %v2283
  %6325 = vmatpush.bf16.msra.mxu0 %v2279
  %6326 = vmatpush.bf16.msra.mxu0 %v2275
  %6327 = vmatmul.bf16.gmra.mxu0 %v6266
  %v6328 = vpop.f32.mrf.mxu0
  %v6329 = vadd.f32 %v6277, %v6328
  %v6330 = vpop.f32.mrf.mxu0
  %6331 = vdwg.mxu0
  %6332 = vmatpush.bf16.msra.mxu0 %v2304
  %6333 = vmatpush.bf16.msra.mxu0 %v2300
  %6334 = vmatpush.bf16.msra.mxu0 %v2296
  %6335 = vmatpush.bf16.msra.mxu0 %v2292
  %6336 = vmatpush.bf16.msra.mxu0 %v2288
  %6337 = vmatpush.bf16.msra.mxu0 %v2284
  %6338 = vmatpush.bf16.msra.mxu0 %v2280
  %6339 = vmatpush.bf16.msra.mxu0 %v2276
  %6340 = vmatmul.bf16.gmra.mxu0 %v6266
  %v6341 = vpop.f32.mrf.mxu0
  %v6342 = vadd.f32 %v6290, %v6341
  %v6343 = vpop.f32.mrf.mxu0
  %6344 = vdwg.mxu0
  %6345 = vmatpush.bf16.msra.mxu0 %v2305
  %6346 = vmatpush.bf16.msra.mxu0 %v2301
  %6347 = vmatpush.bf16.msra.mxu0 %v2297
  %6348 = vmatpush.bf16.msra.mxu0 %v2293
  %6349 = vmatpush.bf16.msra.mxu0 %v2289
  %6350 = vmatpush.bf16.msra.mxu0 %v2285
  %6351 = vmatpush.bf16.msra.mxu0 %v2281
  %6352 = vmatpush.bf16.msra.mxu0 %v2277
  %6353 = vmatmul.bf16.gmra.mxu0 %v6266
  %v6354 = vpop.f32.mrf.mxu0
  %v6355 = vadd.f32 %v6303, %v6354
  %v6356 = vpop.f32.mrf.mxu0
  %6357 = vdwg.mxu0
  %6358 = vmatpush.bf16.msra.mxu0 %v2306
  %6359 = vmatpush.bf16.msra.mxu0 %v2302
  %6360 = vmatpush.bf16.msra.mxu0 %v2298
  %6361 = vmatpush.bf16.msra.mxu0 %v2294
  %6362 = vmatpush.bf16.msra.mxu0 %v2290
  %6363 = vmatpush.bf16.msra.mxu0 %v2286
  %6364 = vmatpush.bf16.msra.mxu0 %v2282
  %6365 = vmatpush.bf16.msra.mxu0 %v2278
  %6366 = vmatmul.bf16.gmra.mxu0 %v6266
  %v6367 = vpop.f32.mrf.mxu0
  %v6368 = vadd.f32 %v6316, %v6367
  %v6369 = vpop.f32.mrf.mxu0
  %6370 = vdwg.mxu0
  %v6371 = vadd.f32 %v6329, %v64
  %v6372 = vadd.f32 %v6342, %v65
  %v6373 = vadd.f32 %v6355, %v66
  %v6374 = vadd.f32 %v6368, %v67
  %v6375 = vxor.u32 %v6371, 2147483648
  %v6376 = vxor.u32 %v6372, 2147483648
  %v6377 = vxor.u32 %v6373, 2147483648
  %v6378 = vmul.f32 %v6375, 1.442695
  %v6379 = vpow.pop %v6378
  %v6380 = vmul.f32 %v6376, 1.442695
  %v6381 = vpow.pop %v6380
  %v6382 = vmul.f32 %v6377, 1.442695
  %v6383 = vpow.pop %v6382
  %v6384 = vadd.f32 %v6379, 1.0
  %v6385 = vadd.f32 %v6381, 1.0
  %v6386 = vadd.f32 %v6383, 1.0
  %v6387 = vrcp.pop %v6384
  %v6388 = vmul.f32 %v6384, %v6387
  %v6389 = vsub.f32 1.0, %v6388
  %v6390 = vmul.f32 %v6387, %v6389
  %v6391 = vadd.f32 %v6387, %v6390
  %vm6392 = vweird.f32 %v6384
  %vm6393 = vweird.f32 %v6387
  %vm6394 = vmor %vm6392, %vm6393
  %v6395 = vsel %vm6394, %v6387, %v6391
  %v6396 = vand.u32 2147483647, %v6384
  %vm6397 = vcmp.eq.f32.partialorder %v6396, 8.507059e+37
  %v6398 = vand.u32 %v6384, 2147483648
  %v6399 = vor.u32 1.1754944e-38, %v6398
  %v6400 = vsel %vm6397, %v6399, %v6395
  %v6401 = vmul.f32 1.0, %v6400
  %v6402 = vrcp.pop %v6385
  %v6403 = vmul.f32 %v6385, %v6402
  %v6404 = vsub.f32 1.0, %v6403
  %v6405 = vmul.f32 %v6402, %v6404
  %v6406 = vadd.f32 %v6402, %v6405
  %vm6407 = vweird.f32 %v6385
  %vm6408 = vweird.f32 %v6402
  %vm6409 = vmor %vm6407, %vm6408
  %v6410 = vsel %vm6409, %v6402, %v6406
  %v6411 = vand.u32 2147483647, %v6385
  %vm6412 = vcmp.eq.f32.partialorder %v6411, 8.507059e+37
  %v6413 = vand.u32 %v6385, 2147483648
  %v6414 = vor.u32 1.1754944e-38, %v6413
  %v6415 = vsel %vm6412, %v6414, %v6410
  %v6416 = vmul.f32 1.0, %v6415
  %v6417 = vrcp.pop %v6386
  %v6418 = vmul.f32 %v6386, %v6417
  %v6419 = vsub.f32 1.0, %v6418
  %v6420 = vmul.f32 %v6417, %v6419
  %v6421 = vadd.f32 %v6417, %v6420
  %vm6422 = vweird.f32 %v6386
  %vm6423 = vweird.f32 %v6417
  %vm6424 = vmor %vm6422, %vm6423
  %v6425 = vsel %vm6424, %v6417, %v6421
  %v6426 = vand.u32 2147483647, %v6386
  %vm6427 = vcmp.eq.f32.partialorder %v6426, 8.507059e+37
  %v6428 = vand.u32 %v6386, 2147483648
  %v6429 = vor.u32 1.1754944e-38, %v6428
  %v6430 = vsel %vm6427, %v6429, %v6425
  %v6431 = vmul.f32 1.0, %v6430
  %v6432 = vtanh.pop %v6374
  %v6433 = vmul.f32 %v6416, %v6091
  %v6434 = vmul.f32 %v6401, %v6432
  %v6435 = vadd.f32 %v6433, %v6434
  %v6436 = vtanh.pop %v6435
  %v6437 = vmul.f32 %v6431, %v6436
  %v6438 = vpack.c.bf16 %v6437, %v6437
  %6439 = vmatpush.bf16.msra.mxu0 %v2905
  %6440 = vmatpush.bf16.msra.mxu0 %v2901
  %6441 = vmatpush.bf16.msra.mxu0 %v2897
  %6442 = vmatpush.bf16.msra.mxu0 %v2893
  %6443 = vmatpush.bf16.msra.mxu0 %v2889
  %6444 = vmatpush.bf16.msra.mxu0 %v2885
  %6445 = vmatpush.bf16.msra.mxu0 %v2881
  %6446 = vmatpush.bf16.msra.mxu0 %v2877
  %6447 = vmatmul.bf16.gmra.mxu0 %v6266
  %v6448 = vpop.f32.mrf.mxu0
  %v6449 = vadd.f32 0.0, %v6448
  %v6450 = vpop.f32.mrf.mxu0
  %6451 = vdwg.mxu0
  %6452 = vmatpush.bf16.msra.mxu0 %v2906
  %6453 = vmatpush.bf16.msra.mxu0 %v2902
  %6454 = vmatpush.bf16.msra.mxu0 %v2898
  %6455 = vmatpush.bf16.msra.mxu0 %v2894
  %6456 = vmatpush.bf16.msra.mxu0 %v2890
  %6457 = vmatpush.bf16.msra.mxu0 %v2886
  %6458 = vmatpush.bf16.msra.mxu0 %v2882
  %6459 = vmatpush.bf16.msra.mxu0 %v2878
  %6460 = vmatmul.bf16.gmra.mxu0 %v6266
  %v6461 = vpop.f32.mrf.mxu0
  %v6462 = vadd.f32 0.0, %v6461
  %v6463 = vpop.f32.mrf.mxu0
  %6464 = vdwg.mxu0
  %6465 = vmatpush.bf16.msra.mxu0 %v2907
  %6466 = vmatpush.bf16.msra.mxu0 %v2903
  %6467 = vmatpush.bf16.msra.mxu0 %v2899
  %6468 = vmatpush.bf16.msra.mxu0 %v2895
  %6469 = vmatpush.bf16.msra.mxu0 %v2891
  %6470 = vmatpush.bf16.msra.mxu0 %v2887
  %6471 = vmatpush.bf16.msra.mxu0 %v2883
  %6472 = vmatpush.bf16.msra.mxu0 %v2879
  %6473 = vmatmul.bf16.gmra.mxu0 %v6266
  %v6474 = vpop.f32.mrf.mxu0
  %v6475 = vadd.f32 0.0, %v6474
  %v6476 = vpop.f32.mrf.mxu0
  %6477 = vdwg.mxu0
  %6478 = vmatpush.bf16.msra.mxu0 %v2908
  %6479 = vmatpush.bf16.msra.mxu0 %v2904
  %6480 = vmatpush.bf16.msra.mxu0 %v2900
  %6481 = vmatpush.bf16.msra.mxu0 %v2896
  %6482 = vmatpush.bf16.msra.mxu0 %v2892
  %6483 = vmatpush.bf16.msra.mxu0 %v2888
  %6484 = vmatpush.bf16.msra.mxu0 %v2884
  %6485 = vmatpush.bf16.msra.mxu0 %v2880
  %6486 = vmatmul.bf16.gmra.mxu0 %v6266
  %v6487 = vpop.f32.mrf.mxu0
  %v6488 = vadd.f32 0.0, %v6487
  %v6489 = vpop.f32.mrf.mxu0
  %6490 = vdwg.mxu0
  %6491 = vmatpush.bf16.msra.mxu0 %v3117
  %6492 = vmatpush.bf16.msra.mxu0 %v3113
  %6493 = vmatpush.bf16.msra.mxu0 %v3109
  %6494 = vmatpush.bf16.msra.mxu0 %v3105
  %6495 = vmatpush.bf16.msra.mxu0 %v3101
  %6496 = vmatpush.bf16.msra.mxu0 %v3097
  %6497 = vmatpush.bf16.msra.mxu0 %v3093
  %6498 = vmatpush.bf16.msra.mxu0 %v3089
  %6499 = vmatmul.bf16.gmra.mxu0 %v6438
  %v6500 = vpop.f32.mrf.mxu0
  %v6501 = vadd.f32 %v6449, %v6500
  %v6502 = vpop.f32.mrf.mxu0
  %6503 = vdwg.mxu0
  %6504 = vmatpush.bf16.msra.mxu0 %v3118
  %6505 = vmatpush.bf16.msra.mxu0 %v3114
  %6506 = vmatpush.bf16.msra.mxu0 %v3110
  %6507 = vmatpush.bf16.msra.mxu0 %v3106
  %6508 = vmatpush.bf16.msra.mxu0 %v3102
  %6509 = vmatpush.bf16.msra.mxu0 %v3098
  %6510 = vmatpush.bf16.msra.mxu0 %v3094
  %6511 = vmatpush.bf16.msra.mxu0 %v3090
  %6512 = vmatmul.bf16.gmra.mxu0 %v6438
  %v6513 = vpop.f32.mrf.mxu0
  %v6514 = vadd.f32 %v6462, %v6513
  %v6515 = vpop.f32.mrf.mxu0
  %6516 = vdwg.mxu0
  %6517 = vmatpush.bf16.msra.mxu0 %v3119
  %6518 = vmatpush.bf16.msra.mxu0 %v3115
  %6519 = vmatpush.bf16.msra.mxu0 %v3111
  %6520 = vmatpush.bf16.msra.mxu0 %v3107
  %6521 = vmatpush.bf16.msra.mxu0 %v3103
  %6522 = vmatpush.bf16.msra.mxu0 %v3099
  %6523 = vmatpush.bf16.msra.mxu0 %v3095
  %6524 = vmatpush.bf16.msra.mxu0 %v3091
  %6525 = vmatmul.bf16.gmra.mxu0 %v6438
  %v6526 = vpop.f32.mrf.mxu0
  %v6527 = vadd.f32 %v6475, %v6526
  %v6528 = vpop.f32.mrf.mxu0
  %6529 = vdwg.mxu0
  %6530 = vmatpush.bf16.msra.mxu0 %v3120
  %6531 = vmatpush.bf16.msra.mxu0 %v3116
  %6532 = vmatpush.bf16.msra.mxu0 %v3112
  %6533 = vmatpush.bf16.msra.mxu0 %v3108
  %6534 = vmatpush.bf16.msra.mxu0 %v3104
  %6535 = vmatpush.bf16.msra.mxu0 %v3100
  %6536 = vmatpush.bf16.msra.mxu0 %v3096
  %6537 = vmatpush.bf16.msra.mxu0 %v3092
  %6538 = vmatmul.bf16.gmra.mxu0 %v6438
  %v6539 = vpop.f32.mrf.mxu0
  %v6540 = vadd.f32 %v6488, %v6539
  %v6541 = vpop.f32.mrf.mxu0
  %6542 = vdwg.mxu0
  %v6543 = vadd.f32 %v6501, %v75
  %v6544 = vadd.f32 %v6514, %v76
  %v6545 = vadd.f32 %v6527, %v77
  %v6546 = vadd.f32 %v6540, %v78
  %v6547 = vxor.u32 %v6543, 2147483648
  %v6548 = vxor.u32 %v6544, 2147483648
  %v6549 = vxor.u32 %v6545, 2147483648
  %v6550 = vmul.f32 %v6547, 1.442695
  %v6551 = vpow.pop %v6550
  %v6552 = vmul.f32 %v6548, 1.442695
  %v6553 = vpow.pop %v6552
  %v6554 = vmul.f32 %v6549, 1.442695
  %v6555 = vpow.pop %v6554
  %v6556 = vadd.f32 %v6551, 1.0
  %v6557 = vadd.f32 %v6553, 1.0
  %v6558 = vadd.f32 %v6555, 1.0
  %v6559 = vrcp.pop %v6556
  %v6560 = vmul.f32 %v6556, %v6559
  %v6561 = vsub.f32 1.0, %v6560
  %v6562 = vmul.f32 %v6559, %v6561
  %v6563 = vadd.f32 %v6559, %v6562
  %vm6564 = vweird.f32 %v6556
  %vm6565 = vweird.f32 %v6559
  %vm6566 = vmor %vm6564, %vm6565
  %v6567 = vsel %vm6566, %v6559, %v6563
  %v6568 = vand.u32 2147483647, %v6556
  %vm6569 = vcmp.eq.f32.partialorder %v6568, 8.507059e+37
  %v6570 = vand.u32 %v6556, 2147483648
  %v6571 = vor.u32 1.1754944e-38, %v6570
  %v6572 = vsel %vm6569, %v6571, %v6567
  %v6573 = vmul.f32 1.0, %v6572
  %v6574 = vrcp.pop %v6557
  %v6575 = vmul.f32 %v6557, %v6574
  %v6576 = vsub.f32 1.0, %v6575
  %v6577 = vmul.f32 %v6574, %v6576
  %v6578 = vadd.f32 %v6574, %v6577
  %vm6579 = vweird.f32 %v6557
  %vm6580 = vweird.f32 %v6574
  %vm6581 = vmor %vm6579, %vm6580
  %v6582 = vsel %vm6581, %v6574, %v6578
  %v6583 = vand.u32 2147483647, %v6557
  %vm6584 = vcmp.eq.f32.partialorder %v6583, 8.507059e+37
  %v6585 = vand.u32 %v6557, 2147483648
  %v6586 = vor.u32 1.1754944e-38, %v6585
  %v6587 = vsel %vm6584, %v6586, %v6582
  %v6588 = vmul.f32 1.0, %v6587
  %v6589 = vrcp.pop %v6558
  %v6590 = vmul.f32 %v6558, %v6589
  %v6591 = vsub.f32 1.0, %v6590
  %v6592 = vmul.f32 %v6589, %v6591
  %v6593 = vadd.f32 %v6589, %v6592
  %vm6594 = vweird.f32 %v6558
  %vm6595 = vweird.f32 %v6589
  %vm6596 = vmor %vm6594, %vm6595
  %v6597 = vsel %vm6596, %v6589, %v6593
  %v6598 = vand.u32 2147483647, %v6558
  %vm6599 = vcmp.eq.f32.partialorder %v6598, 8.507059e+37
  %v6600 = vand.u32 %v6558, 2147483648
  %v6601 = vor.u32 1.1754944e-38, %v6600
  %v6602 = vsel %vm6599, %v6601, %v6597
  %v6603 = vmul.f32 1.0, %v6602
  %v6604 = vtanh.pop %v6546
  %v6605 = vmul.f32 %v6588, %v6263
  %v6606 = vmul.f32 %v6573, %v6604
  %v6607 = vadd.f32 %v6605, %v6606
  %v6608 = vtanh.pop %v6607
  %v6609 = vmul.f32 %v6603, %v6608
  %v6611 = vrot.slane %v4545, 4
  %v6614 = vrot.slane %v5233, 4
  %v6617 = vrot.slane %v5921, 4
  %v6620 = vrot.slane %v6609, 4
  %vm6622 = vcmask 1043456
  %v6623 = vsel %vm6622, %v4198, %v6611
  %v6624 = vsel %vm6622, %v4889, %v6614
  %v6625 = vsel %vm6622, %v5577, %v6617
  %v6626 = vsel %vm6622, %v6265, %v6620
  %6627 = vst [vmem:[%s11] sm:$0xff] %v6623
  %6628 = vst [vmem:[%s11 + $0x8] sm:$0xff] %v6624
  %6629 = vst [vmem:[%s11 + $0x10] sm:$0xff] %v6625
  %6630 = vst [vmem:[%s11 + $0x18] sm:$0xff] %v6626
  %v6631 = vrot.slane %v4545, 6
  %v6634 = vrot.slane %v4889, 4
  %v6636 = vrot.slane %v5233, 2
  %vm6638 = vcmask 1041408
  %v6639 = vsel %vm6638, %v4198, %v6631
  %v6640 = vsel %vm6622, %v6639, %v6634
  %vm6641 = vcmask 1045504
  %v6642 = vsel %vm6641, %v6640, %v6636
  %v6643 = vpack.c.bf16 %v6642, %v6642
  %v6645 = vrot.slane %v4198, 4
  %v6647 = vsel %vm6638, %v6636, %v4889
  %v6648 = vsel %vm6622, %v6647, %v6631
  %v6649 = vsel %vm6641, %v6648, %v6645
  %v6650 = vpack.c.bf16 %v6649, %v6649
  %v6651 = vld [vmem:[%s10] sm:$0x1]
  %v6653 = vperm.slane %v6651, 0
  %v6655 = vld [vmem:[%s8] sm:$0xf]
  %v6656 = vld [vmem:[%s8 + $0x4] sm:$0xf]
  %v6657 = vld [vmem:[%s8 + $0x8] sm:$0xf]
  %v6658 = vld [vmem:[%s8 + $0xc] sm:$0xf]
  %v6659 = vld [vmem:[%s8 + $0x10] sm:$0xf]
  %v6660 = vld [vmem:[%s8 + $0x14] sm:$0xf]
  %v6661 = vld [vmem:[%s8 + $0x18] sm:$0xf]
  %v6662 = vld [vmem:[%s8 + $0x1c] sm:$0xf]
  %v6663 = vld [vmem:[%s8 + $0x20] sm:$0xf]
  %v6664 = vld [vmem:[%s8 + $0x24] sm:$0xf]
  %v6665 = vld [vmem:[%s8 + $0x28] sm:$0xf]
  %v6666 = vld [vmem:[%s8 + $0x2c] sm:$0xf]
  %v6667 = vld [vmem:[%s8 + $0x30] sm:$0xf]
  %v6668 = vld [vmem:[%s8 + $0x34] sm:$0xf]
  %v6669 = vld [vmem:[%s8 + $0x38] sm:$0xf]
  %v6670 = vld [vmem:[%s8 + $0x3c] sm:$0xf]
  %v6671 = vld [vmem:[%s9] sm:$0xf]
  %v6672 = vld [vmem:[%s9 + $0x4] sm:$0xf]
  %v6673 = vld [vmem:[%s9 + $0x8] sm:$0xf]
  %v6674 = vld [vmem:[%s9 + $0xc] sm:$0xf]
  %v6675 = vld [vmem:[%s9 + $0x10] sm:$0xf]
  %v6676 = vld [vmem:[%s9 + $0x14] sm:$0xf]
  %v6677 = vld [vmem:[%s9 + $0x18] sm:$0xf]
  %v6678 = vld [vmem:[%s9 + $0x1c] sm:$0xf]
  %v6679 = vld [vmem:[%s9 + $0x20] sm:$0xf]
  %v6680 = vld [vmem:[%s9 + $0x24] sm:$0xf]
  %v6681 = vld [vmem:[%s9 + $0x28] sm:$0xf]
  %v6682 = vld [vmem:[%s9 + $0x2c] sm:$0xf]
  %v6683 = vld [vmem:[%s9 + $0x30] sm:$0xf]
  %v6684 = vld [vmem:[%s9 + $0x34] sm:$0xf]
  %v6685 = vld [vmem:[%s9 + $0x38] sm:$0xf]
  %v6686 = vld [vmem:[%s9 + $0x3c] sm:$0xf]
  %v6703 = vunpack.c.l.b16 %v6671
  %v6704 = vunpack.c.l.b16 %v6672
  %v6705 = vunpack.c.l.b16 %v6673
  %v6706 = vunpack.c.l.b16 %v6674
  %v6707 = vunpack.c.l.b16 %v6675
  %v6708 = vunpack.c.l.b16 %v6676
  %v6709 = vunpack.c.l.b16 %v6677
  %v6710 = vunpack.c.l.b16 %v6678
  %v6711 = vunpack.c.l.b16 %v6679
  %v6712 = vunpack.c.l.b16 %v6680
  %v6713 = vunpack.c.l.b16 %v6681
  %v6714 = vunpack.c.l.b16 %v6682
  %v6715 = vunpack.c.l.b16 %v6683
  %v6716 = vunpack.c.l.b16 %v6684
  %v6717 = vunpack.c.l.b16 %v6685
  %v6718 = vunpack.c.l.b16 %v6686
  %v6719 = vpack.c.b16 %v6704, %v6703
  %v6720 = vpack.c.b16 %v6706, %v6705
  %v6721 = vpack.c.b16 %v6708, %v6707
  %v6722 = vpack.c.b16 %v6710, %v6709
  %v6723 = vpack.c.b16 %v6712, %v6711
  %v6724 = vpack.c.b16 %v6714, %v6713
  %v6725 = vpack.c.b16 %v6716, %v6715
  %v6726 = vpack.c.b16 %v6718, %v6717
  %6735 = vmatpush.bf16.msra.mxu0 %v6726
  %6736 = vmatpush.bf16.msra.mxu0 %v6725
  %6737 = vmatpush.bf16.msra.mxu0 %v6724
  %6738 = vmatpush.bf16.msra.mxu0 %v6723
  %6739 = vmatpush.bf16.msra.mxu0 %v6722
  %6740 = vmatpush.bf16.msra.mxu0 %v6721
  %6741 = vmatpush.bf16.msra.mxu0 %v6720
  %6742 = vmatpush.bf16.msra.mxu0 %v6719
  %6743 = vmatmul.bf16.gmra.mxu0 %v6650
  %v6744 = vpop.f32.mrf.mxu0
  %v6745 = vadd.f32 0.0, %v6744
  %v6746 = vpop.f32.mrf.mxu0
  %6747 = vdwg.mxu0
  %v6764 = vunpack.c.l.b16 %v6655
  %v6765 = vunpack.c.l.b16 %v6656
  %v6766 = vunpack.c.l.b16 %v6657
  %v6767 = vunpack.c.l.b16 %v6658
  %v6768 = vunpack.c.l.b16 %v6659
  %v6769 = vunpack.c.l.b16 %v6660
  %v6770 = vunpack.c.l.b16 %v6661
  %v6771 = vunpack.c.l.b16 %v6662
  %v6772 = vunpack.c.l.b16 %v6663
  %v6773 = vunpack.c.l.b16 %v6664
  %v6774 = vunpack.c.l.b16 %v6665
  %v6775 = vunpack.c.l.b16 %v6666
  %v6776 = vunpack.c.l.b16 %v6667
  %v6777 = vunpack.c.l.b16 %v6668
  %v6778 = vunpack.c.l.b16 %v6669
  %v6779 = vunpack.c.l.b16 %v6670
  %v6780 = vpack.c.b16 %v6765, %v6764
  %v6781 = vpack.c.b16 %v6767, %v6766
  %v6782 = vpack.c.b16 %v6769, %v6768
  %v6783 = vpack.c.b16 %v6771, %v6770
  %v6784 = vpack.c.b16 %v6773, %v6772
  %v6785 = vpack.c.b16 %v6775, %v6774
  %v6786 = vpack.c.b16 %v6777, %v6776
  %v6787 = vpack.c.b16 %v6779, %v6778
  %6796 = vmatpush.bf16.msra.mxu0 %v6787
  %6797 = vmatpush.bf16.msra.mxu0 %v6786
  %6798 = vmatpush.bf16.msra.mxu0 %v6785
  %6799 = vmatpush.bf16.msra.mxu0 %v6784
  %6800 = vmatpush.bf16.msra.mxu0 %v6783
  %6801 = vmatpush.bf16.msra.mxu0 %v6782
  %6802 = vmatpush.bf16.msra.mxu0 %v6781
  %6803 = vmatpush.bf16.msra.mxu0 %v6780
  %6804 = vmatmul.bf16.gmra.mxu0 %v6643
  %v6805 = vpop.f32.mrf.mxu0
  %v6806 = vadd.f32 %v6745, %v6805
  %v6807 = vpop.f32.mrf.mxu0
  %6808 = vdwg.mxu0
  %v6809 = vadd.f32 %v6806, %v6653
  %vm6810 = vcmp.gt.f32.partialorder %v6809, 0.0
  %v6811 = vmul.f32 %v6809, 0.2
  %v6812 = vsel %vm6810, %v6809, %v6811
  %6813 = vst [vmem:[%s12] sm:$0xff] %v6812
  // Predicated region
  $region46: #{pallas_forward.1} parent=0 // pred_check
    _
  $region47: #{pallas_forward.1} parent=0 // pred_check_branch
    %6815 = sbr.rel (0) target = $region49
  $region48: #{pallas_forward.1} parent=0 // pred_region
    _
  $region49: #{pallas_forward.1} parent=0 // pred_fallthru
    _
  // Predicated region
  $region50: #{pallas_forward.1} parent=0 // pred_check
    _
  $region51: #{pallas_forward.1} parent=0 // pred_check_branch
    %6817 = sbr.rel (0) target = $region53
  $region52: #{pallas_forward.1} parent=0 // pred_region
    _
  $region53: #{pallas_forward.1} parent=0 // pred_fallthru
    _
  // Predicated region
  $region54: #{pallas_forward.1} parent=0 // pred_check
    _
  $region55: #{pallas_forward.1} parent=0 // pred_check_branch
    %6819 = sbr.rel (0) target = $region57
  $region56: #{pallas_forward.1} parent=0 // pred_region
    _
  $region57: #{pallas_forward.1} parent=0 // pred_fallthru
    _
  // Predicated region
  $region58: #{pallas_forward.1} parent=0 // pred_check
    _
  $region59: #{pallas_forward.1} parent=0 // pred_check_branch
    %6821 = sbr.rel (0) target = $region61
  $region60: #{pallas_forward.1} parent=0 // pred_region
    _
  $region61: #{pallas_forward.1} parent=0 // pred_fallthru
    _

</llo_original>
